<compile_context>
chip_gen: v7x
topology: tpu7x:2x2x1
jax: 0.10.0
libtpu: 0.0.40
codegen_flags: <defaults>
</compile_context>

<pallas_src>
import functools

import jax
import jax.numpy as jnp
import numpy as np
from jax.experimental import pallas as pl
from jax.experimental.pallas import tpu as pltpu

EPS = 1e-5
LANES = 128


def _round_up(a, m):
    return (a + m - 1) // m * m


def _cdiv(a, b):
    return -(-a // b)


def _cparams():
    return pltpu.CompilerParams(
        dimension_semantics=("parallel",),            # row tiles independent
        vmem_limit_bytes=32 * 1024 * 1024,            # fits v7x (64 MiB) easily
    )


def _pick_halo(wp):
    # rows of the "next tile" touched by the 3x3 taps: up to 2*wp + 2
    return max(8, pl.next_power_of_2(2 * wp + 2))


def _pick_tile_rows(rcore, halo):
    # Largest power-of-two row tile that still leaves >=4 grid steps
    # (pipelining + v7x megacore balance); never smaller than the halo.
    for cand in (1024, 512, 256, 128, 64):
        if cand >= halo and _cdiv(rcore, cand) >= 4:
            return cand
    return max(halo, 64)


# ---------------------------------------------------------------------------
# In-kernel helpers
# ---------------------------------------------------------------------------

def _tap_matmuls(xbuf_ref, w_ref, offsets, tr, cin_p, cout_p):
    """Sum of 9 tap-shifted (tr, cin_p) @ (cin_p, cout_p) bf16 MXU matmuls.

    xbuf_ref is a VMEM ref holding (tr + halo) staged rows; offsets are static
    python ints.
    """
    # TODO(synk): on v6e/v7x pack two taps per dot (K=256) / use MRB
    # accumulation; kept at K=128 here so the same kernel stays optimal on v5e.
    acc = jnp.zeros((tr, cout_p), jnp.float32)
    for t, off in enumerate(offsets):
        acc = acc + jnp.dot(xbuf_ref[off:off + tr, :],
                            w_ref[t * cin_p:(t + 1) * cin_p, :],
                            preferred_element_type=jnp.float32)
    return acc


# ---------------------------------------------------------------------------
# Kernels
# ---------------------------------------------------------------------------

def _conv1_proj_kernel(x0_ref, xh_ref, w_ref, ws_ref, m_ref,
                       z_ref, s_ref, st_ref, xbuf_ref,
                       *, offsets, c_off, tr, halo, cin_p):
    # conv1 (3x3, as 9 tap matmuls) + fused 1x1 projection shortcut.
    xbuf_ref[0:tr, :] = x0_ref[...]
    xbuf_ref[tr:tr + halo, :] = xh_ref[...]
    cout_p = z_ref.shape[-1]
    m = m_ref[...]

    z = _tap_matmuls(xbuf_ref, w_ref, offsets, tr, cin_p, cout_p)
    z_ref[...] = z.astype(jnp.bfloat16)                 # bf16 intermediate
    z_sum = jnp.sum(z * m, axis=0, keepdims=True)
    z_sq = jnp.sum(z * z * m, axis=0, keepdims=True)

    # Shortcut computed after z so the two big f32 tiles are not live together.
    s = jnp.dot(xbuf_ref[c_off:c_off + tr, :], ws_ref[...],
                preferred_element_type=jnp.float32)
    s_ref[...] = s.astype(jnp.bfloat16)
    s_sum = jnp.sum(s * m, axis=0, keepdims=True)
    s_sq = jnp.sum(s * s * m, axis=0, keepdims=True)

    st_ref[...] = jnp.concatenate(
        [z_sum, z_sq, s_sum, s_sq, jnp.zeros((4, cout_p), jnp.float32)], axis=0)


def _conv1_id_kernel(x0_ref, xh_ref, w_ref, m_ref,
                     z_ref, st_ref, xbuf_ref,
                     *, offsets, tr, halo, cin_p):
    xbuf_ref[0:tr, :] = x0_ref[...]
    xbuf_ref[tr:tr + halo, :] = xh_ref[...]
    cout_p = z_ref.shape[-1]
    m = m_ref[...]
    z = _tap_matmuls(xbuf_ref, w_ref, offsets, tr, cin_p, cout_p)
    z_ref[...] = z.astype(jnp.bfloat16)
    st_ref[...] = jnp.concatenate(
        [jnp.sum(z * m, axis=0, keepdims=True),
         jnp.sum(z * z * m, axis=0, keepdims=True),
         jnp.zeros((6, cout_p), jnp.float32)], axis=0)


def _conv2_kernel(z0_ref, zh_ref, mi0_ref, mih_ref, bn1_ref, w_ref, mo_ref,
                  z2_ref, st_ref, ybuf_ref,
                  *, offsets, tr, halo, chunk, cp):
    # BN1 + ReLU + padding mask fused onto the (bf16) input, processed in row
    # chunks so only the bf16 result is materialized (into a VMEM scratch).
    bn = bn1_ref[...]                               # rows: mean, inv, gamma, beta
    mean = bn[0:1, :]
    scale = bn[1:2, :] * bn[2:3, :]
    beta = bn[3:4, :]

    for c0 in range(0, tr, chunk):
        zc = z0_ref[c0:c0 + chunk, :].astype(jnp.float32)
        mc = mi0_ref[c0:c0 + chunk, :]
        y = jnp.maximum((zc - mean) * scale + beta, 0.0) * mc
        ybuf_ref[c0:c0 + chunk, :] = y.astype(jnp.bfloat16)
    hchunk = min(chunk, halo)
    for c0 in range(0, halo, hchunk):
        zc = zh_ref[c0:c0 + hchunk, :].astype(jnp.float32)
        mc = mih_ref[c0:c0 + hchunk, :]
        y = jnp.maximum((zc - mean) * scale + beta, 0.0) * mc
        ybuf_ref[tr + c0:tr + c0 + hchunk, :] = y.astype(jnp.bfloat16)

    z2 = _tap_matmuls(ybuf_ref, w_ref, offsets, tr, cp, cp)
    z2_ref[...] = z2
    mo = mo_ref[...]
    st_ref[...] = jnp.concatenate(
        [jnp.sum(z2 * mo, axis=0, keepdims=True),
         jnp.sum(z2 * z2 * mo, axis=0, keepdims=True),
         jnp.zeros((6, cp), jnp.float32)], axis=0)


def _final_proj_kernel(z2_ref, s_ref, bn2_ref, bns_ref, o_ref):
    bn2 = bn2_ref[...]
    bns = bns_ref[...]
    y = (z2_ref[...] - bn2[0:1, :]) * (bn2[1:2, :] * bn2[2:3, :]) + bn2[3:4, :]
    sc = (s_ref[...].astype(jnp.float32) - bns[0:1, :]) * \
         (bns[1:2, :] * bns[2:3, :]) + bns[3:4, :]
    o_ref[...] = jnp.maximum(y + sc, 0.0)


def _final_id_kernel(z2_ref, x0_ref, xh_ref, bn2_ref, o_ref, *, shift, tr):
    bn2 = bn2_ref[...]
    # identity shortcut = centre-tap rows of the padded-flat x (static shift)
    xs = jnp.concatenate([x0_ref[shift:tr, :], xh_ref[0:shift, :]],
                         axis=0).astype(jnp.float32)
    y = (z2_ref[...] - bn2[0:1, :]) * (bn2[1:2, :] * bn2[2:3, :]) + bn2[3:4, :]
    o_ref[...] = jnp.maximum(y + xs, 0.0)


# ---------------------------------------------------------------------------
# pallas_call wrappers
# ---------------------------------------------------------------------------

def _conv1_call(x_flat_bf, w_mat, ws_mat, mask, t, tr, halo, cin_p, cout_p,
                wp, project):
    offsets = tuple(kh * wp + kw for kh in range(3) for kw in range(3))
    c_off = wp + 1                                   # centre tap == 1x1 conv input
    rat = tr // halo
    x0_spec = pl.BlockSpec((tr, cin_p), lambda i: (i, 0))
    xh_spec = pl.BlockSpec((halo, cin_p), lambda i: ((i + 1) * rat, 0))
    w_spec = pl.BlockSpec((9 * cin_p, cout_p), lambda i: (0, 0))
    m_spec = pl.BlockSpec((tr, 1), lambda i: (i, 0))
    z_spec = pl.BlockSpec((tr, cout_p), lambda i: (i, 0))
    st_spec = pl.BlockSpec((None, 8, cout_p), lambda i: (i, 0, 0))
    z_shape = jax.ShapeDtypeStruct((t * tr, cout_p), jnp.bfloat16)
    st_shape = jax.ShapeDtypeStruct((t, 8, cout_p), jnp.float32)
    scratch = [pltpu.VMEM((tr + halo, cin_p), jnp.bfloat16)]
    if project:
        kern = functools.partial(_conv1_proj_kernel, offsets=offsets,
                                 c_off=c_off, tr=tr, halo=halo, cin_p=cin_p)
        return pl.pallas_call(
            kern, grid=(t,),
            in_specs=[x0_spec, xh_spec, w_spec,
                      pl.BlockSpec((cin_p, cout_p), lambda i: (0, 0)),
                      m_spec],
            out_specs=[z_spec, z_spec, st_spec],
            out_shape=[z_shape, z_shape, st_shape],
            scratch_shapes=scratch,
            compiler_params=_cparams(),
        )(x_flat_bf, x_flat_bf, w_mat, ws_mat, mask)
    kern = functools.partial(_conv1_id_kernel, offsets=offsets,
                             tr=tr, halo=halo, cin_p=cin_p)
    return pl.pallas_call(
        kern, grid=(t,),
        in_specs=[x0_spec, xh_spec, w_spec, m_spec],
        out_specs=[z_spec, st_spec],
        out_shape=[z_shape, st_shape],
        scratch_shapes=scratch,
        compiler_params=_cparams(),
    )(x_flat_bf, x_flat_bf, w_mat, mask)


def _conv2_call(z_in, mask_in, bn1, w_mat, mask_out, t, tr, halo, cp, wp):
    offsets = tuple(kh * wp + kw for kh in range(3) for kw in range(3))
    rat = tr // halo
    chunk = min(64, tr)
    kern = functools.partial(_conv2_kernel, offsets=offsets, tr=tr, halo=halo,
                             chunk=chunk, cp=cp)
    row0 = pl.BlockSpec((tr, cp), lambda i: (i, 0))
    rowh = pl.BlockSpec((halo, cp), lambda i: ((i + 1) * rat, 0))
    m0 = pl.BlockSpec((tr, 1), lambda i: (i, 0))
    mh = pl.BlockSpec((halo, 1), lambda i: ((i + 1) * rat, 0))
    return pl.pallas_call(
        kern, grid=(t,),
        in_specs=[row0, rowh, m0, mh,
                  pl.BlockSpec((4, cp), lambda i: (0, 0)),
                  pl.BlockSpec((9 * cp, cp), lambda i: (0, 0)),
                  m0],
        out_specs=[row0, pl.BlockSpec((None, 8, cp), lambda i: (i, 0, 0))],
        out_shape=[jax.ShapeDtypeStruct((t * tr, cp), jnp.float32),
                   jax.ShapeDtypeStruct((t, 8, cp), jnp.float32)],
        scratch_shapes=[pltpu.VMEM((tr + halo, cp), jnp.bfloat16)],
        compiler_params=_cparams(),
    )(z_in, z_in, mask_in, mask_in, bn1, w_mat, mask_out)


def _final_proj_call(z2, s_rows, bn2, bns, t, tr, cp):
    row = pl.BlockSpec((tr, cp), lambda i: (i, 0))
    bn_spec = pl.BlockSpec((4, cp), lambda i: (0, 0))
    return pl.pallas_call(
        _final_proj_kernel, grid=(t,),
        in_specs=[row, row, bn_spec, bn_spec],
        out_specs=row,
        out_shape=jax.ShapeDtypeStruct((t * tr, cp), jnp.float32),
        compiler_params=_cparams(),
    )(z2, s_rows, bn2, bns)


def _final_id_call(z2, x_flat_bf, bn2, t, tr, halo, cp, shift):
    rat = tr // halo
    kern = functools.partial(_final_id_kernel, shift=shift, tr=tr)
    row = pl.BlockSpec((tr, cp), lambda i: (i, 0))
    rowh = pl.BlockSpec((halo, cp), lambda i: ((i + 1) * rat, 0))
    bn_spec = pl.BlockSpec((4, cp), lambda i: (0, 0))
    return pl.pallas_call(
        kern, grid=(t,),
        in_specs=[row, row, rowh, bn_spec],
        out_specs=row,
        out_shape=jax.ShapeDtypeStruct((t * tr, cp), jnp.float32),
        compiler_params=_cparams(),
    )(z2, x_flat_bf, x_flat_bf, bn2)


# ---------------------------------------------------------------------------
# JAX glue (layout prep, masks, BN stat reduction)
# ---------------------------------------------------------------------------

def _pad_last(a, size):
    return jnp.pad(a, [(0, 0)] * (a.ndim - 1) + [(0, size - a.shape[-1])])


def _flatten_padded(x_nhwc, tr, halo):
    """Spatial zero-pad by 1, flatten (N,Hp,Wp) rows, pad rows to t*tr + halo."""
    n, h, w, c = x_nhwc.shape
    xp = jnp.pad(x_nhwc, ((0, 0), (1, 1), (1, 1), (0, 0)))
    hp, wp = h + 2, w + 2
    rcore = n * hp * wp
    t = _cdiv(rcore, tr)
    flat = xp.reshape(rcore, c)
    flat = jnp.pad(flat, ((0, t * tr + halo - rcore), (0, 0)))
    return flat, t, hp, wp


def _kept_rows_mask(n, hp, wp, h_valid, w_valid, stride, rows):
    """1.0 on padded-flat base rows that map to a kept (strided) conv output."""
    p = np.arange(hp)
    q = np.arange(wp)
    vp = ((p % stride) == 0) & (p < h_valid)
    vq = ((q % stride) == 0) & (q < w_valid)
    m = np.outer(vp, vq).astype(np.float32)
    m = np.broadcast_to(m[None], (n, hp, wp)).reshape(-1)
    m = np.pad(m, (0, rows - m.size))
    return jnp.asarray(m.reshape(rows, 1))


def _interior_rows_mask(n, hp, wp, rows):
    """1.0 on rows that are real (non-padding) positions of the padded grid."""
    p = np.arange(hp)
    q = np.arange(wp)
    m = np.outer((p >= 1) & (p <= hp - 2),
                 (q >= 1) & (q <= wp - 2)).astype(np.float32)
    m = np.broadcast_to(m[None], (n, hp, wp)).reshape(-1)
    m = np.pad(m, (0, rows - m.size))
    return jnp.asarray(m.reshape(rows, 1))


def _pack_conv_weight(w_hwio, cin_p, cout_p):
    kh, kw, cin, cout = w_hwio.shape
    w = jnp.pad(w_hwio, ((0, 0), (0, 0), (0, cin_p - cin), (0, cout_p - cout)))
    return w.reshape(kh * kw * cin_p, cout_p).astype(jnp.bfloat16)


def _stats_to_bn(stat_rows, count, gamma_p, beta_p):
    mean = stat_rows[0:1, :] / count
    var = jnp.maximum(stat_rows[1:2, :] / count - mean * mean, 0.0)
    inv = jax.lax.rsqrt(var + EPS)
    return jnp.concatenate([mean, inv, gamma_p, beta_p], axis=0)   # (4, cp)


# ---------------------------------------------------------------------------
# Forward pass
# ---------------------------------------------------------------------------

def baseline_arch_forward(x_nchw, params, stride, project, tile_rows=None):
    x = jnp.transpose(x_nchw, (0, 2, 3, 1)).astype(jnp.float32)     # NHWC
    n, h, w, cin = x.shape
    cout = params["w1"].shape[-1]
    if not project:
        assert cin == cout and stride == 1, "identity shortcut needs cin==cout, stride==1"
    cin_p = _round_up(cin, LANES)
    cout_p = _round_up(cout, LANES)
    ho = (h - 1) // stride + 1
    wo = (w - 1) // stride + 1
    rv = n * ho * wo                         # number of real output positions

    hp1, wp1 = h + 2, w + 2
    r1core = n * hp1 * wp1
    halo = _pick_halo(wp1)
    tr = tile_rows if tile_rows is not None else _pick_tile_rows(r1core, halo)
    assert halo <= tr and tr % halo == 0 and tr % 8 == 0

    g1 = _pad_last(params["g1"], cout_p)
    b1 = _pad_last(params["b1"], cout_p)
    g2 = _pad_last(params["g2"], cout_p)
    b2 = _pad_last(params["b2"], cout_p)

    # ---- stage 1: conv1 3x3 stride s (+ fused 1x1 projection shortcut) ----
    x_cp = _pad_last(x, cin_p)                                      # lane dense
    x_flat, t1, _, _ = _flatten_padded(x_cp, tr, halo)
    x_flat_bf = x_flat.astype(jnp.bfloat16)                         # MXU operand dtype
    w1_mat = _pack_conv_weight(params["w1"], cin_p, cout_p)
    mask1 = _kept_rows_mask(n, hp1, wp1, h, w, stride, t1 * tr)
    if project:
        ws_mat = jnp.pad(params["ws"],
                         ((0, cin_p - cin), (0, cout_p - cout))).astype(jnp.bfloat16)
        z1_full, s_full, st1 = _conv1_call(x_flat_bf, w1_mat, ws_mat, mask1,
                                           t1, tr, halo, cin_p, cout_p, wp1, True)
    else:
        s_full = None
        z1_full, st1 = _conv1_call(x_flat_bf, w1_mat, None, mask1,
                                   t1, tr, halo, cin_p, cout_p, wp1, False)
    st1r = jnp.sum(st1, axis=0)                                     # (8, cout_p)
    bn1 = _stats_to_bn(st1r[0:2, :], rv, g1, b1)

    # ---- stage 2: conv2 3x3 stride 1 (BN1 + ReLU fused onto its input) ----
    z1_keep = z1_full[:r1core].reshape(n, hp1, wp1, cout_p)[:, 0:h:stride, 0:w:stride, :]
    # TODO(synk): this strided-subsample + re-pad relayout of the (bf16) z1 is
    # the one remaining XLA glue round trip; folding it into the conv2 kernel
    # needs leading-halo blocks / scalar-prefetch row tables.
    z2_in, t2, hp2, wp2 = _flatten_padded(z1_keep, tr, halo)        # bf16
    r2core = n * hp2 * wp2
    mask2_in = _interior_rows_mask(n, hp2, wp2, t2 * tr + halo)
    mask2_out = _kept_rows_mask(n, hp2, wp2, ho, wo, 1, t2 * tr)
    w2_mat = _pack_conv_weight(params["w2"], cout_p, cout_p)
    z2_full, st2 = _conv2_call(z2_in, mask2_in, bn1, w2_mat, mask2_out,
                               t2, tr, halo, cout_p, wp2)
    st2r = jnp.sum(st2, axis=0)
    bn2 = _stats_to_bn(st2r[0:2, :], rv, g2, b2)

    # ---- stage 3: BN2 + shortcut(BN) + residual add + ReLU, computed in the
    # conv2-output padded-grid layout; one kept-row gather at the very end.
    if project:
        gs = _pad_last(params["gs"], cout_p)
        bs = _pad_last(params["bs"], cout_p)
        bns = _stats_to_bn(st1r[2:4, :], rv, gs, bs)
        if stride == 1:
            s_rows = s_full                       # same padded-grid layout as z2
        else:
            s_keep = s_full[:r1core].reshape(n, hp1, wp1, cout_p)[:, 0:h:stride,
                                                                  0:w:stride, :]
            s_pad = jnp.pad(s_keep, ((0, 0), (0, hp2 - ho), (0, wp2 - wo), (0, 0)))
            s_rows = jnp.pad(s_pad.reshape(r2core, cout_p),
                             ((0, t2 * tr - r2core), (0, 0)))
        out_full = _final_proj_call(z2_full, s_rows, bn2, bns, t2, tr, cout_p)
    else:
        out_full = _final_id_call(z2_full, x_flat_bf, bn2, t2, tr, halo,
                                  cout_p, shift=wp1 + 1)

    out = out_full[:r2core].reshape(n, hp2, wp2, cout_p)[:, :ho, :wo, :cout]
    return jnp.transpose(out, (0, 3, 1, 2))                         # NCHW


# ---------------------------------------------------------------------------
# Pure-JAX reference (PyTorch semantics; conv operands rounded to bf16 to
# match the MXU operand quantization of the Pallas path, everything else f32)
# ---------------------------------------------------------------------------

def _bn_ref(z, gamma, beta):
    mean = jnp.mean(z, axis=(0, 1, 2), keepdims=True)
    var = jnp.mean((z - mean) ** 2, axis=(0, 1, 2), keepdims=True)
    return (z - mean) * jax.lax.rsqrt(var + EPS) * gamma + beta


def _conv_ref(x_nhwc, w_hwio, stride, padding):
    xb = x_nhwc.astype(jnp.bfloat16).astype(jnp.float32)
    wb = w_hwio.astype(jnp.bfloat16).astype(jnp.float32)
    return jax.lax.conv_general_dilated(
        xb, wb, (stride, stride), ((padding, padding), (padding, padding)),
        dimension_numbers=("NHWC", "HWIO", "NHWC"))


def reference_forward(x_nchw, params, stride, project):
    x = jnp.transpose(x_nchw, (0, 2, 3, 1)).astype(jnp.float32)
    cin = x.shape[-1]
    cout = params["w1"].shape[-1]

    def cvec(v):
        return v.reshape(1, 1, 1, -1)

    y = _conv_ref(x, params["w1"], stride, 1)
    y = jnp.maximum(_bn_ref(y, cvec(params["g1"]), cvec(params["b1"])), 0.0)
    y = _conv_ref(y, params["w2"], 1, 1)
    y = _bn_ref(y, cvec(params["g2"]), cvec(params["b2"]))
    if project:
        s = _conv_ref(x, params["ws"].reshape(1, 1, cin, cout), stride, 0)
        s = _bn_ref(s, cvec(params["gs"]), cvec(params["bs"]))
    else:
        s = x
    out = jnp.maximum(y + s, 0.0)
    return jnp.transpose(out, (0, 3, 1, 2))


def init_params(key, in_channels, channels, stride):
    ks = jax.random.split(key, 9)
    p = {
        "w1": 0.1 * jax.random.normal(ks[0], (3, 3, in_channels, channels), jnp.float32),
        "g1": 1.0 + 0.1 * jax.random.normal(ks[1], (1, channels), jnp.float32),
        "b1": 0.1 * jax.random.normal(ks[2], (1, channels), jnp.float32),
        "w2": 0.1 * jax.random.normal(ks[3], (3, 3, channels, channels), jnp.float32),
        "g2": 1.0 + 0.1 * jax.random.normal(ks[4], (1, channels), jnp.float32),
        "b2": 0.1 * jax.random.normal(ks[5], (1, channels), jnp.float32),
    }
    project = not (in_channels == channels and stride == 1)
    if project:
        p["ws"] = 0.1 * jax.random.normal(ks[6], (in_channels, channels), jnp.float32)
        p["gs"] = 1.0 + 0.1 * jax.random.normal(ks[7], (1, channels), jnp.float32)
        p["bs"] = 0.1 * jax.random.normal(ks[8], (1, channels), jnp.float32)
    return p, project


if __name__ == "__main__":
    # (batch, in_channels, channels, spatial, stride): projection- and
    # identity-shortcut configurations.
    configs = [
        (2, 4, 8, 16, 2),
        (2, 8, 8, 8, 1),
    ]
    key = jax.random.PRNGKey(0)
    for (n, cin, cch, hw, stride) in configs:
        key, kx, kp = jax.random.split(key, 3)
        x = jax.random.normal(kx, (n, cin, hw, hw), jnp.float32)   # NCHW
        params, project = init_params(kp, cin, cch, stride)

        fwd = jax.jit(functools.partial(baseline_arch_forward,
                                        stride=stride, project=project))
        out = jax.block_until_ready(fwd(x, params))
        ho = (hw - 1) // stride + 1
        assert out.shape == (n, cch, ho, ho), out.shape

        ref = jax.block_until_ready(reference_forward(x, params, stride, project))
        # bf16 MXU operands + bf16 storage of the z1 / shortcut intermediates
        # => tolerance covers the ~2^-8 relative rounding of those values.
        np.testing.assert_allclose(np.asarray(out), np.asarray(ref),
                                   rtol=2e-2, atol=2e-2)
    print("KERNEL_OK")
</pallas_src>

<mosaic_0001>
module attributes {stable_mosaic.version = 11 : i64} {
  func.func @_conv1_proj_kernel(%arg0: i32, %arg1: memref<128x128xbf16, #tpu.memory_space<vmem>>, %arg2: memref<64x128xbf16, #tpu.memory_space<vmem>>, %arg3: memref<1152x128xbf16, #tpu.memory_space<vmem>>, %arg4: memref<128x128xbf16, #tpu.memory_space<vmem>>, %arg5: memref<128x1xf32, #tpu.memory_space<vmem>>, %arg6: memref<128x128xbf16, #tpu.memory_space<vmem>>, %arg7: memref<128x128xbf16, #tpu.memory_space<vmem>>, %arg8: memref<1x8x128xf32, #tpu.memory_space<vmem>>, %arg9: memref<192x128xbf16, #tpu.memory_space<vmem>>) attributes {dimension_semantics = [#tpu.dimension_semantics<parallel>], iteration_bounds = array<i64: 6>, scalar_prefetch = 0 : i64, scratch_operands = 1 : i64, tpu.core_type = #tpu.core_type<tc>, window_params = [{transform_indices = @transform_0, window_bounds = array<i64: 128, 128>}, {transform_indices = @transform_1, window_bounds = array<i64: 64, 128>}, {pipeline_mode = #tpu.pipeline_mode<synchronous>, transform_indices = @transform_2, window_bounds = array<i64: 1152, 128>}, {pipeline_mode = #tpu.pipeline_mode<synchronous>, transform_indices = @transform_3, window_bounds = array<i64: 128, 128>}, {transform_indices = @transform_4, window_bounds = array<i64: 128, 1>}, {transform_indices = @transform_5, window_bounds = array<i64: 128, 128>}, {transform_indices = @transform_6, window_bounds = array<i64: 128, 128>}, {transform_indices = @transform_7, window_bounds = array<i64: 1, 8, 128>}]} {
    %c0 = arith.constant 0 : index
    %c0_0 = arith.constant 0 : index
    %0 = vector.load %arg1[%c0, %c0_0] : memref<128x128xbf16, #tpu.memory_space<vmem>>, vector<128x128xbf16>
    %c0_1 = arith.constant 0 : index
    %c0_2 = arith.constant 0 : index
    %1 = vector.load %arg9[%c0_1, %c0_2] : memref<192x128xbf16, #tpu.memory_space<vmem>>, vector<128x128xbf16>
    tpu.vector_store %arg9[%c0_1, %c0_2], %0 {strides = array<i32>} : memref<192x128xbf16, #tpu.memory_space<vmem>>, vector<128x128xbf16>,
    %c0_3 = arith.constant 0 : index
    %c0_4 = arith.constant 0 : index
    %2 = vector.load %arg2[%c0_3, %c0_4] : memref<64x128xbf16, #tpu.memory_space<vmem>>, vector<64x128xbf16>
    %c128 = arith.constant 128 : index
    %c0_5 = arith.constant 0 : index
    %3 = vector.load %arg9[%c128, %c0_5] : memref<192x128xbf16, #tpu.memory_space<vmem>>, vector<64x128xbf16>
    tpu.vector_store %arg9[%c128, %c0_5], %2 {strides = array<i32>} : memref<192x128xbf16, #tpu.memory_space<vmem>>, vector<64x128xbf16>,
    %c0_6 = arith.constant 0 : index
    %c0_7 = arith.constant 0 : index
    %4 = vector.load %arg5[%c0_6, %c0_7] : memref<128x1xf32, #tpu.memory_space<vmem>>, vector<128x1xf32>
    %cst = arith.constant 0.000000e+00 : f32
    %5 = vector.broadcast %cst : f32 to vector<128x128xf32>
    %c0_8 = arith.constant 0 : index
    %c0_9 = arith.constant 0 : index
    %6 = vector.load %arg9[%c0_8, %c0_9] : memref<192x128xbf16, #tpu.memory_space<vmem>>, vector<128x128xbf16>
    %c0_10 = arith.constant 0 : index
    %c0_11 = arith.constant 0 : index
    %7 = vector.load %arg3[%c0_10, %c0_11] : memref<1152x128xbf16, #tpu.memory_space<vmem>>, vector<128x128xbf16>
    %cst_12 = arith.constant dense<0.000000e+00> : vector<128x128xf32>
    %8 = tpu.matmul %6, %7, %cst_12 {dimension_numbers = #tpu.dot_dimension_numbers<[1], [0], [0], [1], [0, 0, 1, 1], [], []>} : vector<128x128xbf16>, vector<128x128xbf16>, vector<128x128xf32> -> vector<128x128xf32>
    %9 = arith.addf %5, %8 : vector<128x128xf32>
    %c1 = arith.constant 1 : index
    %c0_13 = arith.constant 0 : index
    %10 = vector.load %arg9[%c1, %c0_13] : memref<192x128xbf16, #tpu.memory_space<vmem>>, vector<128x128xbf16>
    %c128_14 = arith.constant 128 : index
    %c0_15 = arith.constant 0 : index
    %11 = vector.load %arg3[%c128_14, %c0_15] : memref<1152x128xbf16, #tpu.memory_space<vmem>>, vector<128x128xbf16>
    %cst_16 = arith.constant dense<0.000000e+00> : vector<128x128xf32>
    %12 = tpu.matmul %10, %11, %cst_16 {dimension_numbers = #tpu.dot_dimension_numbers<[1], [0], [0], [1], [0, 0, 1, 1], [], []>} : vector<128x128xbf16>, vector<128x128xbf16>, vector<128x128xf32> -> vector<128x128xf32>
    %13 = arith.addf %9, %12 : vector<128x128xf32>
    %c2 = arith.constant 2 : index
    %c0_17 = arith.constant 0 : index
    %14 = vector.load %arg9[%c2, %c0_17] : memref<192x128xbf16, #tpu.memory_space<vmem>>, vector<128x128xbf16>
    %c256 = arith.constant 256 : index
    %c0_18 = arith.constant 0 : index
    %15 = vector.load %arg3[%c256, %c0_18] : memref<1152x128xbf16, #tpu.memory_space<vmem>>, vector<128x128xbf16>
    %cst_19 = arith.constant dense<0.000000e+00> : vector<128x128xf32>
    %16 = tpu.matmul %14, %15, %cst_19 {dimension_numbers = #tpu.dot_dimension_numbers<[1], [0], [0], [1], [0, 0, 1, 1], [], []>} : vector<128x128xbf16>, vector<128x128xbf16>, vector<128x128xf32> -> vector<128x128xf32>
    %17 = arith.addf %13, %16 : vector<128x128xf32>
    %c18 = arith.constant 18 : index
    %c0_20 = arith.constant 0 : index
    %18 = vector.load %arg9[%c18, %c0_20] : memref<192x128xbf16, #tpu.memory_space<vmem>>, vector<128x128xbf16>
    %c384 = arith.constant 384 : index
    %c0_21 = arith.constant 0 : index
    %19 = vector.load %arg3[%c384, %c0_21] : memref<1152x128xbf16, #tpu.memory_space<vmem>>, vector<128x128xbf16>
    %cst_22 = arith.constant dense<0.000000e+00> : vector<128x128xf32>
    %20 = tpu.matmul %18, %19, %cst_22 {dimension_numbers = #tpu.dot_dimension_numbers<[1], [0], [0], [1], [0, 0, 1, 1], [], []>} : vector<128x128xbf16>, vector<128x128xbf16>, vector<128x128xf32> -> vector<128x128xf32>
    %21 = arith.addf %17, %20 : vector<128x128xf32>
    %c19 = arith.constant 19 : index
    %c0_23 = arith.constant 0 : index
    %22 = vector.load %arg9[%c19, %c0_23] : memref<192x128xbf16, #tpu.memory_space<vmem>>, vector<128x128xbf16>
    %c512 = arith.constant 512 : index
    %c0_24 = arith.constant 0 : index
    %23 = vector.load %arg3[%c512, %c0_24] : memref<1152x128xbf16, #tpu.memory_space<vmem>>, vector<128x128xbf16>
    %cst_25 = arith.constant dense<0.000000e+00> : vector<128x128xf32>
    %24 = tpu.matmul %22, %23, %cst_25 {dimension_numbers = #tpu.dot_dimension_numbers<[1], [0], [0], [1], [0, 0, 1, 1], [], []>} : vector<128x128xbf16>, vector<128x128xbf16>, vector<128x128xf32> -> vector<128x128xf32>
    %25 = arith.addf %21, %24 : vector<128x128xf32>
    %c20 = arith.constant 20 : index
    %c0_26 = arith.constant 0 : index
    %26 = vector.load %arg9[%c20, %c0_26] : memref<192x128xbf16, #tpu.memory_space<vmem>>, vector<128x128xbf16>
    %c640 = arith.constant 640 : index
    %c0_27 = arith.constant 0 : index
    %27 = vector.load %arg3[%c640, %c0_27] : memref<1152x128xbf16, #tpu.memory_space<vmem>>, vector<128x128xbf16>
    %cst_28 = arith.constant dense<0.000000e+00> : vector<128x128xf32>
    %28 = tpu.matmul %26, %27, %cst_28 {dimension_numbers = #tpu.dot_dimension_numbers<[1], [0], [0], [1], [0, 0, 1, 1], [], []>} : vector<128x128xbf16>, vector<128x128xbf16>, vector<128x128xf32> -> vector<128x128xf32>
    %29 = arith.addf %25, %28 : vector<128x128xf32>
    %c36 = arith.constant 36 : index
    %c0_29 = arith.constant 0 : index
    %30 = vector.load %arg9[%c36, %c0_29] : memref<192x128xbf16, #tpu.memory_space<vmem>>, vector<128x128xbf16>
    %c768 = arith.constant 768 : index
    %c0_30 = arith.constant 0 : index
    %31 = vector.load %arg3[%c768, %c0_30] : memref<1152x128xbf16, #tpu.memory_space<vmem>>, vector<128x128xbf16>
    %cst_31 = arith.constant dense<0.000000e+00> : vector<128x128xf32>
    %32 = tpu.matmul %30, %31, %cst_31 {dimension_numbers = #tpu.dot_dimension_numbers<[1], [0], [0], [1], [0, 0, 1, 1], [], []>} : vector<128x128xbf16>, vector<128x128xbf16>, vector<128x128xf32> -> vector<128x128xf32>
    %33 = arith.addf %29, %32 : vector<128x128xf32>
    %c37 = arith.constant 37 : index
    %c0_32 = arith.constant 0 : index
    %34 = vector.load %arg9[%c37, %c0_32] : memref<192x128xbf16, #tpu.memory_space<vmem>>, vector<128x128xbf16>
    %c896 = arith.constant 896 : index
    %c0_33 = arith.constant 0 : index
    %35 = vector.load %arg3[%c896, %c0_33] : memref<1152x128xbf16, #tpu.memory_space<vmem>>, vector<128x128xbf16>
    %cst_34 = arith.constant dense<0.000000e+00> : vector<128x128xf32>
    %36 = tpu.matmul %34, %35, %cst_34 {dimension_numbers = #tpu.dot_dimension_numbers<[1], [0], [0], [1], [0, 0, 1, 1], [], []>} : vector<128x128xbf16>, vector<128x128xbf16>, vector<128x128xf32> -> vector<128x128xf32>
    %37 = arith.addf %33, %36 : vector<128x128xf32>
    %c38 = arith.constant 38 : index
    %c0_35 = arith.constant 0 : index
    %38 = vector.load %arg9[%c38, %c0_35] : memref<192x128xbf16, #tpu.memory_space<vmem>>, vector<128x128xbf16>
    %c1024 = arith.constant 1024 : index
    %c0_36 = arith.constant 0 : index
    %39 = vector.load %arg3[%c1024, %c0_36] : memref<1152x128xbf16, #tpu.memory_space<vmem>>, vector<128x128xbf16>
    %cst_37 = arith.constant dense<0.000000e+00> : vector<128x128xf32>
    %40 = tpu.matmul %38, %39, %cst_37 {dimension_numbers = #tpu.dot_dimension_numbers<[1], [0], [0], [1], [0, 0, 1, 1], [], []>} : vector<128x128xbf16>, vector<128x128xbf16>, vector<128x128xf32> -> vector<128x128xf32>
    %41 = arith.addf %37, %40 : vector<128x128xf32>
    %42 = arith.truncf %41 : vector<128x128xf32> to vector<128x128xbf16>
    %c0_38 = arith.constant 0 : index
    %c0_39 = arith.constant 0 : index
    %43 = vector.load %arg6[%c0_38, %c0_39] : memref<128x128xbf16, #tpu.memory_space<vmem>>, vector<128x128xbf16>
    tpu.vector_store %arg6[%c0_38, %c0_39], %42 {strides = array<i32>} : memref<128x128xbf16, #tpu.memory_space<vmem>>, vector<128x128xbf16>,
    %44 = vector.broadcast %4 : vector<128x1xf32> to vector<128x128xf32>
    %45 = arith.mulf %41, %44 : vector<128x128xf32>
    %cst_40 = arith.constant dense<0.000000e+00> : vector<128xf32>
    %46 = vector.multi_reduction <add>, %45, %cst_40 [0] : vector<128x128xf32> to vector<128xf32>
    %47 = vector.shape_cast %46 : vector<128xf32> to vector<1x128xf32>
    %48 = arith.mulf %41, %41 : vector<128x128xf32>
    %49 = vector.broadcast %4 : vector<128x1xf32> to vector<128x128xf32>
    %50 = arith.mulf %48, %49 : vector<128x128xf32>
    %cst_41 = arith.constant dense<0.000000e+00> : vector<128xf32>
    %51 = vector.multi_reduction <add>, %50, %cst_41 [0] : vector<128x128xf32> to vector<128xf32>
    %52 = vector.shape_cast %51 : vector<128xf32> to vector<1x128xf32>
    %c19_42 = arith.constant 19 : index
    %c0_43 = arith.constant 0 : index
    %53 = vector.load %arg9[%c19_42, %c0_43] : memref<192x128xbf16, #tpu.memory_space<vmem>>, vector<128x128xbf16>
    %c0_44 = arith.constant 0 : index
    %c0_45 = arith.constant 0 : index
    %54 = vector.load %arg4[%c0_44, %c0_45] : memref<128x128xbf16, #tpu.memory_space<vmem>>, vector<128x128xbf16>
    %cst_46 = arith.constant dense<0.000000e+00> : vector<128x128xf32>
    %55 = tpu.matmul %53, %54, %cst_46 {dimension_numbers = #tpu.dot_dimension_numbers<[1], [0], [0], [1], [0, 0, 1, 1], [], []>} : vector<128x128xbf16>, vector<128x128xbf16>, vector<128x128xf32> -> vector<128x128xf32>
    %56 = arith.truncf %55 : vector<128x128xf32> to vector<128x128xbf16>
    %c0_47 = arith.constant 0 : index
    %c0_48 = arith.constant 0 : index
    %57 = vector.load %arg7[%c0_47, %c0_48] : memref<128x128xbf16, #tpu.memory_space<vmem>>, vector<128x128xbf16>
    tpu.vector_store %arg7[%c0_47, %c0_48], %56 {strides = array<i32>} : memref<128x128xbf16, #tpu.memory_space<vmem>>, vector<128x128xbf16>,
    %58 = vector.broadcast %4 : vector<128x1xf32> to vector<128x128xf32>
    %59 = arith.mulf %55, %58 : vector<128x128xf32>
    %cst_49 = arith.constant dense<0.000000e+00> : vector<128xf32>
    %60 = vector.multi_reduction <add>, %59, %cst_49 [0] : vector<128x128xf32> to vector<128xf32>
    %61 = vector.shape_cast %60 : vector<128xf32> to vector<1x128xf32>
    %62 = arith.mulf %55, %55 : vector<128x128xf32>
    %63 = vector.broadcast %4 : vector<128x1xf32> to vector<128x128xf32>
    %64 = arith.mulf %62, %63 : vector<128x128xf32>
    %cst_50 = arith.constant dense<0.000000e+00> : vector<128xf32>
    %65 = vector.multi_reduction <add>, %64, %cst_50 [0] : vector<128x128xf32> to vector<128xf32>
    %66 = vector.shape_cast %65 : vector<128xf32> to vector<1x128xf32>
    %cst_51 = arith.constant 0.000000e+00 : f32
    %67 = vector.broadcast %cst_51 : f32 to vector<4x128xf32>
    %68 = tpu.concatenate %47, %52, %61, %66, %67 in 0 : vector<1x128xf32>, vector<1x128xf32>, vector<1x128xf32>, vector<1x128xf32>, vector<4x128xf32> -> vector<8x128xf32>
    %c0_52 = arith.constant 0 : index
    %c0_53 = arith.constant 0 : index
    %c0_54 = arith.constant 0 : index
    %69 = vector.load %arg8[%c0_52, %c0_53, %c0_54] : memref<1x8x128xf32, #tpu.memory_space<vmem>>, vector<1x8x128xf32>
    %70 = vector.shape_cast %69 : vector<1x8x128xf32> to vector<8x128xf32>
    %71 = vector.shape_cast %68 : vector<8x128xf32> to vector<1x8x128xf32>
    tpu.vector_store %arg8[%c0_52, %c0_53, %c0_54], %71 {strides = array<i32>} : memref<1x8x128xf32, #tpu.memory_space<vmem>>, vector<1x8x128xf32>,
    return
  }
  func.func @transform_0(%arg0: i32) -> (i32, i32) {
    %c0_i32 = arith.constant 0 : i32
    %c0_i32_0 = arith.constant 0 : i32
    return %arg0, %c0_i32 : i32, i32
  }
  func.func @transform_1(%arg0: i32) -> (i32, i32) {
    %c1_i32 = arith.constant 1 : i32
    %0 = arith.addi %arg0, %c1_i32 : i32
    %c2_i32 = arith.constant 2 : i32
    %1 = arith.muli %0, %c2_i32 : i32
    %c0_i32 = arith.constant 0 : i32
    %c0_i32_0 = arith.constant 0 : i32
    return %1, %c0_i32 : i32, i32
  }
  func.func @transform_2(%arg0: i32) -> (i32, i32) {
    %c0_i32 = arith.constant 0 : i32
    %c0_i32_0 = arith.constant 0 : i32
    %c0_i32_1 = arith.constant 0 : i32
    return %c0_i32, %c0_i32_0 : i32, i32
  }
  func.func @transform_3(%arg0: i32) -> (i32, i32) {
    %c0_i32 = arith.constant 0 : i32
    %c0_i32_0 = arith.constant 0 : i32
    %c0_i32_1 = arith.constant 0 : i32
    return %c0_i32, %c0_i32_0 : i32, i32
  }
  func.func @transform_4(%arg0: i32) -> (i32, i32) {
    %c0_i32 = arith.constant 0 : i32
    %c0_i32_0 = arith.constant 0 : i32
    return %arg0, %c0_i32 : i32, i32
  }
  func.func @transform_5(%arg0: i32) -> (i32, i32) {
    %c0_i32 = arith.constant 0 : i32
    %c0_i32_0 = arith.constant 0 : i32
    return %arg0, %c0_i32 : i32, i32
  }
  func.func @transform_6(%arg0: i32) -> (i32, i32) {
    %c0_i32 = arith.constant 0 : i32
    %c0_i32_0 = arith.constant 0 : i32
    return %arg0, %c0_i32 : i32, i32
  }
  func.func @transform_7(%arg0: i32) -> (i32, i32, i32) {
    %c0_i32 = arith.constant 0 : i32
    %c0_i32_0 = arith.constant 0 : i32
    %c0_i32_1 = arith.constant 0 : i32
    return %arg0, %c0_i32, %c0_i32_0 : i32, i32, i32
  }
}

module attributes {stable_mosaic.version = 11 : i64} {
  func.func @_conv2_kernel(%arg0: i32, %arg1: memref<128x128xbf16, #tpu.memory_space<vmem>>, %arg2: memref<64x128xbf16, #tpu.memory_space<vmem>>, %arg3: memref<128x1xf32, #tpu.memory_space<vmem>>, %arg4: memref<64x1xf32, #tpu.memory_space<vmem>>, %arg5: memref<4x128xf32, #tpu.memory_space<vmem>>, %arg6: memref<1152x128xbf16, #tpu.memory_space<vmem>>, %arg7: memref<128x1xf32, #tpu.memory_space<vmem>>, %arg8: memref<128x128xf32, #tpu.memory_space<vmem>>, %arg9: memref<1x8x128xf32, #tpu.memory_space<vmem>>, %arg10: memref<192x128xbf16, #tpu.memory_space<vmem>>) attributes {dimension_semantics = [#tpu.dimension_semantics<parallel>], iteration_bounds = array<i64: 2>, scalar_prefetch = 0 : i64, scratch_operands = 1 : i64, tpu.core_type = #tpu.core_type<tc>, window_params = [{transform_indices = @transform_0, window_bounds = array<i64: 128, 128>}, {transform_indices = @transform_1, window_bounds = array<i64: 64, 128>}, {transform_indices = @transform_2, window_bounds = array<i64: 128, 1>}, {transform_indices = @transform_3, window_bounds = array<i64: 64, 1>}, {pipeline_mode = #tpu.pipeline_mode<synchronous>, transform_indices = @transform_4, window_bounds = array<i64: 4, 128>}, {pipeline_mode = #tpu.pipeline_mode<synchronous>, transform_indices = @transform_5, window_bounds = array<i64: 1152, 128>}, {transform_indices = @transform_6, window_bounds = array<i64: 128, 1>}, {transform_indices = @transform_7, window_bounds = array<i64: 128, 128>}, {transform_indices = @transform_8, window_bounds = array<i64: 1, 8, 128>}]} {
    %c0 = arith.constant 0 : index
    %c0_0 = arith.constant 0 : index
    %0 = vector.load %arg5[%c0, %c0_0] : memref<4x128xf32, #tpu.memory_space<vmem>>, vector<4x128xf32>
    %1 = vector.extract_strided_slice %0 {offsets = [0, 0], sizes = [1, 128], strides = [1, 1]} : vector<4x128xf32> to vector<1x128xf32>
    %2 = vector.extract_strided_slice %0 {offsets = [1, 0], sizes = [1, 128], strides = [1, 1]} : vector<4x128xf32> to vector<1x128xf32>
    %3 = vector.extract_strided_slice %0 {offsets = [2, 0], sizes = [1, 128], strides = [1, 1]} : vector<4x128xf32> to vector<1x128xf32>
    %4 = arith.mulf %2, %3 : vector<1x128xf32>
    %5 = vector.extract_strided_slice %0 {offsets = [3, 0], sizes = [1, 128], strides = [1, 1]} : vector<4x128xf32> to vector<1x128xf32>
    %c0_1 = arith.constant 0 : index
    %c0_2 = arith.constant 0 : index
    %6 = vector.load %arg1[%c0_1, %c0_2] : memref<128x128xbf16, #tpu.memory_space<vmem>>, vector<64x128xbf16>
    %7 = arith.extf %6 : vector<64x128xbf16> to vector<64x128xf32>
    %c0_3 = arith.constant 0 : index
    %c0_4 = arith.constant 0 : index
    %8 = vector.load %arg3[%c0_3, %c0_4] : memref<128x1xf32, #tpu.memory_space<vmem>>, vector<64x1xf32>
    %9 = vector.broadcast %1 : vector<1x128xf32> to vector<64x128xf32>
    %10 = arith.subf %7, %9 : vector<64x128xf32>
    %11 = vector.broadcast %4 : vector<1x128xf32> to vector<64x128xf32>
    %12 = arith.mulf %10, %11 : vector<64x128xf32>
    %13 = vector.broadcast %5 : vector<1x128xf32> to vector<64x128xf32>
    %14 = arith.addf %12, %13 : vector<64x128xf32>
    %cst = arith.constant 0.000000e+00 : f32
    %15 = vector.broadcast %cst : f32 to vector<64x128xf32>
    %16 = arith.maximumf %14, %15 : vector<64x128xf32>
    %17 = vector.broadcast %8 : vector<64x1xf32> to vector<64x128xf32>
    %18 = arith.mulf %16, %17 : vector<64x128xf32>
    %19 = arith.truncf %18 : vector<64x128xf32> to vector<64x128xbf16>
    %c0_5 = arith.constant 0 : index
    %c0_6 = arith.constant 0 : index
    %20 = vector.load %arg10[%c0_5, %c0_6] : memref<192x128xbf16, #tpu.memory_space<vmem>>, vector<64x128xbf16>
    tpu.vector_store %arg10[%c0_5, %c0_6], %19 {strides = array<i32>} : memref<192x128xbf16, #tpu.memory_space<vmem>>, vector<64x128xbf16>,
    %c64 = arith.constant 64 : index
    %c0_7 = arith.constant 0 : index
    %21 = vector.load %arg1[%c64, %c0_7] : memref<128x128xbf16, #tpu.memory_space<vmem>>, vector<64x128xbf16>
    %22 = arith.extf %21 : vector<64x128xbf16> to vector<64x128xf32>
    %c64_8 = arith.constant 64 : index
    %c0_9 = arith.constant 0 : index
    %23 = vector.load %arg3[%c64_8, %c0_9] : memref<128x1xf32, #tpu.memory_space<vmem>>, vector<64x1xf32>
    %24 = vector.broadcast %1 : vector<1x128xf32> to vector<64x128xf32>
    %25 = arith.subf %22, %24 : vector<64x128xf32>
    %26 = vector.broadcast %4 : vector<1x128xf32> to vector<64x128xf32>
    %27 = arith.mulf %25, %26 : vector<64x128xf32>
    %28 = vector.broadcast %5 : vector<1x128xf32> to vector<64x128xf32>
    %29 = arith.addf %27, %28 : vector<64x128xf32>
    %cst_10 = arith.constant 0.000000e+00 : f32
    %30 = vector.broadcast %cst_10 : f32 to vector<64x128xf32>
    %31 = arith.maximumf %29, %30 : vector<64x128xf32>
    %32 = vector.broadcast %23 : vector<64x1xf32> to vector<64x128xf32>
    %33 = arith.mulf %31, %32 : vector<64x128xf32>
    %34 = arith.truncf %33 : vector<64x128xf32> to vector<64x128xbf16>
    %c64_11 = arith.constant 64 : index
    %c0_12 = arith.constant 0 : index
    %35 = vector.load %arg10[%c64_11, %c0_12] : memref<192x128xbf16, #tpu.memory_space<vmem>>, vector<64x128xbf16>
    tpu.vector_store %arg10[%c64_11, %c0_12], %34 {strides = array<i32>} : memref<192x128xbf16, #tpu.memory_space<vmem>>, vector<64x128xbf16>,
    %c0_13 = arith.constant 0 : index
    %c0_14 = arith.constant 0 : index
    %36 = vector.load %arg2[%c0_13, %c0_14] : memref<64x128xbf16, #tpu.memory_space<vmem>>, vector<64x128xbf16>
    %37 = arith.extf %36 : vector<64x128xbf16> to vector<64x128xf32>
    %c0_15 = arith.constant 0 : index
    %c0_16 = arith.constant 0 : index
    %38 = vector.load %arg4[%c0_15, %c0_16] : memref<64x1xf32, #tpu.memory_space<vmem>>, vector<64x1xf32>
    %39 = vector.broadcast %1 : vector<1x128xf32> to vector<64x128xf32>
    %40 = arith.subf %37, %39 : vector<64x128xf32>
    %41 = vector.broadcast %4 : vector<1x128xf32> to vector<64x128xf32>
    %42 = arith.mulf %40, %41 : vector<64x128xf32>
    %43 = vector.broadcast %5 : vector<1x128xf32> to vector<64x128xf32>
    %44 = arith.addf %42, %43 : vector<64x128xf32>
    %cst_17 = arith.constant 0.000000e+00 : f32
    %45 = vector.broadcast %cst_17 : f32 to vector<64x128xf32>
    %46 = arith.maximumf %44, %45 : vector<64x128xf32>
    %47 = vector.broadcast %38 : vector<64x1xf32> to vector<64x128xf32>
    %48 = arith.mulf %46, %47 : vector<64x128xf32>
    %49 = arith.truncf %48 : vector<64x128xf32> to vector<64x128xbf16>
    %c128 = arith.constant 128 : index
    %c0_18 = arith.constant 0 : index
    %50 = vector.load %arg10[%c128, %c0_18] : memref<192x128xbf16, #tpu.memory_space<vmem>>, vector<64x128xbf16>
    tpu.vector_store %arg10[%c128, %c0_18], %49 {strides = array<i32>} : memref<192x128xbf16, #tpu.memory_space<vmem>>, vector<64x128xbf16>,
    %cst_19 = arith.constant 0.000000e+00 : f32
    %51 = vector.broadcast %cst_19 : f32 to vector<128x128xf32>
    %c0_20 = arith.constant 0 : index
    %c0_21 = arith.constant 0 : index
    %52 = vector.load %arg10[%c0_20, %c0_21] : memref<192x128xbf16, #tpu.memory_space<vmem>>, vector<128x128xbf16>
    %c0_22 = arith.constant 0 : index
    %c0_23 = arith.constant 0 : index
    %53 = vector.load %arg6[%c0_22, %c0_23] : memref<1152x128xbf16, #tpu.memory_space<vmem>>, vector<128x128xbf16>
    %cst_24 = arith.constant dense<0.000000e+00> : vector<128x128xf32>
    %54 = tpu.matmul %52, %53, %cst_24 {dimension_numbers = #tpu.dot_dimension_numbers<[1], [0], [0], [1], [0, 0, 1, 1], [], []>} : vector<128x128xbf16>, vector<128x128xbf16>, vector<128x128xf32> -> vector<128x128xf32>
    %55 = arith.addf %51, %54 : vector<128x128xf32>
    %c1 = arith.constant 1 : index
    %c0_25 = arith.constant 0 : index
    %56 = vector.load %arg10[%c1, %c0_25] : memref<192x128xbf16, #tpu.memory_space<vmem>>, vector<128x128xbf16>
    %c128_26 = arith.constant 128 : index
    %c0_27 = arith.constant 0 : index
    %57 = vector.load %arg6[%c128_26, %c0_27] : memref<1152x128xbf16, #tpu.memory_space<vmem>>, vector<128x128xbf16>
    %cst_28 = arith.constant dense<0.000000e+00> : vector<128x128xf32>
    %58 = tpu.matmul %56, %57, %cst_28 {dimension_numbers = #tpu.dot_dimension_numbers<[1], [0], [0], [1], [0, 0, 1, 1], [], []>} : vector<128x128xbf16>, vector<128x128xbf16>, vector<128x128xf32> -> vector<128x128xf32>
    %59 = arith.addf %55, %58 : vector<128x128xf32>
    %c2 = arith.constant 2 : index
    %c0_29 = arith.constant 0 : index
    %60 = vector.load %arg10[%c2, %c0_29] : memref<192x128xbf16, #tpu.memory_space<vmem>>, vector<128x128xbf16>
    %c256 = arith.constant 256 : index
    %c0_30 = arith.constant 0 : index
    %61 = vector.load %arg6[%c256, %c0_30] : memref<1152x128xbf16, #tpu.memory_space<vmem>>, vector<128x128xbf16>
    %cst_31 = arith.constant dense<0.000000e+00> : vector<128x128xf32>
    %62 = tpu.matmul %60, %61, %cst_31 {dimension_numbers = #tpu.dot_dimension_numbers<[1], [0], [0], [1], [0, 0, 1, 1], [], []>} : vector<128x128xbf16>, vector<128x128xbf16>, vector<128x128xf32> -> vector<128x128xf32>
    %63 = arith.addf %59, %62 : vector<128x128xf32>
    %c10 = arith.constant 10 : index
    %c0_32 = arith.constant 0 : index
    %64 = vector.load %arg10[%c10, %c0_32] : memref<192x128xbf16, #tpu.memory_space<vmem>>, vector<128x128xbf16>
    %c384 = arith.constant 384 : index
    %c0_33 = arith.constant 0 : index
    %65 = vector.load %arg6[%c384, %c0_33] : memref<1152x128xbf16, #tpu.memory_space<vmem>>, vector<128x128xbf16>
    %cst_34 = arith.constant dense<0.000000e+00> : vector<128x128xf32>
    %66 = tpu.matmul %64, %65, %cst_34 {dimension_numbers = #tpu.dot_dimension_numbers<[1], [0], [0], [1], [0, 0, 1, 1], [], []>} : vector<128x128xbf16>, vector<128x128xbf16>, vector<128x128xf32> -> vector<128x128xf32>
    %67 = arith.addf %63, %66 : vector<128x128xf32>
    %c11 = arith.constant 11 : index
    %c0_35 = arith.constant 0 : index
    %68 = vector.load %arg10[%c11, %c0_35] : memref<192x128xbf16, #tpu.memory_space<vmem>>, vector<128x128xbf16>
    %c512 = arith.constant 512 : index
    %c0_36 = arith.constant 0 : index
    %69 = vector.load %arg6[%c512, %c0_36] : memref<1152x128xbf16, #tpu.memory_space<vmem>>, vector<128x128xbf16>
    %cst_37 = arith.constant dense<0.000000e+00> : vector<128x128xf32>
    %70 = tpu.matmul %68, %69, %cst_37 {dimension_numbers = #tpu.dot_dimension_numbers<[1], [0], [0], [1], [0, 0, 1, 1], [], []>} : vector<128x128xbf16>, vector<128x128xbf16>, vector<128x128xf32> -> vector<128x128xf32>
    %71 = arith.addf %67, %70 : vector<128x128xf32>
    %c12 = arith.constant 12 : index
    %c0_38 = arith.constant 0 : index
    %72 = vector.load %arg10[%c12, %c0_38] : memref<192x128xbf16, #tpu.memory_space<vmem>>, vector<128x128xbf16>
    %c640 = arith.constant 640 : index
    %c0_39 = arith.constant 0 : index
    %73 = vector.load %arg6[%c640, %c0_39] : memref<1152x128xbf16, #tpu.memory_space<vmem>>, vector<128x128xbf16>
    %cst_40 = arith.constant dense<0.000000e+00> : vector<128x128xf32>
    %74 = tpu.matmul %72, %73, %cst_40 {dimension_numbers = #tpu.dot_dimension_numbers<[1], [0], [0], [1], [0, 0, 1, 1], [], []>} : vector<128x128xbf16>, vector<128x128xbf16>, vector<128x128xf32> -> vector<128x128xf32>
    %75 = arith.addf %71, %74 : vector<128x128xf32>
    %c20 = arith.constant 20 : index
    %c0_41 = arith.constant 0 : index
    %76 = vector.load %arg10[%c20, %c0_41] : memref<192x128xbf16, #tpu.memory_space<vmem>>, vector<128x128xbf16>
    %c768 = arith.constant 768 : index
    %c0_42 = arith.constant 0 : index
    %77 = vector.load %arg6[%c768, %c0_42] : memref<1152x128xbf16, #tpu.memory_space<vmem>>, vector<128x128xbf16>
    %cst_43 = arith.constant dense<0.000000e+00> : vector<128x128xf32>
    %78 = tpu.matmul %76, %77, %cst_43 {dimension_numbers = #tpu.dot_dimension_numbers<[1], [0], [0], [1], [0, 0, 1, 1], [], []>} : vector<128x128xbf16>, vector<128x128xbf16>, vector<128x128xf32> -> vector<128x128xf32>
    %79 = arith.addf %75, %78 : vector<128x128xf32>
    %c21 = arith.constant 21 : index
    %c0_44 = arith.constant 0 : index
    %80 = vector.load %arg10[%c21, %c0_44] : memref<192x128xbf16, #tpu.memory_space<vmem>>, vector<128x128xbf16>
    %c896 = arith.constant 896 : index
    %c0_45 = arith.constant 0 : index
    %81 = vector.load %arg6[%c896, %c0_45] : memref<1152x128xbf16, #tpu.memory_space<vmem>>, vector<128x128xbf16>
    %cst_46 = arith.constant dense<0.000000e+00> : vector<128x128xf32>
    %82 = tpu.matmul %80, %81, %cst_46 {dimension_numbers = #tpu.dot_dimension_numbers<[1], [0], [0], [1], [0, 0, 1, 1], [], []>} : vector<128x128xbf16>, vector<128x128xbf16>, vector<128x128xf32> -> vector<128x128xf32>
    %83 = arith.addf %79, %82 : vector<128x128xf32>
    %c22 = arith.constant 22 : index
    %c0_47 = arith.constant 0 : index
    %84 = vector.load %arg10[%c22, %c0_47] : memref<192x128xbf16, #tpu.memory_space<vmem>>, vector<128x128xbf16>
    %c1024 = arith.constant 1024 : index
    %c0_48 = arith.constant 0 : index
    %85 = vector.load %arg6[%c1024, %c0_48] : memref<1152x128xbf16, #tpu.memory_space<vmem>>, vector<128x128xbf16>
    %cst_49 = arith.constant dense<0.000000e+00> : vector<128x128xf32>
    %86 = tpu.matmul %84, %85, %cst_49 {dimension_numbers = #tpu.dot_dimension_numbers<[1], [0], [0], [1], [0, 0, 1, 1], [], []>} : vector<128x128xbf16>, vector<128x128xbf16>, vector<128x128xf32> -> vector<128x128xf32>
    %87 = arith.addf %83, %86 : vector<128x128xf32>
    %c0_50 = arith.constant 0 : index
    %c0_51 = arith.constant 0 : index
    %88 = vector.load %arg8[%c0_50, %c0_51] : memref<128x128xf32, #tpu.memory_space<vmem>>, vector<128x128xf32>
    tpu.vector_store %arg8[%c0_50, %c0_51], %87 {strides = array<i32>} : memref<128x128xf32, #tpu.memory_space<vmem>>, vector<128x128xf32>,
    %c0_52 = arith.constant 0 : index
    %c0_53 = arith.constant 0 : index
    %89 = vector.load %arg7[%c0_52, %c0_53] : memref<128x1xf32, #tpu.memory_space<vmem>>, vector<128x1xf32>
    %90 = vector.broadcast %89 : vector<128x1xf32> to vector<128x128xf32>
    %91 = arith.mulf %87, %90 : vector<128x128xf32>
    %cst_54 = arith.constant dense<0.000000e+00> : vector<128xf32>
    %92 = vector.multi_reduction <add>, %91, %cst_54 [0] : vector<128x128xf32> to vector<128xf32>
    %93 = vector.shape_cast %92 : vector<128xf32> to vector<1x128xf32>
    %94 = arith.mulf %87, %87 : vector<128x128xf32>
    %95 = vector.broadcast %89 : vector<128x1xf32> to vector<128x128xf32>
    %96 = arith.mulf %94, %95 : vector<128x128xf32>
    %cst_55 = arith.constant dense<0.000000e+00> : vector<128xf32>
    %97 = vector.multi_reduction <add>, %96, %cst_55 [0] : vector<128x128xf32> to vector<128xf32>
    %98 = vector.shape_cast %97 : vector<128xf32> to vector<1x128xf32>
    %cst_56 = arith.constant 0.000000e+00 : f32
    %99 = vector.broadcast %cst_56 : f32 to vector<6x128xf32>
    %100 = tpu.concatenate %93, %98, %99 in 0 : vector<1x128xf32>, vector<1x128xf32>, vector<6x128xf32> -> vector<8x128xf32>
    %c0_57 = arith.constant 0 : index
    %c0_58 = arith.constant 0 : index
    %c0_59 = arith.constant 0 : index
    %101 = vector.load %arg9[%c0_57, %c0_58, %c0_59] : memref<1x8x128xf32, #tpu.memory_space<vmem>>, vector<1x8x128xf32>
    %102 = vector.shape_cast %101 : vector<1x8x128xf32> to vector<8x128xf32>
    %103 = vector.shape_cast %100 : vector<8x128xf32> to vector<1x8x128xf32>
    tpu.vector_store %arg9[%c0_57, %c0_58, %c0_59], %103 {strides = array<i32>} : memref<1x8x128xf32, #tpu.memory_space<vmem>>, vector<1x8x128xf32>,
    return
  }
  func.func @transform_0(%arg0: i32) -> (i32, i32) {
    %c0_i32 = arith.constant 0 : i32
    %c0_i32_0 = arith.constant 0 : i32
    return %arg0, %c0_i32 : i32, i32
  }
  func.func @transform_1(%arg0: i32) -> (i32, i32) {
    %c1_i32 = arith.constant 1 : i32
    %0 = arith.addi %arg0, %c1_i32 : i32
    %c2_i32 = arith.constant 2 : i32
    %1 = arith.muli %0, %c2_i32 : i32
    %c0_i32 = arith.constant 0 : i32
    %c0_i32_0 = arith.constant 0 : i32
    return %1, %c0_i32 : i32, i32
  }
  func.func @transform_2(%arg0: i32) -> (i32, i32) {
    %c0_i32 = arith.constant 0 : i32
    %c0_i32_0 = arith.constant 0 : i32
    return %arg0, %c0_i32 : i32, i32
  }
  func.func @transform_3(%arg0: i32) -> (i32, i32) {
    %c1_i32 = arith.constant 1 : i32
    %0 = arith.addi %arg0, %c1_i32 : i32
    %c2_i32 = arith.constant 2 : i32
    %1 = arith.muli %0, %c2_i32 : i32
    %c0_i32 = arith.constant 0 : i32
    %c0_i32_0 = arith.constant 0 : i32
    return %1, %c0_i32 : i32, i32
  }
  func.func @transform_4(%arg0: i32) -> (i32, i32) {
    %c0_i32 = arith.constant 0 : i32
    %c0_i32_0 = arith.constant 0 : i32
    %c0_i32_1 = arith.constant 0 : i32
    return %c0_i32, %c0_i32_0 : i32, i32
  }
  func.func @transform_5(%arg0: i32) -> (i32, i32) {
    %c0_i32 = arith.constant 0 : i32
    %c0_i32_0 = arith.constant 0 : i32
    %c0_i32_1 = arith.constant 0 : i32
    return %c0_i32, %c0_i32_0 : i32, i32
  }
  func.func @transform_6(%arg0: i32) -> (i32, i32) {
    %c0_i32 = arith.constant 0 : i32
    %c0_i32_0 = arith.constant 0 : i32
    return %arg0, %c0_i32 : i32, i32
  }
  func.func @transform_7(%arg0: i32) -> (i32, i32) {
    %c0_i32 = arith.constant 0 : i32
    %c0_i32_0 = arith.constant 0 : i32
    return %arg0, %c0_i32 : i32, i32
  }
  func.func @transform_8(%arg0: i32) -> (i32, i32, i32) {
    %c0_i32 = arith.constant 0 : i32
    %c0_i32_0 = arith.constant 0 : i32
    %c0_i32_1 = arith.constant 0 : i32
    return %arg0, %c0_i32, %c0_i32_0 : i32, i32, i32
  }
}

module attributes {stable_mosaic.version = 11 : i64} {
  func.func @_final_proj_kernel(%arg0: i32, %arg1: memref<128x128xf32, #tpu.memory_space<vmem>>, %arg2: memref<128x128xbf16, #tpu.memory_space<vmem>>, %arg3: memref<4x128xf32, #tpu.memory_space<vmem>>, %arg4: memref<4x128xf32, #tpu.memory_space<vmem>>, %arg5: memref<128x128xf32, #tpu.memory_space<vmem>>) attributes {dimension_semantics = [#tpu.dimension_semantics<parallel>], iteration_bounds = array<i64: 2>, scalar_prefetch = 0 : i64, scratch_operands = 0 : i64, tpu.core_type = #tpu.core_type<tc>, window_params = [{transform_indices = @transform_0, window_bounds = array<i64: 128, 128>}, {transform_indices = @transform_1, window_bounds = array<i64: 128, 128>}, {pipeline_mode = #tpu.pipeline_mode<synchronous>, transform_indices = @transform_2, window_bounds = array<i64: 4, 128>}, {pipeline_mode = #tpu.pipeline_mode<synchronous>, transform_indices = @transform_3, window_bounds = array<i64: 4, 128>}, {transform_indices = @transform_4, window_bounds = array<i64: 128, 128>}]} {
    %c0 = arith.constant 0 : index
    %c0_0 = arith.constant 0 : index
    %0 = vector.load %arg3[%c0, %c0_0] : memref<4x128xf32, #tpu.memory_space<vmem>>, vector<4x128xf32>
    %c0_1 = arith.constant 0 : index
    %c0_2 = arith.constant 0 : index
    %1 = vector.load %arg4[%c0_1, %c0_2] : memref<4x128xf32, #tpu.memory_space<vmem>>, vector<4x128xf32>
    %c0_3 = arith.constant 0 : index
    %c0_4 = arith.constant 0 : index
    %2 = vector.load %arg1[%c0_3, %c0_4] : memref<128x128xf32, #tpu.memory_space<vmem>>, vector<128x128xf32>
    %3 = vector.extract_strided_slice %0 {offsets = [0, 0], sizes = [1, 128], strides = [1, 1]} : vector<4x128xf32> to vector<1x128xf32>
    %4 = vector.broadcast %3 : vector<1x128xf32> to vector<128x128xf32>
    %5 = arith.subf %2, %4 : vector<128x128xf32>
    %6 = vector.extract_strided_slice %0 {offsets = [1, 0], sizes = [1, 128], strides = [1, 1]} : vector<4x128xf32> to vector<1x128xf32>
    %7 = vector.extract_strided_slice %0 {offsets = [2, 0], sizes = [1, 128], strides = [1, 1]} : vector<4x128xf32> to vector<1x128xf32>
    %8 = arith.mulf %6, %7 : vector<1x128xf32>
    %9 = vector.broadcast %8 : vector<1x128xf32> to vector<128x128xf32>
    %10 = arith.mulf %5, %9 : vector<128x128xf32>
    %11 = vector.extract_strided_slice %0 {offsets = [3, 0], sizes = [1, 128], strides = [1, 1]} : vector<4x128xf32> to vector<1x128xf32>
    %12 = vector.broadcast %11 : vector<1x128xf32> to vector<128x128xf32>
    %13 = arith.addf %10, %12 : vector<128x128xf32>
    %c0_5 = arith.constant 0 : index
    %c0_6 = arith.constant 0 : index
    %14 = vector.load %arg2[%c0_5, %c0_6] : memref<128x128xbf16, #tpu.memory_space<vmem>>, vector<128x128xbf16>
    %15 = arith.extf %14 : vector<128x128xbf16> to vector<128x128xf32>
    %16 = vector.extract_strided_slice %1 {offsets = [0, 0], sizes = [1, 128], strides = [1, 1]} : vector<4x128xf32> to vector<1x128xf32>
    %17 = vector.broadcast %16 : vector<1x128xf32> to vector<128x128xf32>
    %18 = arith.subf %15, %17 : vector<128x128xf32>
    %19 = vector.extract_strided_slice %1 {offsets = [1, 0], sizes = [1, 128], strides = [1, 1]} : vector<4x128xf32> to vector<1x128xf32>
    %20 = vector.extract_strided_slice %1 {offsets = [2, 0], sizes = [1, 128], strides = [1, 1]} : vector<4x128xf32> to vector<1x128xf32>
    %21 = arith.mulf %19, %20 : vector<1x128xf32>
    %22 = vector.broadcast %21 : vector<1x128xf32> to vector<128x128xf32>
    %23 = arith.mulf %18, %22 : vector<128x128xf32>
    %24 = vector.extract_strided_slice %1 {offsets = [3, 0], sizes = [1, 128], strides = [1, 1]} : vector<4x128xf32> to vector<1x128xf32>
    %25 = vector.broadcast %24 : vector<1x128xf32> to vector<128x128xf32>
    %26 = arith.addf %23, %25 : vector<128x128xf32>
    %27 = arith.addf %13, %26 : vector<128x128xf32>
    %cst = arith.constant 0.000000e+00 : f32
    %28 = vector.broadcast %cst : f32 to vector<128x128xf32>
    %29 = arith.maximumf %27, %28 : vector<128x128xf32>
    %c0_7 = arith.constant 0 : index
    %c0_8 = arith.constant 0 : index
    %30 = vector.load %arg5[%c0_7, %c0_8] : memref<128x128xf32, #tpu.memory_space<vmem>>, vector<128x128xf32>
    tpu.vector_store %arg5[%c0_7, %c0_8], %29 {strides = array<i32>} : memref<128x128xf32, #tpu.memory_space<vmem>>, vector<128x128xf32>,
    return
  }
  func.func @transform_0(%arg0: i32) -> (i32, i32) {
    %c0_i32 = arith.constant 0 : i32
    %c0_i32_0 = arith.constant 0 : i32
    return %arg0, %c0_i32 : i32, i32
  }
  func.func @transform_1(%arg0: i32) -> (i32, i32) {
    %c0_i32 = arith.constant 0 : i32
    %c0_i32_0 = arith.constant 0 : i32
    return %arg0, %c0_i32 : i32, i32
  }
  func.func @transform_2(%arg0: i32) -> (i32, i32) {
    %c0_i32 = arith.constant 0 : i32
    %c0_i32_0 = arith.constant 0 : i32
    %c0_i32_1 = arith.constant 0 : i32
    return %c0_i32, %c0_i32_0 : i32, i32
  }
  func.func @transform_3(%arg0: i32) -> (i32, i32) {
    %c0_i32 = arith.constant 0 : i32
    %c0_i32_0 = arith.constant 0 : i32
    %c0_i32_1 = arith.constant 0 : i32
    return %c0_i32, %c0_i32_0 : i32, i32
  }
  func.func @transform_4(%arg0: i32) -> (i32, i32) {
    %c0_i32 = arith.constant 0 : i32
    %c0_i32_0 = arith.constant 0 : i32
    return %arg0, %c0_i32 : i32, i32
  }
}

</mosaic_0001>

<llo_original>
// kernel: baseline_arch_forward.5
$region0: #{baseline_arch_forward.5}
  #allocation0 [shape = 'u32[]', space=smem, size = 0x4, offset = 0x4, fixed_abs, tag = 'smem constant byte address 0x4 - core index']
  #allocation1 [shape = 'u32[144,128]{1,0:T(1,128)}', space=vmem, size = 0x12000, scoped, tag = 'internal scratch']
  %s0 = inlined_call_operand.vmem [shape: f32[256,128], index: 0, kind: input, shape index: {}]
  %s1 = inlined_call_operand.vmem [shape: bf16[256,128], index: 1, kind: input, shape index: {}]
  %s2 = inlined_call_operand.vmem [shape: f32[4,128], index: 2, kind: input, shape index: {}]
  %s3 = inlined_call_operand.vmem [shape: f32[4,128], index: 3, kind: input, shape index: {}]
  %s4 = inlined_call_operand.vmem [shape: f32[256,128], index: 4, kind: output, shape index: {}]
  %s5 = sld [smem:[#allocation0]]
  $region49: #{baseline_arch_forward.5} parent=0
    _
  %s7 = ssub.s32 1, %s5
  %s8 = scalar_select 0, %s7, %s5
  loop: start=0, step=1, limit=4
  $region2: #{baseline_arch_forward.5} parent=0 // loop_pre_header
    _
  $region3: #{baseline_arch_forward.5} parent=0 // loop_header
    %s10 = sphi 0, %s14
    %p11 = scmp.ge.s32.totalorder %s10, 4
    %s20 = sphi 0, %s22
    %s23 = sphi 0, %s20
    %s24 = sphi 0, %s23
    %s40 = sphi 0, %s24
    %s46 = sphi 0, %s48
    %s49 = sphi 0, %s46
    %s50 = sphi 0, %s49
    %s66 = sphi 0, %s50
    %s70 = sphi 0, %s70
    %s72 = sphi 0, %s70
    %s73 = sphi 0, %s72
    %s87 = sphi 0, %s73
    %s91 = sphi 0, %s91
    %s93 = sphi 0, %s91
    %s94 = sphi 0, %s93
    %s108 = sphi 0, %s94
    %s114 = sphi 0, %s116
    %s117 = sphi 0, %s114
    %s118 = sphi 0, %s117
    %s134 = sphi 0, %s118
  $region4: #{baseline_arch_forward.5} parent=0 // loop_header_branch
    %13 = sbr.rel (%p11) target = $region8
  $region5: #{baseline_arch_forward.5} parent=0 // loop_body
    %s15 = ssub.s32 %s10, 1
    %s16 = ssub.s32 %s10, 2
    %s17 = sadd.s32 %s10, 1
    %s18 = ssub.s32 %s10, %s17
    %p19 = scmp.eq.s32.totalorder %s18, 0
    %s21 = sadd.s32 %s20, 1
    %s22 = scalar_select %p19, %s20, %s21
    %p25 = pneg %p19
    %p26 = scmp.eq.s32.totalorder %s10, 1
    %p27 = por %p25, %p26
    %p28 = scmp.ne.s32.totalorder %s20, %s23
    %p29 = scmp.eq.s32.totalorder %s10, 0
    %p30 = por %p28, %p29
    %p31 = scmp.ne.s32.totalorder %s20, %s23
    %p32 = scmp.eq.s32.totalorder %s15, 1
    %p33 = por %p31, %p32
    %p34 = scmp.ne.s32.totalorder %s23, %s24
    %p35 = scmp.eq.s32.totalorder %s15, 0
    %p36 = por %p34, %p35
    %p37 = scmp.ne.s32.totalorder %s23, %s24
    %p38 = scmp.eq.s32.totalorder %s16, 1
    %p39 = por %p37, %p38
    %p41 = scmp.ne.s32.totalorder %s24, %s40
    %p42 = scmp.eq.s32.totalorder %s16, 0
    %p43 = por %p41, %p42
    %s44 = ssub.s32 %s10, %s17
    %p45 = scmp.eq.s32.totalorder %s44, 0
    %s47 = sadd.s32 %s46, 1
    %s48 = scalar_select %p45, %s46, %s47
    %p51 = pneg %p45
    %p52 = scmp.eq.s32.totalorder %s10, 1
    %p53 = por %p51, %p52
    %p54 = scmp.ne.s32.totalorder %s46, %s49
    %p55 = scmp.eq.s32.totalorder %s10, 0
    %p56 = por %p54, %p55
    %p57 = scmp.ne.s32.totalorder %s46, %s49
    %p58 = scmp.eq.s32.totalorder %s15, 1
    %p59 = por %p57, %p58
    %p60 = scmp.ne.s32.totalorder %s49, %s50
    %p61 = scmp.eq.s32.totalorder %s15, 0
    %p62 = por %p60, %p61
    %p63 = scmp.ne.s32.totalorder %s49, %s50
    %p64 = scmp.eq.s32.totalorder %s16, 1
    %p65 = por %p63, %p64
    %p67 = scmp.ne.s32.totalorder %s50, %s66
    %p68 = scmp.eq.s32.totalorder %s16, 0
    %p69 = por %p67, %p68
    %s71 = sadd.s32 %s70, 1
    %p74 = scmp.eq.s32.totalorder %s10, 1
    %p75 = scmp.ne.s32.totalorder %s70, %s72
    %p76 = scmp.eq.s32.totalorder %s10, 0
    %p77 = por %p75, %p76
    %p78 = scmp.ne.s32.totalorder %s70, %s72
    %p79 = scmp.eq.s32.totalorder %s15, 1
    %p80 = por %p78, %p79
    %p81 = scmp.ne.s32.totalorder %s72, %s73
    %p82 = scmp.eq.s32.totalorder %s15, 0
    %p83 = por %p81, %p82
    %p84 = scmp.ne.s32.totalorder %s72, %s73
    %p85 = scmp.eq.s32.totalorder %s16, 1
    %p86 = por %p84, %p85
    %p88 = scmp.ne.s32.totalorder %s73, %s87
    %p89 = scmp.eq.s32.totalorder %s16, 0
    %p90 = por %p88, %p89
    %s92 = sadd.s32 %s91, 1
    %p95 = scmp.eq.s32.totalorder %s10, 1
    %p96 = scmp.ne.s32.totalorder %s91, %s93
    %p97 = scmp.eq.s32.totalorder %s10, 0
    %p98 = por %p96, %p97
    %p99 = scmp.ne.s32.totalorder %s91, %s93
    %p100 = scmp.eq.s32.totalorder %s15, 1
    %p101 = por %p99, %p100
    %p102 = scmp.ne.s32.totalorder %s93, %s94
    %p103 = scmp.eq.s32.totalorder %s15, 0
    %p104 = por %p102, %p103
    %p105 = scmp.ne.s32.totalorder %s93, %s94
    %p106 = scmp.eq.s32.totalorder %s16, 1
    %p107 = por %p105, %p106
    %p109 = scmp.ne.s32.totalorder %s94, %s108
    %p110 = scmp.eq.s32.totalorder %s16, 0
    %p111 = por %p109, %p110
    %s112 = ssub.s32 %s10, %s17
    %p113 = scmp.eq.s32.totalorder %s112, 0
    %s115 = sadd.s32 %s114, 1
    %s116 = scalar_select %p113, %s114, %s115
    %p119 = pneg %p113
    %p120 = scmp.eq.s32.totalorder %s10, 1
    %p121 = por %p119, %p120
    %p122 = scmp.ne.s32.totalorder %s114, %s117
    %p123 = scmp.eq.s32.totalorder %s10, 0
    %p124 = por %p122, %p123
    %p125 = scmp.ne.s32.totalorder %s114, %s117
    %p126 = scmp.eq.s32.totalorder %s15, 1
    %p127 = por %p125, %p126
    %p128 = scmp.ne.s32.totalorder %s117, %s118
    %p129 = scmp.eq.s32.totalorder %s15, 0
    %p130 = por %p128, %p129
    %p131 = scmp.ne.s32.totalorder %s117, %s118
    %p132 = scmp.eq.s32.totalorder %s16, 1
    %p133 = por %p131, %p132
    %p135 = scmp.ne.s32.totalorder %s118, %s134
    %p136 = scmp.eq.s32.totalorder %s16, 0
    %p137 = por %p135, %p136
    %p138 = scmp.le.s32.totalorder 1, %s10
    %p139 = scmp.lt.s32.totalorder %s10, 3
    %p140 = pnand %p138, %p139
    %p141 = pneg %p140
    // Predicated region
    $region9: #{baseline_arch_forward.5} parent=5 // pred_check
      _
    $region10: #{baseline_arch_forward.5} parent=5 // pred_check_branch
      %143 = sbr.rel (%p140) target = $region12
    $region11: #{baseline_arch_forward.5} parent=5 // pred_region
      %s144 = ssub.s32 %s10, 1
      // Predicated region
      $region13: #{baseline_arch_forward.5} parent=11 // pred_check
        %p145 = pneg %p83
      $region14: #{baseline_arch_forward.5} parent=11 // pred_check_branch
        %147 = sbr.rel (%p145) target = $region16
      $region15: #{baseline_arch_forward.5} parent=11 // pred_region
        _
      $region16: #{baseline_arch_forward.5} parent=11 // pred_fallthru
        _
      // Predicated region
      $region17: #{baseline_arch_forward.5} parent=11 // pred_check
        %p148 = pneg %p104
      $region18: #{baseline_arch_forward.5} parent=11 // pred_check_branch
        %150 = sbr.rel (%p148) target = $region20
      $region19: #{baseline_arch_forward.5} parent=11 // pred_region
        _
      $region20: #{baseline_arch_forward.5} parent=11 // pred_fallthru
        _
    $region12: #{baseline_arch_forward.5} parent=5 // pred_fallthru
      _
    %p151 = scmp.lt.s32.totalorder %s10, 2
    // Predicated region
    $region21: #{baseline_arch_forward.5} parent=5 // pred_check
      %p152 = pneg %p151
    $region22: #{baseline_arch_forward.5} parent=5 // pred_check_branch
      %154 = sbr.rel (%p152) target = $region24
    $region23: #{baseline_arch_forward.5} parent=5 // pred_region
      // Predicated region
      $region25: #{baseline_arch_forward.5} parent=23 // pred_check
        %p155 = pneg %p30
      $region26: #{baseline_arch_forward.5} parent=23 // pred_check_branch
        %157 = sbr.rel (%p155) target = $region28
      $region27: #{baseline_arch_forward.5} parent=23 // pred_region
        %s158 = smul.u32 16, %s10
        %p159 = scmp.lt.s32.totalorder %s158, 31
        %s160 = scalar_select %p159, %s158, 31
        %s161 = smul.addr %s160, 8
        %s162 = scalar_lea.vmem %s0, %s161
        %s163 = smul.u32 16, %s10
      $region28: #{baseline_arch_forward.5} parent=23 // pred_fallthru
        _
      // Predicated region
      $region29: #{baseline_arch_forward.5} parent=23 // pred_check
        %p164 = pneg %p56
      $region30: #{baseline_arch_forward.5} parent=23 // pred_check_branch
        %166 = sbr.rel (%p164) target = $region32
      $region31: #{baseline_arch_forward.5} parent=23 // pred_region
        %s167 = smul.u32 16, %s10
        %p168 = scmp.lt.s32.totalorder %s167, 31
        %s169 = scalar_select %p168, %s167, 31
        %s170 = smul.addr %s169, 4
        %s171 = scalar_lea.vmem %s1, %s170
        %s172 = smul.u32 16, %s10
      $region32: #{baseline_arch_forward.5} parent=23 // pred_fallthru
        _
    $region24: #{baseline_arch_forward.5} parent=5 // pred_fallthru
      _
    %p173 = scmp.le.s32.totalorder 1, %s10
    %p174 = scmp.lt.s32.totalorder %s10, 3
    %p175 = pnand %p173, %p174
    %p176 = pneg %p175
    // Predicated region
    $region33: #{baseline_arch_forward.5} parent=5 // pred_check
      _
    $region34: #{baseline_arch_forward.5} parent=5 // pred_check_branch
      %178 = sbr.rel (%p175) target = $region36
    $region35: #{baseline_arch_forward.5} parent=5 // pred_region
      %s179 = ssub.s32 %s10, 1
      %s180 = smul.u32 16, %s15
      %p181 = scmp.lt.s32.totalorder %s180, 31
      %s182 = scalar_select %p181, %s180, 31
      %s183 = smul.addr %s182, 8
      %s184 = scalar_lea.vmem %s0, %s183
      %p185 = pneg %p36
      %p186 = pneg %p33
      %s187 = smul.u32 16, %s15
      %p188 = scmp.lt.s32.totalorder %s187, 31
      %s189 = scalar_select %p188, %s187, 31
      %s190 = smul.addr %s189, 4
      %s191 = scalar_lea.vmem %s1, %s190
      %p192 = pneg %p62
      %p193 = pneg %p59
      %p194 = pneg %p83
      %p195 = pneg %p80
      %p196 = pneg %p104
      %p197 = pneg %p101
      %p198 = pneg %p130
      %p199 = pneg %p127
      %s200 = smul.u32 16, %s15
      %p201 = scmp.lt.s32.totalorder %s200, 31
      %s202 = scalar_select %p201, %s200, 31
      %s203 = smul.addr %s202, 8
      %s204 = scalar_lea.vmem %s4, %s203
      %s205 = smul.u32 16, %s15
      %p206 = scmp.lt.s32.totalorder %s205, 31
      %s207 = scalar_select %p206, %s205, 31
      %s208 = smul.addr %s207, 8
      %s209 = scalar_lea.vmem %s0, %s208
      %s210 = smul.u32 16, %s15
      %s211 = smul.u32 16, %s15
      %p212 = scmp.lt.s32.totalorder %s211, 31
      %s213 = scalar_select %p212, %s211, 31
      %s214 = smul.addr %s213, 4
      %s215 = scalar_lea.vmem %s1, %s214
      %s216 = smul.u32 16, %s15
      %s217 = smul.u32 16, %s15
      %p218 = scmp.lt.s32.totalorder %s217, 31
      %s219 = scalar_select %p218, %s217, 31
      %s220 = smul.addr %s219, 8
      %s221 = scalar_lea.vmem %s4, %s220
      %s222 = smul.u32 16, %s15
      %v223 = vld [vmem:[%s2] sm:$0xf]
      %v224 = vld [vmem:[%s3] sm:$0xf]
      %v225 = vld [vmem:[%s209] sm:$0xff]
      %v226 = vld [vmem:[%s209 + $0x8] sm:$0xff]
      %v227 = vld [vmem:[%s209 + $0x10] sm:$0xff]
      %v228 = vld [vmem:[%s209 + $0x18] sm:$0xff]
      %v229 = vld [vmem:[%s209 + $0x20] sm:$0xff]
      %v230 = vld [vmem:[%s209 + $0x28] sm:$0xff]
      %v231 = vld [vmem:[%s209 + $0x30] sm:$0xff]
      %v232 = vld [vmem:[%s209 + $0x38] sm:$0xff]
      %v233 = vld [vmem:[%s209 + $0x40] sm:$0xff]
      %v234 = vld [vmem:[%s209 + $0x48] sm:$0xff]
      %v235 = vld [vmem:[%s209 + $0x50] sm:$0xff]
      %v236 = vld [vmem:[%s209 + $0x58] sm:$0xff]
      %v237 = vld [vmem:[%s209 + $0x60] sm:$0xff]
      %v238 = vld [vmem:[%s209 + $0x68] sm:$0xff]
      %v239 = vld [vmem:[%s209 + $0x70] sm:$0xff]
      %v240 = vld [vmem:[%s209 + $0x78] sm:$0xff]
      %v241 = vlaneseq
      %v242 = vshrl.u32 %v241, 7
      %v243 = vsub.s32 0, %v242
      %v244 = vrot.slane %v223, %v243
      %v245 = vsub.f32 %v225, %v244
      %v246 = vsub.f32 %v226, %v244
      %v247 = vsub.f32 %v227, %v244
      %v248 = vsub.f32 %v228, %v244
      %v249 = vsub.f32 %v229, %v244
      %v250 = vsub.f32 %v230, %v244
      %v251 = vsub.f32 %v231, %v244
      %v252 = vsub.f32 %v232, %v244
      %v253 = vsub.f32 %v233, %v244
      %v254 = vsub.f32 %v234, %v244
      %v255 = vsub.f32 %v235, %v244
      %v256 = vsub.f32 %v236, %v244
      %v257 = vsub.f32 %v237, %v244
      %v258 = vsub.f32 %v238, %v244
      %v259 = vsub.f32 %v239, %v244
      %v260 = vsub.f32 %v240, %v244
      %v262 = vrot.slane %v223, 1
      %v264 = vmul.f32 %v223, %v262
      %v265 = vlaneseq
      %v266 = vshrl.u32 %v265, 7
      %v267 = vsub.s32 1, %v266
      %v268 = vrot.slane %v264, %v267
      %v269 = vmul.f32 %v245, %v268
      %v270 = vmul.f32 %v246, %v268
      %v271 = vmul.f32 %v247, %v268
      %v272 = vmul.f32 %v248, %v268
      %v273 = vmul.f32 %v249, %v268
      %v274 = vmul.f32 %v250, %v268
      %v275 = vmul.f32 %v251, %v268
      %v276 = vmul.f32 %v252, %v268
      %v277 = vmul.f32 %v253, %v268
      %v278 = vmul.f32 %v254, %v268
      %v279 = vmul.f32 %v255, %v268
      %v280 = vmul.f32 %v256, %v268
      %v281 = vmul.f32 %v257, %v268
      %v282 = vmul.f32 %v258, %v268
      %v283 = vmul.f32 %v259, %v268
      %v284 = vmul.f32 %v260, %v268
      %v285 = vlaneseq
      %v286 = vshrl.u32 %v285, 7
      %v287 = vsub.s32 3, %v286
      %v288 = vrot.slane %v223, %v287
      %v289 = vadd.f32 %v269, %v288
      %v290 = vadd.f32 %v270, %v288
      %v291 = vadd.f32 %v271, %v288
      %v292 = vadd.f32 %v272, %v288
      %v293 = vadd.f32 %v273, %v288
      %v294 = vadd.f32 %v274, %v288
      %v295 = vadd.f32 %v275, %v288
      %v296 = vadd.f32 %v276, %v288
      %v297 = vadd.f32 %v277, %v288
      %v298 = vadd.f32 %v278, %v288
      %v299 = vadd.f32 %v279, %v288
      %v300 = vadd.f32 %v280, %v288
      %v301 = vadd.f32 %v281, %v288
      %v302 = vadd.f32 %v282, %v288
      %v303 = vadd.f32 %v283, %v288
      %v304 = vadd.f32 %v284, %v288
      %v305 = vld [vmem:[%s215] sm:$0xf]
      %v306 = vld [vmem:[%s215 + $0x4] sm:$0xf]
      %v307 = vld [vmem:[%s215 + $0x8] sm:$0xf]
      %v308 = vld [vmem:[%s215 + $0xc] sm:$0xf]
      %v309 = vld [vmem:[%s215 + $0x10] sm:$0xf]
      %v310 = vld [vmem:[%s215 + $0x14] sm:$0xf]
      %v311 = vld [vmem:[%s215 + $0x18] sm:$0xf]
      %v312 = vld [vmem:[%s215 + $0x1c] sm:$0xf]
      %v313 = vld [vmem:[%s215 + $0x20] sm:$0xf]
      %v314 = vld [vmem:[%s215 + $0x24] sm:$0xf]
      %v315 = vld [vmem:[%s215 + $0x28] sm:$0xf]
      %v316 = vld [vmem:[%s215 + $0x2c] sm:$0xf]
      %v317 = vld [vmem:[%s215 + $0x30] sm:$0xf]
      %v318 = vld [vmem:[%s215 + $0x34] sm:$0xf]
      %v319 = vld [vmem:[%s215 + $0x38] sm:$0xf]
      %v320 = vld [vmem:[%s215 + $0x3c] sm:$0xf]
      %v321 = vunpack.c.l.bf16 %v305
      %v322 = vunpack.c.l.bf16 %v306
      %v323 = vunpack.c.l.bf16 %v307
      %v324 = vunpack.c.l.bf16 %v308
      %v325 = vunpack.c.l.bf16 %v309
      %v326 = vunpack.c.l.bf16 %v310
      %v327 = vunpack.c.l.bf16 %v311
      %v328 = vunpack.c.l.bf16 %v312
      %v329 = vunpack.c.l.bf16 %v313
      %v330 = vunpack.c.l.bf16 %v314
      %v331 = vunpack.c.l.bf16 %v315
      %v332 = vunpack.c.l.bf16 %v316
      %v333 = vunpack.c.l.bf16 %v317
      %v334 = vunpack.c.l.bf16 %v318
      %v335 = vunpack.c.l.bf16 %v319
      %v336 = vunpack.c.l.bf16 %v320
      %v337 = vlaneseq
      %v338 = vshrl.u32 %v337, 7
      %v339 = vsub.s32 0, %v338
      %v340 = vrot.slane %v224, %v339
      %v341 = vsub.f32 %v321, %v340
      %v342 = vsub.f32 %v322, %v340
      %v343 = vsub.f32 %v323, %v340
      %v344 = vsub.f32 %v324, %v340
      %v345 = vsub.f32 %v325, %v340
      %v346 = vsub.f32 %v326, %v340
      %v347 = vsub.f32 %v327, %v340
      %v348 = vsub.f32 %v328, %v340
      %v349 = vsub.f32 %v329, %v340
      %v350 = vsub.f32 %v330, %v340
      %v351 = vsub.f32 %v331, %v340
      %v352 = vsub.f32 %v332, %v340
      %v353 = vsub.f32 %v333, %v340
      %v354 = vsub.f32 %v334, %v340
      %v355 = vsub.f32 %v335, %v340
      %v356 = vsub.f32 %v336, %v340
      %v358 = vrot.slane %v224, 1
      %v360 = vmul.f32 %v224, %v358
      %v361 = vlaneseq
      %v362 = vshrl.u32 %v361, 7
      %v363 = vsub.s32 1, %v362
      %v364 = vrot.slane %v360, %v363
      %v365 = vmul.f32 %v341, %v364
      %v366 = vmul.f32 %v342, %v364
      %v367 = vmul.f32 %v343, %v364
      %v368 = vmul.f32 %v344, %v364
      %v369 = vmul.f32 %v345, %v364
      %v370 = vmul.f32 %v346, %v364
      %v371 = vmul.f32 %v347, %v364
      %v372 = vmul.f32 %v348, %v364
      %v373 = vmul.f32 %v349, %v364
      %v374 = vmul.f32 %v350, %v364
      %v375 = vmul.f32 %v351, %v364
      %v376 = vmul.f32 %v352, %v364
      %v377 = vmul.f32 %v353, %v364
      %v378 = vmul.f32 %v354, %v364
      %v379 = vmul.f32 %v355, %v364
      %v380 = vmul.f32 %v356, %v364
      %v381 = vlaneseq
      %v382 = vshrl.u32 %v381, 7
      %v383 = vsub.s32 3, %v382
      %v384 = vrot.slane %v224, %v383
      %v385 = vadd.f32 %v365, %v384
      %v386 = vadd.f32 %v366, %v384
      %v387 = vadd.f32 %v367, %v384
      %v388 = vadd.f32 %v368, %v384
      %v389 = vadd.f32 %v369, %v384
      %v390 = vadd.f32 %v370, %v384
      %v391 = vadd.f32 %v371, %v384
      %v392 = vadd.f32 %v372, %v384
      %v393 = vadd.f32 %v373, %v384
      %v394 = vadd.f32 %v374, %v384
      %v395 = vadd.f32 %v375, %v384
      %v396 = vadd.f32 %v376, %v384
      %v397 = vadd.f32 %v377, %v384
      %v398 = vadd.f32 %v378, %v384
      %v399 = vadd.f32 %v379, %v384
      %v400 = vadd.f32 %v380, %v384
      %v401 = vadd.f32 %v289, %v385
      %v402 = vadd.f32 %v290, %v386
      %v403 = vadd.f32 %v291, %v387
      %v404 = vadd.f32 %v292, %v388
      %v405 = vadd.f32 %v293, %v389
      %v406 = vadd.f32 %v294, %v390
      %v407 = vadd.f32 %v295, %v391
      %v408 = vadd.f32 %v296, %v392
      %v409 = vadd.f32 %v297, %v393
      %v410 = vadd.f32 %v298, %v394
      %v411 = vadd.f32 %v299, %v395
      %v412 = vadd.f32 %v300, %v396
      %v413 = vadd.f32 %v301, %v397
      %v414 = vadd.f32 %v302, %v398
      %v415 = vadd.f32 %v303, %v399
      %v416 = vadd.f32 %v304, %v400
      %v417 = vmax.f32 %v401, 0.0
      %v418 = vmax.f32 %v402, 0.0
      %v419 = vmax.f32 %v403, 0.0
      %v420 = vmax.f32 %v404, 0.0
      %v421 = vmax.f32 %v405, 0.0
      %v422 = vmax.f32 %v406, 0.0
      %v423 = vmax.f32 %v407, 0.0
      %v424 = vmax.f32 %v408, 0.0
      %v425 = vmax.f32 %v409, 0.0
      %v426 = vmax.f32 %v410, 0.0
      %v427 = vmax.f32 %v411, 0.0
      %v428 = vmax.f32 %v412, 0.0
      %v429 = vmax.f32 %v413, 0.0
      %v430 = vmax.f32 %v414, 0.0
      %v431 = vmax.f32 %v415, 0.0
      %v432 = vmax.f32 %v416, 0.0
      %433 = vst [vmem:[%s221] sm:$0xff] %v417
      %434 = vst [vmem:[%s221 + $0x8] sm:$0xff] %v418
      %435 = vst [vmem:[%s221 + $0x10] sm:$0xff] %v419
      %436 = vst [vmem:[%s221 + $0x18] sm:$0xff] %v420
      %437 = vst [vmem:[%s221 + $0x20] sm:$0xff] %v421
      %438 = vst [vmem:[%s221 + $0x28] sm:$0xff] %v422
      %439 = vst [vmem:[%s221 + $0x30] sm:$0xff] %v423
      %440 = vst [vmem:[%s221 + $0x38] sm:$0xff] %v424
      %441 = vst [vmem:[%s221 + $0x40] sm:$0xff] %v425
      %442 = vst [vmem:[%s221 + $0x48] sm:$0xff] %v426
      %443 = vst [vmem:[%s221 + $0x50] sm:$0xff] %v427
      %444 = vst [vmem:[%s221 + $0x58] sm:$0xff] %v428
      %445 = vst [vmem:[%s221 + $0x60] sm:$0xff] %v429
      %446 = vst [vmem:[%s221 + $0x68] sm:$0xff] %v430
      %447 = vst [vmem:[%s221 + $0x70] sm:$0xff] %v431
      %448 = vst [vmem:[%s221 + $0x78] sm:$0xff] %v432
      %s449 = smul.u32 16, %s15
      %p450 = scmp.lt.s32.totalorder %s449, 31
      %s451 = scalar_select %p450, %s449, 31
      %s452 = smul.addr %s451, 8
      %s453 = scalar_lea.vmem %s4, %s452
      // Predicated region
      $region37: #{baseline_arch_forward.5} parent=35 // pred_check
        %p454 = pneg %p127
      $region38: #{baseline_arch_forward.5} parent=35 // pred_check_branch
        %456 = sbr.rel (%p454) target = $region40
      $region39: #{baseline_arch_forward.5} parent=35 // pred_region
        %s457 = smul.u32 16, %s15
      $region40: #{baseline_arch_forward.5} parent=35 // pred_fallthru
        _
    $region36: #{baseline_arch_forward.5} parent=5 // pred_fallthru
      _
    %p458 = scmp.le.s32.totalorder 2, %s10
    // Predicated region
    $region41: #{baseline_arch_forward.5} parent=5 // pred_check
      %p459 = pneg %p458
    $region42: #{baseline_arch_forward.5} parent=5 // pred_check_branch
      %461 = sbr.rel (%p459) target = $region44
    $region43: #{baseline_arch_forward.5} parent=5 // pred_region
      %s462 = ssub.s32 %s10, 2
      // Predicated region
      $region45: #{baseline_arch_forward.5} parent=43 // pred_check
        %p463 = pneg %p133
      $region46: #{baseline_arch_forward.5} parent=43 // pred_check_branch
        %465 = sbr.rel (%p463) target = $region48
      $region47: #{baseline_arch_forward.5} parent=43 // pred_region
        %s466 = smul.u32 16, %s16
        %p467 = scmp.lt.s32.totalorder %s466, 31
        %s468 = scalar_select %p467, %s466, 31
        %s469 = smul.addr %s468, 8
        %s470 = scalar_lea.vmem %s4, %s469
      $region48: #{baseline_arch_forward.5} parent=43 // pred_fallthru
        _
    $region44: #{baseline_arch_forward.5} parent=5 // pred_fallthru
      _
  $region6: #{baseline_arch_forward.5} parent=0 // loop_footer
    %s14 = sadd.s32 1, %s10
  $region7: #{baseline_arch_forward.5} parent=0 // loop_footer_branch
    %9 = sbr.rel target = $region3
  $region8: #{baseline_arch_forward.5} parent=0 // loop_exit
    _

// kernel: baseline_arch_forward.3
$region0: #{baseline_arch_forward.3}
  #allocation0 [shape = 'u32[]', space=smem, size = 0x4, offset = 0x4, fixed_abs, tag = 'smem constant byte address 0x4 - core index']
  #allocation1 [shape = 'u32[144,128]{1,0:T(1,128)}', space=vmem, size = 0x12000, scoped, tag = 'internal scratch']
  #allocation2 [shape = 'bf16[192,128]{1,0:T(16,128)(2,1)}', space=vmem, size = 0xc000, scoped, tag = 'scratch operand']
  %s0 = inlined_call_operand.vmem [shape: bf16[832,128], index: 0, kind: input, shape index: {}, may-alias: {0,1}]
  %s1 = inlined_call_operand.vmem [shape: bf16[832,128], index: 1, kind: input, shape index: {}, may-alias: {0,1}]
  %s2 = inlined_call_operand.vmem [shape: bf16[1152,128], index: 2, kind: input, shape index: {}]
  %s3 = inlined_call_operand.vmem [shape: bf16[128,128], index: 3, kind: input, shape index: {}]
  %s4 = inlined_call_operand.vmem [shape: f32[768,1], index: 4, kind: input, shape index: {}]
  %s5 = inlined_call_operand.vmem [shape: bf16[768,128], index: 5, kind: output, shape index: {0}]
  %s6 = inlined_call_operand.vmem [shape: bf16[768,128], index: 6, kind: output, shape index: {1}]
  %s7 = inlined_call_operand.vmem [shape: f32[6,8,128], index: 7, kind: output, shape index: {2}]
  %8 = xla_tuple %s5, %s6, %s7
  %s9 = sld [smem:[#allocation0]]
  $region69: #{baseline_arch_forward.3} parent=0
    _
  %s11 = ssub.s32 1, %s9
  %s12 = scalar_select 0, %s11, %s9
  loop: start=0, step=1, limit=8
  $region2: #{baseline_arch_forward.3} parent=0 // loop_pre_header
    _
  $region3: #{baseline_arch_forward.3} parent=0 // loop_header
    %s14 = sphi 0, %s18
    %p15 = scmp.ge.s32.totalorder %s14, 8
    %s24 = sphi 0, %s26
    %s27 = sphi 0, %s24
    %s28 = sphi 0, %s27
    %s44 = sphi 0, %s28
    %s54 = sphi 0, %s56
    %s57 = sphi 0, %s54
    %s58 = sphi 0, %s57
    %s74 = sphi 0, %s58
    %s78 = sphi 0, %s78
    %s80 = sphi 0, %s78
    %s81 = sphi 0, %s80
    %s95 = sphi 0, %s81
    %s99 = sphi 0, %s99
    %s101 = sphi 0, %s99
    %s102 = sphi 0, %s101
    %s116 = sphi 0, %s102
    %s122 = sphi 0, %s124
    %s125 = sphi 0, %s122
    %s126 = sphi 0, %s125
    %s142 = sphi 0, %s126
    %s148 = sphi 0, %s150
    %s151 = sphi 0, %s148
    %s152 = sphi 0, %s151
    %s168 = sphi 0, %s152
    %s174 = sphi 0, %s176
    %s177 = sphi 0, %s174
    %s178 = sphi 0, %s177
    %s194 = sphi 0, %s178
    %s200 = sphi 0, %s202
    %s203 = sphi 0, %s200
    %s204 = sphi 0, %s203
    %s220 = sphi 0, %s204
  $region4: #{baseline_arch_forward.3} parent=0 // loop_header_branch
    %17 = sbr.rel (%p15) target = $region8
  $region5: #{baseline_arch_forward.3} parent=0 // loop_body
    %s19 = ssub.s32 %s14, 1
    %s20 = ssub.s32 %s14, 2
    %s21 = sadd.s32 %s14, 1
    %s22 = ssub.s32 %s14, %s21
    %p23 = scmp.eq.s32.totalorder %s22, 0
    %s25 = sadd.s32 %s24, 1
    %s26 = scalar_select %p23, %s24, %s25
    %p29 = pneg %p23
    %p30 = scmp.eq.s32.totalorder %s14, 5
    %p31 = por %p29, %p30
    %p32 = scmp.ne.s32.totalorder %s24, %s27
    %p33 = scmp.eq.s32.totalorder %s14, 0
    %p34 = por %p32, %p33
    %p35 = scmp.ne.s32.totalorder %s24, %s27
    %p36 = scmp.eq.s32.totalorder %s19, 5
    %p37 = por %p35, %p36
    %p38 = scmp.ne.s32.totalorder %s27, %s28
    %p39 = scmp.eq.s32.totalorder %s19, 0
    %p40 = por %p38, %p39
    %p41 = scmp.ne.s32.totalorder %s27, %s28
    %p42 = scmp.eq.s32.totalorder %s20, 5
    %p43 = por %p41, %p42
    %p45 = scmp.ne.s32.totalorder %s28, %s44
    %p46 = scmp.eq.s32.totalorder %s20, 0
    %p47 = por %p45, %p46
    %s48 = sadd.s32 %s14, 1
    %s49 = smul.u32 %s48, 2
    %s50 = sadd.s32 %s21, 1
    %s51 = smul.u32 %s50, 2
    %s52 = ssub.s32 %s49, %s51
    %p53 = scmp.eq.s32.totalorder %s52, 0
    %s55 = sadd.s32 %s54, 1
    %s56 = scalar_select %p53, %s54, %s55
    %p59 = pneg %p53
    %p60 = scmp.eq.s32.totalorder %s14, 5
    %p61 = por %p59, %p60
    %p62 = scmp.ne.s32.totalorder %s54, %s57
    %p63 = scmp.eq.s32.totalorder %s14, 0
    %p64 = por %p62, %p63
    %p65 = scmp.ne.s32.totalorder %s54, %s57
    %p66 = scmp.eq.s32.totalorder %s19, 5
    %p67 = por %p65, %p66
    %p68 = scmp.ne.s32.totalorder %s57, %s58
    %p69 = scmp.eq.s32.totalorder %s19, 0
    %p70 = por %p68, %p69
    %p71 = scmp.ne.s32.totalorder %s57, %s58
    %p72 = scmp.eq.s32.totalorder %s20, 5
    %p73 = por %p71, %p72
    %p75 = scmp.ne.s32.totalorder %s58, %s74
    %p76 = scmp.eq.s32.totalorder %s20, 0
    %p77 = por %p75, %p76
    %s79 = sadd.s32 %s78, 1
    %p82 = scmp.eq.s32.totalorder %s14, 5
    %p83 = scmp.ne.s32.totalorder %s78, %s80
    %p84 = scmp.eq.s32.totalorder %s14, 0
    %p85 = por %p83, %p84
    %p86 = scmp.ne.s32.totalorder %s78, %s80
    %p87 = scmp.eq.s32.totalorder %s19, 5
    %p88 = por %p86, %p87
    %p89 = scmp.ne.s32.totalorder %s80, %s81
    %p90 = scmp.eq.s32.totalorder %s19, 0
    %p91 = por %p89, %p90
    %p92 = scmp.ne.s32.totalorder %s80, %s81
    %p93 = scmp.eq.s32.totalorder %s20, 5
    %p94 = por %p92, %p93
    %p96 = scmp.ne.s32.totalorder %s81, %s95
    %p97 = scmp.eq.s32.totalorder %s20, 0
    %p98 = por %p96, %p97
    %s100 = sadd.s32 %s99, 1
    %p103 = scmp.eq.s32.totalorder %s14, 5
    %p104 = scmp.ne.s32.totalorder %s99, %s101
    %p105 = scmp.eq.s32.totalorder %s14, 0
    %p106 = por %p104, %p105
    %p107 = scmp.ne.s32.totalorder %s99, %s101
    %p108 = scmp.eq.s32.totalorder %s19, 5
    %p109 = por %p107, %p108
    %p110 = scmp.ne.s32.totalorder %s101, %s102
    %p111 = scmp.eq.s32.totalorder %s19, 0
    %p112 = por %p110, %p111
    %p113 = scmp.ne.s32.totalorder %s101, %s102
    %p114 = scmp.eq.s32.totalorder %s20, 5
    %p115 = por %p113, %p114
    %p117 = scmp.ne.s32.totalorder %s102, %s116
    %p118 = scmp.eq.s32.totalorder %s20, 0
    %p119 = por %p117, %p118
    %s120 = ssub.s32 %s14, %s21
    %p121 = scmp.eq.s32.totalorder %s120, 0
    %s123 = sadd.s32 %s122, 1
    %s124 = scalar_select %p121, %s122, %s123
    %p127 = pneg %p121
    %p128 = scmp.eq.s32.totalorder %s14, 5
    %p129 = por %p127, %p128
    %p130 = scmp.ne.s32.totalorder %s122, %s125
    %p131 = scmp.eq.s32.totalorder %s14, 0
    %p132 = por %p130, %p131
    %p133 = scmp.ne.s32.totalorder %s122, %s125
    %p134 = scmp.eq.s32.totalorder %s19, 5
    %p135 = por %p133, %p134
    %p136 = scmp.ne.s32.totalorder %s125, %s126
    %p137 = scmp.eq.s32.totalorder %s19, 0
    %p138 = por %p136, %p137
    %p139 = scmp.ne.s32.totalorder %s125, %s126
    %p140 = scmp.eq.s32.totalorder %s20, 5
    %p141 = por %p139, %p140
    %p143 = scmp.ne.s32.totalorder %s126, %s142
    %p144 = scmp.eq.s32.totalorder %s20, 0
    %p145 = por %p143, %p144
    %s146 = ssub.s32 %s14, %s21
    %p147 = scmp.eq.s32.totalorder %s146, 0
    %s149 = sadd.s32 %s148, 1
    %s150 = scalar_select %p147, %s148, %s149
    %p153 = pneg %p147
    %p154 = scmp.eq.s32.totalorder %s14, 5
    %p155 = por %p153, %p154
    %p156 = scmp.ne.s32.totalorder %s148, %s151
    %p157 = scmp.eq.s32.totalorder %s14, 0
    %p158 = por %p156, %p157
    %p159 = scmp.ne.s32.totalorder %s148, %s151
    %p160 = scmp.eq.s32.totalorder %s19, 5
    %p161 = por %p159, %p160
    %p162 = scmp.ne.s32.totalorder %s151, %s152
    %p163 = scmp.eq.s32.totalorder %s19, 0
    %p164 = por %p162, %p163
    %p165 = scmp.ne.s32.totalorder %s151, %s152
    %p166 = scmp.eq.s32.totalorder %s20, 5
    %p167 = por %p165, %p166
    %p169 = scmp.ne.s32.totalorder %s152, %s168
    %p170 = scmp.eq.s32.totalorder %s20, 0
    %p171 = por %p169, %p170
    %s172 = ssub.s32 %s14, %s21
    %p173 = scmp.eq.s32.totalorder %s172, 0
    %s175 = sadd.s32 %s174, 1
    %s176 = scalar_select %p173, %s174, %s175
    %p179 = pneg %p173
    %p180 = scmp.eq.s32.totalorder %s14, 5
    %p181 = por %p179, %p180
    %p182 = scmp.ne.s32.totalorder %s174, %s177
    %p183 = scmp.eq.s32.totalorder %s14, 0
    %p184 = por %p182, %p183
    %p185 = scmp.ne.s32.totalorder %s174, %s177
    %p186 = scmp.eq.s32.totalorder %s19, 5
    %p187 = por %p185, %p186
    %p188 = scmp.ne.s32.totalorder %s177, %s178
    %p189 = scmp.eq.s32.totalorder %s19, 0
    %p190 = por %p188, %p189
    %p191 = scmp.ne.s32.totalorder %s177, %s178
    %p192 = scmp.eq.s32.totalorder %s20, 5
    %p193 = por %p191, %p192
    %p195 = scmp.ne.s32.totalorder %s178, %s194
    %p196 = scmp.eq.s32.totalorder %s20, 0
    %p197 = por %p195, %p196
    %s198 = ssub.s32 %s14, %s21
    %p199 = scmp.eq.s32.totalorder %s198, 0
    %s201 = sadd.s32 %s200, 1
    %s202 = scalar_select %p199, %s200, %s201
    %p205 = pneg %p199
    %p206 = scmp.eq.s32.totalorder %s14, 5
    %p207 = por %p205, %p206
    %p208 = scmp.ne.s32.totalorder %s200, %s203
    %p209 = scmp.eq.s32.totalorder %s14, 0
    %p210 = por %p208, %p209
    %p211 = scmp.ne.s32.totalorder %s200, %s203
    %p212 = scmp.eq.s32.totalorder %s19, 5
    %p213 = por %p211, %p212
    %p214 = scmp.ne.s32.totalorder %s203, %s204
    %p215 = scmp.eq.s32.totalorder %s19, 0
    %p216 = por %p214, %p215
    %p217 = scmp.ne.s32.totalorder %s203, %s204
    %p218 = scmp.eq.s32.totalorder %s20, 5
    %p219 = por %p217, %p218
    %p221 = scmp.ne.s32.totalorder %s204, %s220
    %p222 = scmp.eq.s32.totalorder %s20, 0
    %p223 = por %p221, %p222
    %p224 = scmp.le.s32.totalorder 1, %s14
    %p225 = scmp.lt.s32.totalorder %s14, 7
    %p226 = pnand %p224, %p225
    %p227 = pneg %p226
    // Predicated region
    $region9: #{baseline_arch_forward.3} parent=5 // pred_check
      _
    $region10: #{baseline_arch_forward.3} parent=5 // pred_check_branch
      %229 = sbr.rel (%p226) target = $region12
    $region11: #{baseline_arch_forward.3} parent=5 // pred_region
      %s230 = ssub.s32 %s14, 1
      // Predicated region
      $region13: #{baseline_arch_forward.3} parent=11 // pred_check
        %p231 = pneg %p91
      $region14: #{baseline_arch_forward.3} parent=11 // pred_check_branch
        %233 = sbr.rel (%p231) target = $region16
      $region15: #{baseline_arch_forward.3} parent=11 // pred_region
        _
      $region16: #{baseline_arch_forward.3} parent=11 // pred_fallthru
        _
      // Predicated region
      $region17: #{baseline_arch_forward.3} parent=11 // pred_check
        %p234 = pneg %p112
      $region18: #{baseline_arch_forward.3} parent=11 // pred_check_branch
        %236 = sbr.rel (%p234) target = $region20
      $region19: #{baseline_arch_forward.3} parent=11 // pred_region
        _
      $region20: #{baseline_arch_forward.3} parent=11 // pred_fallthru
        _
    $region12: #{baseline_arch_forward.3} parent=5 // pred_fallthru
      _
    %p237 = scmp.lt.s32.totalorder %s14, 6
    // Predicated region
    $region21: #{baseline_arch_forward.3} parent=5 // pred_check
      %p238 = pneg %p237
    $region22: #{baseline_arch_forward.3} parent=5 // pred_check_branch
      %240 = sbr.rel (%p238) target = $region24
    $region23: #{baseline_arch_forward.3} parent=5 // pred_region
      // Predicated region
      $region25: #{baseline_arch_forward.3} parent=23 // pred_check
        %p241 = pneg %p34
      $region26: #{baseline_arch_forward.3} parent=23 // pred_check_branch
        %243 = sbr.rel (%p241) target = $region28
      $region27: #{baseline_arch_forward.3} parent=23 // pred_region
        %s244 = smul.u32 16, %s14
        %s245 = ssub.s32 104, %s244
        %p246 = scmp.lt.s32.totalorder %s245, 16
        %s247 = scalar_select %p246, %s245, 16
        %s248 = smul.u32 64, %s247
        %p249 = scmp.lt.s32.totalorder %s244, 103
        %s250 = scalar_select %p249, %s244, 103
        %s251 = smul.addr %s250, 4
        %s252 = scalar_lea.vmem %s0, %s251
        %s253 = smul.u32 16, %s14
        %s254 = ssub.s32 104, %s253
        %p255 = scmp.lt.s32.totalorder %s254, 16
        %s256 = scalar_select %p255, %s254, 16
        %s257 = smul.u32 64, %s256
      $region28: #{baseline_arch_forward.3} parent=23 // pred_fallthru
        _
      // Predicated region
      $region29: #{baseline_arch_forward.3} parent=23 // pred_check
        %p258 = pneg %p64
      $region30: #{baseline_arch_forward.3} parent=23 // pred_check_branch
        %260 = sbr.rel (%p258) target = $region32
      $region31: #{baseline_arch_forward.3} parent=23 // pred_region
        %s261 = sadd.s32 %s14, 1
        %s262 = smul.u32 %s261, 2
        %s263 = smul.u32 8, %s262
        %p264 = scmp.lt.s32.totalorder %s263, 103
        %s265 = scalar_select %p264, %s263, 103
        %s266 = smul.addr %s265, 4
        %s267 = scalar_lea.vmem %s1, %s266
        %s268 = sadd.s32 %s14, 1
        %s269 = smul.u32 %s268, 2
        %s270 = smul.u32 8, %s269
      $region32: #{baseline_arch_forward.3} parent=23 // pred_fallthru
        _
      // Predicated region
      $region33: #{baseline_arch_forward.3} parent=23 // pred_check
        %p271 = pneg %p132
      $region34: #{baseline_arch_forward.3} parent=23 // pred_check_branch
        %273 = sbr.rel (%p271) target = $region36
      $region35: #{baseline_arch_forward.3} parent=23 // pred_region
        %s274 = smul.u32 16, %s14
        %p275 = scmp.lt.s32.totalorder %s274, 95
        %s276 = scalar_select %p275, %s274, 95
        %s277 = smul.addr %s276, 8
        %s278 = scalar_lea.vmem %s4, %s277
        %s279 = smul.u32 16, %s14
      $region36: #{baseline_arch_forward.3} parent=23 // pred_fallthru
        _
    $region24: #{baseline_arch_forward.3} parent=5 // pred_fallthru
      _
    %p280 = scmp.le.s32.totalorder 1, %s14
    %p281 = scmp.lt.s32.totalorder %s14, 7
    %p282 = pnand %p280, %p281
    %p283 = pneg %p282
    // Predicated region
    $region37: #{baseline_arch_forward.3} parent=5 // pred_check
      _
    $region38: #{baseline_arch_forward.3} parent=5 // pred_check_branch
      %285 = sbr.rel (%p282) target = $region40
    $region39: #{baseline_arch_forward.3} parent=5 // pred_region
      %s286 = ssub.s32 %s14, 1
      %s287 = smul.u32 16, %s19
      %s288 = ssub.s32 104, %s287
      %p289 = scmp.lt.s32.totalorder %s288, 16
      %s290 = scalar_select %p289, %s288, 16
      %s291 = smul.u32 64, %s290
      %p292 = scmp.lt.s32.totalorder %s287, 103
      %s293 = scalar_select %p292, %s287, 103
      %s294 = smul.addr %s293, 4
      %s295 = scalar_lea.vmem %s0, %s294
      %p296 = pneg %p40
      %p297 = pneg %p37
      %s298 = sadd.s32 %s19, 1
      %s299 = smul.u32 %s298, 2
      %s300 = smul.u32 8, %s299
      %p301 = scmp.lt.s32.totalorder %s300, 103
      %s302 = scalar_select %p301, %s300, 103
      %s303 = smul.addr %s302, 4
      %s304 = scalar_lea.vmem %s1, %s303
      %p305 = pneg %p70
      %p306 = pneg %p67
      %p307 = pneg %p91
      %p308 = pneg %p88
      %p309 = pneg %p112
      %p310 = pneg %p109
      %s311 = smul.u32 16, %s19
      %p312 = scmp.lt.s32.totalorder %s311, 95
      %s313 = scalar_select %p312, %s311, 95
      %s314 = smul.addr %s313, 8
      %s315 = scalar_lea.vmem %s4, %s314
      %p316 = pneg %p138
      %p317 = pneg %p135
      %p318 = pneg %p164
      %p319 = pneg %p161
      %s320 = smul.u32 16, %s19
      %p321 = scmp.lt.s32.totalorder %s320, 95
      %s322 = scalar_select %p321, %s320, 95
      %s323 = smul.addr %s322, 4
      %s324 = scalar_lea.vmem %s5, %s323
      %p325 = pneg %p190
      %p326 = pneg %p187
      %s327 = smul.u32 16, %s19
      %p328 = scmp.lt.s32.totalorder %s327, 95
      %s329 = scalar_select %p328, %s327, 95
      %s330 = smul.addr %s329, 4
      %s331 = scalar_lea.vmem %s6, %s330
      %p332 = pneg %p216
      %p333 = pneg %p213
      %p334 = scmp.lt.s32.totalorder %s19, 5
      %s335 = scalar_select %p334, %s19, 5
      %s336 = smul.addr %s335, 8
      %s337 = scalar_lea.vmem %s7, %s336
      %s338 = smul.u32 16, %s19
      %s339 = ssub.s32 104, %s338
      %p340 = scmp.lt.s32.totalorder %s339, 16
      %s341 = scalar_select %p340, %s339, 16
      %s342 = smul.u32 64, %s341
      %p343 = scmp.lt.s32.totalorder %s338, 103
      %s344 = scalar_select %p343, %s338, 103
      %s345 = smul.addr %s344, 4
      %s346 = scalar_lea.vmem %s0, %s345
      %s347 = smul.u32 16, %s19
      %s348 = ssub.s32 104, %s347
      %p349 = scmp.lt.s32.totalorder %s348, 16
      %s350 = scalar_select %p349, %s348, 16
      %s351 = smul.u32 64, %s350
      %s352 = sadd.s32 %s19, 1
      %s353 = smul.u32 %s352, 2
      %s354 = smul.u32 8, %s353
      %p355 = scmp.lt.s32.totalorder %s354, 103
      %s356 = scalar_select %p355, %s354, 103
      %s357 = smul.addr %s356, 4
      %s358 = scalar_lea.vmem %s1, %s357
      %s359 = sadd.s32 %s19, 1
      %s360 = smul.u32 %s359, 2
      %s361 = smul.u32 8, %s360
      %s362 = smul.u32 16, %s19
      %p363 = scmp.lt.s32.totalorder %s362, 95
      %s364 = scalar_select %p363, %s362, 95
      %s365 = smul.addr %s364, 8
      %s366 = scalar_lea.vmem %s4, %s365
      %s367 = smul.u32 16, %s19
      %s368 = smul.u32 16, %s19
      %p369 = scmp.lt.s32.totalorder %s368, 95
      %s370 = scalar_select %p369, %s368, 95
      %s371 = smul.addr %s370, 4
      %s372 = scalar_lea.vmem %s5, %s371
      %s373 = smul.u32 16, %s19
      %s374 = smul.u32 16, %s19
      %p375 = scmp.lt.s32.totalorder %s374, 95
      %s376 = scalar_select %p375, %s374, 95
      %s377 = smul.addr %s376, 4
      %s378 = scalar_lea.vmem %s6, %s377
      %s379 = smul.u32 16, %s19
      %p380 = scmp.lt.s32.totalorder %s19, 5
      %s381 = scalar_select %p380, %s19, 5
      %s382 = smul.addr %s381, 8
      %s383 = scalar_lea.vmem %s7, %s382
      %v385 = vld [vmem:[%s346] sm:$0xf]
      %v386 = vld [vmem:[%s346 + $0x4] sm:$0xf]
      %v387 = vld [vmem:[%s346 + $0x8] sm:$0xf]
      %v388 = vld [vmem:[%s346 + $0xc] sm:$0xf]
      %v389 = vld [vmem:[%s346 + $0x10] sm:$0xf]
      %v390 = vld [vmem:[%s346 + $0x14] sm:$0xf]
      %v391 = vld [vmem:[%s346 + $0x18] sm:$0xf]
      %v392 = vld [vmem:[%s346 + $0x1c] sm:$0xf]
      %v393 = vld [vmem:[%s346 + $0x20] sm:$0xf]
      %v394 = vld [vmem:[%s346 + $0x24] sm:$0xf]
      %v395 = vld [vmem:[%s346 + $0x28] sm:$0xf]
      %v396 = vld [vmem:[%s346 + $0x2c] sm:$0xf]
      %v397 = vld [vmem:[%s346 + $0x30] sm:$0xf]
      %v398 = vld [vmem:[%s346 + $0x34] sm:$0xf]
      %v399 = vld [vmem:[%s346 + $0x38] sm:$0xf]
      %v400 = vld [vmem:[%s346 + $0x3c] sm:$0xf]
      %v417 = vunpack.c.l.b16 %v385
      %v418 = vunpack.c.l.b16 %v386
      %v419 = vunpack.c.l.b16 %v387
      %v420 = vunpack.c.l.b16 %v388
      %v421 = vunpack.c.l.b16 %v389
      %v422 = vunpack.c.l.b16 %v390
      %v423 = vunpack.c.l.b16 %v391
      %v424 = vunpack.c.l.b16 %v392
      %v425 = vunpack.c.l.b16 %v393
      %v426 = vunpack.c.l.b16 %v394
      %v427 = vunpack.c.l.b16 %v395
      %v428 = vunpack.c.l.b16 %v396
      %v429 = vunpack.c.l.b16 %v397
      %v430 = vunpack.c.l.b16 %v398
      %v431 = vunpack.c.l.b16 %v399
      %v432 = vunpack.c.l.b16 %v400
      %v433 = vpack.c.b16 %v418, %v417
      %v434 = vpack.c.b16 %v420, %v419
      %v435 = vpack.c.b16 %v422, %v421
      %v436 = vpack.c.b16 %v424, %v423
      %v437 = vpack.c.b16 %v426, %v425
      %v438 = vpack.c.b16 %v428, %v427
      %v439 = vpack.c.b16 %v430, %v429
      %v440 = vpack.c.b16 %v432, %v431
      %449 = vst [vmem:[#allocation2] sm:$0xff] %v433
      %450 = vst [vmem:[#allocation2 + $0x8] sm:$0xff] %v434
      %451 = vst [vmem:[#allocation2 + $0x10] sm:$0xff] %v435
      %452 = vst [vmem:[#allocation2 + $0x18] sm:$0xff] %v436
      %453 = vst [vmem:[#allocation2 + $0x20] sm:$0xff] %v437
      %454 = vst [vmem:[#allocation2 + $0x28] sm:$0xff] %v438
      %455 = vst [vmem:[#allocation2 + $0x30] sm:$0xff] %v439
      %456 = vst [vmem:[#allocation2 + $0x38] sm:$0xff] %v440
      %v457 = vld [vmem:[%s358] sm:$0xf]
      %v458 = vld [vmem:[%s358 + $0x4] sm:$0xf]
      %v459 = vld [vmem:[%s358 + $0x8] sm:$0xf]
      %v460 = vld [vmem:[%s358 + $0xc] sm:$0xf]
      %v461 = vld [vmem:[%s358 + $0x10] sm:$0xf]
      %v462 = vld [vmem:[%s358 + $0x14] sm:$0xf]
      %v463 = vld [vmem:[%s358 + $0x18] sm:$0xf]
      %v464 = vld [vmem:[%s358 + $0x1c] sm:$0xf]
      %v473 = vunpack.c.l.b16 %v457
      %v474 = vunpack.c.l.b16 %v458
      %v475 = vunpack.c.l.b16 %v459
      %v476 = vunpack.c.l.b16 %v460
      %v477 = vunpack.c.l.b16 %v461
      %v478 = vunpack.c.l.b16 %v462
      %v479 = vunpack.c.l.b16 %v463
      %v480 = vunpack.c.l.b16 %v464
      %v481 = vpack.c.b16 %v474, %v473
      %v482 = vpack.c.b16 %v476, %v475
      %v483 = vpack.c.b16 %v478, %v477
      %v484 = vpack.c.b16 %v480, %v479
      %489 = vst [vmem:[#allocation2 + $0x40] sm:$0xff] %v481
      %490 = vst [vmem:[#allocation2 + $0x48] sm:$0xff] %v482
      %491 = vst [vmem:[#allocation2 + $0x50] sm:$0xff] %v483
      %492 = vst [vmem:[#allocation2 + $0x58] sm:$0xff] %v484
      %v493 = vld [vmem:[%s366] sm:$0xff]
      %v494 = vld [vmem:[%s366 + $0x8] sm:$0xff]
      %v495 = vld [vmem:[%s366 + $0x10] sm:$0xff]
      %v496 = vld [vmem:[%s366 + $0x18] sm:$0xff]
      %v497 = vld [vmem:[%s366 + $0x20] sm:$0xff]
      %v498 = vld [vmem:[%s366 + $0x28] sm:$0xff]
      %v499 = vld [vmem:[%s366 + $0x30] sm:$0xff]
      %v500 = vld [vmem:[%s366 + $0x38] sm:$0xff]
      %v501 = vld [vmem:[%s366 + $0x40] sm:$0xff]
      %v502 = vld [vmem:[%s366 + $0x48] sm:$0xff]
      %v503 = vld [vmem:[%s366 + $0x50] sm:$0xff]
      %v504 = vld [vmem:[%s366 + $0x58] sm:$0xff]
      %v505 = vld [vmem:[%s366 + $0x60] sm:$0xff]
      %v506 = vld [vmem:[%s366 + $0x68] sm:$0xff]
      %v507 = vld [vmem:[%s366 + $0x70] sm:$0xff]
      %v508 = vld [vmem:[%s366 + $0x78] sm:$0xff]
      %v509 = vld [vmem:[#allocation2] sm:$0xff]
      %v510 = vld [vmem:[#allocation2 + $0x8] sm:$0xff]
      %v511 = vld [vmem:[#allocation2 + $0x10] sm:$0xff]
      %v512 = vld [vmem:[#allocation2 + $0x18] sm:$0xff]
      %v513 = vld [vmem:[#allocation2 + $0x20] sm:$0xff]
      %v514 = vld [vmem:[#allocation2 + $0x28] sm:$0xff]
      %v515 = vld [vmem:[#allocation2 + $0x30] sm:$0xff]
      %v516 = vld [vmem:[#allocation2 + $0x38] sm:$0xff]
      %v517 = vld [vmem:[%s2] sm:$0xf]
      %v518 = vld [vmem:[%s2 + $0x4] sm:$0xf]
      %v519 = vld [vmem:[%s2 + $0x8] sm:$0xf]
      %v520 = vld [vmem:[%s2 + $0xc] sm:$0xf]
      %v521 = vld [vmem:[%s2 + $0x10] sm:$0xf]
      %v522 = vld [vmem:[%s2 + $0x14] sm:$0xf]
      %v523 = vld [vmem:[%s2 + $0x18] sm:$0xf]
      %v524 = vld [vmem:[%s2 + $0x1c] sm:$0xf]
      %v525 = vld [vmem:[%s2 + $0x20] sm:$0xf]
      %v526 = vld [vmem:[%s2 + $0x24] sm:$0xf]
      %v527 = vld [vmem:[%s2 + $0x28] sm:$0xf]
      %v528 = vld [vmem:[%s2 + $0x2c] sm:$0xf]
      %v529 = vld [vmem:[%s2 + $0x30] sm:$0xf]
      %v530 = vld [vmem:[%s2 + $0x34] sm:$0xf]
      %v531 = vld [vmem:[%s2 + $0x38] sm:$0xf]
      %v532 = vld [vmem:[%s2 + $0x3c] sm:$0xf]
      %v533 = vld [vmem:[#allocation2 + $0x40] sm:$0x1]
      %v534 = vld [vmem:[%s2 + $0x40] sm:$0xf]
      %v535 = vld [vmem:[%s2 + $0x44] sm:$0xf]
      %v536 = vld [vmem:[%s2 + $0x48] sm:$0xf]
      %v537 = vld [vmem:[%s2 + $0x4c] sm:$0xf]
      %v538 = vld [vmem:[%s2 + $0x50] sm:$0xf]
      %v539 = vld [vmem:[%s2 + $0x54] sm:$0xf]
      %v540 = vld [vmem:[%s2 + $0x58] sm:$0xf]
      %v541 = vld [vmem:[%s2 + $0x5c] sm:$0xf]
      %v542 = vld [vmem:[%s2 + $0x60] sm:$0xf]
      %v543 = vld [vmem:[%s2 + $0x64] sm:$0xf]
      %v544 = vld [vmem:[%s2 + $0x68] sm:$0xf]
      %v545 = vld [vmem:[%s2 + $0x6c] sm:$0xf]
      %v546 = vld [vmem:[%s2 + $0x70] sm:$0xf]
      %v547 = vld [vmem:[%s2 + $0x74] sm:$0xf]
      %v548 = vld [vmem:[%s2 + $0x78] sm:$0xf]
      %v549 = vld [vmem:[%s2 + $0x7c] sm:$0xf]
      %vm550 = vsmask.f32 7424
      %v552 = vshrl.u32 %v509, 16
      %v554 = vshll.u32 %v509, 16
      %v556 = vrot.slane %v554, 1
      %v557 = vor.u32 %v552, %v556
      %v559 = vshll.u32 %v510, 16
      %v561 = vrot.slane %v559, 1
      %v562 = vsel %vm550, %v557, %v561
      %v563 = vshrl.u32 %v510, 16
      %v565 = vor.u32 %v563, %v561
      %v567 = vshll.u32 %v511, 16
      %v569 = vrot.slane %v567, 1
      %v570 = vsel %vm550, %v565, %v569
      %v571 = vshrl.u32 %v511, 16
      %v573 = vor.u32 %v571, %v569
      %v575 = vshll.u32 %v512, 16
      %v577 = vrot.slane %v575, 1
      %v578 = vsel %vm550, %v573, %v577
      %v579 = vshrl.u32 %v512, 16
      %v581 = vor.u32 %v579, %v577
      %v583 = vshll.u32 %v513, 16
      %v585 = vrot.slane %v583, 1
      %v586 = vsel %vm550, %v581, %v585
      %v587 = vshrl.u32 %v513, 16
      %v589 = vor.u32 %v587, %v585
      %v591 = vshll.u32 %v514, 16
      %v593 = vrot.slane %v591, 1
      %v594 = vsel %vm550, %v589, %v593
      %v595 = vshrl.u32 %v514, 16
      %v597 = vor.u32 %v595, %v593
      %v599 = vshll.u32 %v515, 16
      %v601 = vrot.slane %v599, 1
      %v602 = vsel %vm550, %v597, %v601
      %v603 = vshrl.u32 %v515, 16
      %v605 = vor.u32 %v603, %v601
      %v607 = vshll.u32 %v516, 16
      %v609 = vrot.slane %v607, 1
      %v610 = vsel %vm550, %v605, %v609
      %v611 = vshrl.u32 %v516, 16
      %v613 = vor.u32 %v611, %v609
      %v615 = vshll.u32 %v533, 16
      %v617 = vrot.slane %v615, 1
      %v618 = vsel %vm550, %v613, %v617
      %v643 = vunpack.c.l.b16 %v534
      %v644 = vunpack.c.l.b16 %v535
      %v645 = vunpack.c.l.b16 %v536
      %v646 = vunpack.c.l.b16 %v537
      %v647 = vunpack.c.l.b16 %v538
      %v648 = vunpack.c.l.b16 %v539
      %v649 = vunpack.c.l.b16 %v540
      %v650 = vunpack.c.l.b16 %v541
      %v651 = vunpack.c.l.b16 %v542
      %v652 = vunpack.c.l.b16 %v543
      %v653 = vunpack.c.l.b16 %v544
      %v654 = vunpack.c.l.b16 %v545
      %v655 = vunpack.c.l.b16 %v546
      %v656 = vunpack.c.l.b16 %v547
      %v657 = vunpack.c.l.b16 %v548
      %v658 = vunpack.c.l.b16 %v549
      %v659 = vpack.c.b16 %v644, %v643
      %v660 = vpack.c.b16 %v646, %v645
      %v661 = vpack.c.b16 %v648, %v647
      %v662 = vpack.c.b16 %v650, %v649
      %v663 = vpack.c.b16 %v652, %v651
      %v664 = vpack.c.b16 %v654, %v653
      %v665 = vpack.c.b16 %v656, %v655
      %v666 = vpack.c.b16 %v658, %v657
      %675 = vmatprep.subr.bf16.mxu0 0
      %676 = vmatpush1.bf16.msra.mxu0 %v659
      %677 = vmatprep.subr.bf16.mxu0 0
      %678 = vmatpush1.bf16.msra.mxu0 %v660
      %679 = vmatprep.subr.bf16.mxu0 0
      %680 = vmatpush1.bf16.msra.mxu0 %v661
      %681 = vmatprep.subr.bf16.mxu0 0
      %682 = vmatpush1.bf16.msra.mxu0 %v662
      %683 = vmatprep.subr.bf16.mxu0 0
      %684 = vmatpush1.bf16.msra.mxu0 %v663
      %685 = vmatprep.subr.bf16.mxu0 0
      %686 = vmatpush1.bf16.msra.mxu0 %v664
      %687 = vmatprep.subr.bf16.mxu0 0
      %688 = vmatpush1.bf16.msra.mxu0 %v665
      %689 = vmatprep.subr.bf16.mxu0 0
      %690 = vmatpush1.bf16.msra.mxu0 %v666
      %691 = vmatprep.subr.bf16.mxu0 0
      %692 = vmatpush1.bf16.msra.mxu0 0
      %693 = vmatprep.subr.bf16.mxu0 0
      %694 = vmatpush1.bf16.msra.mxu0 0
      %695 = vmatprep.subr.bf16.mxu0 0
      %696 = vmatpush1.bf16.msra.mxu0 0
      %697 = vmatprep.subr.bf16.mxu0 0
      %698 = vmatpush1.bf16.msra.mxu0 0
      %699 = vmatprep.subr.bf16.mxu0 0
      %700 = vmatpush1.bf16.msra.mxu0 0
      %701 = vmatprep.subr.bf16.mxu0 0
      %702 = vmatpush1.bf16.msra.mxu0 0
      %703 = vmatprep.subr.bf16.mxu0 0
      %704 = vmatpush1.bf16.msra.mxu0 0
      %705 = vmatprep.subr.bf16.mxu0 0
      %706 = vmatpush1.bf16.msra.mxu0 0
      %707 = vmatprep.mubr.bf16.mxu0 0
      %708 = vmatmul.mubr.bf16.gmra.mrb[0].mxu0 %v562
      %v709 = vpop.f32.mrb[0].mxu0
      %v710 = vadd.f32 0.0, %v709
      %v711 = vpop.f32.mrb[0].mxu0
      %v712 = vpop.f32.mrb[0].mxu0
      %v713 = vadd.f32 0.0, %v712
      %v714 = vpop.f32.mrb[0].mxu0
      %715 = vmatprep.mubr.bf16.mxu0 0
      %716 = vmatmul.mubr.bf16.gmra.mrb[0].mxu0 %v570
      %v717 = vpop.f32.mrb[0].mxu0
      %v718 = vadd.f32 0.0, %v717
      %v719 = vpop.f32.mrb[0].mxu0
      %v720 = vpop.f32.mrb[0].mxu0
      %v721 = vadd.f32 0.0, %v720
      %v722 = vpop.f32.mrb[0].mxu0
      %723 = vmatprep.mubr.bf16.mxu0 0
      %724 = vmatmul.mubr.bf16.gmra.mrb[0].mxu0 %v578
      %v725 = vpop.f32.mrb[0].mxu0
      %v726 = vadd.f32 0.0, %v725
      %v727 = vpop.f32.mrb[0].mxu0
      %v728 = vpop.f32.mrb[0].mxu0
      %v729 = vadd.f32 0.0, %v728
      %v730 = vpop.f32.mrb[0].mxu0
      %731 = vmatprep.mubr.bf16.mxu0 0
      %732 = vmatmul.mubr.bf16.gmra.mrb[0].mxu0 %v586
      %v733 = vpop.f32.mrb[0].mxu0
      %v734 = vadd.f32 0.0, %v733
      %v735 = vpop.f32.mrb[0].mxu0
      %v736 = vpop.f32.mrb[0].mxu0
      %v737 = vadd.f32 0.0, %v736
      %v738 = vpop.f32.mrb[0].mxu0
      %739 = vmatprep.mubr.bf16.mxu0 0
      %740 = vmatmul.mubr.bf16.gmra.mrb[0].mxu0 %v594
      %v741 = vpop.f32.mrb[0].mxu0
      %v742 = vadd.f32 0.0, %v741
      %v743 = vpop.f32.mrb[0].mxu0
      %v744 = vpop.f32.mrb[0].mxu0
      %v745 = vadd.f32 0.0, %v744
      %v746 = vpop.f32.mrb[0].mxu0
      %747 = vmatprep.mubr.bf16.mxu0 0
      %748 = vmatmul.mubr.bf16.gmra.mrb[0].mxu0 %v602
      %v749 = vpop.f32.mrb[0].mxu0
      %v750 = vadd.f32 0.0, %v749
      %v751 = vpop.f32.mrb[0].mxu0
      %v752 = vpop.f32.mrb[0].mxu0
      %v753 = vadd.f32 0.0, %v752
      %v754 = vpop.f32.mrb[0].mxu0
      %755 = vmatprep.mubr.bf16.mxu0 0
      %756 = vmatmul.mubr.bf16.gmra.mrb[0].mxu0 %v610
      %v757 = vpop.f32.mrb[0].mxu0
      %v758 = vadd.f32 0.0, %v757
      %v759 = vpop.f32.mrb[0].mxu0
      %v760 = vpop.f32.mrb[0].mxu0
      %v761 = vadd.f32 0.0, %v760
      %v762 = vpop.f32.mrb[0].mxu0
      %763 = vmatprep.mubr.bf16.mxu0 0
      %764 = vmatmul.mubr.bf16.gmra.mrb[0].mxu0 %v618
      %v765 = vpop.f32.mrb[0].mxu0
      %v766 = vadd.f32 0.0, %v765
      %v767 = vpop.f32.mrb[0].mxu0
      %v768 = vpop.f32.mrb[0].mxu0
      %v769 = vadd.f32 0.0, %v768
      %v770 = vpop.f32.mrb[0].mxu0
      %771 = vdwg.mxu0
      %v788 = vunpack.c.l.b16 %v517
      %v789 = vunpack.c.l.b16 %v518
      %v790 = vunpack.c.l.b16 %v519
      %v791 = vunpack.c.l.b16 %v520
      %v792 = vunpack.c.l.b16 %v521
      %v793 = vunpack.c.l.b16 %v522
      %v794 = vunpack.c.l.b16 %v523
      %v795 = vunpack.c.l.b16 %v524
      %v796 = vunpack.c.l.b16 %v525
      %v797 = vunpack.c.l.b16 %v526
      %v798 = vunpack.c.l.b16 %v527
      %v799 = vunpack.c.l.b16 %v528
      %v800 = vunpack.c.l.b16 %v529
      %v801 = vunpack.c.l.b16 %v530
      %v802 = vunpack.c.l.b16 %v531
      %v803 = vunpack.c.l.b16 %v532
      %v804 = vpack.c.b16 %v789, %v788
      %v805 = vpack.c.b16 %v791, %v790
      %v806 = vpack.c.b16 %v793, %v792
      %v807 = vpack.c.b16 %v795, %v794
      %v808 = vpack.c.b16 %v797, %v796
      %v809 = vpack.c.b16 %v799, %v798
      %v810 = vpack.c.b16 %v801, %v800
      %v811 = vpack.c.b16 %v803, %v802
      %820 = vmatprep.subr.bf16.mxu0 0
      %821 = vmatpush1.bf16.msra.mxu0 %v804
      %822 = vmatprep.subr.bf16.mxu0 0
      %823 = vmatpush1.bf16.msra.mxu0 %v805
      %824 = vmatprep.subr.bf16.mxu0 0
      %825 = vmatpush1.bf16.msra.mxu0 %v806
      %826 = vmatprep.subr.bf16.mxu0 0
      %827 = vmatpush1.bf16.msra.mxu0 %v807
      %828 = vmatprep.subr.bf16.mxu0 0
      %829 = vmatpush1.bf16.msra.mxu0 %v808
      %830 = vmatprep.subr.bf16.mxu0 0
      %831 = vmatpush1.bf16.msra.mxu0 %v809
      %832 = vmatprep.subr.bf16.mxu0 0
      %833 = vmatpush1.bf16.msra.mxu0 %v810
      %834 = vmatprep.subr.bf16.mxu0 0
      %835 = vmatpush1.bf16.msra.mxu0 %v811
      %836 = vmatprep.subr.bf16.mxu0 0
      %837 = vmatpush1.bf16.msra.mxu0 0
      %838 = vmatprep.subr.bf16.mxu0 0
      %839 = vmatpush1.bf16.msra.mxu0 0
      %840 = vmatprep.subr.bf16.mxu0 0
      %841 = vmatpush1.bf16.msra.mxu0 0
      %842 = vmatprep.subr.bf16.mxu0 0
      %843 = vmatpush1.bf16.msra.mxu0 0
      %844 = vmatprep.subr.bf16.mxu0 0
      %845 = vmatpush1.bf16.msra.mxu0 0
      %846 = vmatprep.subr.bf16.mxu0 0
      %847 = vmatpush1.bf16.msra.mxu0 0
      %848 = vmatprep.subr.bf16.mxu0 0
      %849 = vmatpush1.bf16.msra.mxu0 0
      %850 = vmatprep.subr.bf16.mxu0 0
      %851 = vmatpush1.bf16.msra.mxu0 0
      %852 = vmatprep.mubr.bf16.mxu0 0
      %853 = vmatmul.mubr.bf16.gmra.mrb[0].mxu0 %v509
      %v854 = vpop.f32.mrb[0].mxu0
      %v855 = vadd.f32 %v710, %v854
      %v856 = vpop.f32.mrb[0].mxu0
      %v857 = vpop.f32.mrb[0].mxu0
      %v858 = vadd.f32 %v713, %v857
      %v859 = vpop.f32.mrb[0].mxu0
      %860 = vmatprep.mubr.bf16.mxu0 0
      %861 = vmatmul.mubr.bf16.gmra.mrb[0].mxu0 %v510
      %v862 = vpop.f32.mrb[0].mxu0
      %v863 = vadd.f32 %v718, %v862
      %v864 = vpop.f32.mrb[0].mxu0
      %v865 = vpop.f32.mrb[0].mxu0
      %v866 = vadd.f32 %v721, %v865
      %v867 = vpop.f32.mrb[0].mxu0
      %868 = vmatprep.mubr.bf16.mxu0 0
      %869 = vmatmul.mubr.bf16.gmra.mrb[0].mxu0 %v511
      %v870 = vpop.f32.mrb[0].mxu0
      %v871 = vadd.f32 %v726, %v870
      %v872 = vpop.f32.mrb[0].mxu0
      %v873 = vpop.f32.mrb[0].mxu0
      %v874 = vadd.f32 %v729, %v873
      %v875 = vpop.f32.mrb[0].mxu0
      %876 = vmatprep.mubr.bf16.mxu0 0
      %877 = vmatmul.mubr.bf16.gmra.mrb[0].mxu0 %v512
      %v878 = vpop.f32.mrb[0].mxu0
      %v879 = vadd.f32 %v734, %v878
      %v880 = vpop.f32.mrb[0].mxu0
      %v881 = vpop.f32.mrb[0].mxu0
      %v882 = vadd.f32 %v737, %v881
      %v883 = vpop.f32.mrb[0].mxu0
      %884 = vmatprep.mubr.bf16.mxu0 0
      %885 = vmatmul.mubr.bf16.gmra.mrb[0].mxu0 %v513
      %v886 = vpop.f32.mrb[0].mxu0
      %v887 = vadd.f32 %v742, %v886
      %v888 = vpop.f32.mrb[0].mxu0
      %v889 = vpop.f32.mrb[0].mxu0
      %v890 = vadd.f32 %v745, %v889
      %v891 = vpop.f32.mrb[0].mxu0
      %892 = vmatprep.mubr.bf16.mxu0 0
      %893 = vmatmul.mubr.bf16.gmra.mrb[0].mxu0 %v514
      %v894 = vpop.f32.mrb[0].mxu0
      %v895 = vadd.f32 %v750, %v894
      %v896 = vpop.f32.mrb[0].mxu0
      %v897 = vpop.f32.mrb[0].mxu0
      %v898 = vadd.f32 %v753, %v897
      %v899 = vpop.f32.mrb[0].mxu0
      %900 = vmatprep.mubr.bf16.mxu0 0
      %901 = vmatmul.mubr.bf16.gmra.mrb[0].mxu0 %v515
      %v902 = vpop.f32.mrb[0].mxu0
      %v903 = vadd.f32 %v758, %v902
      %v904 = vpop.f32.mrb[0].mxu0
      %v905 = vpop.f32.mrb[0].mxu0
      %v906 = vadd.f32 %v761, %v905
      %v907 = vpop.f32.mrb[0].mxu0
      %908 = vmatprep.mubr.bf16.mxu0 0
      %909 = vmatmul.mubr.bf16.gmra.mrb[0].mxu0 %v516
      %v910 = vpop.f32.mrb[0].mxu0
      %v911 = vadd.f32 %v766, %v910
      %v912 = vpop.f32.mrb[0].mxu0
      %v913 = vpop.f32.mrb[0].mxu0
      %v914 = vadd.f32 %v769, %v913
      %v915 = vpop.f32.mrb[0].mxu0
      %916 = vdwg.mxu0
      %v917 = vld [vmem:[#allocation2] sm:$0xfe]
      %v918 = vld [vmem:[%s2 + $0x80] sm:$0xf]
      %v919 = vld [vmem:[%s2 + $0x84] sm:$0xf]
      %v920 = vld [vmem:[%s2 + $0x88] sm:$0xf]
      %v921 = vld [vmem:[%s2 + $0x8c] sm:$0xf]
      %v922 = vld [vmem:[%s2 + $0x90] sm:$0xf]
      %v923 = vld [vmem:[%s2 + $0x94] sm:$0xf]
      %v924 = vld [vmem:[%s2 + $0x98] sm:$0xf]
      %v925 = vld [vmem:[%s2 + $0x9c] sm:$0xf]
      %v926 = vld [vmem:[%s2 + $0xa0] sm:$0xf]
      %v927 = vld [vmem:[%s2 + $0xa4] sm:$0xf]
      %v928 = vld [vmem:[%s2 + $0xa8] sm:$0xf]
      %v929 = vld [vmem:[%s2 + $0xac] sm:$0xf]
      %v930 = vld [vmem:[%s2 + $0xb0] sm:$0xf]
      %v931 = vld [vmem:[%s2 + $0xb4] sm:$0xf]
      %v932 = vld [vmem:[%s2 + $0xb8] sm:$0xf]
      %v933 = vld [vmem:[%s2 + $0xbc] sm:$0xf]
      %vm943 = vcmask 1046528
      %v944 = vrot.slane %v917, 1
      %v945 = vrot.slane %v510, 1
      %v946 = vsel %vm943, %v944, %v945
      %v947 = vrot.slane %v511, 1
      %v948 = vsel %vm943, %v945, %v947
      %v949 = vrot.slane %v512, 1
      %v950 = vsel %vm943, %v947, %v949
      %v951 = vrot.slane %v513, 1
      %v952 = vsel %vm943, %v949, %v951
      %v953 = vrot.slane %v514, 1
      %v954 = vsel %vm943, %v951, %v953
      %v955 = vrot.slane %v515, 1
      %v956 = vsel %vm943, %v953, %v955
      %v957 = vrot.slane %v516, 1
      %v958 = vsel %vm943, %v955, %v957
      %v959 = vrot.slane %v533, 1
      %v960 = vsel %vm943, %v957, %v959
      %v985 = vunpack.c.l.b16 %v918
      %v986 = vunpack.c.l.b16 %v919
      %v987 = vunpack.c.l.b16 %v920
      %v988 = vunpack.c.l.b16 %v921
      %v989 = vunpack.c.l.b16 %v922
      %v990 = vunpack.c.l.b16 %v923
      %v991 = vunpack.c.l.b16 %v924
      %v992 = vunpack.c.l.b16 %v925
      %v993 = vunpack.c.l.b16 %v926
      %v994 = vunpack.c.l.b16 %v927
      %v995 = vunpack.c.l.b16 %v928
      %v996 = vunpack.c.l.b16 %v929
      %v997 = vunpack.c.l.b16 %v930
      %v998 = vunpack.c.l.b16 %v931
      %v999 = vunpack.c.l.b16 %v932
      %v1000 = vunpack.c.l.b16 %v933
      %v1001 = vpack.c.b16 %v986, %v985
      %v1002 = vpack.c.b16 %v988, %v987
      %v1003 = vpack.c.b16 %v990, %v989
      %v1004 = vpack.c.b16 %v992, %v991
      %v1005 = vpack.c.b16 %v994, %v993
      %v1006 = vpack.c.b16 %v996, %v995
      %v1007 = vpack.c.b16 %v998, %v997
      %v1008 = vpack.c.b16 %v1000, %v999
      %1017 = vmatprep.subr.bf16.mxu0 0
      %1018 = vmatpush1.bf16.msra.mxu0 %v1001
      %1019 = vmatprep.subr.bf16.mxu0 0
      %1020 = vmatpush1.bf16.msra.mxu0 %v1002
      %1021 = vmatprep.subr.bf16.mxu0 0
      %1022 = vmatpush1.bf16.msra.mxu0 %v1003
      %1023 = vmatprep.subr.bf16.mxu0 0
      %1024 = vmatpush1.bf16.msra.mxu0 %v1004
      %1025 = vmatprep.subr.bf16.mxu0 0
      %1026 = vmatpush1.bf16.msra.mxu0 %v1005
      %1027 = vmatprep.subr.bf16.mxu0 0
      %1028 = vmatpush1.bf16.msra.mxu0 %v1006
      %1029 = vmatprep.subr.bf16.mxu0 0
      %1030 = vmatpush1.bf16.msra.mxu0 %v1007
      %1031 = vmatprep.subr.bf16.mxu0 0
      %1032 = vmatpush1.bf16.msra.mxu0 %v1008
      %1033 = vmatprep.subr.bf16.mxu0 0
      %1034 = vmatpush1.bf16.msra.mxu0 0
      %1035 = vmatprep.subr.bf16.mxu0 0
      %1036 = vmatpush1.bf16.msra.mxu0 0
      %1037 = vmatprep.subr.bf16.mxu0 0
      %1038 = vmatpush1.bf16.msra.mxu0 0
      %1039 = vmatprep.subr.bf16.mxu0 0
      %1040 = vmatpush1.bf16.msra.mxu0 0
      %1041 = vmatprep.subr.bf16.mxu0 0
      %1042 = vmatpush1.bf16.msra.mxu0 0
      %1043 = vmatprep.subr.bf16.mxu0 0
      %1044 = vmatpush1.bf16.msra.mxu0 0
      %1045 = vmatprep.subr.bf16.mxu0 0
      %1046 = vmatpush1.bf16.msra.mxu0 0
      %1047 = vmatprep.subr.bf16.mxu0 0
      %1048 = vmatpush1.bf16.msra.mxu0 0
      %1049 = vmatprep.mubr.bf16.mxu0 0
      %1050 = vmatmul.mubr.bf16.gmra.mrb[0].mxu0 %v946
      %v1051 = vpop.f32.mrb[0].mxu0
      %v1052 = vadd.f32 0.0, %v1051
      %v1053 = vpop.f32.mrb[0].mxu0
      %v1054 = vpop.f32.mrb[0].mxu0
      %v1055 = vadd.f32 0.0, %v1054
      %v1056 = vpop.f32.mrb[0].mxu0
      %1057 = vmatprep.mubr.bf16.mxu0 0
      %1058 = vmatmul.mubr.bf16.gmra.mrb[0].mxu0 %v948
      %v1059 = vpop.f32.mrb[0].mxu0
      %v1060 = vadd.f32 0.0, %v1059
      %v1061 = vpop.f32.mrb[0].mxu0
      %v1062 = vpop.f32.mrb[0].mxu0
      %v1063 = vadd.f32 0.0, %v1062
      %v1064 = vpop.f32.mrb[0].mxu0
      %1065 = vmatprep.mubr.bf16.mxu0 0
      %1066 = vmatmul.mubr.bf16.gmra.mrb[0].mxu0 %v950
      %v1067 = vpop.f32.mrb[0].mxu0
      %v1068 = vadd.f32 0.0, %v1067
      %v1069 = vpop.f32.mrb[0].mxu0
      %v1070 = vpop.f32.mrb[0].mxu0
      %v1071 = vadd.f32 0.0, %v1070
      %v1072 = vpop.f32.mrb[0].mxu0
      %1073 = vmatprep.mubr.bf16.mxu0 0
      %1074 = vmatmul.mubr.bf16.gmra.mrb[0].mxu0 %v952
      %v1075 = vpop.f32.mrb[0].mxu0
      %v1076 = vadd.f32 0.0, %v1075
      %v1077 = vpop.f32.mrb[0].mxu0
      %v1078 = vpop.f32.mrb[0].mxu0
      %v1079 = vadd.f32 0.0, %v1078
      %v1080 = vpop.f32.mrb[0].mxu0
      %1081 = vmatprep.mubr.bf16.mxu0 0
      %1082 = vmatmul.mubr.bf16.gmra.mrb[0].mxu0 %v954
      %v1083 = vpop.f32.mrb[0].mxu0
      %v1084 = vadd.f32 0.0, %v1083
      %v1085 = vpop.f32.mrb[0].mxu0
      %v1086 = vpop.f32.mrb[0].mxu0
      %v1087 = vadd.f32 0.0, %v1086
      %v1088 = vpop.f32.mrb[0].mxu0
      %1089 = vmatprep.mubr.bf16.mxu0 0
      %1090 = vmatmul.mubr.bf16.gmra.mrb[0].mxu0 %v956
      %v1091 = vpop.f32.mrb[0].mxu0
      %v1092 = vadd.f32 0.0, %v1091
      %v1093 = vpop.f32.mrb[0].mxu0
      %v1094 = vpop.f32.mrb[0].mxu0
      %v1095 = vadd.f32 0.0, %v1094
      %v1096 = vpop.f32.mrb[0].mxu0
      %1097 = vmatprep.mubr.bf16.mxu0 0
      %1098 = vmatmul.mubr.bf16.gmra.mrb[0].mxu0 %v958
      %v1099 = vpop.f32.mrb[0].mxu0
      %v1100 = vadd.f32 0.0, %v1099
      %v1101 = vpop.f32.mrb[0].mxu0
      %v1102 = vpop.f32.mrb[0].mxu0
      %v1103 = vadd.f32 0.0, %v1102
      %v1104 = vpop.f32.mrb[0].mxu0
      %1105 = vmatprep.mubr.bf16.mxu0 0
      %1106 = vmatmul.mubr.bf16.gmra.mrb[0].mxu0 %v960
      %v1107 = vpop.f32.mrb[0].mxu0
      %v1108 = vadd.f32 0.0, %v1107
      %v1109 = vpop.f32.mrb[0].mxu0
      %v1110 = vpop.f32.mrb[0].mxu0
      %v1111 = vadd.f32 0.0, %v1110
      %v1112 = vpop.f32.mrb[0].mxu0
      %1113 = vdwg.mxu0
      %v1114 = vadd.f32 %v855, %v1052
      %v1115 = vadd.f32 %v858, %v1055
      %v1116 = vadd.f32 %v863, %v1060
      %v1117 = vadd.f32 %v866, %v1063
      %v1118 = vadd.f32 %v871, %v1068
      %v1119 = vadd.f32 %v874, %v1071
      %v1120 = vadd.f32 %v879, %v1076
      %v1121 = vadd.f32 %v882, %v1079
      %v1122 = vadd.f32 %v887, %v1084
      %v1123 = vadd.f32 %v890, %v1087
      %v1124 = vadd.f32 %v895, %v1092
      %v1125 = vadd.f32 %v898, %v1095
      %v1126 = vadd.f32 %v903, %v1100
      %v1127 = vadd.f32 %v906, %v1103
      %v1128 = vadd.f32 %v911, %v1108
      %v1129 = vadd.f32 %v914, %v1111
      %v1130 = vld [vmem:[#allocation2 + $0x8] sm:$0xfe]
      %v1131 = vld [vmem:[#allocation2 + $0x10] sm:$0xff]
      %v1132 = vld [vmem:[#allocation2 + $0x18] sm:$0xff]
      %v1133 = vld [vmem:[#allocation2 + $0x20] sm:$0xff]
      %v1134 = vld [vmem:[#allocation2 + $0x28] sm:$0xff]
      %v1135 = vld [vmem:[#allocation2 + $0x30] sm:$0xff]
      %v1136 = vld [vmem:[#allocation2 + $0x38] sm:$0xff]
      %v1137 = vld [vmem:[#allocation2 + $0x40] sm:$0xff]
      %v1138 = vld [vmem:[#allocation2 + $0x48] sm:$0x1]
      %v1139 = vld [vmem:[%s2 + $0xc0] sm:$0xf]
      %v1140 = vld [vmem:[%s2 + $0xc4] sm:$0xf]
      %v1141 = vld [vmem:[%s2 + $0xc8] sm:$0xf]
      %v1142 = vld [vmem:[%s2 + $0xcc] sm:$0xf]
      %v1143 = vld [vmem:[%s2 + $0xd0] sm:$0xf]
      %v1144 = vld [vmem:[%s2 + $0xd4] sm:$0xf]
      %v1145 = vld [vmem:[%s2 + $0xd8] sm:$0xf]
      %v1146 = vld [vmem:[%s2 + $0xdc] sm:$0xf]
      %v1147 = vld [vmem:[%s2 + $0xe0] sm:$0xf]
      %v1148 = vld [vmem:[%s2 + $0xe4] sm:$0xf]
      %v1149 = vld [vmem:[%s2 + $0xe8] sm:$0xf]
      %v1150 = vld [vmem:[%s2 + $0xec] sm:$0xf]
      %v1151 = vld [vmem:[%s2 + $0xf0] sm:$0xf]
      %v1152 = vld [vmem:[%s2 + $0xf4] sm:$0xf]
      %v1153 = vld [vmem:[%s2 + $0xf8] sm:$0xf]
      %v1154 = vld [vmem:[%s2 + $0xfc] sm:$0xf]
      %v1164 = vrot.slane %v1130, 1
      %v1165 = vrot.slane %v1131, 1
      %v1166 = vsel %vm943, %v1164, %v1165
      %v1167 = vrot.slane %v1132, 1
      %v1168 = vsel %vm943, %v1165, %v1167
      %v1169 = vrot.slane %v1133, 1
      %v1170 = vsel %vm943, %v1167, %v1169
      %v1171 = vrot.slane %v1134, 1
      %v1172 = vsel %vm943, %v1169, %v1171
      %v1173 = vrot.slane %v1135, 1
      %v1174 = vsel %vm943, %v1171, %v1173
      %v1175 = vrot.slane %v1136, 1
      %v1176 = vsel %vm943, %v1173, %v1175
      %v1177 = vrot.slane %v1137, 1
      %v1178 = vsel %vm943, %v1175, %v1177
      %v1179 = vrot.slane %v1138, 1
      %v1180 = vsel %vm943, %v1177, %v1179
      %v1205 = vunpack.c.l.b16 %v1139
      %v1206 = vunpack.c.l.b16 %v1140
      %v1207 = vunpack.c.l.b16 %v1141
      %v1208 = vunpack.c.l.b16 %v1142
      %v1209 = vunpack.c.l.b16 %v1143
      %v1210 = vunpack.c.l.b16 %v1144
      %v1211 = vunpack.c.l.b16 %v1145
      %v1212 = vunpack.c.l.b16 %v1146
      %v1213 = vunpack.c.l.b16 %v1147
      %v1214 = vunpack.c.l.b16 %v1148
      %v1215 = vunpack.c.l.b16 %v1149
      %v1216 = vunpack.c.l.b16 %v1150
      %v1217 = vunpack.c.l.b16 %v1151
      %v1218 = vunpack.c.l.b16 %v1152
      %v1219 = vunpack.c.l.b16 %v1153
      %v1220 = vunpack.c.l.b16 %v1154
      %v1221 = vpack.c.b16 %v1206, %v1205
      %v1222 = vpack.c.b16 %v1208, %v1207
      %v1223 = vpack.c.b16 %v1210, %v1209
      %v1224 = vpack.c.b16 %v1212, %v1211
      %v1225 = vpack.c.b16 %v1214, %v1213
      %v1226 = vpack.c.b16 %v1216, %v1215
      %v1227 = vpack.c.b16 %v1218, %v1217
      %v1228 = vpack.c.b16 %v1220, %v1219
      %1237 = vmatprep.subr.bf16.mxu0 0
      %1238 = vmatpush1.bf16.msra.mxu0 %v1221
      %1239 = vmatprep.subr.bf16.mxu0 0
      %1240 = vmatpush1.bf16.msra.mxu0 %v1222
      %1241 = vmatprep.subr.bf16.mxu0 0
      %1242 = vmatpush1.bf16.msra.mxu0 %v1223
      %1243 = vmatprep.subr.bf16.mxu0 0
      %1244 = vmatpush1.bf16.msra.mxu0 %v1224
      %1245 = vmatprep.subr.bf16.mxu0 0
      %1246 = vmatpush1.bf16.msra.mxu0 %v1225
      %1247 = vmatprep.subr.bf16.mxu0 0
      %1248 = vmatpush1.bf16.msra.mxu0 %v1226
      %1249 = vmatprep.subr.bf16.mxu0 0
      %1250 = vmatpush1.bf16.msra.mxu0 %v1227
      %1251 = vmatprep.subr.bf16.mxu0 0
      %1252 = vmatpush1.bf16.msra.mxu0 %v1228
      %1253 = vmatprep.subr.bf16.mxu0 0
      %1254 = vmatpush1.bf16.msra.mxu0 0
      %1255 = vmatprep.subr.bf16.mxu0 0
      %1256 = vmatpush1.bf16.msra.mxu0 0
      %1257 = vmatprep.subr.bf16.mxu0 0
      %1258 = vmatpush1.bf16.msra.mxu0 0
      %1259 = vmatprep.subr.bf16.mxu0 0
      %1260 = vmatpush1.bf16.msra.mxu0 0
      %1261 = vmatprep.subr.bf16.mxu0 0
      %1262 = vmatpush1.bf16.msra.mxu0 0
      %1263 = vmatprep.subr.bf16.mxu0 0
      %1264 = vmatpush1.bf16.msra.mxu0 0
      %1265 = vmatprep.subr.bf16.mxu0 0
      %1266 = vmatpush1.bf16.msra.mxu0 0
      %1267 = vmatprep.subr.bf16.mxu0 0
      %1268 = vmatpush1.bf16.msra.mxu0 0
      %1269 = vmatprep.mubr.bf16.mxu0 0
      %1270 = vmatmul.mubr.bf16.gmra.mrb[0].mxu0 %v1166
      %v1271 = vpop.f32.mrb[0].mxu0
      %v1272 = vadd.f32 0.0, %v1271
      %v1273 = vpop.f32.mrb[0].mxu0
      %v1274 = vpop.f32.mrb[0].mxu0
      %v1275 = vadd.f32 0.0, %v1274
      %v1276 = vpop.f32.mrb[0].mxu0
      %1277 = vmatprep.mubr.bf16.mxu0 0
      %1278 = vmatmul.mubr.bf16.gmra.mrb[0].mxu0 %v1168
      %v1279 = vpop.f32.mrb[0].mxu0
      %v1280 = vadd.f32 0.0, %v1279
      %v1281 = vpop.f32.mrb[0].mxu0
      %v1282 = vpop.f32.mrb[0].mxu0
      %v1283 = vadd.f32 0.0, %v1282
      %v1284 = vpop.f32.mrb[0].mxu0
      %1285 = vmatprep.mubr.bf16.mxu0 0
      %1286 = vmatmul.mubr.bf16.gmra.mrb[0].mxu0 %v1170
      %v1287 = vpop.f32.mrb[0].mxu0
      %v1288 = vadd.f32 0.0, %v1287
      %v1289 = vpop.f32.mrb[0].mxu0
      %v1290 = vpop.f32.mrb[0].mxu0
      %v1291 = vadd.f32 0.0, %v1290
      %v1292 = vpop.f32.mrb[0].mxu0
      %1293 = vmatprep.mubr.bf16.mxu0 0
      %1294 = vmatmul.mubr.bf16.gmra.mrb[0].mxu0 %v1172
      %v1295 = vpop.f32.mrb[0].mxu0
      %v1296 = vadd.f32 0.0, %v1295
      %v1297 = vpop.f32.mrb[0].mxu0
      %v1298 = vpop.f32.mrb[0].mxu0
      %v1299 = vadd.f32 0.0, %v1298
      %v1300 = vpop.f32.mrb[0].mxu0
      %1301 = vmatprep.mubr.bf16.mxu0 0
      %1302 = vmatmul.mubr.bf16.gmra.mrb[0].mxu0 %v1174
      %v1303 = vpop.f32.mrb[0].mxu0
      %v1304 = vadd.f32 0.0, %v1303
      %v1305 = vpop.f32.mrb[0].mxu0
      %v1306 = vpop.f32.mrb[0].mxu0
      %v1307 = vadd.f32 0.0, %v1306
      %v1308 = vpop.f32.mrb[0].mxu0
      %1309 = vmatprep.mubr.bf16.mxu0 0
      %1310 = vmatmul.mubr.bf16.gmra.mrb[0].mxu0 %v1176
      %v1311 = vpop.f32.mrb[0].mxu0
      %v1312 = vadd.f32 0.0, %v1311
      %v1313 = vpop.f32.mrb[0].mxu0
      %v1314 = vpop.f32.mrb[0].mxu0
      %v1315 = vadd.f32 0.0, %v1314
      %v1316 = vpop.f32.mrb[0].mxu0
      %1317 = vmatprep.mubr.bf16.mxu0 0
      %1318 = vmatmul.mubr.bf16.gmra.mrb[0].mxu0 %v1178
      %v1319 = vpop.f32.mrb[0].mxu0
      %v1320 = vadd.f32 0.0, %v1319
      %v1321 = vpop.f32.mrb[0].mxu0
      %v1322 = vpop.f32.mrb[0].mxu0
      %v1323 = vadd.f32 0.0, %v1322
      %v1324 = vpop.f32.mrb[0].mxu0
      %1325 = vmatprep.mubr.bf16.mxu0 0
      %1326 = vmatmul.mubr.bf16.gmra.mrb[0].mxu0 %v1180
      %v1327 = vpop.f32.mrb[0].mxu0
      %v1328 = vadd.f32 0.0, %v1327
      %v1329 = vpop.f32.mrb[0].mxu0
      %v1330 = vpop.f32.mrb[0].mxu0
      %v1331 = vadd.f32 0.0, %v1330
      %v1332 = vpop.f32.mrb[0].mxu0
      %1333 = vdwg.mxu0
      %v1334 = vadd.f32 %v1114, %v1272
      %v1335 = vadd.f32 %v1115, %v1275
      %v1336 = vadd.f32 %v1116, %v1280
      %v1337 = vadd.f32 %v1117, %v1283
      %v1338 = vadd.f32 %v1118, %v1288
      %v1339 = vadd.f32 %v1119, %v1291
      %v1340 = vadd.f32 %v1120, %v1296
      %v1341 = vadd.f32 %v1121, %v1299
      %v1342 = vadd.f32 %v1122, %v1304
      %v1343 = vadd.f32 %v1123, %v1307
      %v1344 = vadd.f32 %v1124, %v1312
      %v1345 = vadd.f32 %v1125, %v1315
      %v1346 = vadd.f32 %v1126, %v1320
      %v1347 = vadd.f32 %v1127, %v1323
      %v1348 = vadd.f32 %v1128, %v1328
      %v1349 = vadd.f32 %v1129, %v1331
      %v1350 = vld [vmem:[#allocation2 + $0x48] sm:$0x3]
      %v1351 = vld [vmem:[%s2 + $0x100] sm:$0xf]
      %v1352 = vld [vmem:[%s2 + $0x104] sm:$0xf]
      %v1353 = vld [vmem:[%s2 + $0x108] sm:$0xf]
      %v1354 = vld [vmem:[%s2 + $0x10c] sm:$0xf]
      %v1355 = vld [vmem:[%s2 + $0x110] sm:$0xf]
      %v1356 = vld [vmem:[%s2 + $0x114] sm:$0xf]
      %v1357 = vld [vmem:[%s2 + $0x118] sm:$0xf]
      %v1358 = vld [vmem:[%s2 + $0x11c] sm:$0xf]
      %v1359 = vld [vmem:[%s2 + $0x120] sm:$0xf]
      %v1360 = vld [vmem:[%s2 + $0x124] sm:$0xf]
      %v1361 = vld [vmem:[%s2 + $0x128] sm:$0xf]
      %v1362 = vld [vmem:[%s2 + $0x12c] sm:$0xf]
      %v1363 = vld [vmem:[%s2 + $0x130] sm:$0xf]
      %v1364 = vld [vmem:[%s2 + $0x134] sm:$0xf]
      %v1365 = vld [vmem:[%s2 + $0x138] sm:$0xf]
      %v1366 = vld [vmem:[%s2 + $0x13c] sm:$0xf]
      %vm1367 = vsmask.f32 6400
      %v1369 = vshrl.u32 %v1130, 16
      %v1371 = vrot.slane %v1369, 1
      %v1372 = vshll.u32 %v1130, 16
      %v1374 = vrot.slane %v1372, 2
      %v1375 = vor.u32 %v1371, %v1374
      %v1377 = vshrl.u32 %v1131, 16
      %v1379 = vrot.slane %v1377, 1
      %v1380 = vshll.u32 %v1131, 16
      %v1382 = vrot.slane %v1380, 2
      %v1383 = vor.u32 %v1379, %v1382
      %v1384 = vsel %vm1367, %v1375, %v1383
      %v1386 = vshrl.u32 %v1132, 16
      %v1388 = vrot.slane %v1386, 1
      %v1389 = vshll.u32 %v1132, 16
      %v1391 = vrot.slane %v1389, 2
      %v1392 = vor.u32 %v1388, %v1391
      %v1393 = vsel %vm1367, %v1383, %v1392
      %v1395 = vshrl.u32 %v1133, 16
      %v1397 = vrot.slane %v1395, 1
      %v1398 = vshll.u32 %v1133, 16
      %v1400 = vrot.slane %v1398, 2
      %v1401 = vor.u32 %v1397, %v1400
      %v1402 = vsel %vm1367, %v1392, %v1401
      %v1404 = vshrl.u32 %v1134, 16
      %v1406 = vrot.slane %v1404, 1
      %v1407 = vshll.u32 %v1134, 16
      %v1409 = vrot.slane %v1407, 2
      %v1410 = vor.u32 %v1406, %v1409
      %v1411 = vsel %vm1367, %v1401, %v1410
      %v1413 = vshrl.u32 %v1135, 16
      %v1415 = vrot.slane %v1413, 1
      %v1416 = vshll.u32 %v1135, 16
      %v1418 = vrot.slane %v1416, 2
      %v1419 = vor.u32 %v1415, %v1418
      %v1420 = vsel %vm1367, %v1410, %v1419
      %v1422 = vshrl.u32 %v1136, 16
      %v1424 = vrot.slane %v1422, 1
      %v1425 = vshll.u32 %v1136, 16
      %v1427 = vrot.slane %v1425, 2
      %v1428 = vor.u32 %v1424, %v1427
      %v1429 = vsel %vm1367, %v1419, %v1428
      %v1431 = vshrl.u32 %v1137, 16
      %v1433 = vrot.slane %v1431, 1
      %v1434 = vshll.u32 %v1137, 16
      %v1436 = vrot.slane %v1434, 2
      %v1437 = vor.u32 %v1433, %v1436
      %v1438 = vsel %vm1367, %v1428, %v1437
      %v1440 = vshrl.u32 %v1350, 16
      %v1442 = vrot.slane %v1440, 1
      %v1443 = vshll.u32 %v1350, 16
      %v1445 = vrot.slane %v1443, 2
      %v1446 = vor.u32 %v1442, %v1445
      %v1447 = vsel %vm1367, %v1437, %v1446
      %v1472 = vunpack.c.l.b16 %v1351
      %v1473 = vunpack.c.l.b16 %v1352
      %v1474 = vunpack.c.l.b16 %v1353
      %v1475 = vunpack.c.l.b16 %v1354
      %v1476 = vunpack.c.l.b16 %v1355
      %v1477 = vunpack.c.l.b16 %v1356
      %v1478 = vunpack.c.l.b16 %v1357
      %v1479 = vunpack.c.l.b16 %v1358
      %v1480 = vunpack.c.l.b16 %v1359
      %v1481 = vunpack.c.l.b16 %v1360
      %v1482 = vunpack.c.l.b16 %v1361
      %v1483 = vunpack.c.l.b16 %v1362
      %v1484 = vunpack.c.l.b16 %v1363
      %v1485 = vunpack.c.l.b16 %v1364
      %v1486 = vunpack.c.l.b16 %v1365
      %v1487 = vunpack.c.l.b16 %v1366
      %v1488 = vpack.c.b16 %v1473, %v1472
      %v1489 = vpack.c.b16 %v1475, %v1474
      %v1490 = vpack.c.b16 %v1477, %v1476
      %v1491 = vpack.c.b16 %v1479, %v1478
      %v1492 = vpack.c.b16 %v1481, %v1480
      %v1493 = vpack.c.b16 %v1483, %v1482
      %v1494 = vpack.c.b16 %v1485, %v1484
      %v1495 = vpack.c.b16 %v1487, %v1486
      %1504 = vmatprep.subr.bf16.mxu0 0
      %1505 = vmatpush1.bf16.msra.mxu0 %v1488
      %1506 = vmatprep.subr.bf16.mxu0 0
      %1507 = vmatpush1.bf16.msra.mxu0 %v1489
      %1508 = vmatprep.subr.bf16.mxu0 0
      %1509 = vmatpush1.bf16.msra.mxu0 %v1490
      %1510 = vmatprep.subr.bf16.mxu0 0
      %1511 = vmatpush1.bf16.msra.mxu0 %v1491
      %1512 = vmatprep.subr.bf16.mxu0 0
      %1513 = vmatpush1.bf16.msra.mxu0 %v1492
      %1514 = vmatprep.subr.bf16.mxu0 0
      %1515 = vmatpush1.bf16.msra.mxu0 %v1493
      %1516 = vmatprep.subr.bf16.mxu0 0
      %1517 = vmatpush1.bf16.msra.mxu0 %v1494
      %1518 = vmatprep.subr.bf16.mxu0 0
      %1519 = vmatpush1.bf16.msra.mxu0 %v1495
      %1520 = vmatprep.subr.bf16.mxu0 0
      %1521 = vmatpush1.bf16.msra.mxu0 0
      %1522 = vmatprep.subr.bf16.mxu0 0
      %1523 = vmatpush1.bf16.msra.mxu0 0
      %1524 = vmatprep.subr.bf16.mxu0 0
      %1525 = vmatpush1.bf16.msra.mxu0 0
      %1526 = vmatprep.subr.bf16.mxu0 0
      %1527 = vmatpush1.bf16.msra.mxu0 0
      %1528 = vmatprep.subr.bf16.mxu0 0
      %1529 = vmatpush1.bf16.msra.mxu0 0
      %1530 = vmatprep.subr.bf16.mxu0 0
      %1531 = vmatpush1.bf16.msra.mxu0 0
      %1532 = vmatprep.subr.bf16.mxu0 0
      %1533 = vmatpush1.bf16.msra.mxu0 0
      %1534 = vmatprep.subr.bf16.mxu0 0
      %1535 = vmatpush1.bf16.msra.mxu0 0
      %1536 = vmatprep.mubr.bf16.mxu0 0
      %1537 = vmatmul.mubr.bf16.gmra.mrb[0].mxu0 %v1384
      %v1538 = vpop.f32.mrb[0].mxu0
      %v1539 = vadd.f32 0.0, %v1538
      %v1540 = vpop.f32.mrb[0].mxu0
      %v1541 = vpop.f32.mrb[0].mxu0
      %v1542 = vadd.f32 0.0, %v1541
      %v1543 = vpop.f32.mrb[0].mxu0
      %1544 = vmatprep.mubr.bf16.mxu0 0
      %1545 = vmatmul.mubr.bf16.gmra.mrb[0].mxu0 %v1393
      %v1546 = vpop.f32.mrb[0].mxu0
      %v1547 = vadd.f32 0.0, %v1546
      %v1548 = vpop.f32.mrb[0].mxu0
      %v1549 = vpop.f32.mrb[0].mxu0
      %v1550 = vadd.f32 0.0, %v1549
      %v1551 = vpop.f32.mrb[0].mxu0
      %1552 = vmatprep.mubr.bf16.mxu0 0
      %1553 = vmatmul.mubr.bf16.gmra.mrb[0].mxu0 %v1402
      %v1554 = vpop.f32.mrb[0].mxu0
      %v1555 = vadd.f32 0.0, %v1554
      %v1556 = vpop.f32.mrb[0].mxu0
      %v1557 = vpop.f32.mrb[0].mxu0
      %v1558 = vadd.f32 0.0, %v1557
      %v1559 = vpop.f32.mrb[0].mxu0
      %1560 = vmatprep.mubr.bf16.mxu0 0
      %1561 = vmatmul.mubr.bf16.gmra.mrb[0].mxu0 %v1411
      %v1562 = vpop.f32.mrb[0].mxu0
      %v1563 = vadd.f32 0.0, %v1562
      %v1564 = vpop.f32.mrb[0].mxu0
      %v1565 = vpop.f32.mrb[0].mxu0
      %v1566 = vadd.f32 0.0, %v1565
      %v1567 = vpop.f32.mrb[0].mxu0
      %1568 = vmatprep.mubr.bf16.mxu0 0
      %1569 = vmatmul.mubr.bf16.gmra.mrb[0].mxu0 %v1420
      %v1570 = vpop.f32.mrb[0].mxu0
      %v1571 = vadd.f32 0.0, %v1570
      %v1572 = vpop.f32.mrb[0].mxu0
      %v1573 = vpop.f32.mrb[0].mxu0
      %v1574 = vadd.f32 0.0, %v1573
      %v1575 = vpop.f32.mrb[0].mxu0
      %1576 = vmatprep.mubr.bf16.mxu0 0
      %1577 = vmatmul.mubr.bf16.gmra.mrb[0].mxu0 %v1429
      %v1578 = vpop.f32.mrb[0].mxu0
      %v1579 = vadd.f32 0.0, %v1578
      %v1580 = vpop.f32.mrb[0].mxu0
      %v1581 = vpop.f32.mrb[0].mxu0
      %v1582 = vadd.f32 0.0, %v1581
      %v1583 = vpop.f32.mrb[0].mxu0
      %1584 = vmatprep.mubr.bf16.mxu0 0
      %1585 = vmatmul.mubr.bf16.gmra.mrb[0].mxu0 %v1438
      %v1586 = vpop.f32.mrb[0].mxu0
      %v1587 = vadd.f32 0.0, %v1586
      %v1588 = vpop.f32.mrb[0].mxu0
      %v1589 = vpop.f32.mrb[0].mxu0
      %v1590 = vadd.f32 0.0, %v1589
      %v1591 = vpop.f32.mrb[0].mxu0
      %1592 = vmatprep.mubr.bf16.mxu0 0
      %1593 = vmatmul.mubr.bf16.gmra.mrb[0].mxu0 %v1447
      %v1594 = vpop.f32.mrb[0].mxu0
      %v1595 = vadd.f32 0.0, %v1594
      %v1596 = vpop.f32.mrb[0].mxu0
      %v1597 = vpop.f32.mrb[0].mxu0
      %v1598 = vadd.f32 0.0, %v1597
      %v1599 = vpop.f32.mrb[0].mxu0
      %1600 = vdwg.mxu0
      %v1601 = vadd.f32 %v1334, %v1539
      %v1602 = vadd.f32 %v1335, %v1542
      %v1603 = vadd.f32 %v1336, %v1547
      %v1604 = vadd.f32 %v1337, %v1550
      %v1605 = vadd.f32 %v1338, %v1555
      %v1606 = vadd.f32 %v1339, %v1558
      %v1607 = vadd.f32 %v1340, %v1563
      %v1608 = vadd.f32 %v1341, %v1566
      %v1609 = vadd.f32 %v1342, %v1571
      %v1610 = vadd.f32 %v1343, %v1574
      %v1611 = vadd.f32 %v1344, %v1579
      %v1612 = vadd.f32 %v1345, %v1582
      %v1613 = vadd.f32 %v1346, %v1587
      %v1614 = vadd.f32 %v1347, %v1590
      %v1615 = vadd.f32 %v1348, %v1595
      %v1616 = vadd.f32 %v1349, %v1598
      %v1617 = vld [vmem:[#allocation2 + $0x8] sm:$0xfc]
      %v1618 = vld [vmem:[%s2 + $0x140] sm:$0xf]
      %v1619 = vld [vmem:[%s2 + $0x144] sm:$0xf]
      %v1620 = vld [vmem:[%s2 + $0x148] sm:$0xf]
      %v1621 = vld [vmem:[%s2 + $0x14c] sm:$0xf]
      %v1622 = vld [vmem:[%s2 + $0x150] sm:$0xf]
      %v1623 = vld [vmem:[%s2 + $0x154] sm:$0xf]
      %v1624 = vld [vmem:[%s2 + $0x158] sm:$0xf]
      %v1625 = vld [vmem:[%s2 + $0x15c] sm:$0xf]
      %v1626 = vld [vmem:[%s2 + $0x160] sm:$0xf]
      %v1627 = vld [vmem:[%s2 + $0x164] sm:$0xf]
      %v1628 = vld [vmem:[%s2 + $0x168] sm:$0xf]
      %v1629 = vld [vmem:[%s2 + $0x16c] sm:$0xf]
      %v1630 = vld [vmem:[%s2 + $0x170] sm:$0xf]
      %v1631 = vld [vmem:[%s2 + $0x174] sm:$0xf]
      %v1632 = vld [vmem:[%s2 + $0x178] sm:$0xf]
      %v1633 = vld [vmem:[%s2 + $0x17c] sm:$0xf]
      %vm1636 = vcmask 1045504
      %v1637 = vrot.slane %v1617, 2
      %v1638 = vrot.slane %v1131, 2
      %v1639 = vsel %vm1636, %v1637, %v1638
      %v1640 = vrot.slane %v1132, 2
      %v1641 = vsel %vm1636, %v1638, %v1640
      %v1642 = vrot.slane %v1133, 2
      %v1643 = vsel %vm1636, %v1640, %v1642
      %v1644 = vrot.slane %v1134, 2
      %v1645 = vsel %vm1636, %v1642, %v1644
      %v1646 = vrot.slane %v1135, 2
      %v1647 = vsel %vm1636, %v1644, %v1646
      %v1648 = vrot.slane %v1136, 2
      %v1649 = vsel %vm1636, %v1646, %v1648
      %v1650 = vrot.slane %v1137, 2
      %v1651 = vsel %vm1636, %v1648, %v1650
      %v1652 = vrot.slane %v1350, 2
      %v1653 = vsel %vm1636, %v1650, %v1652
      %v1678 = vunpack.c.l.b16 %v1618
      %v1679 = vunpack.c.l.b16 %v1619
      %v1680 = vunpack.c.l.b16 %v1620
      %v1681 = vunpack.c.l.b16 %v1621
      %v1682 = vunpack.c.l.b16 %v1622
      %v1683 = vunpack.c.l.b16 %v1623
      %v1684 = vunpack.c.l.b16 %v1624
      %v1685 = vunpack.c.l.b16 %v1625
      %v1686 = vunpack.c.l.b16 %v1626
      %v1687 = vunpack.c.l.b16 %v1627
      %v1688 = vunpack.c.l.b16 %v1628
      %v1689 = vunpack.c.l.b16 %v1629
      %v1690 = vunpack.c.l.b16 %v1630
      %v1691 = vunpack.c.l.b16 %v1631
      %v1692 = vunpack.c.l.b16 %v1632
      %v1693 = vunpack.c.l.b16 %v1633
      %v1694 = vpack.c.b16 %v1679, %v1678
      %v1695 = vpack.c.b16 %v1681, %v1680
      %v1696 = vpack.c.b16 %v1683, %v1682
      %v1697 = vpack.c.b16 %v1685, %v1684
      %v1698 = vpack.c.b16 %v1687, %v1686
      %v1699 = vpack.c.b16 %v1689, %v1688
      %v1700 = vpack.c.b16 %v1691, %v1690
      %v1701 = vpack.c.b16 %v1693, %v1692
      %1710 = vmatprep.subr.bf16.mxu0 0
      %1711 = vmatpush1.bf16.msra.mxu0 %v1694
      %1712 = vmatprep.subr.bf16.mxu0 0
      %1713 = vmatpush1.bf16.msra.mxu0 %v1695
      %1714 = vmatprep.subr.bf16.mxu0 0
      %1715 = vmatpush1.bf16.msra.mxu0 %v1696
      %1716 = vmatprep.subr.bf16.mxu0 0
      %1717 = vmatpush1.bf16.msra.mxu0 %v1697
      %1718 = vmatprep.subr.bf16.mxu0 0
      %1719 = vmatpush1.bf16.msra.mxu0 %v1698
      %1720 = vmatprep.subr.bf16.mxu0 0
      %1721 = vmatpush1.bf16.msra.mxu0 %v1699
      %1722 = vmatprep.subr.bf16.mxu0 0
      %1723 = vmatpush1.bf16.msra.mxu0 %v1700
      %1724 = vmatprep.subr.bf16.mxu0 0
      %1725 = vmatpush1.bf16.msra.mxu0 %v1701
      %1726 = vmatprep.subr.bf16.mxu0 0
      %1727 = vmatpush1.bf16.msra.mxu0 0
      %1728 = vmatprep.subr.bf16.mxu0 0
      %1729 = vmatpush1.bf16.msra.mxu0 0
      %1730 = vmatprep.subr.bf16.mxu0 0
      %1731 = vmatpush1.bf16.msra.mxu0 0
      %1732 = vmatprep.subr.bf16.mxu0 0
      %1733 = vmatpush1.bf16.msra.mxu0 0
      %1734 = vmatprep.subr.bf16.mxu0 0
      %1735 = vmatpush1.bf16.msra.mxu0 0
      %1736 = vmatprep.subr.bf16.mxu0 0
      %1737 = vmatpush1.bf16.msra.mxu0 0
      %1738 = vmatprep.subr.bf16.mxu0 0
      %1739 = vmatpush1.bf16.msra.mxu0 0
      %1740 = vmatprep.subr.bf16.mxu0 0
      %1741 = vmatpush1.bf16.msra.mxu0 0
      %1742 = vmatprep.mubr.bf16.mxu0 0
      %1743 = vmatmul.mubr.bf16.gmra.mrb[0].mxu0 %v1639
      %v1744 = vpop.f32.mrb[0].mxu0
      %v1745 = vadd.f32 0.0, %v1744
      %v1746 = vpop.f32.mrb[0].mxu0
      %v1747 = vpop.f32.mrb[0].mxu0
      %v1748 = vadd.f32 0.0, %v1747
      %v1749 = vpop.f32.mrb[0].mxu0
      %1750 = vmatprep.mubr.bf16.mxu0 0
      %1751 = vmatmul.mubr.bf16.gmra.mrb[0].mxu0 %v1641
      %v1752 = vpop.f32.mrb[0].mxu0
      %v1753 = vadd.f32 0.0, %v1752
      %v1754 = vpop.f32.mrb[0].mxu0
      %v1755 = vpop.f32.mrb[0].mxu0
      %v1756 = vadd.f32 0.0, %v1755
      %v1757 = vpop.f32.mrb[0].mxu0
      %1758 = vmatprep.mubr.bf16.mxu0 0
      %1759 = vmatmul.mubr.bf16.gmra.mrb[0].mxu0 %v1643
      %v1760 = vpop.f32.mrb[0].mxu0
      %v1761 = vadd.f32 0.0, %v1760
      %v1762 = vpop.f32.mrb[0].mxu0
      %v1763 = vpop.f32.mrb[0].mxu0
      %v1764 = vadd.f32 0.0, %v1763
      %v1765 = vpop.f32.mrb[0].mxu0
      %1766 = vmatprep.mubr.bf16.mxu0 0
      %1767 = vmatmul.mubr.bf16.gmra.mrb[0].mxu0 %v1645
      %v1768 = vpop.f32.mrb[0].mxu0
      %v1769 = vadd.f32 0.0, %v1768
      %v1770 = vpop.f32.mrb[0].mxu0
      %v1771 = vpop.f32.mrb[0].mxu0
      %v1772 = vadd.f32 0.0, %v1771
      %v1773 = vpop.f32.mrb[0].mxu0
      %1774 = vmatprep.mubr.bf16.mxu0 0
      %1775 = vmatmul.mubr.bf16.gmra.mrb[0].mxu0 %v1647
      %v1776 = vpop.f32.mrb[0].mxu0
      %v1777 = vadd.f32 0.0, %v1776
      %v1778 = vpop.f32.mrb[0].mxu0
      %v1779 = vpop.f32.mrb[0].mxu0
      %v1780 = vadd.f32 0.0, %v1779
      %v1781 = vpop.f32.mrb[0].mxu0
      %1782 = vmatprep.mubr.bf16.mxu0 0
      %1783 = vmatmul.mubr.bf16.gmra.mrb[0].mxu0 %v1649
      %v1784 = vpop.f32.mrb[0].mxu0
      %v1785 = vadd.f32 0.0, %v1784
      %v1786 = vpop.f32.mrb[0].mxu0
      %v1787 = vpop.f32.mrb[0].mxu0
      %v1788 = vadd.f32 0.0, %v1787
      %v1789 = vpop.f32.mrb[0].mxu0
      %1790 = vmatprep.mubr.bf16.mxu0 0
      %1791 = vmatmul.mubr.bf16.gmra.mrb[0].mxu0 %v1651
      %v1792 = vpop.f32.mrb[0].mxu0
      %v1793 = vadd.f32 0.0, %v1792
      %v1794 = vpop.f32.mrb[0].mxu0
      %v1795 = vpop.f32.mrb[0].mxu0
      %v1796 = vadd.f32 0.0, %v1795
      %v1797 = vpop.f32.mrb[0].mxu0
      %1798 = vmatprep.mubr.bf16.mxu0 0
      %1799 = vmatmul.mubr.bf16.gmra.mrb[0].mxu0 %v1653
      %v1800 = vpop.f32.mrb[0].mxu0
      %v1801 = vadd.f32 0.0, %v1800
      %v1802 = vpop.f32.mrb[0].mxu0
      %v1803 = vpop.f32.mrb[0].mxu0
      %v1804 = vadd.f32 0.0, %v1803
      %v1805 = vpop.f32.mrb[0].mxu0
      %1806 = vdwg.mxu0
      %v1807 = vadd.f32 %v1601, %v1745
      %v1808 = vadd.f32 %v1602, %v1748
      %v1809 = vadd.f32 %v1603, %v1753
      %v1810 = vadd.f32 %v1604, %v1756
      %v1811 = vadd.f32 %v1605, %v1761
      %v1812 = vadd.f32 %v1606, %v1764
      %v1813 = vadd.f32 %v1607, %v1769
      %v1814 = vadd.f32 %v1608, %v1772
      %v1815 = vadd.f32 %v1609, %v1777
      %v1816 = vadd.f32 %v1610, %v1780
      %v1817 = vadd.f32 %v1611, %v1785
      %v1818 = vadd.f32 %v1612, %v1788
      %v1819 = vadd.f32 %v1613, %v1793
      %v1820 = vadd.f32 %v1614, %v1796
      %v1821 = vadd.f32 %v1615, %v1801
      %v1822 = vadd.f32 %v1616, %v1804
      %v1823 = vld [vmem:[#allocation2 + $0x10] sm:$0xfc]
      %v1824 = vld [vmem:[#allocation2 + $0x18] sm:$0xff]
      %v1825 = vld [vmem:[#allocation2 + $0x20] sm:$0xff]
      %v1826 = vld [vmem:[#allocation2 + $0x28] sm:$0xff]
      %v1827 = vld [vmem:[#allocation2 + $0x30] sm:$0xff]
      %v1828 = vld [vmem:[#allocation2 + $0x38] sm:$0xff]
      %v1829 = vld [vmem:[#allocation2 + $0x40] sm:$0xff]
      %v1830 = vld [vmem:[#allocation2 + $0x48] sm:$0xff]
      %v1831 = vld [vmem:[#allocation2 + $0x50] sm:$0x3]
      %v1832 = vld [vmem:[%s2 + $0x180] sm:$0xf]
      %v1833 = vld [vmem:[%s2 + $0x184] sm:$0xf]
      %v1834 = vld [vmem:[%s2 + $0x188] sm:$0xf]
      %v1835 = vld [vmem:[%s2 + $0x18c] sm:$0xf]
      %v1836 = vld [vmem:[%s2 + $0x190] sm:$0xf]
      %v1837 = vld [vmem:[%s2 + $0x194] sm:$0xf]
      %v1838 = vld [vmem:[%s2 + $0x198] sm:$0xf]
      %v1839 = vld [vmem:[%s2 + $0x19c] sm:$0xf]
      %v1840 = vld [vmem:[%s2 + $0x1a0] sm:$0xf]
      %v1841 = vld [vmem:[%s2 + $0x1a4] sm:$0xf]
      %v1842 = vld [vmem:[%s2 + $0x1a8] sm:$0xf]
      %v1843 = vld [vmem:[%s2 + $0x1ac] sm:$0xf]
      %v1844 = vld [vmem:[%s2 + $0x1b0] sm:$0xf]
      %v1845 = vld [vmem:[%s2 + $0x1b4] sm:$0xf]
      %v1846 = vld [vmem:[%s2 + $0x1b8] sm:$0xf]
      %v1847 = vld [vmem:[%s2 + $0x1bc] sm:$0xf]
      %v1857 = vrot.slane %v1823, 2
      %v1858 = vrot.slane %v1824, 2
      %v1859 = vsel %vm1636, %v1857, %v1858
      %v1860 = vrot.slane %v1825, 2
      %v1861 = vsel %vm1636, %v1858, %v1860
      %v1862 = vrot.slane %v1826, 2
      %v1863 = vsel %vm1636, %v1860, %v1862
      %v1864 = vrot.slane %v1827, 2
      %v1865 = vsel %vm1636, %v1862, %v1864
      %v1866 = vrot.slane %v1828, 2
      %v1867 = vsel %vm1636, %v1864, %v1866
      %v1868 = vrot.slane %v1829, 2
      %v1869 = vsel %vm1636, %v1866, %v1868
      %v1870 = vrot.slane %v1830, 2
      %v1871 = vsel %vm1636, %v1868, %v1870
      %v1872 = vrot.slane %v1831, 2
      %v1873 = vsel %vm1636, %v1870, %v1872
      %v1898 = vunpack.c.l.b16 %v1832
      %v1899 = vunpack.c.l.b16 %v1833
      %v1900 = vunpack.c.l.b16 %v1834
      %v1901 = vunpack.c.l.b16 %v1835
      %v1902 = vunpack.c.l.b16 %v1836
      %v1903 = vunpack.c.l.b16 %v1837
      %v1904 = vunpack.c.l.b16 %v1838
      %v1905 = vunpack.c.l.b16 %v1839
      %v1906 = vunpack.c.l.b16 %v1840
      %v1907 = vunpack.c.l.b16 %v1841
      %v1908 = vunpack.c.l.b16 %v1842
      %v1909 = vunpack.c.l.b16 %v1843
      %v1910 = vunpack.c.l.b16 %v1844
      %v1911 = vunpack.c.l.b16 %v1845
      %v1912 = vunpack.c.l.b16 %v1846
      %v1913 = vunpack.c.l.b16 %v1847
      %v1914 = vpack.c.b16 %v1899, %v1898
      %v1915 = vpack.c.b16 %v1901, %v1900
      %v1916 = vpack.c.b16 %v1903, %v1902
      %v1917 = vpack.c.b16 %v1905, %v1904
      %v1918 = vpack.c.b16 %v1907, %v1906
      %v1919 = vpack.c.b16 %v1909, %v1908
      %v1920 = vpack.c.b16 %v1911, %v1910
      %v1921 = vpack.c.b16 %v1913, %v1912
      %1930 = vmatprep.subr.bf16.mxu0 0
      %1931 = vmatpush1.bf16.msra.mxu0 %v1914
      %1932 = vmatprep.subr.bf16.mxu0 0
      %1933 = vmatpush1.bf16.msra.mxu0 %v1915
      %1934 = vmatprep.subr.bf16.mxu0 0
      %1935 = vmatpush1.bf16.msra.mxu0 %v1916
      %1936 = vmatprep.subr.bf16.mxu0 0
      %1937 = vmatpush1.bf16.msra.mxu0 %v1917
      %1938 = vmatprep.subr.bf16.mxu0 0
      %1939 = vmatpush1.bf16.msra.mxu0 %v1918
      %1940 = vmatprep.subr.bf16.mxu0 0
      %1941 = vmatpush1.bf16.msra.mxu0 %v1919
      %1942 = vmatprep.subr.bf16.mxu0 0
      %1943 = vmatpush1.bf16.msra.mxu0 %v1920
      %1944 = vmatprep.subr.bf16.mxu0 0
      %1945 = vmatpush1.bf16.msra.mxu0 %v1921
      %1946 = vmatprep.subr.bf16.mxu0 0
      %1947 = vmatpush1.bf16.msra.mxu0 0
      %1948 = vmatprep.subr.bf16.mxu0 0
      %1949 = vmatpush1.bf16.msra.mxu0 0
      %1950 = vmatprep.subr.bf16.mxu0 0
      %1951 = vmatpush1.bf16.msra.mxu0 0
      %1952 = vmatprep.subr.bf16.mxu0 0
      %1953 = vmatpush1.bf16.msra.mxu0 0
      %1954 = vmatprep.subr.bf16.mxu0 0
      %1955 = vmatpush1.bf16.msra.mxu0 0
      %1956 = vmatprep.subr.bf16.mxu0 0
      %1957 = vmatpush1.bf16.msra.mxu0 0
      %1958 = vmatprep.subr.bf16.mxu0 0
      %1959 = vmatpush1.bf16.msra.mxu0 0
      %1960 = vmatprep.subr.bf16.mxu0 0
      %1961 = vmatpush1.bf16.msra.mxu0 0
      %1962 = vmatprep.mubr.bf16.mxu0 0
      %1963 = vmatmul.mubr.bf16.gmra.mrb[0].mxu0 %v1859
      %v1964 = vpop.f32.mrb[0].mxu0
      %v1965 = vadd.f32 0.0, %v1964
      %v1966 = vpop.f32.mrb[0].mxu0
      %v1967 = vpop.f32.mrb[0].mxu0
      %v1968 = vadd.f32 0.0, %v1967
      %v1969 = vpop.f32.mrb[0].mxu0
      %1970 = vmatprep.mubr.bf16.mxu0 0
      %1971 = vmatmul.mubr.bf16.gmra.mrb[0].mxu0 %v1861
      %v1972 = vpop.f32.mrb[0].mxu0
      %v1973 = vadd.f32 0.0, %v1972
      %v1974 = vpop.f32.mrb[0].mxu0
      %v1975 = vpop.f32.mrb[0].mxu0
      %v1976 = vadd.f32 0.0, %v1975
      %v1977 = vpop.f32.mrb[0].mxu0
      %1978 = vmatprep.mubr.bf16.mxu0 0
      %1979 = vmatmul.mubr.bf16.gmra.mrb[0].mxu0 %v1863
      %v1980 = vpop.f32.mrb[0].mxu0
      %v1981 = vadd.f32 0.0, %v1980
      %v1982 = vpop.f32.mrb[0].mxu0
      %v1983 = vpop.f32.mrb[0].mxu0
      %v1984 = vadd.f32 0.0, %v1983
      %v1985 = vpop.f32.mrb[0].mxu0
      %1986 = vmatprep.mubr.bf16.mxu0 0
      %1987 = vmatmul.mubr.bf16.gmra.mrb[0].mxu0 %v1865
      %v1988 = vpop.f32.mrb[0].mxu0
      %v1989 = vadd.f32 0.0, %v1988
      %v1990 = vpop.f32.mrb[0].mxu0
      %v1991 = vpop.f32.mrb[0].mxu0
      %v1992 = vadd.f32 0.0, %v1991
      %v1993 = vpop.f32.mrb[0].mxu0
      %1994 = vmatprep.mubr.bf16.mxu0 0
      %1995 = vmatmul.mubr.bf16.gmra.mrb[0].mxu0 %v1867
      %v1996 = vpop.f32.mrb[0].mxu0
      %v1997 = vadd.f32 0.0, %v1996
      %v1998 = vpop.f32.mrb[0].mxu0
      %v1999 = vpop.f32.mrb[0].mxu0
      %v2000 = vadd.f32 0.0, %v1999
      %v2001 = vpop.f32.mrb[0].mxu0
      %2002 = vmatprep.mubr.bf16.mxu0 0
      %2003 = vmatmul.mubr.bf16.gmra.mrb[0].mxu0 %v1869
      %v2004 = vpop.f32.mrb[0].mxu0
      %v2005 = vadd.f32 0.0, %v2004
      %v2006 = vpop.f32.mrb[0].mxu0
      %v2007 = vpop.f32.mrb[0].mxu0
      %v2008 = vadd.f32 0.0, %v2007
      %v2009 = vpop.f32.mrb[0].mxu0
      %2010 = vmatprep.mubr.bf16.mxu0 0
      %2011 = vmatmul.mubr.bf16.gmra.mrb[0].mxu0 %v1871
      %v2012 = vpop.f32.mrb[0].mxu0
      %v2013 = vadd.f32 0.0, %v2012
      %v2014 = vpop.f32.mrb[0].mxu0
      %v2015 = vpop.f32.mrb[0].mxu0
      %v2016 = vadd.f32 0.0, %v2015
      %v2017 = vpop.f32.mrb[0].mxu0
      %2018 = vmatprep.mubr.bf16.mxu0 0
      %2019 = vmatmul.mubr.bf16.gmra.mrb[0].mxu0 %v1873
      %v2020 = vpop.f32.mrb[0].mxu0
      %v2021 = vadd.f32 0.0, %v2020
      %v2022 = vpop.f32.mrb[0].mxu0
      %v2023 = vpop.f32.mrb[0].mxu0
      %v2024 = vadd.f32 0.0, %v2023
      %v2025 = vpop.f32.mrb[0].mxu0
      %2026 = vdwg.mxu0
      %v2027 = vadd.f32 %v1807, %v1965
      %v2028 = vadd.f32 %v1808, %v1968
      %v2029 = vadd.f32 %v1809, %v1973
      %v2030 = vadd.f32 %v1810, %v1976
      %v2031 = vadd.f32 %v1811, %v1981
      %v2032 = vadd.f32 %v1812, %v1984
      %v2033 = vadd.f32 %v1813, %v1989
      %v2034 = vadd.f32 %v1814, %v1992
      %v2035 = vadd.f32 %v1815, %v1997
      %v2036 = vadd.f32 %v1816, %v2000
      %v2037 = vadd.f32 %v1817, %v2005
      %v2038 = vadd.f32 %v1818, %v2008
      %v2039 = vadd.f32 %v1819, %v2013
      %v2040 = vadd.f32 %v1820, %v2016
      %v2041 = vadd.f32 %v1821, %v2021
      %v2042 = vadd.f32 %v1822, %v2024
      %v2043 = vld [vmem:[#allocation2 + $0x50] sm:$0x7]
      %v2044 = vld [vmem:[%s2 + $0x1c0] sm:$0xf]
      %v2045 = vld [vmem:[%s2 + $0x1c4] sm:$0xf]
      %v2046 = vld [vmem:[%s2 + $0x1c8] sm:$0xf]
      %v2047 = vld [vmem:[%s2 + $0x1cc] sm:$0xf]
      %v2048 = vld [vmem:[%s2 + $0x1d0] sm:$0xf]
      %v2049 = vld [vmem:[%s2 + $0x1d4] sm:$0xf]
      %v2050 = vld [vmem:[%s2 + $0x1d8] sm:$0xf]
      %v2051 = vld [vmem:[%s2 + $0x1dc] sm:$0xf]
      %v2052 = vld [vmem:[%s2 + $0x1e0] sm:$0xf]
      %v2053 = vld [vmem:[%s2 + $0x1e4] sm:$0xf]
      %v2054 = vld [vmem:[%s2 + $0x1e8] sm:$0xf]
      %v2055 = vld [vmem:[%s2 + $0x1ec] sm:$0xf]
      %v2056 = vld [vmem:[%s2 + $0x1f0] sm:$0xf]
      %v2057 = vld [vmem:[%s2 + $0x1f4] sm:$0xf]
      %v2058 = vld [vmem:[%s2 + $0x1f8] sm:$0xf]
      %v2059 = vld [vmem:[%s2 + $0x1fc] sm:$0xf]
      %vm2060 = vsmask.f32 5376
      %v2062 = vshrl.u32 %v1823, 16
      %v2064 = vrot.slane %v2062, 2
      %v2065 = vshll.u32 %v1823, 16
      %v2067 = vrot.slane %v2065, 3
      %v2068 = vor.u32 %v2064, %v2067
      %v2070 = vshrl.u32 %v1824, 16
      %v2072 = vrot.slane %v2070, 2
      %v2073 = vshll.u32 %v1824, 16
      %v2075 = vrot.slane %v2073, 3
      %v2076 = vor.u32 %v2072, %v2075
      %v2077 = vsel %vm2060, %v2068, %v2076
      %v2079 = vshrl.u32 %v1825, 16
      %v2081 = vrot.slane %v2079, 2
      %v2082 = vshll.u32 %v1825, 16
      %v2084 = vrot.slane %v2082, 3
      %v2085 = vor.u32 %v2081, %v2084
      %v2086 = vsel %vm2060, %v2076, %v2085
      %v2088 = vshrl.u32 %v1826, 16
      %v2090 = vrot.slane %v2088, 2
      %v2091 = vshll.u32 %v1826, 16
      %v2093 = vrot.slane %v2091, 3
      %v2094 = vor.u32 %v2090, %v2093
      %v2095 = vsel %vm2060, %v2085, %v2094
      %v2097 = vshrl.u32 %v1827, 16
      %v2099 = vrot.slane %v2097, 2
      %v2100 = vshll.u32 %v1827, 16
      %v2102 = vrot.slane %v2100, 3
      %v2103 = vor.u32 %v2099, %v2102
      %v2104 = vsel %vm2060, %v2094, %v2103
      %v2106 = vshrl.u32 %v1828, 16
      %v2108 = vrot.slane %v2106, 2
      %v2109 = vshll.u32 %v1828, 16
      %v2111 = vrot.slane %v2109, 3
      %v2112 = vor.u32 %v2108, %v2111
      %v2113 = vsel %vm2060, %v2103, %v2112
      %v2115 = vshrl.u32 %v1829, 16
      %v2117 = vrot.slane %v2115, 2
      %v2118 = vshll.u32 %v1829, 16
      %v2120 = vrot.slane %v2118, 3
      %v2121 = vor.u32 %v2117, %v2120
      %v2122 = vsel %vm2060, %v2112, %v2121
      %v2124 = vshrl.u32 %v1830, 16
      %v2126 = vrot.slane %v2124, 2
      %v2127 = vshll.u32 %v1830, 16
      %v2129 = vrot.slane %v2127, 3
      %v2130 = vor.u32 %v2126, %v2129
      %v2131 = vsel %vm2060, %v2121, %v2130
      %v2133 = vshrl.u32 %v2043, 16
      %v2135 = vrot.slane %v2133, 2
      %v2136 = vshll.u32 %v2043, 16
      %v2138 = vrot.slane %v2136, 3
      %v2139 = vor.u32 %v2135, %v2138
      %v2140 = vsel %vm2060, %v2130, %v2139
      %v2165 = vunpack.c.l.b16 %v2044
      %v2166 = vunpack.c.l.b16 %v2045
      %v2167 = vunpack.c.l.b16 %v2046
      %v2168 = vunpack.c.l.b16 %v2047
      %v2169 = vunpack.c.l.b16 %v2048
      %v2170 = vunpack.c.l.b16 %v2049
      %v2171 = vunpack.c.l.b16 %v2050
      %v2172 = vunpack.c.l.b16 %v2051
      %v2173 = vunpack.c.l.b16 %v2052
      %v2174 = vunpack.c.l.b16 %v2053
      %v2175 = vunpack.c.l.b16 %v2054
      %v2176 = vunpack.c.l.b16 %v2055
      %v2177 = vunpack.c.l.b16 %v2056
      %v2178 = vunpack.c.l.b16 %v2057
      %v2179 = vunpack.c.l.b16 %v2058
      %v2180 = vunpack.c.l.b16 %v2059
      %v2181 = vpack.c.b16 %v2166, %v2165
      %v2182 = vpack.c.b16 %v2168, %v2167
      %v2183 = vpack.c.b16 %v2170, %v2169
      %v2184 = vpack.c.b16 %v2172, %v2171
      %v2185 = vpack.c.b16 %v2174, %v2173
      %v2186 = vpack.c.b16 %v2176, %v2175
      %v2187 = vpack.c.b16 %v2178, %v2177
      %v2188 = vpack.c.b16 %v2180, %v2179
      %2197 = vmatprep.subr.bf16.mxu0 0
      %2198 = vmatpush1.bf16.msra.mxu0 %v2181
      %2199 = vmatprep.subr.bf16.mxu0 0
      %2200 = vmatpush1.bf16.msra.mxu0 %v2182
      %2201 = vmatprep.subr.bf16.mxu0 0
      %2202 = vmatpush1.bf16.msra.mxu0 %v2183
      %2203 = vmatprep.subr.bf16.mxu0 0
      %2204 = vmatpush1.bf16.msra.mxu0 %v2184
      %2205 = vmatprep.subr.bf16.mxu0 0
      %2206 = vmatpush1.bf16.msra.mxu0 %v2185
      %2207 = vmatprep.subr.bf16.mxu0 0
      %2208 = vmatpush1.bf16.msra.mxu0 %v2186
      %2209 = vmatprep.subr.bf16.mxu0 0
      %2210 = vmatpush1.bf16.msra.mxu0 %v2187
      %2211 = vmatprep.subr.bf16.mxu0 0
      %2212 = vmatpush1.bf16.msra.mxu0 %v2188
      %2213 = vmatprep.subr.bf16.mxu0 0
      %2214 = vmatpush1.bf16.msra.mxu0 0
      %2215 = vmatprep.subr.bf16.mxu0 0
      %2216 = vmatpush1.bf16.msra.mxu0 0
      %2217 = vmatprep.subr.bf16.mxu0 0
      %2218 = vmatpush1.bf16.msra.mxu0 0
      %2219 = vmatprep.subr.bf16.mxu0 0
      %2220 = vmatpush1.bf16.msra.mxu0 0
      %2221 = vmatprep.subr.bf16.mxu0 0
      %2222 = vmatpush1.bf16.msra.mxu0 0
      %2223 = vmatprep.subr.bf16.mxu0 0
      %2224 = vmatpush1.bf16.msra.mxu0 0
      %2225 = vmatprep.subr.bf16.mxu0 0
      %2226 = vmatpush1.bf16.msra.mxu0 0
      %2227 = vmatprep.subr.bf16.mxu0 0
      %2228 = vmatpush1.bf16.msra.mxu0 0
      %2229 = vmatprep.mubr.bf16.mxu0 0
      %2230 = vmatmul.mubr.bf16.gmra.mrb[0].mxu0 %v2077
      %v2231 = vpop.f32.mrb[0].mxu0
      %v2232 = vadd.f32 0.0, %v2231
      %v2233 = vpop.f32.mrb[0].mxu0
      %v2234 = vpop.f32.mrb[0].mxu0
      %v2235 = vadd.f32 0.0, %v2234
      %v2236 = vpop.f32.mrb[0].mxu0
      %2237 = vmatprep.mubr.bf16.mxu0 0
      %2238 = vmatmul.mubr.bf16.gmra.mrb[0].mxu0 %v2086
      %v2239 = vpop.f32.mrb[0].mxu0
      %v2240 = vadd.f32 0.0, %v2239
      %v2241 = vpop.f32.mrb[0].mxu0
      %v2242 = vpop.f32.mrb[0].mxu0
      %v2243 = vadd.f32 0.0, %v2242
      %v2244 = vpop.f32.mrb[0].mxu0
      %2245 = vmatprep.mubr.bf16.mxu0 0
      %2246 = vmatmul.mubr.bf16.gmra.mrb[0].mxu0 %v2095
      %v2247 = vpop.f32.mrb[0].mxu0
      %v2248 = vadd.f32 0.0, %v2247
      %v2249 = vpop.f32.mrb[0].mxu0
      %v2250 = vpop.f32.mrb[0].mxu0
      %v2251 = vadd.f32 0.0, %v2250
      %v2252 = vpop.f32.mrb[0].mxu0
      %2253 = vmatprep.mubr.bf16.mxu0 0
      %2254 = vmatmul.mubr.bf16.gmra.mrb[0].mxu0 %v2104
      %v2255 = vpop.f32.mrb[0].mxu0
      %v2256 = vadd.f32 0.0, %v2255
      %v2257 = vpop.f32.mrb[0].mxu0
      %v2258 = vpop.f32.mrb[0].mxu0
      %v2259 = vadd.f32 0.0, %v2258
      %v2260 = vpop.f32.mrb[0].mxu0
      %2261 = vmatprep.mubr.bf16.mxu0 0
      %2262 = vmatmul.mubr.bf16.gmra.mrb[0].mxu0 %v2113
      %v2263 = vpop.f32.mrb[0].mxu0
      %v2264 = vadd.f32 0.0, %v2263
      %v2265 = vpop.f32.mrb[0].mxu0
      %v2266 = vpop.f32.mrb[0].mxu0
      %v2267 = vadd.f32 0.0, %v2266
      %v2268 = vpop.f32.mrb[0].mxu0
      %2269 = vmatprep.mubr.bf16.mxu0 0
      %2270 = vmatmul.mubr.bf16.gmra.mrb[0].mxu0 %v2122
      %v2271 = vpop.f32.mrb[0].mxu0
      %v2272 = vadd.f32 0.0, %v2271
      %v2273 = vpop.f32.mrb[0].mxu0
      %v2274 = vpop.f32.mrb[0].mxu0
      %v2275 = vadd.f32 0.0, %v2274
      %v2276 = vpop.f32.mrb[0].mxu0
      %2277 = vmatprep.mubr.bf16.mxu0 0
      %2278 = vmatmul.mubr.bf16.gmra.mrb[0].mxu0 %v2131
      %v2279 = vpop.f32.mrb[0].mxu0
      %v2280 = vadd.f32 0.0, %v2279
      %v2281 = vpop.f32.mrb[0].mxu0
      %v2282 = vpop.f32.mrb[0].mxu0
      %v2283 = vadd.f32 0.0, %v2282
      %v2284 = vpop.f32.mrb[0].mxu0
      %2285 = vmatprep.mubr.bf16.mxu0 0
      %2286 = vmatmul.mubr.bf16.gmra.mrb[0].mxu0 %v2140
      %v2287 = vpop.f32.mrb[0].mxu0
      %v2288 = vadd.f32 0.0, %v2287
      %v2289 = vpop.f32.mrb[0].mxu0
      %v2290 = vpop.f32.mrb[0].mxu0
      %v2291 = vadd.f32 0.0, %v2290
      %v2292 = vpop.f32.mrb[0].mxu0
      %2293 = vdwg.mxu0
      %v2294 = vadd.f32 %v2027, %v2232
      %v2295 = vadd.f32 %v2028, %v2235
      %v2296 = vadd.f32 %v2029, %v2240
      %v2297 = vadd.f32 %v2030, %v2243
      %v2298 = vadd.f32 %v2031, %v2248
      %v2299 = vadd.f32 %v2032, %v2251
      %v2300 = vadd.f32 %v2033, %v2256
      %v2301 = vadd.f32 %v2034, %v2259
      %v2302 = vadd.f32 %v2035, %v2264
      %v2303 = vadd.f32 %v2036, %v2267
      %v2304 = vadd.f32 %v2037, %v2272
      %v2305 = vadd.f32 %v2038, %v2275
      %v2306 = vadd.f32 %v2039, %v2280
      %v2307 = vadd.f32 %v2040, %v2283
      %v2308 = vadd.f32 %v2041, %v2288
      %v2309 = vadd.f32 %v2042, %v2291
      %v2310 = vld [vmem:[#allocation2 + $0x10] sm:$0xf8]
      %v2311 = vld [vmem:[%s2 + $0x200] sm:$0xf]
      %v2312 = vld [vmem:[%s2 + $0x204] sm:$0xf]
      %v2313 = vld [vmem:[%s2 + $0x208] sm:$0xf]
      %v2314 = vld [vmem:[%s2 + $0x20c] sm:$0xf]
      %v2315 = vld [vmem:[%s2 + $0x210] sm:$0xf]
      %v2316 = vld [vmem:[%s2 + $0x214] sm:$0xf]
      %v2317 = vld [vmem:[%s2 + $0x218] sm:$0xf]
      %v2318 = vld [vmem:[%s2 + $0x21c] sm:$0xf]
      %v2319 = vld [vmem:[%s2 + $0x220] sm:$0xf]
      %v2320 = vld [vmem:[%s2 + $0x224] sm:$0xf]
      %v2321 = vld [vmem:[%s2 + $0x228] sm:$0xf]
      %v2322 = vld [vmem:[%s2 + $0x22c] sm:$0xf]
      %v2323 = vld [vmem:[%s2 + $0x230] sm:$0xf]
      %v2324 = vld [vmem:[%s2 + $0x234] sm:$0xf]
      %v2325 = vld [vmem:[%s2 + $0x238] sm:$0xf]
      %v2326 = vld [vmem:[%s2 + $0x23c] sm:$0xf]
      %vm2329 = vcmask 1044480
      %v2330 = vrot.slane %v2310, 3
      %v2331 = vrot.slane %v1824, 3
      %v2332 = vsel %vm2329, %v2330, %v2331
      %v2333 = vrot.slane %v1825, 3
      %v2334 = vsel %vm2329, %v2331, %v2333
      %v2335 = vrot.slane %v1826, 3
      %v2336 = vsel %vm2329, %v2333, %v2335
      %v2337 = vrot.slane %v1827, 3
      %v2338 = vsel %vm2329, %v2335, %v2337
      %v2339 = vrot.slane %v1828, 3
      %v2340 = vsel %vm2329, %v2337, %v2339
      %v2341 = vrot.slane %v1829, 3
      %v2342 = vsel %vm2329, %v2339, %v2341
      %v2343 = vrot.slane %v1830, 3
      %v2344 = vsel %vm2329, %v2341, %v2343
      %v2345 = vrot.slane %v2043, 3
      %v2346 = vsel %vm2329, %v2343, %v2345
      %v2371 = vunpack.c.l.b16 %v2311
      %v2372 = vunpack.c.l.b16 %v2312
      %v2373 = vunpack.c.l.b16 %v2313
      %v2374 = vunpack.c.l.b16 %v2314
      %v2375 = vunpack.c.l.b16 %v2315
      %v2376 = vunpack.c.l.b16 %v2316
      %v2377 = vunpack.c.l.b16 %v2317
      %v2378 = vunpack.c.l.b16 %v2318
      %v2379 = vunpack.c.l.b16 %v2319
      %v2380 = vunpack.c.l.b16 %v2320
      %v2381 = vunpack.c.l.b16 %v2321
      %v2382 = vunpack.c.l.b16 %v2322
      %v2383 = vunpack.c.l.b16 %v2323
      %v2384 = vunpack.c.l.b16 %v2324
      %v2385 = vunpack.c.l.b16 %v2325
      %v2386 = vunpack.c.l.b16 %v2326
      %v2387 = vpack.c.b16 %v2372, %v2371
      %v2388 = vpack.c.b16 %v2374, %v2373
      %v2389 = vpack.c.b16 %v2376, %v2375
      %v2390 = vpack.c.b16 %v2378, %v2377
      %v2391 = vpack.c.b16 %v2380, %v2379
      %v2392 = vpack.c.b16 %v2382, %v2381
      %v2393 = vpack.c.b16 %v2384, %v2383
      %v2394 = vpack.c.b16 %v2386, %v2385
      %2403 = vmatprep.subr.bf16.mxu0 0
      %2404 = vmatpush1.bf16.msra.mxu0 %v2387
      %2405 = vmatprep.subr.bf16.mxu0 0
      %2406 = vmatpush1.bf16.msra.mxu0 %v2388
      %2407 = vmatprep.subr.bf16.mxu0 0
      %2408 = vmatpush1.bf16.msra.mxu0 %v2389
      %2409 = vmatprep.subr.bf16.mxu0 0
      %2410 = vmatpush1.bf16.msra.mxu0 %v2390
      %2411 = vmatprep.subr.bf16.mxu0 0
      %2412 = vmatpush1.bf16.msra.mxu0 %v2391
      %2413 = vmatprep.subr.bf16.mxu0 0
      %2414 = vmatpush1.bf16.msra.mxu0 %v2392
      %2415 = vmatprep.subr.bf16.mxu0 0
      %2416 = vmatpush1.bf16.msra.mxu0 %v2393
      %2417 = vmatprep.subr.bf16.mxu0 0
      %2418 = vmatpush1.bf16.msra.mxu0 %v2394
      %2419 = vmatprep.subr.bf16.mxu0 0
      %2420 = vmatpush1.bf16.msra.mxu0 0
      %2421 = vmatprep.subr.bf16.mxu0 0
      %2422 = vmatpush1.bf16.msra.mxu0 0
      %2423 = vmatprep.subr.bf16.mxu0 0
      %2424 = vmatpush1.bf16.msra.mxu0 0
      %2425 = vmatprep.subr.bf16.mxu0 0
      %2426 = vmatpush1.bf16.msra.mxu0 0
      %2427 = vmatprep.subr.bf16.mxu0 0
      %2428 = vmatpush1.bf16.msra.mxu0 0
      %2429 = vmatprep.subr.bf16.mxu0 0
      %2430 = vmatpush1.bf16.msra.mxu0 0
      %2431 = vmatprep.subr.bf16.mxu0 0
      %2432 = vmatpush1.bf16.msra.mxu0 0
      %2433 = vmatprep.subr.bf16.mxu0 0
      %2434 = vmatpush1.bf16.msra.mxu0 0
      %2435 = vmatprep.mubr.bf16.mxu0 0
      %2436 = vmatmul.mubr.bf16.gmra.mrb[0].mxu0 %v2332
      %v2437 = vpop.f32.mrb[0].mxu0
      %v2438 = vadd.f32 0.0, %v2437
      %v2439 = vpop.f32.mrb[0].mxu0
      %v2440 = vpop.f32.mrb[0].mxu0
      %v2441 = vadd.f32 0.0, %v2440
      %v2442 = vpop.f32.mrb[0].mxu0
      %2443 = vmatprep.mubr.bf16.mxu0 0
      %2444 = vmatmul.mubr.bf16.gmra.mrb[0].mxu0 %v2334
      %v2445 = vpop.f32.mrb[0].mxu0
      %v2446 = vadd.f32 0.0, %v2445
      %v2447 = vpop.f32.mrb[0].mxu0
      %v2448 = vpop.f32.mrb[0].mxu0
      %v2449 = vadd.f32 0.0, %v2448
      %v2450 = vpop.f32.mrb[0].mxu0
      %2451 = vmatprep.mubr.bf16.mxu0 0
      %2452 = vmatmul.mubr.bf16.gmra.mrb[0].mxu0 %v2336
      %v2453 = vpop.f32.mrb[0].mxu0
      %v2454 = vadd.f32 0.0, %v2453
      %v2455 = vpop.f32.mrb[0].mxu0
      %v2456 = vpop.f32.mrb[0].mxu0
      %v2457 = vadd.f32 0.0, %v2456
      %v2458 = vpop.f32.mrb[0].mxu0
      %2459 = vmatprep.mubr.bf16.mxu0 0
      %2460 = vmatmul.mubr.bf16.gmra.mrb[0].mxu0 %v2338
      %v2461 = vpop.f32.mrb[0].mxu0
      %v2462 = vadd.f32 0.0, %v2461
      %v2463 = vpop.f32.mrb[0].mxu0
      %v2464 = vpop.f32.mrb[0].mxu0
      %v2465 = vadd.f32 0.0, %v2464
      %v2466 = vpop.f32.mrb[0].mxu0
      %2467 = vmatprep.mubr.bf16.mxu0 0
      %2468 = vmatmul.mubr.bf16.gmra.mrb[0].mxu0 %v2340
      %v2469 = vpop.f32.mrb[0].mxu0
      %v2470 = vadd.f32 0.0, %v2469
      %v2471 = vpop.f32.mrb[0].mxu0
      %v2472 = vpop.f32.mrb[0].mxu0
      %v2473 = vadd.f32 0.0, %v2472
      %v2474 = vpop.f32.mrb[0].mxu0
      %2475 = vmatprep.mubr.bf16.mxu0 0
      %2476 = vmatmul.mubr.bf16.gmra.mrb[0].mxu0 %v2342
      %v2477 = vpop.f32.mrb[0].mxu0
      %v2478 = vadd.f32 0.0, %v2477
      %v2479 = vpop.f32.mrb[0].mxu0
      %v2480 = vpop.f32.mrb[0].mxu0
      %v2481 = vadd.f32 0.0, %v2480
      %v2482 = vpop.f32.mrb[0].mxu0
      %2483 = vmatprep.mubr.bf16.mxu0 0
      %2484 = vmatmul.mubr.bf16.gmra.mrb[0].mxu0 %v2344
      %v2485 = vpop.f32.mrb[0].mxu0
      %v2486 = vadd.f32 0.0, %v2485
      %v2487 = vpop.f32.mrb[0].mxu0
      %v2488 = vpop.f32.mrb[0].mxu0
      %v2489 = vadd.f32 0.0, %v2488
      %v2490 = vpop.f32.mrb[0].mxu0
      %2491 = vmatprep.mubr.bf16.mxu0 0
      %2492 = vmatmul.mubr.bf16.gmra.mrb[0].mxu0 %v2346
      %v2493 = vpop.f32.mrb[0].mxu0
      %v2494 = vadd.f32 0.0, %v2493
      %v2495 = vpop.f32.mrb[0].mxu0
      %v2496 = vpop.f32.mrb[0].mxu0
      %v2497 = vadd.f32 0.0, %v2496
      %v2498 = vpop.f32.mrb[0].mxu0
      %2499 = vdwg.mxu0
      %v2500 = vadd.f32 %v2294, %v2438
      %v2501 = vadd.f32 %v2295, %v2441
      %v2502 = vadd.f32 %v2296, %v2446
      %v2503 = vadd.f32 %v2297, %v2449
      %v2504 = vadd.f32 %v2298, %v2454
      %v2505 = vadd.f32 %v2299, %v2457
      %v2506 = vadd.f32 %v2300, %v2462
      %v2507 = vadd.f32 %v2301, %v2465
      %v2508 = vadd.f32 %v2302, %v2470
      %v2509 = vadd.f32 %v2303, %v2473
      %v2510 = vadd.f32 %v2304, %v2478
      %v2511 = vadd.f32 %v2305, %v2481
      %v2512 = vadd.f32 %v2306, %v2486
      %v2513 = vadd.f32 %v2307, %v2489
      %v2514 = vadd.f32 %v2308, %v2494
      %v2515 = vadd.f32 %v2309, %v2497
      %v2516 = vpack.c.bf16 %v2501, %v2500
      %v2517 = vpack.c.bf16 %v2503, %v2502
      %v2518 = vpack.c.bf16 %v2505, %v2504
      %v2519 = vpack.c.bf16 %v2507, %v2506
      %v2520 = vpack.c.bf16 %v2509, %v2508
      %v2521 = vpack.c.bf16 %v2511, %v2510
      %v2522 = vpack.c.bf16 %v2513, %v2512
      %v2523 = vpack.c.bf16 %v2515, %v2514
      %v2532 = vunpack.c.l.b16 %v2516
      %v2533 = vunpack.c.h.b16 %v2516
      %v2534 = vunpack.c.l.b16 %v2517
      %v2535 = vunpack.c.h.b16 %v2517
      %v2536 = vunpack.c.l.b16 %v2518
      %v2537 = vunpack.c.h.b16 %v2518
      %v2538 = vunpack.c.l.b16 %v2519
      %v2539 = vunpack.c.h.b16 %v2519
      %v2540 = vunpack.c.l.b16 %v2520
      %v2541 = vunpack.c.h.b16 %v2520
      %v2542 = vunpack.c.l.b16 %v2521
      %v2543 = vunpack.c.h.b16 %v2521
      %v2544 = vunpack.c.l.b16 %v2522
      %v2545 = vunpack.c.h.b16 %v2522
      %v2546 = vunpack.c.l.b16 %v2523
      %v2547 = vunpack.c.h.b16 %v2523
      %v2548 = vpack.c.b16 %v2532, %v2532
      %v2549 = vpack.c.b16 %v2533, %v2533
      %v2550 = vpack.c.b16 %v2534, %v2534
      %v2551 = vpack.c.b16 %v2535, %v2535
      %v2552 = vpack.c.b16 %v2536, %v2536
      %v2553 = vpack.c.b16 %v2537, %v2537
      %v2554 = vpack.c.b16 %v2538, %v2538
      %v2555 = vpack.c.b16 %v2539, %v2539
      %v2556 = vpack.c.b16 %v2540, %v2540
      %v2557 = vpack.c.b16 %v2541, %v2541
      %v2558 = vpack.c.b16 %v2542, %v2542
      %v2559 = vpack.c.b16 %v2543, %v2543
      %v2560 = vpack.c.b16 %v2544, %v2544
      %v2561 = vpack.c.b16 %v2545, %v2545
      %v2562 = vpack.c.b16 %v2546, %v2546
      %v2563 = vpack.c.b16 %v2547, %v2547
      %2580 = vst [vmem:[%s372] sm:$0xf] %v2548
      %2581 = vst [vmem:[%s372 + $0x4] sm:$0xf] %v2549
      %2582 = vst [vmem:[%s372 + $0x8] sm:$0xf] %v2550
      %2583 = vst [vmem:[%s372 + $0xc] sm:$0xf] %v2551
      %2584 = vst [vmem:[%s372 + $0x10] sm:$0xf] %v2552
      %2585 = vst [vmem:[%s372 + $0x14] sm:$0xf] %v2553
      %2586 = vst [vmem:[%s372 + $0x18] sm:$0xf] %v2554
      %2587 = vst [vmem:[%s372 + $0x1c] sm:$0xf] %v2555
      %2588 = vst [vmem:[%s372 + $0x20] sm:$0xf] %v2556
      %2589 = vst [vmem:[%s372 + $0x24] sm:$0xf] %v2557
      %2590 = vst [vmem:[%s372 + $0x28] sm:$0xf] %v2558
      %2591 = vst [vmem:[%s372 + $0x2c] sm:$0xf] %v2559
      %2592 = vst [vmem:[%s372 + $0x30] sm:$0xf] %v2560
      %2593 = vst [vmem:[%s372 + $0x34] sm:$0xf] %v2561
      %2594 = vst [vmem:[%s372 + $0x38] sm:$0xf] %v2562
      %2595 = vst [vmem:[%s372 + $0x3c] sm:$0xf] %v2563
      %2597 = vset.pattern.permute.xlu0 0
      %2598 = vperm.xlu0 %2597, %v493
      %v2599 = vpop.permute.xlu0 %2598
      %2602 = vset.pattern.permute.xlu0 0
      %2603 = vperm.xlu0 %2602, %v494
      %v2604 = vpop.permute.xlu0 %2603
      %2607 = vset.pattern.permute.xlu0 0
      %2608 = vperm.xlu0 %2607, %v495
      %v2609 = vpop.permute.xlu0 %2608
      %2612 = vset.pattern.permute.xlu0 0
      %2613 = vperm.xlu0 %2612, %v496
      %v2614 = vpop.permute.xlu0 %2613
      %2617 = vset.pattern.permute.xlu0 0
      %2618 = vperm.xlu0 %2617, %v497
      %v2619 = vpop.permute.xlu0 %2618
      %2622 = vset.pattern.permute.xlu0 0
      %2623 = vperm.xlu0 %2622, %v498
      %v2624 = vpop.permute.xlu0 %2623
      %2627 = vset.pattern.permute.xlu0 0
      %2628 = vperm.xlu0 %2627, %v499
      %v2629 = vpop.permute.xlu0 %2628
      %2632 = vset.pattern.permute.xlu0 0
      %2633 = vperm.xlu0 %2632, %v500
      %v2634 = vpop.permute.xlu0 %2633
      %2637 = vset.pattern.permute.xlu0 0
      %2638 = vperm.xlu0 %2637, %v501
      %v2639 = vpop.permute.xlu0 %2638
      %2642 = vset.pattern.permute.xlu0 0
      %2643 = vperm.xlu0 %2642, %v502
      %v2644 = vpop.permute.xlu0 %2643
      %2647 = vset.pattern.permute.xlu0 0
      %2648 = vperm.xlu0 %2647, %v503
      %v2649 = vpop.permute.xlu0 %2648
      %2652 = vset.pattern.permute.xlu0 0
      %2653 = vperm.xlu0 %2652, %v504
      %v2654 = vpop.permute.xlu0 %2653
      %2657 = vset.pattern.permute.xlu0 0
      %2658 = vperm.xlu0 %2657, %v505
      %v2659 = vpop.permute.xlu0 %2658
      %2662 = vset.pattern.permute.xlu0 0
      %2663 = vperm.xlu0 %2662, %v506
      %v2664 = vpop.permute.xlu0 %2663
      %2667 = vset.pattern.permute.xlu0 0
      %2668 = vperm.xlu0 %2667, %v507
      %v2669 = vpop.permute.xlu0 %2668
      %2672 = vset.pattern.permute.xlu0 0
      %2673 = vperm.xlu0 %2672, %v508
      %v2674 = vpop.permute.xlu0 %2673
      %v2676 = vmul.f32 %v2500, %v2599
      %v2677 = vmul.f32 %v2501, %v2604
      %v2678 = vmul.f32 %v2502, %v2609
      %v2679 = vmul.f32 %v2503, %v2614
      %v2680 = vmul.f32 %v2504, %v2619
      %v2681 = vmul.f32 %v2505, %v2624
      %v2682 = vmul.f32 %v2506, %v2629
      %v2683 = vmul.f32 %v2507, %v2634
      %v2684 = vmul.f32 %v2508, %v2639
      %v2685 = vmul.f32 %v2509, %v2644
      %v2686 = vmul.f32 %v2510, %v2649
      %v2687 = vmul.f32 %v2511, %v2654
      %v2688 = vmul.f32 %v2512, %v2659
      %v2689 = vmul.f32 %v2513, %v2664
      %v2690 = vmul.f32 %v2514, %v2669
      %v2691 = vmul.f32 %v2515, %v2674
      %v2692 = vadd.f32 %v2676, %v2677
      %v2693 = vadd.f32 %v2692, %v2678
      %v2694 = vadd.f32 %v2693, %v2679
      %v2695 = vadd.f32 %v2694, %v2680
      %v2696 = vadd.f32 %v2695, %v2681
      %v2697 = vadd.f32 %v2696, %v2682
      %v2698 = vadd.f32 %v2697, %v2683
      %v2699 = vadd.f32 %v2698, %v2684
      %v2700 = vadd.f32 %v2699, %v2685
      %v2701 = vadd.f32 %v2700, %v2686
      %v2702 = vadd.f32 %v2701, %v2687
      %v2703 = vadd.f32 %v2702, %v2688
      %v2704 = vadd.f32 %v2703, %v2689
      %v2705 = vadd.f32 %v2704, %v2690
      %v2706 = vadd.f32 %v2705, %v2691
      %v2707 = vrot.slane %v2706, 4
      %v2708 = vadd.f32 %v2706, %v2707
      %v2709 = vrot.slane %v2708, 2
      %v2710 = vadd.f32 %v2708, %v2709
      %v2711 = vrot.slane %v2710, 1
      %v2712 = vadd.f32 %v2710, %v2711
      %v2713 = vmul.f32 %v2500, %v2500
      %v2714 = vmul.f32 %v2501, %v2501
      %v2715 = vmul.f32 %v2502, %v2502
      %v2716 = vmul.f32 %v2503, %v2503
      %v2717 = vmul.f32 %v2504, %v2504
      %v2718 = vmul.f32 %v2505, %v2505
      %v2719 = vmul.f32 %v2506, %v2506
      %v2720 = vmul.f32 %v2507, %v2507
      %v2721 = vmul.f32 %v2508, %v2508
      %v2722 = vmul.f32 %v2509, %v2509
      %v2723 = vmul.f32 %v2510, %v2510
      %v2724 = vmul.f32 %v2511, %v2511
      %v2725 = vmul.f32 %v2512, %v2512
      %v2726 = vmul.f32 %v2513, %v2513
      %v2727 = vmul.f32 %v2514, %v2514
      %v2728 = vmul.f32 %v2515, %v2515
      %v2729 = vmul.f32 %v2713, %v2599
      %v2730 = vmul.f32 %v2714, %v2604
      %v2731 = vmul.f32 %v2715, %v2609
      %v2732 = vmul.f32 %v2716, %v2614
      %v2733 = vmul.f32 %v2717, %v2619
      %v2734 = vmul.f32 %v2718, %v2624
      %v2735 = vmul.f32 %v2719, %v2629
      %v2736 = vmul.f32 %v2720, %v2634
      %v2737 = vmul.f32 %v2721, %v2639
      %v2738 = vmul.f32 %v2722, %v2644
      %v2739 = vmul.f32 %v2723, %v2649
      %v2740 = vmul.f32 %v2724, %v2654
      %v2741 = vmul.f32 %v2725, %v2659
      %v2742 = vmul.f32 %v2726, %v2664
      %v2743 = vmul.f32 %v2727, %v2669
      %v2744 = vmul.f32 %v2728, %v2674
      %v2745 = vadd.f32 %v2729, %v2730
      %v2746 = vadd.f32 %v2745, %v2731
      %v2747 = vadd.f32 %v2746, %v2732
      %v2748 = vadd.f32 %v2747, %v2733
      %v2749 = vadd.f32 %v2748, %v2734
      %v2750 = vadd.f32 %v2749, %v2735
      %v2751 = vadd.f32 %v2750, %v2736
      %v2752 = vadd.f32 %v2751, %v2737
      %v2753 = vadd.f32 %v2752, %v2738
      %v2754 = vadd.f32 %v2753, %v2739
      %v2755 = vadd.f32 %v2754, %v2740
      %v2756 = vadd.f32 %v2755, %v2741
      %v2757 = vadd.f32 %v2756, %v2742
      %v2758 = vadd.f32 %v2757, %v2743
      %v2759 = vadd.f32 %v2758, %v2744
      %v2760 = vrot.slane %v2759, 4
      %v2761 = vadd.f32 %v2759, %v2760
      %v2762 = vrot.slane %v2761, 2
      %v2763 = vadd.f32 %v2761, %v2762
      %v2764 = vrot.slane %v2763, 1
      %v2765 = vadd.f32 %v2763, %v2764
      %v2766 = vld [vmem:[#allocation2 + $0x8] sm:$0xfe]
      %v2767 = vld [vmem:[#allocation2 + $0x10] sm:$0xff]
      %v2768 = vld [vmem:[#allocation2 + $0x18] sm:$0xff]
      %v2769 = vld [vmem:[#allocation2 + $0x20] sm:$0xff]
      %v2770 = vld [vmem:[#allocation2 + $0x28] sm:$0xff]
      %v2771 = vld [vmem:[#allocation2 + $0x30] sm:$0xff]
      %v2772 = vld [vmem:[#allocation2 + $0x38] sm:$0xff]
      %v2773 = vld [vmem:[#allocation2 + $0x40] sm:$0xff]
      %v2774 = vld [vmem:[#allocation2 + $0x48] sm:$0x3]
      %v2775 = vld [vmem:[%s3] sm:$0xf]
      %v2776 = vld [vmem:[%s3 + $0x4] sm:$0xf]
      %v2777 = vld [vmem:[%s3 + $0x8] sm:$0xf]
      %v2778 = vld [vmem:[%s3 + $0xc] sm:$0xf]
      %v2779 = vld [vmem:[%s3 + $0x10] sm:$0xf]
      %v2780 = vld [vmem:[%s3 + $0x14] sm:$0xf]
      %v2781 = vld [vmem:[%s3 + $0x18] sm:$0xf]
      %v2782 = vld [vmem:[%s3 + $0x1c] sm:$0xf]
      %v2783 = vld [vmem:[%s3 + $0x20] sm:$0xf]
      %v2784 = vld [vmem:[%s3 + $0x24] sm:$0xf]
      %v2785 = vld [vmem:[%s3 + $0x28] sm:$0xf]
      %v2786 = vld [vmem:[%s3 + $0x2c] sm:$0xf]
      %v2787 = vld [vmem:[%s3 + $0x30] sm:$0xf]
      %v2788 = vld [vmem:[%s3 + $0x34] sm:$0xf]
      %v2789 = vld [vmem:[%s3 + $0x38] sm:$0xf]
      %v2790 = vld [vmem:[%s3 + $0x3c] sm:$0xf]
      %v2792 = vshrl.u32 %v2766, 16
      %v2794 = vrot.slane %v2792, 1
      %v2795 = vshll.u32 %v2766, 16
      %v2797 = vrot.slane %v2795, 2
      %v2798 = vor.u32 %v2794, %v2797
      %v2800 = vshrl.u32 %v2767, 16
      %v2802 = vrot.slane %v2800, 1
      %v2803 = vshll.u32 %v2767, 16
      %v2805 = vrot.slane %v2803, 2
      %v2806 = vor.u32 %v2802, %v2805
      %v2807 = vsel %vm1367, %v2798, %v2806
      %v2809 = vshrl.u32 %v2768, 16
      %v2811 = vrot.slane %v2809, 1
      %v2812 = vshll.u32 %v2768, 16
      %v2814 = vrot.slane %v2812, 2
      %v2815 = vor.u32 %v2811, %v2814
      %v2816 = vsel %vm1367, %v2806, %v2815
      %v2818 = vshrl.u32 %v2769, 16
      %v2820 = vrot.slane %v2818, 1
      %v2821 = vshll.u32 %v2769, 16
      %v2823 = vrot.slane %v2821, 2
      %v2824 = vor.u32 %v2820, %v2823
      %v2825 = vsel %vm1367, %v2815, %v2824
      %v2827 = vshrl.u32 %v2770, 16
      %v2829 = vrot.slane %v2827, 1
      %v2830 = vshll.u32 %v2770, 16
      %v2832 = vrot.slane %v2830, 2
      %v2833 = vor.u32 %v2829, %v2832
      %v2834 = vsel %vm1367, %v2824, %v2833
      %v2836 = vshrl.u32 %v2771, 16
      %v2838 = vrot.slane %v2836, 1
      %v2839 = vshll.u32 %v2771, 16
      %v2841 = vrot.slane %v2839, 2
      %v2842 = vor.u32 %v2838, %v2841
      %v2843 = vsel %vm1367, %v2833, %v2842
      %v2845 = vshrl.u32 %v2772, 16
      %v2847 = vrot.slane %v2845, 1
      %v2848 = vshll.u32 %v2772, 16
      %v2850 = vrot.slane %v2848, 2
      %v2851 = vor.u32 %v2847, %v2850
      %v2852 = vsel %vm1367, %v2842, %v2851
      %v2854 = vshrl.u32 %v2773, 16
      %v2856 = vrot.slane %v2854, 1
      %v2857 = vshll.u32 %v2773, 16
      %v2859 = vrot.slane %v2857, 2
      %v2860 = vor.u32 %v2856, %v2859
      %v2861 = vsel %vm1367, %v2851, %v2860
      %v2863 = vshrl.u32 %v2774, 16
      %v2865 = vrot.slane %v2863, 1
      %v2866 = vshll.u32 %v2774, 16
      %v2868 = vrot.slane %v2866, 2
      %v2869 = vor.u32 %v2865, %v2868
      %v2870 = vsel %vm1367, %v2860, %v2869
      %v2895 = vunpack.c.l.b16 %v2775
      %v2896 = vunpack.c.l.b16 %v2776
      %v2897 = vunpack.c.l.b16 %v2777
      %v2898 = vunpack.c.l.b16 %v2778
      %v2899 = vunpack.c.l.b16 %v2779
      %v2900 = vunpack.c.l.b16 %v2780
      %v2901 = vunpack.c.l.b16 %v2781
      %v2902 = vunpack.c.l.b16 %v2782
      %v2903 = vunpack.c.l.b16 %v2783
      %v2904 = vunpack.c.l.b16 %v2784
      %v2905 = vunpack.c.l.b16 %v2785
      %v2906 = vunpack.c.l.b16 %v2786
      %v2907 = vunpack.c.l.b16 %v2787
      %v2908 = vunpack.c.l.b16 %v2788
      %v2909 = vunpack.c.l.b16 %v2789
      %v2910 = vunpack.c.l.b16 %v2790
      %v2911 = vpack.c.b16 %v2896, %v2895
      %v2912 = vpack.c.b16 %v2898, %v2897
      %v2913 = vpack.c.b16 %v2900, %v2899
      %v2914 = vpack.c.b16 %v2902, %v2901
      %v2915 = vpack.c.b16 %v2904, %v2903
      %v2916 = vpack.c.b16 %v2906, %v2905
      %v2917 = vpack.c.b16 %v2908, %v2907
      %v2918 = vpack.c.b16 %v2910, %v2909
      %2927 = vmatprep.subr.bf16.mxu0 0
      %2928 = vmatpush1.bf16.msra.mxu0 %v2911
      %2929 = vmatprep.subr.bf16.mxu0 0
      %2930 = vmatpush1.bf16.msra.mxu0 %v2912
      %2931 = vmatprep.subr.bf16.mxu0 0
      %2932 = vmatpush1.bf16.msra.mxu0 %v2913
      %2933 = vmatprep.subr.bf16.mxu0 0
      %2934 = vmatpush1.bf16.msra.mxu0 %v2914
      %2935 = vmatprep.subr.bf16.mxu0 0
      %2936 = vmatpush1.bf16.msra.mxu0 %v2915
      %2937 = vmatprep.subr.bf16.mxu0 0
      %2938 = vmatpush1.bf16.msra.mxu0 %v2916
      %2939 = vmatprep.subr.bf16.mxu0 0
      %2940 = vmatpush1.bf16.msra.mxu0 %v2917
      %2941 = vmatprep.subr.bf16.mxu0 0
      %2942 = vmatpush1.bf16.msra.mxu0 %v2918
      %2943 = vmatprep.subr.bf16.mxu0 0
      %2944 = vmatpush1.bf16.msra.mxu0 0
      %2945 = vmatprep.subr.bf16.mxu0 0
      %2946 = vmatpush1.bf16.msra.mxu0 0
      %2947 = vmatprep.subr.bf16.mxu0 0
      %2948 = vmatpush1.bf16.msra.mxu0 0
      %2949 = vmatprep.subr.bf16.mxu0 0
      %2950 = vmatpush1.bf16.msra.mxu0 0
      %2951 = vmatprep.subr.bf16.mxu0 0
      %2952 = vmatpush1.bf16.msra.mxu0 0
      %2953 = vmatprep.subr.bf16.mxu0 0
      %2954 = vmatpush1.bf16.msra.mxu0 0
      %2955 = vmatprep.subr.bf16.mxu0 0
      %2956 = vmatpush1.bf16.msra.mxu0 0
      %2957 = vmatprep.subr.bf16.mxu0 0
      %2958 = vmatpush1.bf16.msra.mxu0 0
      %2959 = vmatprep.mubr.bf16.mxu0 0
      %2960 = vmatmul.mubr.bf16.gmra.mrb[0].mxu0 %v2807
      %v2961 = vpop.f32.mrb[0].mxu0
      %v2962 = vadd.f32 0.0, %v2961
      %v2963 = vpop.f32.mrb[0].mxu0
      %v2964 = vpop.f32.mrb[0].mxu0
      %v2965 = vadd.f32 0.0, %v2964
      %v2966 = vpop.f32.mrb[0].mxu0
      %2967 = vmatprep.mubr.bf16.mxu0 0
      %2968 = vmatmul.mubr.bf16.gmra.mrb[0].mxu0 %v2816
      %v2969 = vpop.f32.mrb[0].mxu0
      %v2970 = vadd.f32 0.0, %v2969
      %v2971 = vpop.f32.mrb[0].mxu0
      %v2972 = vpop.f32.mrb[0].mxu0
      %v2973 = vadd.f32 0.0, %v2972
      %v2974 = vpop.f32.mrb[0].mxu0
      %2975 = vmatprep.mubr.bf16.mxu0 0
      %2976 = vmatmul.mubr.bf16.gmra.mrb[0].mxu0 %v2825
      %v2977 = vpop.f32.mrb[0].mxu0
      %v2978 = vadd.f32 0.0, %v2977
      %v2979 = vpop.f32.mrb[0].mxu0
      %v2980 = vpop.f32.mrb[0].mxu0
      %v2981 = vadd.f32 0.0, %v2980
      %v2982 = vpop.f32.mrb[0].mxu0
      %2983 = vmatprep.mubr.bf16.mxu0 0
      %2984 = vmatmul.mubr.bf16.gmra.mrb[0].mxu0 %v2834
      %v2985 = vpop.f32.mrb[0].mxu0
      %v2986 = vadd.f32 0.0, %v2985
      %v2987 = vpop.f32.mrb[0].mxu0
      %v2988 = vpop.f32.mrb[0].mxu0
      %v2989 = vadd.f32 0.0, %v2988
      %v2990 = vpop.f32.mrb[0].mxu0
      %2991 = vmatprep.mubr.bf16.mxu0 0
      %2992 = vmatmul.mubr.bf16.gmra.mrb[0].mxu0 %v2843
      %v2993 = vpop.f32.mrb[0].mxu0
      %v2994 = vadd.f32 0.0, %v2993
      %v2995 = vpop.f32.mrb[0].mxu0
      %v2996 = vpop.f32.mrb[0].mxu0
      %v2997 = vadd.f32 0.0, %v2996
      %v2998 = vpop.f32.mrb[0].mxu0
      %2999 = vmatprep.mubr.bf16.mxu0 0
      %3000 = vmatmul.mubr.bf16.gmra.mrb[0].mxu0 %v2852
      %v3001 = vpop.f32.mrb[0].mxu0
      %v3002 = vadd.f32 0.0, %v3001
      %v3003 = vpop.f32.mrb[0].mxu0
      %v3004 = vpop.f32.mrb[0].mxu0
      %v3005 = vadd.f32 0.0, %v3004
      %v3006 = vpop.f32.mrb[0].mxu0
      %3007 = vmatprep.mubr.bf16.mxu0 0
      %3008 = vmatmul.mubr.bf16.gmra.mrb[0].mxu0 %v2861
      %v3009 = vpop.f32.mrb[0].mxu0
      %v3010 = vadd.f32 0.0, %v3009
      %v3011 = vpop.f32.mrb[0].mxu0
      %v3012 = vpop.f32.mrb[0].mxu0
      %v3013 = vadd.f32 0.0, %v3012
      %v3014 = vpop.f32.mrb[0].mxu0
      %3015 = vmatprep.mubr.bf16.mxu0 0
      %3016 = vmatmul.mubr.bf16.gmra.mrb[0].mxu0 %v2870
      %v3017 = vpop.f32.mrb[0].mxu0
      %v3018 = vadd.f32 0.0, %v3017
      %v3019 = vpop.f32.mrb[0].mxu0
      %v3020 = vpop.f32.mrb[0].mxu0
      %v3021 = vadd.f32 0.0, %v3020
      %v3022 = vpop.f32.mrb[0].mxu0
      %3023 = vdwg.mxu0
      %v3024 = vpack.c.bf16 %v2965, %v2962
      %v3025 = vpack.c.bf16 %v2973, %v2970
      %v3026 = vpack.c.bf16 %v2981, %v2978
      %v3027 = vpack.c.bf16 %v2989, %v2986
      %v3028 = vpack.c.bf16 %v2997, %v2994
      %v3029 = vpack.c.bf16 %v3005, %v3002
      %v3030 = vpack.c.bf16 %v3013, %v3010
      %v3031 = vpack.c.bf16 %v3021, %v3018
      %v3040 = vunpack.c.l.b16 %v3024
      %v3041 = vunpack.c.h.b16 %v3024
      %v3042 = vunpack.c.l.b16 %v3025
      %v3043 = vunpack.c.h.b16 %v3025
      %v3044 = vunpack.c.l.b16 %v3026
      %v3045 = vunpack.c.h.b16 %v3026
      %v3046 = vunpack.c.l.b16 %v3027
      %v3047 = vunpack.c.h.b16 %v3027
      %v3048 = vunpack.c.l.b16 %v3028
      %v3049 = vunpack.c.h.b16 %v3028
      %v3050 = vunpack.c.l.b16 %v3029
      %v3051 = vunpack.c.h.b16 %v3029
      %v3052 = vunpack.c.l.b16 %v3030
      %v3053 = vunpack.c.h.b16 %v3030
      %v3054 = vunpack.c.l.b16 %v3031
      %v3055 = vunpack.c.h.b16 %v3031
      %v3056 = vpack.c.b16 %v3040, %v3040
      %v3057 = vpack.c.b16 %v3041, %v3041
      %v3058 = vpack.c.b16 %v3042, %v3042
      %v3059 = vpack.c.b16 %v3043, %v3043
      %v3060 = vpack.c.b16 %v3044, %v3044
      %v3061 = vpack.c.b16 %v3045, %v3045
      %v3062 = vpack.c.b16 %v3046, %v3046
      %v3063 = vpack.c.b16 %v3047, %v3047
      %v3064 = vpack.c.b16 %v3048, %v3048
      %v3065 = vpack.c.b16 %v3049, %v3049
      %v3066 = vpack.c.b16 %v3050, %v3050
      %v3067 = vpack.c.b16 %v3051, %v3051
      %v3068 = vpack.c.b16 %v3052, %v3052
      %v3069 = vpack.c.b16 %v3053, %v3053
      %v3070 = vpack.c.b16 %v3054, %v3054
      %v3071 = vpack.c.b16 %v3055, %v3055
      %3088 = vst [vmem:[%s378] sm:$0xf] %v3056
      %3089 = vst [vmem:[%s378 + $0x4] sm:$0xf] %v3057
      %3090 = vst [vmem:[%s378 + $0x8] sm:$0xf] %v3058
      %3091 = vst [vmem:[%s378 + $0xc] sm:$0xf] %v3059
      %3092 = vst [vmem:[%s378 + $0x10] sm:$0xf] %v3060
      %3093 = vst [vmem:[%s378 + $0x14] sm:$0xf] %v3061
      %3094 = vst [vmem:[%s378 + $0x18] sm:$0xf] %v3062
      %3095 = vst [vmem:[%s378 + $0x1c] sm:$0xf] %v3063
      %3096 = vst [vmem:[%s378 + $0x20] sm:$0xf] %v3064
      %3097 = vst [vmem:[%s378 + $0x24] sm:$0xf] %v3065
      %3098 = vst [vmem:[%s378 + $0x28] sm:$0xf] %v3066
      %3099 = vst [vmem:[%s378 + $0x2c] sm:$0xf] %v3067
      %3100 = vst [vmem:[%s378 + $0x30] sm:$0xf] %v3068
      %3101 = vst [vmem:[%s378 + $0x34] sm:$0xf] %v3069
      %3102 = vst [vmem:[%s378 + $0x38] sm:$0xf] %v3070
      %3103 = vst [vmem:[%s378 + $0x3c] sm:$0xf] %v3071
      %v3104 = vmul.f32 %v2962, %v2599
      %v3105 = vmul.f32 %v2965, %v2604
      %v3106 = vmul.f32 %v2970, %v2609
      %v3107 = vmul.f32 %v2973, %v2614
      %v3108 = vmul.f32 %v2978, %v2619
      %v3109 = vmul.f32 %v2981, %v2624
      %v3110 = vmul.f32 %v2986, %v2629
      %v3111 = vmul.f32 %v2989, %v2634
      %v3112 = vmul.f32 %v2994, %v2639
      %v3113 = vmul.f32 %v2997, %v2644
      %v3114 = vmul.f32 %v3002, %v2649
      %v3115 = vmul.f32 %v3005, %v2654
      %v3116 = vmul.f32 %v3010, %v2659
      %v3117 = vmul.f32 %v3013, %v2664
      %v3118 = vmul.f32 %v3018, %v2669
      %v3119 = vmul.f32 %v3021, %v2674
      %v3120 = vadd.f32 %v3104, %v3105
      %v3121 = vadd.f32 %v3120, %v3106
      %v3122 = vadd.f32 %v3121, %v3107
      %v3123 = vadd.f32 %v3122, %v3108
      %v3124 = vadd.f32 %v3123, %v3109
      %v3125 = vadd.f32 %v3124, %v3110
      %v3126 = vadd.f32 %v3125, %v3111
      %v3127 = vadd.f32 %v3126, %v3112
      %v3128 = vadd.f32 %v3127, %v3113
      %v3129 = vadd.f32 %v3128, %v3114
      %v3130 = vadd.f32 %v3129, %v3115
      %v3131 = vadd.f32 %v3130, %v3116
      %v3132 = vadd.f32 %v3131, %v3117
      %v3133 = vadd.f32 %v3132, %v3118
      %v3134 = vadd.f32 %v3133, %v3119
      %v3135 = vrot.slane %v3134, 4
      %v3136 = vadd.f32 %v3134, %v3135
      %v3137 = vrot.slane %v3136, 2
      %v3138 = vadd.f32 %v3136, %v3137
      %v3139 = vrot.slane %v3138, 1
      %v3140 = vadd.f32 %v3138, %v3139
      %v3141 = vmul.f32 %v2962, %v2962
      %v3142 = vmul.f32 %v2965, %v2965
      %v3143 = vmul.f32 %v2970, %v2970
      %v3144 = vmul.f32 %v2973, %v2973
      %v3145 = vmul.f32 %v2978, %v2978
      %v3146 = vmul.f32 %v2981, %v2981
      %v3147 = vmul.f32 %v2986, %v2986
      %v3148 = vmul.f32 %v2989, %v2989
      %v3149 = vmul.f32 %v2994, %v2994
      %v3150 = vmul.f32 %v2997, %v2997
      %v3151 = vmul.f32 %v3002, %v3002
      %v3152 = vmul.f32 %v3005, %v3005
      %v3153 = vmul.f32 %v3010, %v3010
      %v3154 = vmul.f32 %v3013, %v3013
      %v3155 = vmul.f32 %v3018, %v3018
      %v3156 = vmul.f32 %v3021, %v3021
      %v3157 = vmul.f32 %v3141, %v2599
      %v3158 = vmul.f32 %v3142, %v2604
      %v3159 = vmul.f32 %v3143, %v2609
      %v3160 = vmul.f32 %v3144, %v2614
      %v3161 = vmul.f32 %v3145, %v2619
      %v3162 = vmul.f32 %v3146, %v2624
      %v3163 = vmul.f32 %v3147, %v2629
      %v3164 = vmul.f32 %v3148, %v2634
      %v3165 = vmul.f32 %v3149, %v2639
      %v3166 = vmul.f32 %v3150, %v2644
      %v3167 = vmul.f32 %v3151, %v2649
      %v3168 = vmul.f32 %v3152, %v2654
      %v3169 = vmul.f32 %v3153, %v2659
      %v3170 = vmul.f32 %v3154, %v2664
      %v3171 = vmul.f32 %v3155, %v2669
      %v3172 = vmul.f32 %v3156, %v2674
      %v3173 = vadd.f32 %v3157, %v3158
      %v3174 = vadd.f32 %v3173, %v3159
      %v3175 = vadd.f32 %v3174, %v3160
      %v3176 = vadd.f32 %v3175, %v3161
      %v3177 = vadd.f32 %v3176, %v3162
      %v3178 = vadd.f32 %v3177, %v3163
      %v3179 = vadd.f32 %v3178, %v3164
      %v3180 = vadd.f32 %v3179, %v3165
      %v3181 = vadd.f32 %v3180, %v3166
      %v3182 = vadd.f32 %v3181, %v3167
      %v3183 = vadd.f32 %v3182, %v3168
      %v3184 = vadd.f32 %v3183, %v3169
      %v3185 = vadd.f32 %v3184, %v3170
      %v3186 = vadd.f32 %v3185, %v3171
      %v3187 = vadd.f32 %v3186, %v3172
      %v3188 = vrot.slane %v3187, 4
      %v3189 = vadd.f32 %v3187, %v3188
      %v3190 = vrot.slane %v3189, 2
      %v3191 = vadd.f32 %v3189, %v3190
      %v3192 = vrot.slane %v3191, 1
      %v3193 = vadd.f32 %v3191, %v3192
      %vm3194 = vcmask 1040384
      %v3195 = vsel %vm3194, %v2712, %v2765
      %vm3196 = vcmask 1041408
      %v3197 = vsel %vm3196, %v3195, %v3140
      %vm3198 = vcmask 1042432
      %v3199 = vsel %vm3198, %v3197, %v3193
      %vm3200 = vcmask 1043456
      %v3201 = vsel %vm3200, %v3199, 0.0
      %3202 = vst [vmem:[%s383] sm:$0xff] %v3201
      %s3203 = smul.u32 16, %s19
      %p3204 = scmp.lt.s32.totalorder %s3203, 95
      %s3205 = scalar_select %p3204, %s3203, 95
      %s3206 = smul.addr %s3205, 4
      %s3207 = scalar_lea.vmem %s5, %s3206
      %s3208 = smul.u32 16, %s19
      %p3209 = scmp.lt.s32.totalorder %s3208, 95
      %s3210 = scalar_select %p3209, %s3208, 95
      %s3211 = smul.addr %s3210, 4
      %s3212 = scalar_lea.vmem %s6, %s3211
      %p3213 = scmp.lt.s32.totalorder %s19, 5
      %s3214 = scalar_select %p3213, %s19, 5
      %s3215 = smul.addr %s3214, 8
      %s3216 = scalar_lea.vmem %s7, %s3215
      // Predicated region
      $region41: #{baseline_arch_forward.3} parent=39 // pred_check
        %p3217 = pneg %p161
      $region42: #{baseline_arch_forward.3} parent=39 // pred_check_branch
        %3219 = sbr.rel (%p3217) target = $region44
      $region43: #{baseline_arch_forward.3} parent=39 // pred_region
        %s3220 = smul.u32 16, %s19
      $region44: #{baseline_arch_forward.3} parent=39 // pred_fallthru
        _
      // Predicated region
      $region45: #{baseline_arch_forward.3} parent=39 // pred_check
        %p3221 = pneg %p187
      $region46: #{baseline_arch_forward.3} parent=39 // pred_check_branch
        %3223 = sbr.rel (%p3221) target = $region48
      $region47: #{baseline_arch_forward.3} parent=39 // pred_region
        %s3224 = smul.u32 16, %s19
      $region48: #{baseline_arch_forward.3} parent=39 // pred_fallthru
        _
      // Predicated region
      $region49: #{baseline_arch_forward.3} parent=39 // pred_check
        %p3225 = pneg %p213
      $region50: #{baseline_arch_forward.3} parent=39 // pred_check_branch
        %3227 = sbr.rel (%p3225) target = $region52
      $region51: #{baseline_arch_forward.3} parent=39 // pred_region
        _
      $region52: #{baseline_arch_forward.3} parent=39 // pred_fallthru
        _
    $region40: #{baseline_arch_forward.3} parent=5 // pred_fallthru
      _
    %p3228 = scmp.le.s32.totalorder 2, %s14
    // Predicated region
    $region53: #{baseline_arch_forward.3} parent=5 // pred_check
      %p3229 = pneg %p3228
    $region54: #{baseline_arch_forward.3} parent=5 // pred_check_branch
      %3231 = sbr.rel (%p3229) target = $region56
    $region55: #{baseline_arch_forward.3} parent=5 // pred_region
      %s3232 = ssub.s32 %s14, 2
      // Predicated region
      $region57: #{baseline_arch_forward.3} parent=55 // pred_check
        %p3233 = pneg %p167
      $region58: #{baseline_arch_forward.3} parent=55 // pred_check_branch
        %3235 = sbr.rel (%p3233) target = $region60
      $region59: #{baseline_arch_forward.3} parent=55 // pred_region
        %s3236 = smul.u32 16, %s20
        %p3237 = scmp.lt.s32.totalorder %s3236, 95
        %s3238 = scalar_select %p3237, %s3236, 95
        %s3239 = smul.addr %s3238, 4
        %s3240 = scalar_lea.vmem %s5, %s3239
      $region60: #{baseline_arch_forward.3} parent=55 // pred_fallthru
        _
      // Predicated region
      $region61: #{baseline_arch_forward.3} parent=55 // pred_check
        %p3241 = pneg %p193
      $region62: #{baseline_arch_forward.3} parent=55 // pred_check_branch
        %3243 = sbr.rel (%p3241) target = $region64
      $region63: #{baseline_arch_forward.3} parent=55 // pred_region
        %s3244 = smul.u32 16, %s20
        %p3245 = scmp.lt.s32.totalorder %s3244, 95
        %s3246 = scalar_select %p3245, %s3244, 95
        %s3247 = smul.addr %s3246, 4
        %s3248 = scalar_lea.vmem %s6, %s3247
      $region64: #{baseline_arch_forward.3} parent=55 // pred_fallthru
        _
      // Predicated region
      $region65: #{baseline_arch_forward.3} parent=55 // pred_check
        %p3249 = pneg %p219
      $region66: #{baseline_arch_forward.3} parent=55 // pred_check_branch
        %3251 = sbr.rel (%p3249) target = $region68
      $region67: #{baseline_arch_forward.3} parent=55 // pred_region
        %p3252 = scmp.lt.s32.totalorder %s20, 5
        %s3253 = scalar_select %p3252, %s20, 5
        %s3254 = smul.addr %s3253, 8
        %s3255 = scalar_lea.vmem %s7, %s3254
      $region68: #{baseline_arch_forward.3} parent=55 // pred_fallthru
        _
    $region56: #{baseline_arch_forward.3} parent=5 // pred_fallthru
      _
  $region6: #{baseline_arch_forward.3} parent=0 // loop_footer
    %s18 = sadd.s32 1, %s14
  $region7: #{baseline_arch_forward.3} parent=0 // loop_footer_branch
    %13 = sbr.rel target = $region3
  $region8: #{baseline_arch_forward.3} parent=0 // loop_exit
    _

// kernel: baseline_arch_forward.4
$region0: #{baseline_arch_forward.4}
  #allocation0 [shape = 'u32[]', space=smem, size = 0x4, offset = 0x4, fixed_abs, tag = 'smem constant byte address 0x4 - core index']
  #allocation1 [shape = 'u32[144,128]{1,0:T(1,128)}', space=vmem, size = 0x12000, scoped, tag = 'internal scratch']
  #allocation2 [shape = 'bf16[192,128]{1,0:T(16,128)(2,1)}', space=vmem, size = 0xc000, scoped, tag = 'scratch operand']
  %s0 = inlined_call_operand.vmem [shape: bf16[320,128], index: 0, kind: input, shape index: {}, may-alias: {0,1}]
  %s1 = inlined_call_operand.vmem [shape: bf16[320,128], index: 1, kind: input, shape index: {}, may-alias: {0,1}]
  %s2 = inlined_call_operand.vmem [shape: f32[320,1], index: 2, kind: input, shape index: {}, may-alias: {2,3}]
  %s3 = inlined_call_operand.vmem [shape: f32[320,1], index: 3, kind: input, shape index: {}, may-alias: {2,3}]
  %s4 = inlined_call_operand.vmem [shape: f32[4,128], index: 4, kind: input, shape index: {}]
  %s5 = inlined_call_operand.vmem [shape: bf16[1152,128], index: 5, kind: input, shape index: {}]
  %s6 = inlined_call_operand.vmem [shape: f32[256,1], index: 6, kind: input, shape index: {}]
  %s7 = inlined_call_operand.vmem [shape: f32[256,128], index: 7, kind: output, shape index: {0}]
  %s8 = inlined_call_operand.vmem [shape: f32[2,8,128], index: 8, kind: output, shape index: {1}]
  %9 = xla_tuple %s7, %s8
  %s10 = sld [smem:[#allocation0]]
  $region69: #{baseline_arch_forward.4} parent=0
    _
  %s12 = ssub.s32 1, %s10
  %s13 = scalar_select 0, %s12, %s10
  loop: start=0, step=1, limit=4
  $region2: #{baseline_arch_forward.4} parent=0 // loop_pre_header
    _
  $region3: #{baseline_arch_forward.4} parent=0 // loop_header
    %s15 = sphi 0, %s19
    %p16 = scmp.ge.s32.totalorder %s15, 4
    %s25 = sphi 0, %s27
    %s28 = sphi 0, %s25
    %s29 = sphi 0, %s28
    %s45 = sphi 0, %s29
    %s55 = sphi 0, %s57
    %s58 = sphi 0, %s55
    %s59 = sphi 0, %s58
    %s75 = sphi 0, %s59
    %s81 = sphi 0, %s83
    %s84 = sphi 0, %s81
    %s85 = sphi 0, %s84
    %s101 = sphi 0, %s85
    %s111 = sphi 0, %s113
    %s114 = sphi 0, %s111
    %s115 = sphi 0, %s114
    %s131 = sphi 0, %s115
    %s135 = sphi 0, %s135
    %s137 = sphi 0, %s135
    %s138 = sphi 0, %s137
    %s152 = sphi 0, %s138
    %s156 = sphi 0, %s156
    %s158 = sphi 0, %s156
    %s159 = sphi 0, %s158
    %s173 = sphi 0, %s159
    %s179 = sphi 0, %s181
    %s182 = sphi 0, %s179
    %s183 = sphi 0, %s182
    %s199 = sphi 0, %s183
    %s205 = sphi 0, %s207
    %s208 = sphi 0, %s205
    %s209 = sphi 0, %s208
    %s225 = sphi 0, %s209
    %s231 = sphi 0, %s233
    %s234 = sphi 0, %s231
    %s235 = sphi 0, %s234
    %s251 = sphi 0, %s235
  $region4: #{baseline_arch_forward.4} parent=0 // loop_header_branch
    %18 = sbr.rel (%p16) target = $region8
  $region5: #{baseline_arch_forward.4} parent=0 // loop_body
    %s20 = ssub.s32 %s15, 1
    %s21 = ssub.s32 %s15, 2
    %s22 = sadd.s32 %s15, 1
    %s23 = ssub.s32 %s15, %s22
    %p24 = scmp.eq.s32.totalorder %s23, 0
    %s26 = sadd.s32 %s25, 1
    %s27 = scalar_select %p24, %s25, %s26
    %p30 = pneg %p24
    %p31 = scmp.eq.s32.totalorder %s15, 1
    %p32 = por %p30, %p31
    %p33 = scmp.ne.s32.totalorder %s25, %s28
    %p34 = scmp.eq.s32.totalorder %s15, 0
    %p35 = por %p33, %p34
    %p36 = scmp.ne.s32.totalorder %s25, %s28
    %p37 = scmp.eq.s32.totalorder %s20, 1
    %p38 = por %p36, %p37
    %p39 = scmp.ne.s32.totalorder %s28, %s29
    %p40 = scmp.eq.s32.totalorder %s20, 0
    %p41 = por %p39, %p40
    %p42 = scmp.ne.s32.totalorder %s28, %s29
    %p43 = scmp.eq.s32.totalorder %s21, 1
    %p44 = por %p42, %p43
    %p46 = scmp.ne.s32.totalorder %s29, %s45
    %p47 = scmp.eq.s32.totalorder %s21, 0
    %p48 = por %p46, %p47
    %s49 = sadd.s32 %s15, 1
    %s50 = smul.u32 %s49, 2
    %s51 = sadd.s32 %s22, 1
    %s52 = smul.u32 %s51, 2
    %s53 = ssub.s32 %s50, %s52
    %p54 = scmp.eq.s32.totalorder %s53, 0
    %s56 = sadd.s32 %s55, 1
    %s57 = scalar_select %p54, %s55, %s56
    %p60 = pneg %p54
    %p61 = scmp.eq.s32.totalorder %s15, 1
    %p62 = por %p60, %p61
    %p63 = scmp.ne.s32.totalorder %s55, %s58
    %p64 = scmp.eq.s32.totalorder %s15, 0
    %p65 = por %p63, %p64
    %p66 = scmp.ne.s32.totalorder %s55, %s58
    %p67 = scmp.eq.s32.totalorder %s20, 1
    %p68 = por %p66, %p67
    %p69 = scmp.ne.s32.totalorder %s58, %s59
    %p70 = scmp.eq.s32.totalorder %s20, 0
    %p71 = por %p69, %p70
    %p72 = scmp.ne.s32.totalorder %s58, %s59
    %p73 = scmp.eq.s32.totalorder %s21, 1
    %p74 = por %p72, %p73
    %p76 = scmp.ne.s32.totalorder %s59, %s75
    %p77 = scmp.eq.s32.totalorder %s21, 0
    %p78 = por %p76, %p77
    %s79 = ssub.s32 %s15, %s22
    %p80 = scmp.eq.s32.totalorder %s79, 0
    %s82 = sadd.s32 %s81, 1
    %s83 = scalar_select %p80, %s81, %s82
    %p86 = pneg %p80
    %p87 = scmp.eq.s32.totalorder %s15, 1
    %p88 = por %p86, %p87
    %p89 = scmp.ne.s32.totalorder %s81, %s84
    %p90 = scmp.eq.s32.totalorder %s15, 0
    %p91 = por %p89, %p90
    %p92 = scmp.ne.s32.totalorder %s81, %s84
    %p93 = scmp.eq.s32.totalorder %s20, 1
    %p94 = por %p92, %p93
    %p95 = scmp.ne.s32.totalorder %s84, %s85
    %p96 = scmp.eq.s32.totalorder %s20, 0
    %p97 = por %p95, %p96
    %p98 = scmp.ne.s32.totalorder %s84, %s85
    %p99 = scmp.eq.s32.totalorder %s21, 1
    %p100 = por %p98, %p99
    %p102 = scmp.ne.s32.totalorder %s85, %s101
    %p103 = scmp.eq.s32.totalorder %s21, 0
    %p104 = por %p102, %p103
    %s105 = sadd.s32 %s15, 1
    %s106 = smul.u32 %s105, 2
    %s107 = sadd.s32 %s22, 1
    %s108 = smul.u32 %s107, 2
    %s109 = ssub.s32 %s106, %s108
    %p110 = scmp.eq.s32.totalorder %s109, 0
    %s112 = sadd.s32 %s111, 1
    %s113 = scalar_select %p110, %s111, %s112
    %p116 = pneg %p110
    %p117 = scmp.eq.s32.totalorder %s15, 1
    %p118 = por %p116, %p117
    %p119 = scmp.ne.s32.totalorder %s111, %s114
    %p120 = scmp.eq.s32.totalorder %s15, 0
    %p121 = por %p119, %p120
    %p122 = scmp.ne.s32.totalorder %s111, %s114
    %p123 = scmp.eq.s32.totalorder %s20, 1
    %p124 = por %p122, %p123
    %p125 = scmp.ne.s32.totalorder %s114, %s115
    %p126 = scmp.eq.s32.totalorder %s20, 0
    %p127 = por %p125, %p126
    %p128 = scmp.ne.s32.totalorder %s114, %s115
    %p129 = scmp.eq.s32.totalorder %s21, 1
    %p130 = por %p128, %p129
    %p132 = scmp.ne.s32.totalorder %s115, %s131
    %p133 = scmp.eq.s32.totalorder %s21, 0
    %p134 = por %p132, %p133
    %s136 = sadd.s32 %s135, 1
    %p139 = scmp.eq.s32.totalorder %s15, 1
    %p140 = scmp.ne.s32.totalorder %s135, %s137
    %p141 = scmp.eq.s32.totalorder %s15, 0
    %p142 = por %p140, %p141
    %p143 = scmp.ne.s32.totalorder %s135, %s137
    %p144 = scmp.eq.s32.totalorder %s20, 1
    %p145 = por %p143, %p144
    %p146 = scmp.ne.s32.totalorder %s137, %s138
    %p147 = scmp.eq.s32.totalorder %s20, 0
    %p148 = por %p146, %p147
    %p149 = scmp.ne.s32.totalorder %s137, %s138
    %p150 = scmp.eq.s32.totalorder %s21, 1
    %p151 = por %p149, %p150
    %p153 = scmp.ne.s32.totalorder %s138, %s152
    %p154 = scmp.eq.s32.totalorder %s21, 0
    %p155 = por %p153, %p154
    %s157 = sadd.s32 %s156, 1
    %p160 = scmp.eq.s32.totalorder %s15, 1
    %p161 = scmp.ne.s32.totalorder %s156, %s158
    %p162 = scmp.eq.s32.totalorder %s15, 0
    %p163 = por %p161, %p162
    %p164 = scmp.ne.s32.totalorder %s156, %s158
    %p165 = scmp.eq.s32.totalorder %s20, 1
    %p166 = por %p164, %p165
    %p167 = scmp.ne.s32.totalorder %s158, %s159
    %p168 = scmp.eq.s32.totalorder %s20, 0
    %p169 = por %p167, %p168
    %p170 = scmp.ne.s32.totalorder %s158, %s159
    %p171 = scmp.eq.s32.totalorder %s21, 1
    %p172 = por %p170, %p171
    %p174 = scmp.ne.s32.totalorder %s159, %s173
    %p175 = scmp.eq.s32.totalorder %s21, 0
    %p176 = por %p174, %p175
    %s177 = ssub.s32 %s15, %s22
    %p178 = scmp.eq.s32.totalorder %s177, 0
    %s180 = sadd.s32 %s179, 1
    %s181 = scalar_select %p178, %s179, %s180
    %p184 = pneg %p178
    %p185 = scmp.eq.s32.totalorder %s15, 1
    %p186 = por %p184, %p185
    %p187 = scmp.ne.s32.totalorder %s179, %s182
    %p188 = scmp.eq.s32.totalorder %s15, 0
    %p189 = por %p187, %p188
    %p190 = scmp.ne.s32.totalorder %s179, %s182
    %p191 = scmp.eq.s32.totalorder %s20, 1
    %p192 = por %p190, %p191
    %p193 = scmp.ne.s32.totalorder %s182, %s183
    %p194 = scmp.eq.s32.totalorder %s20, 0
    %p195 = por %p193, %p194
    %p196 = scmp.ne.s32.totalorder %s182, %s183
    %p197 = scmp.eq.s32.totalorder %s21, 1
    %p198 = por %p196, %p197
    %p200 = scmp.ne.s32.totalorder %s183, %s199
    %p201 = scmp.eq.s32.totalorder %s21, 0
    %p202 = por %p200, %p201
    %s203 = ssub.s32 %s15, %s22
    %p204 = scmp.eq.s32.totalorder %s203, 0
    %s206 = sadd.s32 %s205, 1
    %s207 = scalar_select %p204, %s205, %s206
    %p210 = pneg %p204
    %p211 = scmp.eq.s32.totalorder %s15, 1
    %p212 = por %p210, %p211
    %p213 = scmp.ne.s32.totalorder %s205, %s208
    %p214 = scmp.eq.s32.totalorder %s15, 0
    %p215 = por %p213, %p214
    %p216 = scmp.ne.s32.totalorder %s205, %s208
    %p217 = scmp.eq.s32.totalorder %s20, 1
    %p218 = por %p216, %p217
    %p219 = scmp.ne.s32.totalorder %s208, %s209
    %p220 = scmp.eq.s32.totalorder %s20, 0
    %p221 = por %p219, %p220
    %p222 = scmp.ne.s32.totalorder %s208, %s209
    %p223 = scmp.eq.s32.totalorder %s21, 1
    %p224 = por %p222, %p223
    %p226 = scmp.ne.s32.totalorder %s209, %s225
    %p227 = scmp.eq.s32.totalorder %s21, 0
    %p228 = por %p226, %p227
    %s229 = ssub.s32 %s15, %s22
    %p230 = scmp.eq.s32.totalorder %s229, 0
    %s232 = sadd.s32 %s231, 1
    %s233 = scalar_select %p230, %s231, %s232
    %p236 = pneg %p230
    %p237 = scmp.eq.s32.totalorder %s15, 1
    %p238 = por %p236, %p237
    %p239 = scmp.ne.s32.totalorder %s231, %s234
    %p240 = scmp.eq.s32.totalorder %s15, 0
    %p241 = por %p239, %p240
    %p242 = scmp.ne.s32.totalorder %s231, %s234
    %p243 = scmp.eq.s32.totalorder %s20, 1
    %p244 = por %p242, %p243
    %p245 = scmp.ne.s32.totalorder %s234, %s235
    %p246 = scmp.eq.s32.totalorder %s20, 0
    %p247 = por %p245, %p246
    %p248 = scmp.ne.s32.totalorder %s234, %s235
    %p249 = scmp.eq.s32.totalorder %s21, 1
    %p250 = por %p248, %p249
    %p252 = scmp.ne.s32.totalorder %s235, %s251
    %p253 = scmp.eq.s32.totalorder %s21, 0
    %p254 = por %p252, %p253
    %p255 = scmp.le.s32.totalorder 1, %s15
    %p256 = scmp.lt.s32.totalorder %s15, 3
    %p257 = pnand %p255, %p256
    %p258 = pneg %p257
    // Predicated region
    $region9: #{baseline_arch_forward.4} parent=5 // pred_check
      _
    $region10: #{baseline_arch_forward.4} parent=5 // pred_check_branch
      %260 = sbr.rel (%p257) target = $region12
    $region11: #{baseline_arch_forward.4} parent=5 // pred_region
      %s261 = ssub.s32 %s15, 1
      // Predicated region
      $region13: #{baseline_arch_forward.4} parent=11 // pred_check
        %p262 = pneg %p148
      $region14: #{baseline_arch_forward.4} parent=11 // pred_check_branch
        %264 = sbr.rel (%p262) target = $region16
      $region15: #{baseline_arch_forward.4} parent=11 // pred_region
        _
      $region16: #{baseline_arch_forward.4} parent=11 // pred_fallthru
        _
      // Predicated region
      $region17: #{baseline_arch_forward.4} parent=11 // pred_check
        %p265 = pneg %p169
      $region18: #{baseline_arch_forward.4} parent=11 // pred_check_branch
        %267 = sbr.rel (%p265) target = $region20
      $region19: #{baseline_arch_forward.4} parent=11 // pred_region
        _
      $region20: #{baseline_arch_forward.4} parent=11 // pred_fallthru
        _
    $region12: #{baseline_arch_forward.4} parent=5 // pred_fallthru
      _
    %p268 = scmp.lt.s32.totalorder %s15, 2
    // Predicated region
    $region21: #{baseline_arch_forward.4} parent=5 // pred_check
      %p269 = pneg %p268
    $region22: #{baseline_arch_forward.4} parent=5 // pred_check_branch
      %271 = sbr.rel (%p269) target = $region24
    $region23: #{baseline_arch_forward.4} parent=5 // pred_region
      // Predicated region
      $region25: #{baseline_arch_forward.4} parent=23 // pred_check
        %p272 = pneg %p35
      $region26: #{baseline_arch_forward.4} parent=23 // pred_check_branch
        %274 = sbr.rel (%p272) target = $region28
      $region27: #{baseline_arch_forward.4} parent=23 // pred_region
        %s275 = smul.u32 16, %s15
        %s276 = ssub.s32 40, %s275
        %p277 = scmp.lt.s32.totalorder %s276, 16
        %s278 = scalar_select %p277, %s276, 16
        %s279 = smul.u32 64, %s278
        %p280 = scmp.lt.s32.totalorder %s275, 39
        %s281 = scalar_select %p280, %s275, 39
        %s282 = smul.addr %s281, 4
        %s283 = scalar_lea.vmem %s0, %s282
        %s284 = smul.u32 16, %s15
        %s285 = ssub.s32 40, %s284
        %p286 = scmp.lt.s32.totalorder %s285, 16
        %s287 = scalar_select %p286, %s285, 16
        %s288 = smul.u32 64, %s287
      $region28: #{baseline_arch_forward.4} parent=23 // pred_fallthru
        _
      // Predicated region
      $region29: #{baseline_arch_forward.4} parent=23 // pred_check
        %p289 = pneg %p65
      $region30: #{baseline_arch_forward.4} parent=23 // pred_check_branch
        %291 = sbr.rel (%p289) target = $region32
      $region31: #{baseline_arch_forward.4} parent=23 // pred_region
        %s292 = sadd.s32 %s15, 1
        %s293 = smul.u32 %s292, 2
        %s294 = smul.u32 8, %s293
        %p295 = scmp.lt.s32.totalorder %s294, 39
        %s296 = scalar_select %p295, %s294, 39
        %s297 = smul.addr %s296, 4
        %s298 = scalar_lea.vmem %s1, %s297
        %s299 = sadd.s32 %s15, 1
        %s300 = smul.u32 %s299, 2
        %s301 = smul.u32 8, %s300
      $region32: #{baseline_arch_forward.4} parent=23 // pred_fallthru
        _
      // Predicated region
      $region33: #{baseline_arch_forward.4} parent=23 // pred_check
        %p302 = pneg %p91
      $region34: #{baseline_arch_forward.4} parent=23 // pred_check_branch
        %304 = sbr.rel (%p302) target = $region36
      $region35: #{baseline_arch_forward.4} parent=23 // pred_region
        %s305 = smul.u32 16, %s15
        %s306 = ssub.s32 40, %s305
        %p307 = scmp.lt.s32.totalorder %s306, 16
        %s308 = scalar_select %p307, %s306, 16
        %s309 = smul.u32 128, %s308
        %p310 = scmp.lt.s32.totalorder %s305, 39
        %s311 = scalar_select %p310, %s305, 39
        %s312 = smul.addr %s311, 8
        %s313 = scalar_lea.vmem %s2, %s312
        %s314 = smul.u32 16, %s15
        %s315 = ssub.s32 40, %s314
        %p316 = scmp.lt.s32.totalorder %s315, 16
        %s317 = scalar_select %p316, %s315, 16
        %s318 = smul.u32 128, %s317
      $region36: #{baseline_arch_forward.4} parent=23 // pred_fallthru
        _
      // Predicated region
      $region37: #{baseline_arch_forward.4} parent=23 // pred_check
        %p319 = pneg %p121
      $region38: #{baseline_arch_forward.4} parent=23 // pred_check_branch
        %321 = sbr.rel (%p319) target = $region40
      $region39: #{baseline_arch_forward.4} parent=23 // pred_region
        %s322 = sadd.s32 %s15, 1
        %s323 = smul.u32 %s322, 2
        %s324 = smul.u32 8, %s323
        %p325 = scmp.lt.s32.totalorder %s324, 39
        %s326 = scalar_select %p325, %s324, 39
        %s327 = smul.addr %s326, 8
        %s328 = scalar_lea.vmem %s3, %s327
        %s329 = sadd.s32 %s15, 1
        %s330 = smul.u32 %s329, 2
        %s331 = smul.u32 8, %s330
      $region40: #{baseline_arch_forward.4} parent=23 // pred_fallthru
        _
      // Predicated region
      $region41: #{baseline_arch_forward.4} parent=23 // pred_check
        %p332 = pneg %p189
      $region42: #{baseline_arch_forward.4} parent=23 // pred_check_branch
        %334 = sbr.rel (%p332) target = $region44
      $region43: #{baseline_arch_forward.4} parent=23 // pred_region
        %s335 = smul.u32 16, %s15
        %p336 = scmp.lt.s32.totalorder %s335, 31
        %s337 = scalar_select %p336, %s335, 31
        %s338 = smul.addr %s337, 8
        %s339 = scalar_lea.vmem %s6, %s338
        %s340 = smul.u32 16, %s15
      $region44: #{baseline_arch_forward.4} parent=23 // pred_fallthru
        _
    $region24: #{baseline_arch_forward.4} parent=5 // pred_fallthru
      _
    %p341 = scmp.le.s32.totalorder 1, %s15
    %p342 = scmp.lt.s32.totalorder %s15, 3
    %p343 = pnand %p341, %p342
    %p344 = pneg %p343
    // Predicated region
    $region45: #{baseline_arch_forward.4} parent=5 // pred_check
      _
    $region46: #{baseline_arch_forward.4} parent=5 // pred_check_branch
      %346 = sbr.rel (%p343) target = $region48
    $region47: #{baseline_arch_forward.4} parent=5 // pred_region
      %s347 = ssub.s32 %s15, 1
      %s348 = smul.u32 16, %s20
      %s349 = ssub.s32 40, %s348
      %p350 = scmp.lt.s32.totalorder %s349, 16
      %s351 = scalar_select %p350, %s349, 16
      %s352 = smul.u32 64, %s351
      %p353 = scmp.lt.s32.totalorder %s348, 39
      %s354 = scalar_select %p353, %s348, 39
      %s355 = smul.addr %s354, 4
      %s356 = scalar_lea.vmem %s0, %s355
      %p357 = pneg %p41
      %p358 = pneg %p38
      %s359 = sadd.s32 %s20, 1
      %s360 = smul.u32 %s359, 2
      %s361 = smul.u32 8, %s360
      %p362 = scmp.lt.s32.totalorder %s361, 39
      %s363 = scalar_select %p362, %s361, 39
      %s364 = smul.addr %s363, 4
      %s365 = scalar_lea.vmem %s1, %s364
      %p366 = pneg %p71
      %p367 = pneg %p68
      %s368 = smul.u32 16, %s20
      %s369 = ssub.s32 40, %s368
      %p370 = scmp.lt.s32.totalorder %s369, 16
      %s371 = scalar_select %p370, %s369, 16
      %s372 = smul.u32 128, %s371
      %p373 = scmp.lt.s32.totalorder %s368, 39
      %s374 = scalar_select %p373, %s368, 39
      %s375 = smul.addr %s374, 8
      %s376 = scalar_lea.vmem %s2, %s375
      %p377 = pneg %p97
      %p378 = pneg %p94
      %s379 = sadd.s32 %s20, 1
      %s380 = smul.u32 %s379, 2
      %s381 = smul.u32 8, %s380
      %p382 = scmp.lt.s32.totalorder %s381, 39
      %s383 = scalar_select %p382, %s381, 39
      %s384 = smul.addr %s383, 8
      %s385 = scalar_lea.vmem %s3, %s384
      %p386 = pneg %p127
      %p387 = pneg %p124
      %p388 = pneg %p148
      %p389 = pneg %p145
      %p390 = pneg %p169
      %p391 = pneg %p166
      %s392 = smul.u32 16, %s20
      %p393 = scmp.lt.s32.totalorder %s392, 31
      %s394 = scalar_select %p393, %s392, 31
      %s395 = smul.addr %s394, 8
      %s396 = scalar_lea.vmem %s6, %s395
      %p397 = pneg %p195
      %p398 = pneg %p192
      %p399 = pneg %p221
      %p400 = pneg %p218
      %s401 = smul.u32 16, %s20
      %p402 = scmp.lt.s32.totalorder %s401, 31
      %s403 = scalar_select %p402, %s401, 31
      %s404 = smul.addr %s403, 8
      %s405 = scalar_lea.vmem %s7, %s404
      %p406 = pneg %p247
      %p407 = pneg %p244
      %p408 = scmp.lt.s32.totalorder %s20, 1
      %s409 = scalar_select %p408, %s20, 1
      %s410 = smul.addr %s409, 8
      %s411 = scalar_lea.vmem %s8, %s410
      %s412 = smul.u32 16, %s20
      %s413 = ssub.s32 40, %s412
      %p414 = scmp.lt.s32.totalorder %s413, 16
      %s415 = scalar_select %p414, %s413, 16
      %s416 = smul.u32 64, %s415
      %p417 = scmp.lt.s32.totalorder %s412, 39
      %s418 = scalar_select %p417, %s412, 39
      %s419 = smul.addr %s418, 4
      %s420 = scalar_lea.vmem %s0, %s419
      %s421 = smul.u32 16, %s20
      %s422 = ssub.s32 40, %s421
      %p423 = scmp.lt.s32.totalorder %s422, 16
      %s424 = scalar_select %p423, %s422, 16
      %s425 = smul.u32 64, %s424
      %s426 = sadd.s32 %s20, 1
      %s427 = smul.u32 %s426, 2
      %s428 = smul.u32 8, %s427
      %p429 = scmp.lt.s32.totalorder %s428, 39
      %s430 = scalar_select %p429, %s428, 39
      %s431 = smul.addr %s430, 4
      %s432 = scalar_lea.vmem %s1, %s431
      %s433 = sadd.s32 %s20, 1
      %s434 = smul.u32 %s433, 2
      %s435 = smul.u32 8, %s434
      %s436 = smul.u32 16, %s20
      %s437 = ssub.s32 40, %s436
      %p438 = scmp.lt.s32.totalorder %s437, 16
      %s439 = scalar_select %p438, %s437, 16
      %s440 = smul.u32 128, %s439
      %p441 = scmp.lt.s32.totalorder %s436, 39
      %s442 = scalar_select %p441, %s436, 39
      %s443 = smul.addr %s442, 8
      %s444 = scalar_lea.vmem %s2, %s443
      %s445 = smul.u32 16, %s20
      %s446 = ssub.s32 40, %s445
      %p447 = scmp.lt.s32.totalorder %s446, 16
      %s448 = scalar_select %p447, %s446, 16
      %s449 = smul.u32 128, %s448
      %s450 = sadd.s32 %s20, 1
      %s451 = smul.u32 %s450, 2
      %s452 = smul.u32 8, %s451
      %p453 = scmp.lt.s32.totalorder %s452, 39
      %s454 = scalar_select %p453, %s452, 39
      %s455 = smul.addr %s454, 8
      %s456 = scalar_lea.vmem %s3, %s455
      %s457 = sadd.s32 %s20, 1
      %s458 = smul.u32 %s457, 2
      %s459 = smul.u32 8, %s458
      %s460 = smul.u32 16, %s20
      %p461 = scmp.lt.s32.totalorder %s460, 31
      %s462 = scalar_select %p461, %s460, 31
      %s463 = smul.addr %s462, 8
      %s464 = scalar_lea.vmem %s6, %s463
      %s465 = smul.u32 16, %s20
      %s466 = smul.u32 16, %s20
      %p467 = scmp.lt.s32.totalorder %s466, 31
      %s468 = scalar_select %p467, %s466, 31
      %s469 = smul.addr %s468, 8
      %s470 = scalar_lea.vmem %s7, %s469
      %s471 = smul.u32 16, %s20
      %p472 = scmp.lt.s32.totalorder %s20, 1
      %s473 = scalar_select %p472, %s20, 1
      %s474 = smul.addr %s473, 8
      %s475 = scalar_lea.vmem %s8, %s474
      %v477 = vld [vmem:[%s4] sm:$0xf]
      %v479 = vrot.slane %v477, 1
      %v481 = vmul.f32 %v477, %v479
      %v482 = vld [vmem:[%s420] sm:$0xf]
      %v483 = vld [vmem:[%s420 + $0x4] sm:$0xf]
      %v484 = vld [vmem:[%s420 + $0x8] sm:$0xf]
      %v485 = vld [vmem:[%s420 + $0xc] sm:$0xf]
      %v486 = vld [vmem:[%s420 + $0x10] sm:$0xf]
      %v487 = vld [vmem:[%s420 + $0x14] sm:$0xf]
      %v488 = vld [vmem:[%s420 + $0x18] sm:$0xf]
      %v489 = vld [vmem:[%s420 + $0x1c] sm:$0xf]
      %v490 = vunpack.c.l.bf16 %v482
      %v491 = vunpack.c.l.bf16 %v483
      %v492 = vunpack.c.l.bf16 %v484
      %v493 = vunpack.c.l.bf16 %v485
      %v494 = vunpack.c.l.bf16 %v486
      %v495 = vunpack.c.l.bf16 %v487
      %v496 = vunpack.c.l.bf16 %v488
      %v497 = vunpack.c.l.bf16 %v489
      %v498 = vld [vmem:[%s444] sm:$0xff]
      %v499 = vld [vmem:[%s444 + $0x8] sm:$0xff]
      %v500 = vld [vmem:[%s444 + $0x10] sm:$0xff]
      %v501 = vld [vmem:[%s444 + $0x18] sm:$0xff]
      %v502 = vld [vmem:[%s444 + $0x20] sm:$0xff]
      %v503 = vld [vmem:[%s444 + $0x28] sm:$0xff]
      %v504 = vld [vmem:[%s444 + $0x30] sm:$0xff]
      %v505 = vld [vmem:[%s444 + $0x38] sm:$0xff]
      %v506 = vlaneseq
      %v507 = vshrl.u32 %v506, 7
      %v508 = vsub.s32 0, %v507
      %v509 = vrot.slane %v477, %v508
      %v510 = vsub.f32 %v490, %v509
      %v511 = vsub.f32 %v491, %v509
      %v512 = vsub.f32 %v492, %v509
      %v513 = vsub.f32 %v493, %v509
      %v514 = vsub.f32 %v494, %v509
      %v515 = vsub.f32 %v495, %v509
      %v516 = vsub.f32 %v496, %v509
      %v517 = vsub.f32 %v497, %v509
      %v518 = vlaneseq
      %v519 = vshrl.u32 %v518, 7
      %v520 = vsub.s32 1, %v519
      %v521 = vrot.slane %v481, %v520
      %v522 = vmul.f32 %v510, %v521
      %v523 = vmul.f32 %v511, %v521
      %v524 = vmul.f32 %v512, %v521
      %v525 = vmul.f32 %v513, %v521
      %v526 = vmul.f32 %v514, %v521
      %v527 = vmul.f32 %v515, %v521
      %v528 = vmul.f32 %v516, %v521
      %v529 = vmul.f32 %v517, %v521
      %v530 = vlaneseq
      %v531 = vshrl.u32 %v530, 7
      %v532 = vsub.s32 3, %v531
      %v533 = vrot.slane %v477, %v532
      %v534 = vadd.f32 %v522, %v533
      %v535 = vadd.f32 %v523, %v533
      %v536 = vadd.f32 %v524, %v533
      %v537 = vadd.f32 %v525, %v533
      %v538 = vadd.f32 %v526, %v533
      %v539 = vadd.f32 %v527, %v533
      %v540 = vadd.f32 %v528, %v533
      %v541 = vadd.f32 %v529, %v533
      %v542 = vmax.f32 %v534, 0.0
      %v543 = vmax.f32 %v535, 0.0
      %v544 = vmax.f32 %v536, 0.0
      %v545 = vmax.f32 %v537, 0.0
      %v546 = vmax.f32 %v538, 0.0
      %v547 = vmax.f32 %v539, 0.0
      %v548 = vmax.f32 %v540, 0.0
      %v549 = vmax.f32 %v541, 0.0
      %551 = vset.pattern.permute.xlu0 0
      %552 = vperm.xlu0 %551, %v498
      %v553 = vpop.permute.xlu0 %552
      %556 = vset.pattern.permute.xlu0 0
      %557 = vperm.xlu0 %556, %v499
      %v558 = vpop.permute.xlu0 %557
      %561 = vset.pattern.permute.xlu0 0
      %562 = vperm.xlu0 %561, %v500
      %v563 = vpop.permute.xlu0 %562
      %566 = vset.pattern.permute.xlu0 0
      %567 = vperm.xlu0 %566, %v501
      %v568 = vpop.permute.xlu0 %567
      %571 = vset.pattern.permute.xlu0 0
      %572 = vperm.xlu0 %571, %v502
      %v573 = vpop.permute.xlu0 %572
      %576 = vset.pattern.permute.xlu0 0
      %577 = vperm.xlu0 %576, %v503
      %v578 = vpop.permute.xlu0 %577
      %581 = vset.pattern.permute.xlu0 0
      %582 = vperm.xlu0 %581, %v504
      %v583 = vpop.permute.xlu0 %582
      %586 = vset.pattern.permute.xlu0 0
      %587 = vperm.xlu0 %586, %v505
      %v588 = vpop.permute.xlu0 %587
      %v590 = vmul.f32 %v542, %v553
      %v591 = vmul.f32 %v543, %v558
      %v592 = vmul.f32 %v544, %v563
      %v593 = vmul.f32 %v545, %v568
      %v594 = vmul.f32 %v546, %v573
      %v595 = vmul.f32 %v547, %v578
      %v596 = vmul.f32 %v548, %v583
      %v597 = vmul.f32 %v549, %v588
      %v598 = vpack.c.bf16 %v591, %v590
      %v599 = vpack.c.bf16 %v593, %v592
      %v600 = vpack.c.bf16 %v595, %v594
      %v601 = vpack.c.bf16 %v597, %v596
      %602 = vst [vmem:[#allocation2] sm:$0xff] %v598
      %603 = vst [vmem:[#allocation2 + $0x8] sm:$0xff] %v599
      %604 = vst [vmem:[#allocation2 + $0x10] sm:$0xff] %v600
      %605 = vst [vmem:[#allocation2 + $0x18] sm:$0xff] %v601
      %v606 = vld [vmem:[%s420 + $0x20] sm:$0xf]
      %v607 = vld [vmem:[%s420 + $0x24] sm:$0xf]
      %v608 = vld [vmem:[%s420 + $0x28] sm:$0xf]
      %v609 = vld [vmem:[%s420 + $0x2c] sm:$0xf]
      %v610 = vld [vmem:[%s420 + $0x30] sm:$0xf]
      %v611 = vld [vmem:[%s420 + $0x34] sm:$0xf]
      %v612 = vld [vmem:[%s420 + $0x38] sm:$0xf]
      %v613 = vld [vmem:[%s420 + $0x3c] sm:$0xf]
      %v614 = vunpack.c.l.bf16 %v606
      %v615 = vunpack.c.l.bf16 %v607
      %v616 = vunpack.c.l.bf16 %v608
      %v617 = vunpack.c.l.bf16 %v609
      %v618 = vunpack.c.l.bf16 %v610
      %v619 = vunpack.c.l.bf16 %v611
      %v620 = vunpack.c.l.bf16 %v612
      %v621 = vunpack.c.l.bf16 %v613
      %v622 = vld [vmem:[%s444 + $0x40] sm:$0xff]
      %v623 = vld [vmem:[%s444 + $0x48] sm:$0xff]
      %v624 = vld [vmem:[%s444 + $0x50] sm:$0xff]
      %v625 = vld [vmem:[%s444 + $0x58] sm:$0xff]
      %v626 = vld [vmem:[%s444 + $0x60] sm:$0xff]
      %v627 = vld [vmem:[%s444 + $0x68] sm:$0xff]
      %v628 = vld [vmem:[%s444 + $0x70] sm:$0xff]
      %v629 = vld [vmem:[%s444 + $0x78] sm:$0xff]
      %v630 = vsub.f32 %v614, %v509
      %v631 = vsub.f32 %v615, %v509
      %v632 = vsub.f32 %v616, %v509
      %v633 = vsub.f32 %v617, %v509
      %v634 = vsub.f32 %v618, %v509
      %v635 = vsub.f32 %v619, %v509
      %v636 = vsub.f32 %v620, %v509
      %v637 = vsub.f32 %v621, %v509
      %v638 = vmul.f32 %v630, %v521
      %v639 = vmul.f32 %v631, %v521
      %v640 = vmul.f32 %v632, %v521
      %v641 = vmul.f32 %v633, %v521
      %v642 = vmul.f32 %v634, %v521
      %v643 = vmul.f32 %v635, %v521
      %v644 = vmul.f32 %v636, %v521
      %v645 = vmul.f32 %v637, %v521
      %v646 = vadd.f32 %v638, %v533
      %v647 = vadd.f32 %v639, %v533
      %v648 = vadd.f32 %v640, %v533
      %v649 = vadd.f32 %v641, %v533
      %v650 = vadd.f32 %v642, %v533
      %v651 = vadd.f32 %v643, %v533
      %v652 = vadd.f32 %v644, %v533
      %v653 = vadd.f32 %v645, %v533
      %v654 = vmax.f32 %v646, 0.0
      %v655 = vmax.f32 %v647, 0.0
      %v656 = vmax.f32 %v648, 0.0
      %v657 = vmax.f32 %v649, 0.0
      %v658 = vmax.f32 %v650, 0.0
      %v659 = vmax.f32 %v651, 0.0
      %v660 = vmax.f32 %v652, 0.0
      %v661 = vmax.f32 %v653, 0.0
      %663 = vset.pattern.permute.xlu0 0
      %664 = vperm.xlu0 %663, %v622
      %v665 = vpop.permute.xlu0 %664
      %668 = vset.pattern.permute.xlu0 0
      %669 = vperm.xlu0 %668, %v623
      %v670 = vpop.permute.xlu0 %669
      %673 = vset.pattern.permute.xlu0 0
      %674 = vperm.xlu0 %673, %v624
      %v675 = vpop.permute.xlu0 %674
      %678 = vset.pattern.permute.xlu0 0
      %679 = vperm.xlu0 %678, %v625
      %v680 = vpop.permute.xlu0 %679
      %683 = vset.pattern.permute.xlu0 0
      %684 = vperm.xlu0 %683, %v626
      %v685 = vpop.permute.xlu0 %684
      %688 = vset.pattern.permute.xlu0 0
      %689 = vperm.xlu0 %688, %v627
      %v690 = vpop.permute.xlu0 %689
      %693 = vset.pattern.permute.xlu0 0
      %694 = vperm.xlu0 %693, %v628
      %v695 = vpop.permute.xlu0 %694
      %698 = vset.pattern.permute.xlu0 0
      %699 = vperm.xlu0 %698, %v629
      %v700 = vpop.permute.xlu0 %699
      %v702 = vmul.f32 %v654, %v665
      %v703 = vmul.f32 %v655, %v670
      %v704 = vmul.f32 %v656, %v675
      %v705 = vmul.f32 %v657, %v680
      %v706 = vmul.f32 %v658, %v685
      %v707 = vmul.f32 %v659, %v690
      %v708 = vmul.f32 %v660, %v695
      %v709 = vmul.f32 %v661, %v700
      %v710 = vpack.c.bf16 %v703, %v702
      %v711 = vpack.c.bf16 %v705, %v704
      %v712 = vpack.c.bf16 %v707, %v706
      %v713 = vpack.c.bf16 %v709, %v708
      %714 = vst [vmem:[#allocation2 + $0x20] sm:$0xff] %v710
      %715 = vst [vmem:[#allocation2 + $0x28] sm:$0xff] %v711
      %716 = vst [vmem:[#allocation2 + $0x30] sm:$0xff] %v712
      %717 = vst [vmem:[#allocation2 + $0x38] sm:$0xff] %v713
      %v718 = vld [vmem:[%s432] sm:$0xf]
      %v719 = vld [vmem:[%s432 + $0x4] sm:$0xf]
      %v720 = vld [vmem:[%s432 + $0x8] sm:$0xf]
      %v721 = vld [vmem:[%s432 + $0xc] sm:$0xf]
      %v722 = vld [vmem:[%s432 + $0x10] sm:$0xf]
      %v723 = vld [vmem:[%s432 + $0x14] sm:$0xf]
      %v724 = vld [vmem:[%s432 + $0x18] sm:$0xf]
      %v725 = vld [vmem:[%s432 + $0x1c] sm:$0xf]
      %v726 = vunpack.c.l.bf16 %v718
      %v727 = vunpack.c.l.bf16 %v719
      %v728 = vunpack.c.l.bf16 %v720
      %v729 = vunpack.c.l.bf16 %v721
      %v730 = vunpack.c.l.bf16 %v722
      %v731 = vunpack.c.l.bf16 %v723
      %v732 = vunpack.c.l.bf16 %v724
      %v733 = vunpack.c.l.bf16 %v725
      %v734 = vld [vmem:[%s456] sm:$0xff]
      %v735 = vld [vmem:[%s456 + $0x8] sm:$0xff]
      %v736 = vld [vmem:[%s456 + $0x10] sm:$0xff]
      %v737 = vld [vmem:[%s456 + $0x18] sm:$0xff]
      %v738 = vld [vmem:[%s456 + $0x20] sm:$0xff]
      %v739 = vld [vmem:[%s456 + $0x28] sm:$0xff]
      %v740 = vld [vmem:[%s456 + $0x30] sm:$0xff]
      %v741 = vld [vmem:[%s456 + $0x38] sm:$0xff]
      %v742 = vsub.f32 %v726, %v509
      %v743 = vsub.f32 %v727, %v509
      %v744 = vsub.f32 %v728, %v509
      %v745 = vsub.f32 %v729, %v509
      %v746 = vsub.f32 %v730, %v509
      %v747 = vsub.f32 %v731, %v509
      %v748 = vsub.f32 %v732, %v509
      %v749 = vsub.f32 %v733, %v509
      %v750 = vmul.f32 %v742, %v521
      %v751 = vmul.f32 %v743, %v521
      %v752 = vmul.f32 %v744, %v521
      %v753 = vmul.f32 %v745, %v521
      %v754 = vmul.f32 %v746, %v521
      %v755 = vmul.f32 %v747, %v521
      %v756 = vmul.f32 %v748, %v521
      %v757 = vmul.f32 %v749, %v521
      %v758 = vadd.f32 %v750, %v533
      %v759 = vadd.f32 %v751, %v533
      %v760 = vadd.f32 %v752, %v533
      %v761 = vadd.f32 %v753, %v533
      %v762 = vadd.f32 %v754, %v533
      %v763 = vadd.f32 %v755, %v533
      %v764 = vadd.f32 %v756, %v533
      %v765 = vadd.f32 %v757, %v533
      %v766 = vmax.f32 %v758, 0.0
      %v767 = vmax.f32 %v759, 0.0
      %v768 = vmax.f32 %v760, 0.0
      %v769 = vmax.f32 %v761, 0.0
      %v770 = vmax.f32 %v762, 0.0
      %v771 = vmax.f32 %v763, 0.0
      %v772 = vmax.f32 %v764, 0.0
      %v773 = vmax.f32 %v765, 0.0
      %775 = vset.pattern.permute.xlu0 0
      %776 = vperm.xlu0 %775, %v734
      %v777 = vpop.permute.xlu0 %776
      %780 = vset.pattern.permute.xlu0 0
      %781 = vperm.xlu0 %780, %v735
      %v782 = vpop.permute.xlu0 %781
      %785 = vset.pattern.permute.xlu0 0
      %786 = vperm.xlu0 %785, %v736
      %v787 = vpop.permute.xlu0 %786
      %790 = vset.pattern.permute.xlu0 0
      %791 = vperm.xlu0 %790, %v737
      %v792 = vpop.permute.xlu0 %791
      %795 = vset.pattern.permute.xlu0 0
      %796 = vperm.xlu0 %795, %v738
      %v797 = vpop.permute.xlu0 %796
      %800 = vset.pattern.permute.xlu0 0
      %801 = vperm.xlu0 %800, %v739
      %v802 = vpop.permute.xlu0 %801
      %805 = vset.pattern.permute.xlu0 0
      %806 = vperm.xlu0 %805, %v740
      %v807 = vpop.permute.xlu0 %806
      %810 = vset.pattern.permute.xlu0 0
      %811 = vperm.xlu0 %810, %v741
      %v812 = vpop.permute.xlu0 %811
      %v814 = vmul.f32 %v766, %v777
      %v815 = vmul.f32 %v767, %v782
      %v816 = vmul.f32 %v768, %v787
      %v817 = vmul.f32 %v769, %v792
      %v818 = vmul.f32 %v770, %v797
      %v819 = vmul.f32 %v771, %v802
      %v820 = vmul.f32 %v772, %v807
      %v821 = vmul.f32 %v773, %v812
      %v822 = vpack.c.bf16 %v815, %v814
      %v823 = vpack.c.bf16 %v817, %v816
      %v824 = vpack.c.bf16 %v819, %v818
      %v825 = vpack.c.bf16 %v821, %v820
      %826 = vst [vmem:[#allocation2 + $0x40] sm:$0xff] %v822
      %827 = vst [vmem:[#allocation2 + $0x48] sm:$0xff] %v823
      %828 = vst [vmem:[#allocation2 + $0x50] sm:$0xff] %v824
      %829 = vst [vmem:[#allocation2 + $0x58] sm:$0xff] %v825
      %v830 = vld [vmem:[#allocation2] sm:$0xff]
      %v831 = vld [vmem:[#allocation2 + $0x8] sm:$0xff]
      %v832 = vld [vmem:[#allocation2 + $0x10] sm:$0xff]
      %v833 = vld [vmem:[#allocation2 + $0x18] sm:$0xff]
      %v834 = vld [vmem:[#allocation2 + $0x20] sm:$0xff]
      %v835 = vld [vmem:[#allocation2 + $0x28] sm:$0xff]
      %v836 = vld [vmem:[#allocation2 + $0x30] sm:$0xff]
      %v837 = vld [vmem:[#allocation2 + $0x38] sm:$0xff]
      %v838 = vld [vmem:[%s5] sm:$0xf]
      %v839 = vld [vmem:[%s5 + $0x4] sm:$0xf]
      %v840 = vld [vmem:[%s5 + $0x8] sm:$0xf]
      %v841 = vld [vmem:[%s5 + $0xc] sm:$0xf]
      %v842 = vld [vmem:[%s5 + $0x10] sm:$0xf]
      %v843 = vld [vmem:[%s5 + $0x14] sm:$0xf]
      %v844 = vld [vmem:[%s5 + $0x18] sm:$0xf]
      %v845 = vld [vmem:[%s5 + $0x1c] sm:$0xf]
      %v846 = vld [vmem:[%s5 + $0x20] sm:$0xf]
      %v847 = vld [vmem:[%s5 + $0x24] sm:$0xf]
      %v848 = vld [vmem:[%s5 + $0x28] sm:$0xf]
      %v849 = vld [vmem:[%s5 + $0x2c] sm:$0xf]
      %v850 = vld [vmem:[%s5 + $0x30] sm:$0xf]
      %v851 = vld [vmem:[%s5 + $0x34] sm:$0xf]
      %v852 = vld [vmem:[%s5 + $0x38] sm:$0xf]
      %v853 = vld [vmem:[%s5 + $0x3c] sm:$0xf]
      %v854 = vld [vmem:[#allocation2 + $0x40] sm:$0x1]
      %v855 = vld [vmem:[%s5 + $0x40] sm:$0xf]
      %v856 = vld [vmem:[%s5 + $0x44] sm:$0xf]
      %v857 = vld [vmem:[%s5 + $0x48] sm:$0xf]
      %v858 = vld [vmem:[%s5 + $0x4c] sm:$0xf]
      %v859 = vld [vmem:[%s5 + $0x50] sm:$0xf]
      %v860 = vld [vmem:[%s5 + $0x54] sm:$0xf]
      %v861 = vld [vmem:[%s5 + $0x58] sm:$0xf]
      %v862 = vld [vmem:[%s5 + $0x5c] sm:$0xf]
      %v863 = vld [vmem:[%s5 + $0x60] sm:$0xf]
      %v864 = vld [vmem:[%s5 + $0x64] sm:$0xf]
      %v865 = vld [vmem:[%s5 + $0x68] sm:$0xf]
      %v866 = vld [vmem:[%s5 + $0x6c] sm:$0xf]
      %v867 = vld [vmem:[%s5 + $0x70] sm:$0xf]
      %v868 = vld [vmem:[%s5 + $0x74] sm:$0xf]
      %v869 = vld [vmem:[%s5 + $0x78] sm:$0xf]
      %v870 = vld [vmem:[%s5 + $0x7c] sm:$0xf]
      %vm871 = vsmask.f32 7424
      %v873 = vshrl.u32 %v830, 16
      %v875 = vshll.u32 %v830, 16
      %v877 = vrot.slane %v875, 1
      %v878 = vor.u32 %v873, %v877
      %v880 = vshll.u32 %v831, 16
      %v882 = vrot.slane %v880, 1
      %v883 = vsel %vm871, %v878, %v882
      %v884 = vshrl.u32 %v831, 16
      %v886 = vor.u32 %v884, %v882
      %v888 = vshll.u32 %v832, 16
      %v890 = vrot.slane %v888, 1
      %v891 = vsel %vm871, %v886, %v890
      %v892 = vshrl.u32 %v832, 16
      %v894 = vor.u32 %v892, %v890
      %v896 = vshll.u32 %v833, 16
      %v898 = vrot.slane %v896, 1
      %v899 = vsel %vm871, %v894, %v898
      %v900 = vshrl.u32 %v833, 16
      %v902 = vor.u32 %v900, %v898
      %v904 = vshll.u32 %v834, 16
      %v906 = vrot.slane %v904, 1
      %v907 = vsel %vm871, %v902, %v906
      %v908 = vshrl.u32 %v834, 16
      %v910 = vor.u32 %v908, %v906
      %v912 = vshll.u32 %v835, 16
      %v914 = vrot.slane %v912, 1
      %v915 = vsel %vm871, %v910, %v914
      %v916 = vshrl.u32 %v835, 16
      %v918 = vor.u32 %v916, %v914
      %v920 = vshll.u32 %v836, 16
      %v922 = vrot.slane %v920, 1
      %v923 = vsel %vm871, %v918, %v922
      %v924 = vshrl.u32 %v836, 16
      %v926 = vor.u32 %v924, %v922
      %v928 = vshll.u32 %v837, 16
      %v930 = vrot.slane %v928, 1
      %v931 = vsel %vm871, %v926, %v930
      %v932 = vshrl.u32 %v837, 16
      %v934 = vor.u32 %v932, %v930
      %v936 = vshll.u32 %v854, 16
      %v938 = vrot.slane %v936, 1
      %v939 = vsel %vm871, %v934, %v938
      %v964 = vunpack.c.l.b16 %v855
      %v965 = vunpack.c.l.b16 %v856
      %v966 = vunpack.c.l.b16 %v857
      %v967 = vunpack.c.l.b16 %v858
      %v968 = vunpack.c.l.b16 %v859
      %v969 = vunpack.c.l.b16 %v860
      %v970 = vunpack.c.l.b16 %v861
      %v971 = vunpack.c.l.b16 %v862
      %v972 = vunpack.c.l.b16 %v863
      %v973 = vunpack.c.l.b16 %v864
      %v974 = vunpack.c.l.b16 %v865
      %v975 = vunpack.c.l.b16 %v866
      %v976 = vunpack.c.l.b16 %v867
      %v977 = vunpack.c.l.b16 %v868
      %v978 = vunpack.c.l.b16 %v869
      %v979 = vunpack.c.l.b16 %v870
      %v980 = vpack.c.b16 %v965, %v964
      %v981 = vpack.c.b16 %v967, %v966
      %v982 = vpack.c.b16 %v969, %v968
      %v983 = vpack.c.b16 %v971, %v970
      %v984 = vpack.c.b16 %v973, %v972
      %v985 = vpack.c.b16 %v975, %v974
      %v986 = vpack.c.b16 %v977, %v976
      %v987 = vpack.c.b16 %v979, %v978
      %996 = vmatprep.subr.bf16.mxu0 0
      %997 = vmatpush1.bf16.msra.mxu0 %v980
      %998 = vmatprep.subr.bf16.mxu0 0
      %999 = vmatpush1.bf16.msra.mxu0 %v981
      %1000 = vmatprep.subr.bf16.mxu0 0
      %1001 = vmatpush1.bf16.msra.mxu0 %v982
      %1002 = vmatprep.subr.bf16.mxu0 0
      %1003 = vmatpush1.bf16.msra.mxu0 %v983
      %1004 = vmatprep.subr.bf16.mxu0 0
      %1005 = vmatpush1.bf16.msra.mxu0 %v984
      %1006 = vmatprep.subr.bf16.mxu0 0
      %1007 = vmatpush1.bf16.msra.mxu0 %v985
      %1008 = vmatprep.subr.bf16.mxu0 0
      %1009 = vmatpush1.bf16.msra.mxu0 %v986
      %1010 = vmatprep.subr.bf16.mxu0 0
      %1011 = vmatpush1.bf16.msra.mxu0 %v987
      %1012 = vmatprep.subr.bf16.mxu0 0
      %1013 = vmatpush1.bf16.msra.mxu0 0
      %1014 = vmatprep.subr.bf16.mxu0 0
      %1015 = vmatpush1.bf16.msra.mxu0 0
      %1016 = vmatprep.subr.bf16.mxu0 0
      %1017 = vmatpush1.bf16.msra.mxu0 0
      %1018 = vmatprep.subr.bf16.mxu0 0
      %1019 = vmatpush1.bf16.msra.mxu0 0
      %1020 = vmatprep.subr.bf16.mxu0 0
      %1021 = vmatpush1.bf16.msra.mxu0 0
      %1022 = vmatprep.subr.bf16.mxu0 0
      %1023 = vmatpush1.bf16.msra.mxu0 0
      %1024 = vmatprep.subr.bf16.mxu0 0
      %1025 = vmatpush1.bf16.msra.mxu0 0
      %1026 = vmatprep.subr.bf16.mxu0 0
      %1027 = vmatpush1.bf16.msra.mxu0 0
      %1028 = vmatprep.mubr.bf16.mxu0 0
      %1029 = vmatmul.mubr.bf16.gmra.mrb[0].mxu0 %v883
      %v1030 = vpop.f32.mrb[0].mxu0
      %v1031 = vadd.f32 0.0, %v1030
      %v1032 = vpop.f32.mrb[0].mxu0
      %v1033 = vpop.f32.mrb[0].mxu0
      %v1034 = vadd.f32 0.0, %v1033
      %v1035 = vpop.f32.mrb[0].mxu0
      %1036 = vmatprep.mubr.bf16.mxu0 0
      %1037 = vmatmul.mubr.bf16.gmra.mrb[0].mxu0 %v891
      %v1038 = vpop.f32.mrb[0].mxu0
      %v1039 = vadd.f32 0.0, %v1038
      %v1040 = vpop.f32.mrb[0].mxu0
      %v1041 = vpop.f32.mrb[0].mxu0
      %v1042 = vadd.f32 0.0, %v1041
      %v1043 = vpop.f32.mrb[0].mxu0
      %1044 = vmatprep.mubr.bf16.mxu0 0
      %1045 = vmatmul.mubr.bf16.gmra.mrb[0].mxu0 %v899
      %v1046 = vpop.f32.mrb[0].mxu0
      %v1047 = vadd.f32 0.0, %v1046
      %v1048 = vpop.f32.mrb[0].mxu0
      %v1049 = vpop.f32.mrb[0].mxu0
      %v1050 = vadd.f32 0.0, %v1049
      %v1051 = vpop.f32.mrb[0].mxu0
      %1052 = vmatprep.mubr.bf16.mxu0 0
      %1053 = vmatmul.mubr.bf16.gmra.mrb[0].mxu0 %v907
      %v1054 = vpop.f32.mrb[0].mxu0
      %v1055 = vadd.f32 0.0, %v1054
      %v1056 = vpop.f32.mrb[0].mxu0
      %v1057 = vpop.f32.mrb[0].mxu0
      %v1058 = vadd.f32 0.0, %v1057
      %v1059 = vpop.f32.mrb[0].mxu0
      %1060 = vmatprep.mubr.bf16.mxu0 0
      %1061 = vmatmul.mubr.bf16.gmra.mrb[0].mxu0 %v915
      %v1062 = vpop.f32.mrb[0].mxu0
      %v1063 = vadd.f32 0.0, %v1062
      %v1064 = vpop.f32.mrb[0].mxu0
      %v1065 = vpop.f32.mrb[0].mxu0
      %v1066 = vadd.f32 0.0, %v1065
      %v1067 = vpop.f32.mrb[0].mxu0
      %1068 = vmatprep.mubr.bf16.mxu0 0
      %1069 = vmatmul.mubr.bf16.gmra.mrb[0].mxu0 %v923
      %v1070 = vpop.f32.mrb[0].mxu0
      %v1071 = vadd.f32 0.0, %v1070
      %v1072 = vpop.f32.mrb[0].mxu0
      %v1073 = vpop.f32.mrb[0].mxu0
      %v1074 = vadd.f32 0.0, %v1073
      %v1075 = vpop.f32.mrb[0].mxu0
      %1076 = vmatprep.mubr.bf16.mxu0 0
      %1077 = vmatmul.mubr.bf16.gmra.mrb[0].mxu0 %v931
      %v1078 = vpop.f32.mrb[0].mxu0
      %v1079 = vadd.f32 0.0, %v1078
      %v1080 = vpop.f32.mrb[0].mxu0
      %v1081 = vpop.f32.mrb[0].mxu0
      %v1082 = vadd.f32 0.0, %v1081
      %v1083 = vpop.f32.mrb[0].mxu0
      %1084 = vmatprep.mubr.bf16.mxu0 0
      %1085 = vmatmul.mubr.bf16.gmra.mrb[0].mxu0 %v939
      %v1086 = vpop.f32.mrb[0].mxu0
      %v1087 = vadd.f32 0.0, %v1086
      %v1088 = vpop.f32.mrb[0].mxu0
      %v1089 = vpop.f32.mrb[0].mxu0
      %v1090 = vadd.f32 0.0, %v1089
      %v1091 = vpop.f32.mrb[0].mxu0
      %1092 = vdwg.mxu0
      %v1109 = vunpack.c.l.b16 %v838
      %v1110 = vunpack.c.l.b16 %v839
      %v1111 = vunpack.c.l.b16 %v840
      %v1112 = vunpack.c.l.b16 %v841
      %v1113 = vunpack.c.l.b16 %v842
      %v1114 = vunpack.c.l.b16 %v843
      %v1115 = vunpack.c.l.b16 %v844
      %v1116 = vunpack.c.l.b16 %v845
      %v1117 = vunpack.c.l.b16 %v846
      %v1118 = vunpack.c.l.b16 %v847
      %v1119 = vunpack.c.l.b16 %v848
      %v1120 = vunpack.c.l.b16 %v849
      %v1121 = vunpack.c.l.b16 %v850
      %v1122 = vunpack.c.l.b16 %v851
      %v1123 = vunpack.c.l.b16 %v852
      %v1124 = vunpack.c.l.b16 %v853
      %v1125 = vpack.c.b16 %v1110, %v1109
      %v1126 = vpack.c.b16 %v1112, %v1111
      %v1127 = vpack.c.b16 %v1114, %v1113
      %v1128 = vpack.c.b16 %v1116, %v1115
      %v1129 = vpack.c.b16 %v1118, %v1117
      %v1130 = vpack.c.b16 %v1120, %v1119
      %v1131 = vpack.c.b16 %v1122, %v1121
      %v1132 = vpack.c.b16 %v1124, %v1123
      %1141 = vmatprep.subr.bf16.mxu0 0
      %1142 = vmatpush1.bf16.msra.mxu0 %v1125
      %1143 = vmatprep.subr.bf16.mxu0 0
      %1144 = vmatpush1.bf16.msra.mxu0 %v1126
      %1145 = vmatprep.subr.bf16.mxu0 0
      %1146 = vmatpush1.bf16.msra.mxu0 %v1127
      %1147 = vmatprep.subr.bf16.mxu0 0
      %1148 = vmatpush1.bf16.msra.mxu0 %v1128
      %1149 = vmatprep.subr.bf16.mxu0 0
      %1150 = vmatpush1.bf16.msra.mxu0 %v1129
      %1151 = vmatprep.subr.bf16.mxu0 0
      %1152 = vmatpush1.bf16.msra.mxu0 %v1130
      %1153 = vmatprep.subr.bf16.mxu0 0
      %1154 = vmatpush1.bf16.msra.mxu0 %v1131
      %1155 = vmatprep.subr.bf16.mxu0 0
      %1156 = vmatpush1.bf16.msra.mxu0 %v1132
      %1157 = vmatprep.subr.bf16.mxu0 0
      %1158 = vmatpush1.bf16.msra.mxu0 0
      %1159 = vmatprep.subr.bf16.mxu0 0
      %1160 = vmatpush1.bf16.msra.mxu0 0
      %1161 = vmatprep.subr.bf16.mxu0 0
      %1162 = vmatpush1.bf16.msra.mxu0 0
      %1163 = vmatprep.subr.bf16.mxu0 0
      %1164 = vmatpush1.bf16.msra.mxu0 0
      %1165 = vmatprep.subr.bf16.mxu0 0
      %1166 = vmatpush1.bf16.msra.mxu0 0
      %1167 = vmatprep.subr.bf16.mxu0 0
      %1168 = vmatpush1.bf16.msra.mxu0 0
      %1169 = vmatprep.subr.bf16.mxu0 0
      %1170 = vmatpush1.bf16.msra.mxu0 0
      %1171 = vmatprep.subr.bf16.mxu0 0
      %1172 = vmatpush1.bf16.msra.mxu0 0
      %1173 = vmatprep.mubr.bf16.mxu0 0
      %1174 = vmatmul.mubr.bf16.gmra.mrb[0].mxu0 %v830
      %v1175 = vpop.f32.mrb[0].mxu0
      %v1176 = vadd.f32 %v1031, %v1175
      %v1177 = vpop.f32.mrb[0].mxu0
      %v1178 = vpop.f32.mrb[0].mxu0
      %v1179 = vadd.f32 %v1034, %v1178
      %v1180 = vpop.f32.mrb[0].mxu0
      %1181 = vmatprep.mubr.bf16.mxu0 0
      %1182 = vmatmul.mubr.bf16.gmra.mrb[0].mxu0 %v831
      %v1183 = vpop.f32.mrb[0].mxu0
      %v1184 = vadd.f32 %v1039, %v1183
      %v1185 = vpop.f32.mrb[0].mxu0
      %v1186 = vpop.f32.mrb[0].mxu0
      %v1187 = vadd.f32 %v1042, %v1186
      %v1188 = vpop.f32.mrb[0].mxu0
      %1189 = vmatprep.mubr.bf16.mxu0 0
      %1190 = vmatmul.mubr.bf16.gmra.mrb[0].mxu0 %v832
      %v1191 = vpop.f32.mrb[0].mxu0
      %v1192 = vadd.f32 %v1047, %v1191
      %v1193 = vpop.f32.mrb[0].mxu0
      %v1194 = vpop.f32.mrb[0].mxu0
      %v1195 = vadd.f32 %v1050, %v1194
      %v1196 = vpop.f32.mrb[0].mxu0
      %1197 = vmatprep.mubr.bf16.mxu0 0
      %1198 = vmatmul.mubr.bf16.gmra.mrb[0].mxu0 %v833
      %v1199 = vpop.f32.mrb[0].mxu0
      %v1200 = vadd.f32 %v1055, %v1199
      %v1201 = vpop.f32.mrb[0].mxu0
      %v1202 = vpop.f32.mrb[0].mxu0
      %v1203 = vadd.f32 %v1058, %v1202
      %v1204 = vpop.f32.mrb[0].mxu0
      %1205 = vmatprep.mubr.bf16.mxu0 0
      %1206 = vmatmul.mubr.bf16.gmra.mrb[0].mxu0 %v834
      %v1207 = vpop.f32.mrb[0].mxu0
      %v1208 = vadd.f32 %v1063, %v1207
      %v1209 = vpop.f32.mrb[0].mxu0
      %v1210 = vpop.f32.mrb[0].mxu0
      %v1211 = vadd.f32 %v1066, %v1210
      %v1212 = vpop.f32.mrb[0].mxu0
      %1213 = vmatprep.mubr.bf16.mxu0 0
      %1214 = vmatmul.mubr.bf16.gmra.mrb[0].mxu0 %v835
      %v1215 = vpop.f32.mrb[0].mxu0
      %v1216 = vadd.f32 %v1071, %v1215
      %v1217 = vpop.f32.mrb[0].mxu0
      %v1218 = vpop.f32.mrb[0].mxu0
      %v1219 = vadd.f32 %v1074, %v1218
      %v1220 = vpop.f32.mrb[0].mxu0
      %1221 = vmatprep.mubr.bf16.mxu0 0
      %1222 = vmatmul.mubr.bf16.gmra.mrb[0].mxu0 %v836
      %v1223 = vpop.f32.mrb[0].mxu0
      %v1224 = vadd.f32 %v1079, %v1223
      %v1225 = vpop.f32.mrb[0].mxu0
      %v1226 = vpop.f32.mrb[0].mxu0
      %v1227 = vadd.f32 %v1082, %v1226
      %v1228 = vpop.f32.mrb[0].mxu0
      %1229 = vmatprep.mubr.bf16.mxu0 0
      %1230 = vmatmul.mubr.bf16.gmra.mrb[0].mxu0 %v837
      %v1231 = vpop.f32.mrb[0].mxu0
      %v1232 = vadd.f32 %v1087, %v1231
      %v1233 = vpop.f32.mrb[0].mxu0
      %v1234 = vpop.f32.mrb[0].mxu0
      %v1235 = vadd.f32 %v1090, %v1234
      %v1236 = vpop.f32.mrb[0].mxu0
      %1237 = vdwg.mxu0
      %v1238 = vld [vmem:[#allocation2] sm:$0xfe]
      %v1239 = vld [vmem:[%s5 + $0x80] sm:$0xf]
      %v1240 = vld [vmem:[%s5 + $0x84] sm:$0xf]
      %v1241 = vld [vmem:[%s5 + $0x88] sm:$0xf]
      %v1242 = vld [vmem:[%s5 + $0x8c] sm:$0xf]
      %v1243 = vld [vmem:[%s5 + $0x90] sm:$0xf]
      %v1244 = vld [vmem:[%s5 + $0x94] sm:$0xf]
      %v1245 = vld [vmem:[%s5 + $0x98] sm:$0xf]
      %v1246 = vld [vmem:[%s5 + $0x9c] sm:$0xf]
      %v1247 = vld [vmem:[%s5 + $0xa0] sm:$0xf]
      %v1248 = vld [vmem:[%s5 + $0xa4] sm:$0xf]
      %v1249 = vld [vmem:[%s5 + $0xa8] sm:$0xf]
      %v1250 = vld [vmem:[%s5 + $0xac] sm:$0xf]
      %v1251 = vld [vmem:[%s5 + $0xb0] sm:$0xf]
      %v1252 = vld [vmem:[%s5 + $0xb4] sm:$0xf]
      %v1253 = vld [vmem:[%s5 + $0xb8] sm:$0xf]
      %v1254 = vld [vmem:[%s5 + $0xbc] sm:$0xf]
      %vm1264 = vcmask 1046528
      %v1265 = vrot.slane %v1238, 1
      %v1266 = vrot.slane %v831, 1
      %v1267 = vsel %vm1264, %v1265, %v1266
      %v1268 = vrot.slane %v832, 1
      %v1269 = vsel %vm1264, %v1266, %v1268
      %v1270 = vrot.slane %v833, 1
      %v1271 = vsel %vm1264, %v1268, %v1270
      %v1272 = vrot.slane %v834, 1
      %v1273 = vsel %vm1264, %v1270, %v1272
      %v1274 = vrot.slane %v835, 1
      %v1275 = vsel %vm1264, %v1272, %v1274
      %v1276 = vrot.slane %v836, 1
      %v1277 = vsel %vm1264, %v1274, %v1276
      %v1278 = vrot.slane %v837, 1
      %v1279 = vsel %vm1264, %v1276, %v1278
      %v1280 = vrot.slane %v854, 1
      %v1281 = vsel %vm1264, %v1278, %v1280
      %v1306 = vunpack.c.l.b16 %v1239
      %v1307 = vunpack.c.l.b16 %v1240
      %v1308 = vunpack.c.l.b16 %v1241
      %v1309 = vunpack.c.l.b16 %v1242
      %v1310 = vunpack.c.l.b16 %v1243
      %v1311 = vunpack.c.l.b16 %v1244
      %v1312 = vunpack.c.l.b16 %v1245
      %v1313 = vunpack.c.l.b16 %v1246
      %v1314 = vunpack.c.l.b16 %v1247
      %v1315 = vunpack.c.l.b16 %v1248
      %v1316 = vunpack.c.l.b16 %v1249
      %v1317 = vunpack.c.l.b16 %v1250
      %v1318 = vunpack.c.l.b16 %v1251
      %v1319 = vunpack.c.l.b16 %v1252
      %v1320 = vunpack.c.l.b16 %v1253
      %v1321 = vunpack.c.l.b16 %v1254
      %v1322 = vpack.c.b16 %v1307, %v1306
      %v1323 = vpack.c.b16 %v1309, %v1308
      %v1324 = vpack.c.b16 %v1311, %v1310
      %v1325 = vpack.c.b16 %v1313, %v1312
      %v1326 = vpack.c.b16 %v1315, %v1314
      %v1327 = vpack.c.b16 %v1317, %v1316
      %v1328 = vpack.c.b16 %v1319, %v1318
      %v1329 = vpack.c.b16 %v1321, %v1320
      %1338 = vmatprep.subr.bf16.mxu0 0
      %1339 = vmatpush1.bf16.msra.mxu0 %v1322
      %1340 = vmatprep.subr.bf16.mxu0 0
      %1341 = vmatpush1.bf16.msra.mxu0 %v1323
      %1342 = vmatprep.subr.bf16.mxu0 0
      %1343 = vmatpush1.bf16.msra.mxu0 %v1324
      %1344 = vmatprep.subr.bf16.mxu0 0
      %1345 = vmatpush1.bf16.msra.mxu0 %v1325
      %1346 = vmatprep.subr.bf16.mxu0 0
      %1347 = vmatpush1.bf16.msra.mxu0 %v1326
      %1348 = vmatprep.subr.bf16.mxu0 0
      %1349 = vmatpush1.bf16.msra.mxu0 %v1327
      %1350 = vmatprep.subr.bf16.mxu0 0
      %1351 = vmatpush1.bf16.msra.mxu0 %v1328
      %1352 = vmatprep.subr.bf16.mxu0 0
      %1353 = vmatpush1.bf16.msra.mxu0 %v1329
      %1354 = vmatprep.subr.bf16.mxu0 0
      %1355 = vmatpush1.bf16.msra.mxu0 0
      %1356 = vmatprep.subr.bf16.mxu0 0
      %1357 = vmatpush1.bf16.msra.mxu0 0
      %1358 = vmatprep.subr.bf16.mxu0 0
      %1359 = vmatpush1.bf16.msra.mxu0 0
      %1360 = vmatprep.subr.bf16.mxu0 0
      %1361 = vmatpush1.bf16.msra.mxu0 0
      %1362 = vmatprep.subr.bf16.mxu0 0
      %1363 = vmatpush1.bf16.msra.mxu0 0
      %1364 = vmatprep.subr.bf16.mxu0 0
      %1365 = vmatpush1.bf16.msra.mxu0 0
      %1366 = vmatprep.subr.bf16.mxu0 0
      %1367 = vmatpush1.bf16.msra.mxu0 0
      %1368 = vmatprep.subr.bf16.mxu0 0
      %1369 = vmatpush1.bf16.msra.mxu0 0
      %1370 = vmatprep.mubr.bf16.mxu0 0
      %1371 = vmatmul.mubr.bf16.gmra.mrb[0].mxu0 %v1267
      %v1372 = vpop.f32.mrb[0].mxu0
      %v1373 = vadd.f32 0.0, %v1372
      %v1374 = vpop.f32.mrb[0].mxu0
      %v1375 = vpop.f32.mrb[0].mxu0
      %v1376 = vadd.f32 0.0, %v1375
      %v1377 = vpop.f32.mrb[0].mxu0
      %1378 = vmatprep.mubr.bf16.mxu0 0
      %1379 = vmatmul.mubr.bf16.gmra.mrb[0].mxu0 %v1269
      %v1380 = vpop.f32.mrb[0].mxu0
      %v1381 = vadd.f32 0.0, %v1380
      %v1382 = vpop.f32.mrb[0].mxu0
      %v1383 = vpop.f32.mrb[0].mxu0
      %v1384 = vadd.f32 0.0, %v1383
      %v1385 = vpop.f32.mrb[0].mxu0
      %1386 = vmatprep.mubr.bf16.mxu0 0
      %1387 = vmatmul.mubr.bf16.gmra.mrb[0].mxu0 %v1271
      %v1388 = vpop.f32.mrb[0].mxu0
      %v1389 = vadd.f32 0.0, %v1388
      %v1390 = vpop.f32.mrb[0].mxu0
      %v1391 = vpop.f32.mrb[0].mxu0
      %v1392 = vadd.f32 0.0, %v1391
      %v1393 = vpop.f32.mrb[0].mxu0
      %1394 = vmatprep.mubr.bf16.mxu0 0
      %1395 = vmatmul.mubr.bf16.gmra.mrb[0].mxu0 %v1273
      %v1396 = vpop.f32.mrb[0].mxu0
      %v1397 = vadd.f32 0.0, %v1396
      %v1398 = vpop.f32.mrb[0].mxu0
      %v1399 = vpop.f32.mrb[0].mxu0
      %v1400 = vadd.f32 0.0, %v1399
      %v1401 = vpop.f32.mrb[0].mxu0
      %1402 = vmatprep.mubr.bf16.mxu0 0
      %1403 = vmatmul.mubr.bf16.gmra.mrb[0].mxu0 %v1275
      %v1404 = vpop.f32.mrb[0].mxu0
      %v1405 = vadd.f32 0.0, %v1404
      %v1406 = vpop.f32.mrb[0].mxu0
      %v1407 = vpop.f32.mrb[0].mxu0
      %v1408 = vadd.f32 0.0, %v1407
      %v1409 = vpop.f32.mrb[0].mxu0
      %1410 = vmatprep.mubr.bf16.mxu0 0
      %1411 = vmatmul.mubr.bf16.gmra.mrb[0].mxu0 %v1277
      %v1412 = vpop.f32.mrb[0].mxu0
      %v1413 = vadd.f32 0.0, %v1412
      %v1414 = vpop.f32.mrb[0].mxu0
      %v1415 = vpop.f32.mrb[0].mxu0
      %v1416 = vadd.f32 0.0, %v1415
      %v1417 = vpop.f32.mrb[0].mxu0
      %1418 = vmatprep.mubr.bf16.mxu0 0
      %1419 = vmatmul.mubr.bf16.gmra.mrb[0].mxu0 %v1279
      %v1420 = vpop.f32.mrb[0].mxu0
      %v1421 = vadd.f32 0.0, %v1420
      %v1422 = vpop.f32.mrb[0].mxu0
      %v1423 = vpop.f32.mrb[0].mxu0
      %v1424 = vadd.f32 0.0, %v1423
      %v1425 = vpop.f32.mrb[0].mxu0
      %1426 = vmatprep.mubr.bf16.mxu0 0
      %1427 = vmatmul.mubr.bf16.gmra.mrb[0].mxu0 %v1281
      %v1428 = vpop.f32.mrb[0].mxu0
      %v1429 = vadd.f32 0.0, %v1428
      %v1430 = vpop.f32.mrb[0].mxu0
      %v1431 = vpop.f32.mrb[0].mxu0
      %v1432 = vadd.f32 0.0, %v1431
      %v1433 = vpop.f32.mrb[0].mxu0
      %1434 = vdwg.mxu0
      %v1435 = vadd.f32 %v1176, %v1373
      %v1436 = vadd.f32 %v1179, %v1376
      %v1437 = vadd.f32 %v1184, %v1381
      %v1438 = vadd.f32 %v1187, %v1384
      %v1439 = vadd.f32 %v1192, %v1389
      %v1440 = vadd.f32 %v1195, %v1392
      %v1441 = vadd.f32 %v1200, %v1397
      %v1442 = vadd.f32 %v1203, %v1400
      %v1443 = vadd.f32 %v1208, %v1405
      %v1444 = vadd.f32 %v1211, %v1408
      %v1445 = vadd.f32 %v1216, %v1413
      %v1446 = vadd.f32 %v1219, %v1416
      %v1447 = vadd.f32 %v1224, %v1421
      %v1448 = vadd.f32 %v1227, %v1424
      %v1449 = vadd.f32 %v1232, %v1429
      %v1450 = vadd.f32 %v1235, %v1432
      %v1451 = vld [vmem:[#allocation2] sm:$0xe0]
      %v1452 = vld [vmem:[#allocation2 + $0x40] sm:$0x1f]
      %v1453 = vld [vmem:[%s5 + $0xc0] sm:$0xf]
      %v1454 = vld [vmem:[%s5 + $0xc4] sm:$0xf]
      %v1455 = vld [vmem:[%s5 + $0xc8] sm:$0xf]
      %v1456 = vld [vmem:[%s5 + $0xcc] sm:$0xf]
      %v1457 = vld [vmem:[%s5 + $0xd0] sm:$0xf]
      %v1458 = vld [vmem:[%s5 + $0xd4] sm:$0xf]
      %v1459 = vld [vmem:[%s5 + $0xd8] sm:$0xf]
      %v1460 = vld [vmem:[%s5 + $0xdc] sm:$0xf]
      %v1461 = vld [vmem:[%s5 + $0xe0] sm:$0xf]
      %v1462 = vld [vmem:[%s5 + $0xe4] sm:$0xf]
      %v1463 = vld [vmem:[%s5 + $0xe8] sm:$0xf]
      %v1464 = vld [vmem:[%s5 + $0xec] sm:$0xf]
      %v1465 = vld [vmem:[%s5 + $0xf0] sm:$0xf]
      %v1466 = vld [vmem:[%s5 + $0xf4] sm:$0xf]
      %v1467 = vld [vmem:[%s5 + $0xf8] sm:$0xf]
      %v1468 = vld [vmem:[%s5 + $0xfc] sm:$0xf]
      %vm1471 = vcmask 1042432
      %v1472 = vrot.slane %v1451, 5
      %v1473 = vrot.slane %v831, 5
      %v1474 = vsel %vm1471, %v1472, %v1473
      %v1475 = vrot.slane %v832, 5
      %v1476 = vsel %vm1471, %v1473, %v1475
      %v1477 = vrot.slane %v833, 5
      %v1478 = vsel %vm1471, %v1475, %v1477
      %v1479 = vrot.slane %v834, 5
      %v1480 = vsel %vm1471, %v1477, %v1479
      %v1481 = vrot.slane %v835, 5
      %v1482 = vsel %vm1471, %v1479, %v1481
      %v1483 = vrot.slane %v836, 5
      %v1484 = vsel %vm1471, %v1481, %v1483
      %v1485 = vrot.slane %v837, 5
      %v1486 = vsel %vm1471, %v1483, %v1485
      %v1487 = vrot.slane %v1452, 5
      %v1488 = vsel %vm1471, %v1485, %v1487
      %v1513 = vunpack.c.l.b16 %v1453
      %v1514 = vunpack.c.l.b16 %v1454
      %v1515 = vunpack.c.l.b16 %v1455
      %v1516 = vunpack.c.l.b16 %v1456
      %v1517 = vunpack.c.l.b16 %v1457
      %v1518 = vunpack.c.l.b16 %v1458
      %v1519 = vunpack.c.l.b16 %v1459
      %v1520 = vunpack.c.l.b16 %v1460
      %v1521 = vunpack.c.l.b16 %v1461
      %v1522 = vunpack.c.l.b16 %v1462
      %v1523 = vunpack.c.l.b16 %v1463
      %v1524 = vunpack.c.l.b16 %v1464
      %v1525 = vunpack.c.l.b16 %v1465
      %v1526 = vunpack.c.l.b16 %v1466
      %v1527 = vunpack.c.l.b16 %v1467
      %v1528 = vunpack.c.l.b16 %v1468
      %v1529 = vpack.c.b16 %v1514, %v1513
      %v1530 = vpack.c.b16 %v1516, %v1515
      %v1531 = vpack.c.b16 %v1518, %v1517
      %v1532 = vpack.c.b16 %v1520, %v1519
      %v1533 = vpack.c.b16 %v1522, %v1521
      %v1534 = vpack.c.b16 %v1524, %v1523
      %v1535 = vpack.c.b16 %v1526, %v1525
      %v1536 = vpack.c.b16 %v1528, %v1527
      %1545 = vmatprep.subr.bf16.mxu0 0
      %1546 = vmatpush1.bf16.msra.mxu0 %v1529
      %1547 = vmatprep.subr.bf16.mxu0 0
      %1548 = vmatpush1.bf16.msra.mxu0 %v1530
      %1549 = vmatprep.subr.bf16.mxu0 0
      %1550 = vmatpush1.bf16.msra.mxu0 %v1531
      %1551 = vmatprep.subr.bf16.mxu0 0
      %1552 = vmatpush1.bf16.msra.mxu0 %v1532
      %1553 = vmatprep.subr.bf16.mxu0 0
      %1554 = vmatpush1.bf16.msra.mxu0 %v1533
      %1555 = vmatprep.subr.bf16.mxu0 0
      %1556 = vmatpush1.bf16.msra.mxu0 %v1534
      %1557 = vmatprep.subr.bf16.mxu0 0
      %1558 = vmatpush1.bf16.msra.mxu0 %v1535
      %1559 = vmatprep.subr.bf16.mxu0 0
      %1560 = vmatpush1.bf16.msra.mxu0 %v1536
      %1561 = vmatprep.subr.bf16.mxu0 0
      %1562 = vmatpush1.bf16.msra.mxu0 0
      %1563 = vmatprep.subr.bf16.mxu0 0
      %1564 = vmatpush1.bf16.msra.mxu0 0
      %1565 = vmatprep.subr.bf16.mxu0 0
      %1566 = vmatpush1.bf16.msra.mxu0 0
      %1567 = vmatprep.subr.bf16.mxu0 0
      %1568 = vmatpush1.bf16.msra.mxu0 0
      %1569 = vmatprep.subr.bf16.mxu0 0
      %1570 = vmatpush1.bf16.msra.mxu0 0
      %1571 = vmatprep.subr.bf16.mxu0 0
      %1572 = vmatpush1.bf16.msra.mxu0 0
      %1573 = vmatprep.subr.bf16.mxu0 0
      %1574 = vmatpush1.bf16.msra.mxu0 0
      %1575 = vmatprep.subr.bf16.mxu0 0
      %1576 = vmatpush1.bf16.msra.mxu0 0
      %1577 = vmatprep.mubr.bf16.mxu0 0
      %1578 = vmatmul.mubr.bf16.gmra.mrb[0].mxu0 %v1474
      %v1579 = vpop.f32.mrb[0].mxu0
      %v1580 = vadd.f32 0.0, %v1579
      %v1581 = vpop.f32.mrb[0].mxu0
      %v1582 = vpop.f32.mrb[0].mxu0
      %v1583 = vadd.f32 0.0, %v1582
      %v1584 = vpop.f32.mrb[0].mxu0
      %1585 = vmatprep.mubr.bf16.mxu0 0
      %1586 = vmatmul.mubr.bf16.gmra.mrb[0].mxu0 %v1476
      %v1587 = vpop.f32.mrb[0].mxu0
      %v1588 = vadd.f32 0.0, %v1587
      %v1589 = vpop.f32.mrb[0].mxu0
      %v1590 = vpop.f32.mrb[0].mxu0
      %v1591 = vadd.f32 0.0, %v1590
      %v1592 = vpop.f32.mrb[0].mxu0
      %1593 = vmatprep.mubr.bf16.mxu0 0
      %1594 = vmatmul.mubr.bf16.gmra.mrb[0].mxu0 %v1478
      %v1595 = vpop.f32.mrb[0].mxu0
      %v1596 = vadd.f32 0.0, %v1595
      %v1597 = vpop.f32.mrb[0].mxu0
      %v1598 = vpop.f32.mrb[0].mxu0
      %v1599 = vadd.f32 0.0, %v1598
      %v1600 = vpop.f32.mrb[0].mxu0
      %1601 = vmatprep.mubr.bf16.mxu0 0
      %1602 = vmatmul.mubr.bf16.gmra.mrb[0].mxu0 %v1480
      %v1603 = vpop.f32.mrb[0].mxu0
      %v1604 = vadd.f32 0.0, %v1603
      %v1605 = vpop.f32.mrb[0].mxu0
      %v1606 = vpop.f32.mrb[0].mxu0
      %v1607 = vadd.f32 0.0, %v1606
      %v1608 = vpop.f32.mrb[0].mxu0
      %1609 = vmatprep.mubr.bf16.mxu0 0
      %1610 = vmatmul.mubr.bf16.gmra.mrb[0].mxu0 %v1482
      %v1611 = vpop.f32.mrb[0].mxu0
      %v1612 = vadd.f32 0.0, %v1611
      %v1613 = vpop.f32.mrb[0].mxu0
      %v1614 = vpop.f32.mrb[0].mxu0
      %v1615 = vadd.f32 0.0, %v1614
      %v1616 = vpop.f32.mrb[0].mxu0
      %1617 = vmatprep.mubr.bf16.mxu0 0
      %1618 = vmatmul.mubr.bf16.gmra.mrb[0].mxu0 %v1484
      %v1619 = vpop.f32.mrb[0].mxu0
      %v1620 = vadd.f32 0.0, %v1619
      %v1621 = vpop.f32.mrb[0].mxu0
      %v1622 = vpop.f32.mrb[0].mxu0
      %v1623 = vadd.f32 0.0, %v1622
      %v1624 = vpop.f32.mrb[0].mxu0
      %1625 = vmatprep.mubr.bf16.mxu0 0
      %1626 = vmatmul.mubr.bf16.gmra.mrb[0].mxu0 %v1486
      %v1627 = vpop.f32.mrb[0].mxu0
      %v1628 = vadd.f32 0.0, %v1627
      %v1629 = vpop.f32.mrb[0].mxu0
      %v1630 = vpop.f32.mrb[0].mxu0
      %v1631 = vadd.f32 0.0, %v1630
      %v1632 = vpop.f32.mrb[0].mxu0
      %1633 = vmatprep.mubr.bf16.mxu0 0
      %1634 = vmatmul.mubr.bf16.gmra.mrb[0].mxu0 %v1488
      %v1635 = vpop.f32.mrb[0].mxu0
      %v1636 = vadd.f32 0.0, %v1635
      %v1637 = vpop.f32.mrb[0].mxu0
      %v1638 = vpop.f32.mrb[0].mxu0
      %v1639 = vadd.f32 0.0, %v1638
      %v1640 = vpop.f32.mrb[0].mxu0
      %1641 = vdwg.mxu0
      %v1642 = vadd.f32 %v1435, %v1580
      %v1643 = vadd.f32 %v1436, %v1583
      %v1644 = vadd.f32 %v1437, %v1588
      %v1645 = vadd.f32 %v1438, %v1591
      %v1646 = vadd.f32 %v1439, %v1596
      %v1647 = vadd.f32 %v1440, %v1599
      %v1648 = vadd.f32 %v1441, %v1604
      %v1649 = vadd.f32 %v1442, %v1607
      %v1650 = vadd.f32 %v1443, %v1612
      %v1651 = vadd.f32 %v1444, %v1615
      %v1652 = vadd.f32 %v1445, %v1620
      %v1653 = vadd.f32 %v1446, %v1623
      %v1654 = vadd.f32 %v1447, %v1628
      %v1655 = vadd.f32 %v1448, %v1631
      %v1656 = vadd.f32 %v1449, %v1636
      %v1657 = vadd.f32 %v1450, %v1639
      %v1658 = vld [vmem:[#allocation2 + $0x40] sm:$0x3f]
      %v1659 = vld [vmem:[%s5 + $0x100] sm:$0xf]
      %v1660 = vld [vmem:[%s5 + $0x104] sm:$0xf]
      %v1661 = vld [vmem:[%s5 + $0x108] sm:$0xf]
      %v1662 = vld [vmem:[%s5 + $0x10c] sm:$0xf]
      %v1663 = vld [vmem:[%s5 + $0x110] sm:$0xf]
      %v1664 = vld [vmem:[%s5 + $0x114] sm:$0xf]
      %v1665 = vld [vmem:[%s5 + $0x118] sm:$0xf]
      %v1666 = vld [vmem:[%s5 + $0x11c] sm:$0xf]
      %v1667 = vld [vmem:[%s5 + $0x120] sm:$0xf]
      %v1668 = vld [vmem:[%s5 + $0x124] sm:$0xf]
      %v1669 = vld [vmem:[%s5 + $0x128] sm:$0xf]
      %v1670 = vld [vmem:[%s5 + $0x12c] sm:$0xf]
      %v1671 = vld [vmem:[%s5 + $0x130] sm:$0xf]
      %v1672 = vld [vmem:[%s5 + $0x134] sm:$0xf]
      %v1673 = vld [vmem:[%s5 + $0x138] sm:$0xf]
      %v1674 = vld [vmem:[%s5 + $0x13c] sm:$0xf]
      %vm1675 = vsmask.f32 2304
      %v1677 = vshrl.u32 %v1451, 16
      %v1679 = vrot.slane %v1677, 5
      %v1680 = vshll.u32 %v1451, 16
      %v1682 = vrot.slane %v1680, 6
      %v1683 = vor.u32 %v1679, %v1682
      %v1684 = vrot.slane %v884, 5
      %v1685 = vrot.slane %v880, 6
      %v1686 = vor.u32 %v1684, %v1685
      %v1687 = vsel %vm1675, %v1683, %v1686
      %v1688 = vrot.slane %v892, 5
      %v1689 = vrot.slane %v888, 6
      %v1690 = vor.u32 %v1688, %v1689
      %v1691 = vsel %vm1675, %v1686, %v1690
      %v1692 = vrot.slane %v900, 5
      %v1693 = vrot.slane %v896, 6
      %v1694 = vor.u32 %v1692, %v1693
      %v1695 = vsel %vm1675, %v1690, %v1694
      %v1696 = vrot.slane %v908, 5
      %v1697 = vrot.slane %v904, 6
      %v1698 = vor.u32 %v1696, %v1697
      %v1699 = vsel %vm1675, %v1694, %v1698
      %v1700 = vrot.slane %v916, 5
      %v1701 = vrot.slane %v912, 6
      %v1702 = vor.u32 %v1700, %v1701
      %v1703 = vsel %vm1675, %v1698, %v1702
      %v1704 = vrot.slane %v924, 5
      %v1705 = vrot.slane %v920, 6
      %v1706 = vor.u32 %v1704, %v1705
      %v1707 = vsel %vm1675, %v1702, %v1706
      %v1708 = vrot.slane %v932, 5
      %v1709 = vrot.slane %v928, 6
      %v1710 = vor.u32 %v1708, %v1709
      %v1711 = vsel %vm1675, %v1706, %v1710
      %v1713 = vshrl.u32 %v1658, 16
      %v1715 = vrot.slane %v1713, 5
      %v1716 = vshll.u32 %v1658, 16
      %v1718 = vrot.slane %v1716, 6
      %v1719 = vor.u32 %v1715, %v1718
      %v1720 = vsel %vm1675, %v1710, %v1719
      %v1745 = vunpack.c.l.b16 %v1659
      %v1746 = vunpack.c.l.b16 %v1660
      %v1747 = vunpack.c.l.b16 %v1661
      %v1748 = vunpack.c.l.b16 %v1662
      %v1749 = vunpack.c.l.b16 %v1663
      %v1750 = vunpack.c.l.b16 %v1664
      %v1751 = vunpack.c.l.b16 %v1665
      %v1752 = vunpack.c.l.b16 %v1666
      %v1753 = vunpack.c.l.b16 %v1667
      %v1754 = vunpack.c.l.b16 %v1668
      %v1755 = vunpack.c.l.b16 %v1669
      %v1756 = vunpack.c.l.b16 %v1670
      %v1757 = vunpack.c.l.b16 %v1671
      %v1758 = vunpack.c.l.b16 %v1672
      %v1759 = vunpack.c.l.b16 %v1673
      %v1760 = vunpack.c.l.b16 %v1674
      %v1761 = vpack.c.b16 %v1746, %v1745
      %v1762 = vpack.c.b16 %v1748, %v1747
      %v1763 = vpack.c.b16 %v1750, %v1749
      %v1764 = vpack.c.b16 %v1752, %v1751
      %v1765 = vpack.c.b16 %v1754, %v1753
      %v1766 = vpack.c.b16 %v1756, %v1755
      %v1767 = vpack.c.b16 %v1758, %v1757
      %v1768 = vpack.c.b16 %v1760, %v1759
      %1777 = vmatprep.subr.bf16.mxu0 0
      %1778 = vmatpush1.bf16.msra.mxu0 %v1761
      %1779 = vmatprep.subr.bf16.mxu0 0
      %1780 = vmatpush1.bf16.msra.mxu0 %v1762
      %1781 = vmatprep.subr.bf16.mxu0 0
      %1782 = vmatpush1.bf16.msra.mxu0 %v1763
      %1783 = vmatprep.subr.bf16.mxu0 0
      %1784 = vmatpush1.bf16.msra.mxu0 %v1764
      %1785 = vmatprep.subr.bf16.mxu0 0
      %1786 = vmatpush1.bf16.msra.mxu0 %v1765
      %1787 = vmatprep.subr.bf16.mxu0 0
      %1788 = vmatpush1.bf16.msra.mxu0 %v1766
      %1789 = vmatprep.subr.bf16.mxu0 0
      %1790 = vmatpush1.bf16.msra.mxu0 %v1767
      %1791 = vmatprep.subr.bf16.mxu0 0
      %1792 = vmatpush1.bf16.msra.mxu0 %v1768
      %1793 = vmatprep.subr.bf16.mxu0 0
      %1794 = vmatpush1.bf16.msra.mxu0 0
      %1795 = vmatprep.subr.bf16.mxu0 0
      %1796 = vmatpush1.bf16.msra.mxu0 0
      %1797 = vmatprep.subr.bf16.mxu0 0
      %1798 = vmatpush1.bf16.msra.mxu0 0
      %1799 = vmatprep.subr.bf16.mxu0 0
      %1800 = vmatpush1.bf16.msra.mxu0 0
      %1801 = vmatprep.subr.bf16.mxu0 0
      %1802 = vmatpush1.bf16.msra.mxu0 0
      %1803 = vmatprep.subr.bf16.mxu0 0
      %1804 = vmatpush1.bf16.msra.mxu0 0
      %1805 = vmatprep.subr.bf16.mxu0 0
      %1806 = vmatpush1.bf16.msra.mxu0 0
      %1807 = vmatprep.subr.bf16.mxu0 0
      %1808 = vmatpush1.bf16.msra.mxu0 0
      %1809 = vmatprep.mubr.bf16.mxu0 0
      %1810 = vmatmul.mubr.bf16.gmra.mrb[0].mxu0 %v1687
      %v1811 = vpop.f32.mrb[0].mxu0
      %v1812 = vadd.f32 0.0, %v1811
      %v1813 = vpop.f32.mrb[0].mxu0
      %v1814 = vpop.f32.mrb[0].mxu0
      %v1815 = vadd.f32 0.0, %v1814
      %v1816 = vpop.f32.mrb[0].mxu0
      %1817 = vmatprep.mubr.bf16.mxu0 0
      %1818 = vmatmul.mubr.bf16.gmra.mrb[0].mxu0 %v1691
      %v1819 = vpop.f32.mrb[0].mxu0
      %v1820 = vadd.f32 0.0, %v1819
      %v1821 = vpop.f32.mrb[0].mxu0
      %v1822 = vpop.f32.mrb[0].mxu0
      %v1823 = vadd.f32 0.0, %v1822
      %v1824 = vpop.f32.mrb[0].mxu0
      %1825 = vmatprep.mubr.bf16.mxu0 0
      %1826 = vmatmul.mubr.bf16.gmra.mrb[0].mxu0 %v1695
      %v1827 = vpop.f32.mrb[0].mxu0
      %v1828 = vadd.f32 0.0, %v1827
      %v1829 = vpop.f32.mrb[0].mxu0
      %v1830 = vpop.f32.mrb[0].mxu0
      %v1831 = vadd.f32 0.0, %v1830
      %v1832 = vpop.f32.mrb[0].mxu0
      %1833 = vmatprep.mubr.bf16.mxu0 0
      %1834 = vmatmul.mubr.bf16.gmra.mrb[0].mxu0 %v1699
      %v1835 = vpop.f32.mrb[0].mxu0
      %v1836 = vadd.f32 0.0, %v1835
      %v1837 = vpop.f32.mrb[0].mxu0
      %v1838 = vpop.f32.mrb[0].mxu0
      %v1839 = vadd.f32 0.0, %v1838
      %v1840 = vpop.f32.mrb[0].mxu0
      %1841 = vmatprep.mubr.bf16.mxu0 0
      %1842 = vmatmul.mubr.bf16.gmra.mrb[0].mxu0 %v1703
      %v1843 = vpop.f32.mrb[0].mxu0
      %v1844 = vadd.f32 0.0, %v1843
      %v1845 = vpop.f32.mrb[0].mxu0
      %v1846 = vpop.f32.mrb[0].mxu0
      %v1847 = vadd.f32 0.0, %v1846
      %v1848 = vpop.f32.mrb[0].mxu0
      %1849 = vmatprep.mubr.bf16.mxu0 0
      %1850 = vmatmul.mubr.bf16.gmra.mrb[0].mxu0 %v1707
      %v1851 = vpop.f32.mrb[0].mxu0
      %v1852 = vadd.f32 0.0, %v1851
      %v1853 = vpop.f32.mrb[0].mxu0
      %v1854 = vpop.f32.mrb[0].mxu0
      %v1855 = vadd.f32 0.0, %v1854
      %v1856 = vpop.f32.mrb[0].mxu0
      %1857 = vmatprep.mubr.bf16.mxu0 0
      %1858 = vmatmul.mubr.bf16.gmra.mrb[0].mxu0 %v1711
      %v1859 = vpop.f32.mrb[0].mxu0
      %v1860 = vadd.f32 0.0, %v1859
      %v1861 = vpop.f32.mrb[0].mxu0
      %v1862 = vpop.f32.mrb[0].mxu0
      %v1863 = vadd.f32 0.0, %v1862
      %v1864 = vpop.f32.mrb[0].mxu0
      %1865 = vmatprep.mubr.bf16.mxu0 0
      %1866 = vmatmul.mubr.bf16.gmra.mrb[0].mxu0 %v1720
      %v1867 = vpop.f32.mrb[0].mxu0
      %v1868 = vadd.f32 0.0, %v1867
      %v1869 = vpop.f32.mrb[0].mxu0
      %v1870 = vpop.f32.mrb[0].mxu0
      %v1871 = vadd.f32 0.0, %v1870
      %v1872 = vpop.f32.mrb[0].mxu0
      %1873 = vdwg.mxu0
      %v1874 = vadd.f32 %v1642, %v1812
      %v1875 = vadd.f32 %v1643, %v1815
      %v1876 = vadd.f32 %v1644, %v1820
      %v1877 = vadd.f32 %v1645, %v1823
      %v1878 = vadd.f32 %v1646, %v1828
      %v1879 = vadd.f32 %v1647, %v1831
      %v1880 = vadd.f32 %v1648, %v1836
      %v1881 = vadd.f32 %v1649, %v1839
      %v1882 = vadd.f32 %v1650, %v1844
      %v1883 = vadd.f32 %v1651, %v1847
      %v1884 = vadd.f32 %v1652, %v1852
      %v1885 = vadd.f32 %v1653, %v1855
      %v1886 = vadd.f32 %v1654, %v1860
      %v1887 = vadd.f32 %v1655, %v1863
      %v1888 = vadd.f32 %v1656, %v1868
      %v1889 = vadd.f32 %v1657, %v1871
      %v1890 = vld [vmem:[#allocation2] sm:$0xc0]
      %v1891 = vld [vmem:[%s5 + $0x140] sm:$0xf]
      %v1892 = vld [vmem:[%s5 + $0x144] sm:$0xf]
      %v1893 = vld [vmem:[%s5 + $0x148] sm:$0xf]
      %v1894 = vld [vmem:[%s5 + $0x14c] sm:$0xf]
      %v1895 = vld [vmem:[%s5 + $0x150] sm:$0xf]
      %v1896 = vld [vmem:[%s5 + $0x154] sm:$0xf]
      %v1897 = vld [vmem:[%s5 + $0x158] sm:$0xf]
      %v1898 = vld [vmem:[%s5 + $0x15c] sm:$0xf]
      %v1899 = vld [vmem:[%s5 + $0x160] sm:$0xf]
      %v1900 = vld [vmem:[%s5 + $0x164] sm:$0xf]
      %v1901 = vld [vmem:[%s5 + $0x168] sm:$0xf]
      %v1902 = vld [vmem:[%s5 + $0x16c] sm:$0xf]
      %v1903 = vld [vmem:[%s5 + $0x170] sm:$0xf]
      %v1904 = vld [vmem:[%s5 + $0x174] sm:$0xf]
      %v1905 = vld [vmem:[%s5 + $0x178] sm:$0xf]
      %v1906 = vld [vmem:[%s5 + $0x17c] sm:$0xf]
      %vm1909 = vcmask 1041408
      %v1910 = vrot.slane %v1890, 6
      %v1911 = vrot.slane %v831, 6
      %v1912 = vsel %vm1909, %v1910, %v1911
      %v1913 = vrot.slane %v832, 6
      %v1914 = vsel %vm1909, %v1911, %v1913
      %v1915 = vrot.slane %v833, 6
      %v1916 = vsel %vm1909, %v1913, %v1915
      %v1917 = vrot.slane %v834, 6
      %v1918 = vsel %vm1909, %v1915, %v1917
      %v1919 = vrot.slane %v835, 6
      %v1920 = vsel %vm1909, %v1917, %v1919
      %v1921 = vrot.slane %v836, 6
      %v1922 = vsel %vm1909, %v1919, %v1921
      %v1923 = vrot.slane %v837, 6
      %v1924 = vsel %vm1909, %v1921, %v1923
      %v1925 = vrot.slane %v1658, 6
      %v1926 = vsel %vm1909, %v1923, %v1925
      %v1951 = vunpack.c.l.b16 %v1891
      %v1952 = vunpack.c.l.b16 %v1892
      %v1953 = vunpack.c.l.b16 %v1893
      %v1954 = vunpack.c.l.b16 %v1894
      %v1955 = vunpack.c.l.b16 %v1895
      %v1956 = vunpack.c.l.b16 %v1896
      %v1957 = vunpack.c.l.b16 %v1897
      %v1958 = vunpack.c.l.b16 %v1898
      %v1959 = vunpack.c.l.b16 %v1899
      %v1960 = vunpack.c.l.b16 %v1900
      %v1961 = vunpack.c.l.b16 %v1901
      %v1962 = vunpack.c.l.b16 %v1902
      %v1963 = vunpack.c.l.b16 %v1903
      %v1964 = vunpack.c.l.b16 %v1904
      %v1965 = vunpack.c.l.b16 %v1905
      %v1966 = vunpack.c.l.b16 %v1906
      %v1967 = vpack.c.b16 %v1952, %v1951
      %v1968 = vpack.c.b16 %v1954, %v1953
      %v1969 = vpack.c.b16 %v1956, %v1955
      %v1970 = vpack.c.b16 %v1958, %v1957
      %v1971 = vpack.c.b16 %v1960, %v1959
      %v1972 = vpack.c.b16 %v1962, %v1961
      %v1973 = vpack.c.b16 %v1964, %v1963
      %v1974 = vpack.c.b16 %v1966, %v1965
      %1983 = vmatprep.subr.bf16.mxu0 0
      %1984 = vmatpush1.bf16.msra.mxu0 %v1967
      %1985 = vmatprep.subr.bf16.mxu0 0
      %1986 = vmatpush1.bf16.msra.mxu0 %v1968
      %1987 = vmatprep.subr.bf16.mxu0 0
      %1988 = vmatpush1.bf16.msra.mxu0 %v1969
      %1989 = vmatprep.subr.bf16.mxu0 0
      %1990 = vmatpush1.bf16.msra.mxu0 %v1970
      %1991 = vmatprep.subr.bf16.mxu0 0
      %1992 = vmatpush1.bf16.msra.mxu0 %v1971
      %1993 = vmatprep.subr.bf16.mxu0 0
      %1994 = vmatpush1.bf16.msra.mxu0 %v1972
      %1995 = vmatprep.subr.bf16.mxu0 0
      %1996 = vmatpush1.bf16.msra.mxu0 %v1973
      %1997 = vmatprep.subr.bf16.mxu0 0
      %1998 = vmatpush1.bf16.msra.mxu0 %v1974
      %1999 = vmatprep.subr.bf16.mxu0 0
      %2000 = vmatpush1.bf16.msra.mxu0 0
      %2001 = vmatprep.subr.bf16.mxu0 0
      %2002 = vmatpush1.bf16.msra.mxu0 0
      %2003 = vmatprep.subr.bf16.mxu0 0
      %2004 = vmatpush1.bf16.msra.mxu0 0
      %2005 = vmatprep.subr.bf16.mxu0 0
      %2006 = vmatpush1.bf16.msra.mxu0 0
      %2007 = vmatprep.subr.bf16.mxu0 0
      %2008 = vmatpush1.bf16.msra.mxu0 0
      %2009 = vmatprep.subr.bf16.mxu0 0
      %2010 = vmatpush1.bf16.msra.mxu0 0
      %2011 = vmatprep.subr.bf16.mxu0 0
      %2012 = vmatpush1.bf16.msra.mxu0 0
      %2013 = vmatprep.subr.bf16.mxu0 0
      %2014 = vmatpush1.bf16.msra.mxu0 0
      %2015 = vmatprep.mubr.bf16.mxu0 0
      %2016 = vmatmul.mubr.bf16.gmra.mrb[0].mxu0 %v1912
      %v2017 = vpop.f32.mrb[0].mxu0
      %v2018 = vadd.f32 0.0, %v2017
      %v2019 = vpop.f32.mrb[0].mxu0
      %v2020 = vpop.f32.mrb[0].mxu0
      %v2021 = vadd.f32 0.0, %v2020
      %v2022 = vpop.f32.mrb[0].mxu0
      %2023 = vmatprep.mubr.bf16.mxu0 0
      %2024 = vmatmul.mubr.bf16.gmra.mrb[0].mxu0 %v1914
      %v2025 = vpop.f32.mrb[0].mxu0
      %v2026 = vadd.f32 0.0, %v2025
      %v2027 = vpop.f32.mrb[0].mxu0
      %v2028 = vpop.f32.mrb[0].mxu0
      %v2029 = vadd.f32 0.0, %v2028
      %v2030 = vpop.f32.mrb[0].mxu0
      %2031 = vmatprep.mubr.bf16.mxu0 0
      %2032 = vmatmul.mubr.bf16.gmra.mrb[0].mxu0 %v1916
      %v2033 = vpop.f32.mrb[0].mxu0
      %v2034 = vadd.f32 0.0, %v2033
      %v2035 = vpop.f32.mrb[0].mxu0
      %v2036 = vpop.f32.mrb[0].mxu0
      %v2037 = vadd.f32 0.0, %v2036
      %v2038 = vpop.f32.mrb[0].mxu0
      %2039 = vmatprep.mubr.bf16.mxu0 0
      %2040 = vmatmul.mubr.bf16.gmra.mrb[0].mxu0 %v1918
      %v2041 = vpop.f32.mrb[0].mxu0
      %v2042 = vadd.f32 0.0, %v2041
      %v2043 = vpop.f32.mrb[0].mxu0
      %v2044 = vpop.f32.mrb[0].mxu0
      %v2045 = vadd.f32 0.0, %v2044
      %v2046 = vpop.f32.mrb[0].mxu0
      %2047 = vmatprep.mubr.bf16.mxu0 0
      %2048 = vmatmul.mubr.bf16.gmra.mrb[0].mxu0 %v1920
      %v2049 = vpop.f32.mrb[0].mxu0
      %v2050 = vadd.f32 0.0, %v2049
      %v2051 = vpop.f32.mrb[0].mxu0
      %v2052 = vpop.f32.mrb[0].mxu0
      %v2053 = vadd.f32 0.0, %v2052
      %v2054 = vpop.f32.mrb[0].mxu0
      %2055 = vmatprep.mubr.bf16.mxu0 0
      %2056 = vmatmul.mubr.bf16.gmra.mrb[0].mxu0 %v1922
      %v2057 = vpop.f32.mrb[0].mxu0
      %v2058 = vadd.f32 0.0, %v2057
      %v2059 = vpop.f32.mrb[0].mxu0
      %v2060 = vpop.f32.mrb[0].mxu0
      %v2061 = vadd.f32 0.0, %v2060
      %v2062 = vpop.f32.mrb[0].mxu0
      %2063 = vmatprep.mubr.bf16.mxu0 0
      %2064 = vmatmul.mubr.bf16.gmra.mrb[0].mxu0 %v1924
      %v2065 = vpop.f32.mrb[0].mxu0
      %v2066 = vadd.f32 0.0, %v2065
      %v2067 = vpop.f32.mrb[0].mxu0
      %v2068 = vpop.f32.mrb[0].mxu0
      %v2069 = vadd.f32 0.0, %v2068
      %v2070 = vpop.f32.mrb[0].mxu0
      %2071 = vmatprep.mubr.bf16.mxu0 0
      %2072 = vmatmul.mubr.bf16.gmra.mrb[0].mxu0 %v1926
      %v2073 = vpop.f32.mrb[0].mxu0
      %v2074 = vadd.f32 0.0, %v2073
      %v2075 = vpop.f32.mrb[0].mxu0
      %v2076 = vpop.f32.mrb[0].mxu0
      %v2077 = vadd.f32 0.0, %v2076
      %v2078 = vpop.f32.mrb[0].mxu0
      %2079 = vdwg.mxu0
      %v2080 = vadd.f32 %v1874, %v2018
      %v2081 = vadd.f32 %v1875, %v2021
      %v2082 = vadd.f32 %v1876, %v2026
      %v2083 = vadd.f32 %v1877, %v2029
      %v2084 = vadd.f32 %v1878, %v2034
      %v2085 = vadd.f32 %v1879, %v2037
      %v2086 = vadd.f32 %v1880, %v2042
      %v2087 = vadd.f32 %v1881, %v2045
      %v2088 = vadd.f32 %v1882, %v2050
      %v2089 = vadd.f32 %v1883, %v2053
      %v2090 = vadd.f32 %v1884, %v2058
      %v2091 = vadd.f32 %v1885, %v2061
      %v2092 = vadd.f32 %v1886, %v2066
      %v2093 = vadd.f32 %v1887, %v2069
      %v2094 = vadd.f32 %v1888, %v2074
      %v2095 = vadd.f32 %v1889, %v2077
      %v2096 = vld [vmem:[#allocation2 + $0x8] sm:$0xfc]
      %v2097 = vld [vmem:[#allocation2 + $0x10] sm:$0xff]
      %v2098 = vld [vmem:[#allocation2 + $0x18] sm:$0xff]
      %v2099 = vld [vmem:[#allocation2 + $0x20] sm:$0xff]
      %v2100 = vld [vmem:[#allocation2 + $0x28] sm:$0xff]
      %v2101 = vld [vmem:[#allocation2 + $0x30] sm:$0xff]
      %v2102 = vld [vmem:[#allocation2 + $0x38] sm:$0xff]
      %v2103 = vld [vmem:[#allocation2 + $0x40] sm:$0xff]
      %v2104 = vld [vmem:[#allocation2 + $0x48] sm:$0x3]
      %v2105 = vld [vmem:[%s5 + $0x180] sm:$0xf]
      %v2106 = vld [vmem:[%s5 + $0x184] sm:$0xf]
      %v2107 = vld [vmem:[%s5 + $0x188] sm:$0xf]
      %v2108 = vld [vmem:[%s5 + $0x18c] sm:$0xf]
      %v2109 = vld [vmem:[%s5 + $0x190] sm:$0xf]
      %v2110 = vld [vmem:[%s5 + $0x194] sm:$0xf]
      %v2111 = vld [vmem:[%s5 + $0x198] sm:$0xf]
      %v2112 = vld [vmem:[%s5 + $0x19c] sm:$0xf]
      %v2113 = vld [vmem:[%s5 + $0x1a0] sm:$0xf]
      %v2114 = vld [vmem:[%s5 + $0x1a4] sm:$0xf]
      %v2115 = vld [vmem:[%s5 + $0x1a8] sm:$0xf]
      %v2116 = vld [vmem:[%s5 + $0x1ac] sm:$0xf]
      %v2117 = vld [vmem:[%s5 + $0x1b0] sm:$0xf]
      %v2118 = vld [vmem:[%s5 + $0x1b4] sm:$0xf]
      %v2119 = vld [vmem:[%s5 + $0x1b8] sm:$0xf]
      %v2120 = vld [vmem:[%s5 + $0x1bc] sm:$0xf]
      %vm2130 = vcmask 1045504
      %v2131 = vrot.slane %v2096, 2
      %v2132 = vrot.slane %v2097, 2
      %v2133 = vsel %vm2130, %v2131, %v2132
      %v2134 = vrot.slane %v2098, 2
      %v2135 = vsel %vm2130, %v2132, %v2134
      %v2136 = vrot.slane %v2099, 2
      %v2137 = vsel %vm2130, %v2134, %v2136
      %v2138 = vrot.slane %v2100, 2
      %v2139 = vsel %vm2130, %v2136, %v2138
      %v2140 = vrot.slane %v2101, 2
      %v2141 = vsel %vm2130, %v2138, %v2140
      %v2142 = vrot.slane %v2102, 2
      %v2143 = vsel %vm2130, %v2140, %v2142
      %v2144 = vrot.slane %v2103, 2
      %v2145 = vsel %vm2130, %v2142, %v2144
      %v2146 = vrot.slane %v2104, 2
      %v2147 = vsel %vm2130, %v2144, %v2146
      %v2172 = vunpack.c.l.b16 %v2105
      %v2173 = vunpack.c.l.b16 %v2106
      %v2174 = vunpack.c.l.b16 %v2107
      %v2175 = vunpack.c.l.b16 %v2108
      %v2176 = vunpack.c.l.b16 %v2109
      %v2177 = vunpack.c.l.b16 %v2110
      %v2178 = vunpack.c.l.b16 %v2111
      %v2179 = vunpack.c.l.b16 %v2112
      %v2180 = vunpack.c.l.b16 %v2113
      %v2181 = vunpack.c.l.b16 %v2114
      %v2182 = vunpack.c.l.b16 %v2115
      %v2183 = vunpack.c.l.b16 %v2116
      %v2184 = vunpack.c.l.b16 %v2117
      %v2185 = vunpack.c.l.b16 %v2118
      %v2186 = vunpack.c.l.b16 %v2119
      %v2187 = vunpack.c.l.b16 %v2120
      %v2188 = vpack.c.b16 %v2173, %v2172
      %v2189 = vpack.c.b16 %v2175, %v2174
      %v2190 = vpack.c.b16 %v2177, %v2176
      %v2191 = vpack.c.b16 %v2179, %v2178
      %v2192 = vpack.c.b16 %v2181, %v2180
      %v2193 = vpack.c.b16 %v2183, %v2182
      %v2194 = vpack.c.b16 %v2185, %v2184
      %v2195 = vpack.c.b16 %v2187, %v2186
      %2204 = vmatprep.subr.bf16.mxu0 0
      %2205 = vmatpush1.bf16.msra.mxu0 %v2188
      %2206 = vmatprep.subr.bf16.mxu0 0
      %2207 = vmatpush1.bf16.msra.mxu0 %v2189
      %2208 = vmatprep.subr.bf16.mxu0 0
      %2209 = vmatpush1.bf16.msra.mxu0 %v2190
      %2210 = vmatprep.subr.bf16.mxu0 0
      %2211 = vmatpush1.bf16.msra.mxu0 %v2191
      %2212 = vmatprep.subr.bf16.mxu0 0
      %2213 = vmatpush1.bf16.msra.mxu0 %v2192
      %2214 = vmatprep.subr.bf16.mxu0 0
      %2215 = vmatpush1.bf16.msra.mxu0 %v2193
      %2216 = vmatprep.subr.bf16.mxu0 0
      %2217 = vmatpush1.bf16.msra.mxu0 %v2194
      %2218 = vmatprep.subr.bf16.mxu0 0
      %2219 = vmatpush1.bf16.msra.mxu0 %v2195
      %2220 = vmatprep.subr.bf16.mxu0 0
      %2221 = vmatpush1.bf16.msra.mxu0 0
      %2222 = vmatprep.subr.bf16.mxu0 0
      %2223 = vmatpush1.bf16.msra.mxu0 0
      %2224 = vmatprep.subr.bf16.mxu0 0
      %2225 = vmatpush1.bf16.msra.mxu0 0
      %2226 = vmatprep.subr.bf16.mxu0 0
      %2227 = vmatpush1.bf16.msra.mxu0 0
      %2228 = vmatprep.subr.bf16.mxu0 0
      %2229 = vmatpush1.bf16.msra.mxu0 0
      %2230 = vmatprep.subr.bf16.mxu0 0
      %2231 = vmatpush1.bf16.msra.mxu0 0
      %2232 = vmatprep.subr.bf16.mxu0 0
      %2233 = vmatpush1.bf16.msra.mxu0 0
      %2234 = vmatprep.subr.bf16.mxu0 0
      %2235 = vmatpush1.bf16.msra.mxu0 0
      %2236 = vmatprep.mubr.bf16.mxu0 0
      %2237 = vmatmul.mubr.bf16.gmra.mrb[0].mxu0 %v2133
      %v2238 = vpop.f32.mrb[0].mxu0
      %v2239 = vadd.f32 0.0, %v2238
      %v2240 = vpop.f32.mrb[0].mxu0
      %v2241 = vpop.f32.mrb[0].mxu0
      %v2242 = vadd.f32 0.0, %v2241
      %v2243 = vpop.f32.mrb[0].mxu0
      %2244 = vmatprep.mubr.bf16.mxu0 0
      %2245 = vmatmul.mubr.bf16.gmra.mrb[0].mxu0 %v2135
      %v2246 = vpop.f32.mrb[0].mxu0
      %v2247 = vadd.f32 0.0, %v2246
      %v2248 = vpop.f32.mrb[0].mxu0
      %v2249 = vpop.f32.mrb[0].mxu0
      %v2250 = vadd.f32 0.0, %v2249
      %v2251 = vpop.f32.mrb[0].mxu0
      %2252 = vmatprep.mubr.bf16.mxu0 0
      %2253 = vmatmul.mubr.bf16.gmra.mrb[0].mxu0 %v2137
      %v2254 = vpop.f32.mrb[0].mxu0
      %v2255 = vadd.f32 0.0, %v2254
      %v2256 = vpop.f32.mrb[0].mxu0
      %v2257 = vpop.f32.mrb[0].mxu0
      %v2258 = vadd.f32 0.0, %v2257
      %v2259 = vpop.f32.mrb[0].mxu0
      %2260 = vmatprep.mubr.bf16.mxu0 0
      %2261 = vmatmul.mubr.bf16.gmra.mrb[0].mxu0 %v2139
      %v2262 = vpop.f32.mrb[0].mxu0
      %v2263 = vadd.f32 0.0, %v2262
      %v2264 = vpop.f32.mrb[0].mxu0
      %v2265 = vpop.f32.mrb[0].mxu0
      %v2266 = vadd.f32 0.0, %v2265
      %v2267 = vpop.f32.mrb[0].mxu0
      %2268 = vmatprep.mubr.bf16.mxu0 0
      %2269 = vmatmul.mubr.bf16.gmra.mrb[0].mxu0 %v2141
      %v2270 = vpop.f32.mrb[0].mxu0
      %v2271 = vadd.f32 0.0, %v2270
      %v2272 = vpop.f32.mrb[0].mxu0
      %v2273 = vpop.f32.mrb[0].mxu0
      %v2274 = vadd.f32 0.0, %v2273
      %v2275 = vpop.f32.mrb[0].mxu0
      %2276 = vmatprep.mubr.bf16.mxu0 0
      %2277 = vmatmul.mubr.bf16.gmra.mrb[0].mxu0 %v2143
      %v2278 = vpop.f32.mrb[0].mxu0
      %v2279 = vadd.f32 0.0, %v2278
      %v2280 = vpop.f32.mrb[0].mxu0
      %v2281 = vpop.f32.mrb[0].mxu0
      %v2282 = vadd.f32 0.0, %v2281
      %v2283 = vpop.f32.mrb[0].mxu0
      %2284 = vmatprep.mubr.bf16.mxu0 0
      %2285 = vmatmul.mubr.bf16.gmra.mrb[0].mxu0 %v2145
      %v2286 = vpop.f32.mrb[0].mxu0
      %v2287 = vadd.f32 0.0, %v2286
      %v2288 = vpop.f32.mrb[0].mxu0
      %v2289 = vpop.f32.mrb[0].mxu0
      %v2290 = vadd.f32 0.0, %v2289
      %v2291 = vpop.f32.mrb[0].mxu0
      %2292 = vmatprep.mubr.bf16.mxu0 0
      %2293 = vmatmul.mubr.bf16.gmra.mrb[0].mxu0 %v2147
      %v2294 = vpop.f32.mrb[0].mxu0
      %v2295 = vadd.f32 0.0, %v2294
      %v2296 = vpop.f32.mrb[0].mxu0
      %v2297 = vpop.f32.mrb[0].mxu0
      %v2298 = vadd.f32 0.0, %v2297
      %v2299 = vpop.f32.mrb[0].mxu0
      %2300 = vdwg.mxu0
      %v2301 = vadd.f32 %v2080, %v2239
      %v2302 = vadd.f32 %v2081, %v2242
      %v2303 = vadd.f32 %v2082, %v2247
      %v2304 = vadd.f32 %v2083, %v2250
      %v2305 = vadd.f32 %v2084, %v2255
      %v2306 = vadd.f32 %v2085, %v2258
      %v2307 = vadd.f32 %v2086, %v2263
      %v2308 = vadd.f32 %v2087, %v2266
      %v2309 = vadd.f32 %v2088, %v2271
      %v2310 = vadd.f32 %v2089, %v2274
      %v2311 = vadd.f32 %v2090, %v2279
      %v2312 = vadd.f32 %v2091, %v2282
      %v2313 = vadd.f32 %v2092, %v2287
      %v2314 = vadd.f32 %v2093, %v2290
      %v2315 = vadd.f32 %v2094, %v2295
      %v2316 = vadd.f32 %v2095, %v2298
      %v2317 = vld [vmem:[#allocation2 + $0x48] sm:$0x7]
      %v2318 = vld [vmem:[%s5 + $0x1c0] sm:$0xf]
      %v2319 = vld [vmem:[%s5 + $0x1c4] sm:$0xf]
      %v2320 = vld [vmem:[%s5 + $0x1c8] sm:$0xf]
      %v2321 = vld [vmem:[%s5 + $0x1cc] sm:$0xf]
      %v2322 = vld [vmem:[%s5 + $0x1d0] sm:$0xf]
      %v2323 = vld [vmem:[%s5 + $0x1d4] sm:$0xf]
      %v2324 = vld [vmem:[%s5 + $0x1d8] sm:$0xf]
      %v2325 = vld [vmem:[%s5 + $0x1dc] sm:$0xf]
      %v2326 = vld [vmem:[%s5 + $0x1e0] sm:$0xf]
      %v2327 = vld [vmem:[%s5 + $0x1e4] sm:$0xf]
      %v2328 = vld [vmem:[%s5 + $0x1e8] sm:$0xf]
      %v2329 = vld [vmem:[%s5 + $0x1ec] sm:$0xf]
      %v2330 = vld [vmem:[%s5 + $0x1f0] sm:$0xf]
      %v2331 = vld [vmem:[%s5 + $0x1f4] sm:$0xf]
      %v2332 = vld [vmem:[%s5 + $0x1f8] sm:$0xf]
      %v2333 = vld [vmem:[%s5 + $0x1fc] sm:$0xf]
      %vm2334 = vsmask.f32 5376
      %v2336 = vshrl.u32 %v2096, 16
      %v2338 = vrot.slane %v2336, 2
      %v2339 = vshll.u32 %v2096, 16
      %v2341 = vrot.slane %v2339, 3
      %v2342 = vor.u32 %v2338, %v2341
      %v2344 = vshrl.u32 %v2097, 16
      %v2346 = vrot.slane %v2344, 2
      %v2347 = vshll.u32 %v2097, 16
      %v2349 = vrot.slane %v2347, 3
      %v2350 = vor.u32 %v2346, %v2349
      %v2351 = vsel %vm2334, %v2342, %v2350
      %v2353 = vshrl.u32 %v2098, 16
      %v2355 = vrot.slane %v2353, 2
      %v2356 = vshll.u32 %v2098, 16
      %v2358 = vrot.slane %v2356, 3
      %v2359 = vor.u32 %v2355, %v2358
      %v2360 = vsel %vm2334, %v2350, %v2359
      %v2362 = vshrl.u32 %v2099, 16
      %v2364 = vrot.slane %v2362, 2
      %v2365 = vshll.u32 %v2099, 16
      %v2367 = vrot.slane %v2365, 3
      %v2368 = vor.u32 %v2364, %v2367
      %v2369 = vsel %vm2334, %v2359, %v2368
      %v2371 = vshrl.u32 %v2100, 16
      %v2373 = vrot.slane %v2371, 2
      %v2374 = vshll.u32 %v2100, 16
      %v2376 = vrot.slane %v2374, 3
      %v2377 = vor.u32 %v2373, %v2376
      %v2378 = vsel %vm2334, %v2368, %v2377
      %v2380 = vshrl.u32 %v2101, 16
      %v2382 = vrot.slane %v2380, 2
      %v2383 = vshll.u32 %v2101, 16
      %v2385 = vrot.slane %v2383, 3
      %v2386 = vor.u32 %v2382, %v2385
      %v2387 = vsel %vm2334, %v2377, %v2386
      %v2389 = vshrl.u32 %v2102, 16
      %v2391 = vrot.slane %v2389, 2
      %v2392 = vshll.u32 %v2102, 16
      %v2394 = vrot.slane %v2392, 3
      %v2395 = vor.u32 %v2391, %v2394
      %v2396 = vsel %vm2334, %v2386, %v2395
      %v2398 = vshrl.u32 %v2103, 16
      %v2400 = vrot.slane %v2398, 2
      %v2401 = vshll.u32 %v2103, 16
      %v2403 = vrot.slane %v2401, 3
      %v2404 = vor.u32 %v2400, %v2403
      %v2405 = vsel %vm2334, %v2395, %v2404
      %v2407 = vshrl.u32 %v2317, 16
      %v2409 = vrot.slane %v2407, 2
      %v2410 = vshll.u32 %v2317, 16
      %v2412 = vrot.slane %v2410, 3
      %v2413 = vor.u32 %v2409, %v2412
      %v2414 = vsel %vm2334, %v2404, %v2413
      %v2439 = vunpack.c.l.b16 %v2318
      %v2440 = vunpack.c.l.b16 %v2319
      %v2441 = vunpack.c.l.b16 %v2320
      %v2442 = vunpack.c.l.b16 %v2321
      %v2443 = vunpack.c.l.b16 %v2322
      %v2444 = vunpack.c.l.b16 %v2323
      %v2445 = vunpack.c.l.b16 %v2324
      %v2446 = vunpack.c.l.b16 %v2325
      %v2447 = vunpack.c.l.b16 %v2326
      %v2448 = vunpack.c.l.b16 %v2327
      %v2449 = vunpack.c.l.b16 %v2328
      %v2450 = vunpack.c.l.b16 %v2329
      %v2451 = vunpack.c.l.b16 %v2330
      %v2452 = vunpack.c.l.b16 %v2331
      %v2453 = vunpack.c.l.b16 %v2332
      %v2454 = vunpack.c.l.b16 %v2333
      %v2455 = vpack.c.b16 %v2440, %v2439
      %v2456 = vpack.c.b16 %v2442, %v2441
      %v2457 = vpack.c.b16 %v2444, %v2443
      %v2458 = vpack.c.b16 %v2446, %v2445
      %v2459 = vpack.c.b16 %v2448, %v2447
      %v2460 = vpack.c.b16 %v2450, %v2449
      %v2461 = vpack.c.b16 %v2452, %v2451
      %v2462 = vpack.c.b16 %v2454, %v2453
      %2471 = vmatprep.subr.bf16.mxu0 0
      %2472 = vmatpush1.bf16.msra.mxu0 %v2455
      %2473 = vmatprep.subr.bf16.mxu0 0
      %2474 = vmatpush1.bf16.msra.mxu0 %v2456
      %2475 = vmatprep.subr.bf16.mxu0 0
      %2476 = vmatpush1.bf16.msra.mxu0 %v2457
      %2477 = vmatprep.subr.bf16.mxu0 0
      %2478 = vmatpush1.bf16.msra.mxu0 %v2458
      %2479 = vmatprep.subr.bf16.mxu0 0
      %2480 = vmatpush1.bf16.msra.mxu0 %v2459
      %2481 = vmatprep.subr.bf16.mxu0 0
      %2482 = vmatpush1.bf16.msra.mxu0 %v2460
      %2483 = vmatprep.subr.bf16.mxu0 0
      %2484 = vmatpush1.bf16.msra.mxu0 %v2461
      %2485 = vmatprep.subr.bf16.mxu0 0
      %2486 = vmatpush1.bf16.msra.mxu0 %v2462
      %2487 = vmatprep.subr.bf16.mxu0 0
      %2488 = vmatpush1.bf16.msra.mxu0 0
      %2489 = vmatprep.subr.bf16.mxu0 0
      %2490 = vmatpush1.bf16.msra.mxu0 0
      %2491 = vmatprep.subr.bf16.mxu0 0
      %2492 = vmatpush1.bf16.msra.mxu0 0
      %2493 = vmatprep.subr.bf16.mxu0 0
      %2494 = vmatpush1.bf16.msra.mxu0 0
      %2495 = vmatprep.subr.bf16.mxu0 0
      %2496 = vmatpush1.bf16.msra.mxu0 0
      %2497 = vmatprep.subr.bf16.mxu0 0
      %2498 = vmatpush1.bf16.msra.mxu0 0
      %2499 = vmatprep.subr.bf16.mxu0 0
      %2500 = vmatpush1.bf16.msra.mxu0 0
      %2501 = vmatprep.subr.bf16.mxu0 0
      %2502 = vmatpush1.bf16.msra.mxu0 0
      %2503 = vmatprep.mubr.bf16.mxu0 0
      %2504 = vmatmul.mubr.bf16.gmra.mrb[0].mxu0 %v2351
      %v2505 = vpop.f32.mrb[0].mxu0
      %v2506 = vadd.f32 0.0, %v2505
      %v2507 = vpop.f32.mrb[0].mxu0
      %v2508 = vpop.f32.mrb[0].mxu0
      %v2509 = vadd.f32 0.0, %v2508
      %v2510 = vpop.f32.mrb[0].mxu0
      %2511 = vmatprep.mubr.bf16.mxu0 0
      %2512 = vmatmul.mubr.bf16.gmra.mrb[0].mxu0 %v2360
      %v2513 = vpop.f32.mrb[0].mxu0
      %v2514 = vadd.f32 0.0, %v2513
      %v2515 = vpop.f32.mrb[0].mxu0
      %v2516 = vpop.f32.mrb[0].mxu0
      %v2517 = vadd.f32 0.0, %v2516
      %v2518 = vpop.f32.mrb[0].mxu0
      %2519 = vmatprep.mubr.bf16.mxu0 0
      %2520 = vmatmul.mubr.bf16.gmra.mrb[0].mxu0 %v2369
      %v2521 = vpop.f32.mrb[0].mxu0
      %v2522 = vadd.f32 0.0, %v2521
      %v2523 = vpop.f32.mrb[0].mxu0
      %v2524 = vpop.f32.mrb[0].mxu0
      %v2525 = vadd.f32 0.0, %v2524
      %v2526 = vpop.f32.mrb[0].mxu0
      %2527 = vmatprep.mubr.bf16.mxu0 0
      %2528 = vmatmul.mubr.bf16.gmra.mrb[0].mxu0 %v2378
      %v2529 = vpop.f32.mrb[0].mxu0
      %v2530 = vadd.f32 0.0, %v2529
      %v2531 = vpop.f32.mrb[0].mxu0
      %v2532 = vpop.f32.mrb[0].mxu0
      %v2533 = vadd.f32 0.0, %v2532
      %v2534 = vpop.f32.mrb[0].mxu0
      %2535 = vmatprep.mubr.bf16.mxu0 0
      %2536 = vmatmul.mubr.bf16.gmra.mrb[0].mxu0 %v2387
      %v2537 = vpop.f32.mrb[0].mxu0
      %v2538 = vadd.f32 0.0, %v2537
      %v2539 = vpop.f32.mrb[0].mxu0
      %v2540 = vpop.f32.mrb[0].mxu0
      %v2541 = vadd.f32 0.0, %v2540
      %v2542 = vpop.f32.mrb[0].mxu0
      %2543 = vmatprep.mubr.bf16.mxu0 0
      %2544 = vmatmul.mubr.bf16.gmra.mrb[0].mxu0 %v2396
      %v2545 = vpop.f32.mrb[0].mxu0
      %v2546 = vadd.f32 0.0, %v2545
      %v2547 = vpop.f32.mrb[0].mxu0
      %v2548 = vpop.f32.mrb[0].mxu0
      %v2549 = vadd.f32 0.0, %v2548
      %v2550 = vpop.f32.mrb[0].mxu0
      %2551 = vmatprep.mubr.bf16.mxu0 0
      %2552 = vmatmul.mubr.bf16.gmra.mrb[0].mxu0 %v2405
      %v2553 = vpop.f32.mrb[0].mxu0
      %v2554 = vadd.f32 0.0, %v2553
      %v2555 = vpop.f32.mrb[0].mxu0
      %v2556 = vpop.f32.mrb[0].mxu0
      %v2557 = vadd.f32 0.0, %v2556
      %v2558 = vpop.f32.mrb[0].mxu0
      %2559 = vmatprep.mubr.bf16.mxu0 0
      %2560 = vmatmul.mubr.bf16.gmra.mrb[0].mxu0 %v2414
      %v2561 = vpop.f32.mrb[0].mxu0
      %v2562 = vadd.f32 0.0, %v2561
      %v2563 = vpop.f32.mrb[0].mxu0
      %v2564 = vpop.f32.mrb[0].mxu0
      %v2565 = vadd.f32 0.0, %v2564
      %v2566 = vpop.f32.mrb[0].mxu0
      %2567 = vdwg.mxu0
      %v2568 = vadd.f32 %v2301, %v2506
      %v2569 = vadd.f32 %v2302, %v2509
      %v2570 = vadd.f32 %v2303, %v2514
      %v2571 = vadd.f32 %v2304, %v2517
      %v2572 = vadd.f32 %v2305, %v2522
      %v2573 = vadd.f32 %v2306, %v2525
      %v2574 = vadd.f32 %v2307, %v2530
      %v2575 = vadd.f32 %v2308, %v2533
      %v2576 = vadd.f32 %v2309, %v2538
      %v2577 = vadd.f32 %v2310, %v2541
      %v2578 = vadd.f32 %v2311, %v2546
      %v2579 = vadd.f32 %v2312, %v2549
      %v2580 = vadd.f32 %v2313, %v2554
      %v2581 = vadd.f32 %v2314, %v2557
      %v2582 = vadd.f32 %v2315, %v2562
      %v2583 = vadd.f32 %v2316, %v2565
      %v2584 = vld [vmem:[#allocation2 + $0x8] sm:$0xf8]
      %v2585 = vld [vmem:[%s5 + $0x200] sm:$0xf]
      %v2586 = vld [vmem:[%s5 + $0x204] sm:$0xf]
      %v2587 = vld [vmem:[%s5 + $0x208] sm:$0xf]
      %v2588 = vld [vmem:[%s5 + $0x20c] sm:$0xf]
      %v2589 = vld [vmem:[%s5 + $0x210] sm:$0xf]
      %v2590 = vld [vmem:[%s5 + $0x214] sm:$0xf]
      %v2591 = vld [vmem:[%s5 + $0x218] sm:$0xf]
      %v2592 = vld [vmem:[%s5 + $0x21c] sm:$0xf]
      %v2593 = vld [vmem:[%s5 + $0x220] sm:$0xf]
      %v2594 = vld [vmem:[%s5 + $0x224] sm:$0xf]
      %v2595 = vld [vmem:[%s5 + $0x228] sm:$0xf]
      %v2596 = vld [vmem:[%s5 + $0x22c] sm:$0xf]
      %v2597 = vld [vmem:[%s5 + $0x230] sm:$0xf]
      %v2598 = vld [vmem:[%s5 + $0x234] sm:$0xf]
      %v2599 = vld [vmem:[%s5 + $0x238] sm:$0xf]
      %v2600 = vld [vmem:[%s5 + $0x23c] sm:$0xf]
      %vm2603 = vcmask 1044480
      %v2604 = vrot.slane %v2584, 3
      %v2605 = vrot.slane %v2097, 3
      %v2606 = vsel %vm2603, %v2604, %v2605
      %v2607 = vrot.slane %v2098, 3
      %v2608 = vsel %vm2603, %v2605, %v2607
      %v2609 = vrot.slane %v2099, 3
      %v2610 = vsel %vm2603, %v2607, %v2609
      %v2611 = vrot.slane %v2100, 3
      %v2612 = vsel %vm2603, %v2609, %v2611
      %v2613 = vrot.slane %v2101, 3
      %v2614 = vsel %vm2603, %v2611, %v2613
      %v2615 = vrot.slane %v2102, 3
      %v2616 = vsel %vm2603, %v2613, %v2615
      %v2617 = vrot.slane %v2103, 3
      %v2618 = vsel %vm2603, %v2615, %v2617
      %v2619 = vrot.slane %v2317, 3
      %v2620 = vsel %vm2603, %v2617, %v2619
      %v2645 = vunpack.c.l.b16 %v2585
      %v2646 = vunpack.c.l.b16 %v2586
      %v2647 = vunpack.c.l.b16 %v2587
      %v2648 = vunpack.c.l.b16 %v2588
      %v2649 = vunpack.c.l.b16 %v2589
      %v2650 = vunpack.c.l.b16 %v2590
      %v2651 = vunpack.c.l.b16 %v2591
      %v2652 = vunpack.c.l.b16 %v2592
      %v2653 = vunpack.c.l.b16 %v2593
      %v2654 = vunpack.c.l.b16 %v2594
      %v2655 = vunpack.c.l.b16 %v2595
      %v2656 = vunpack.c.l.b16 %v2596
      %v2657 = vunpack.c.l.b16 %v2597
      %v2658 = vunpack.c.l.b16 %v2598
      %v2659 = vunpack.c.l.b16 %v2599
      %v2660 = vunpack.c.l.b16 %v2600
      %v2661 = vpack.c.b16 %v2646, %v2645
      %v2662 = vpack.c.b16 %v2648, %v2647
      %v2663 = vpack.c.b16 %v2650, %v2649
      %v2664 = vpack.c.b16 %v2652, %v2651
      %v2665 = vpack.c.b16 %v2654, %v2653
      %v2666 = vpack.c.b16 %v2656, %v2655
      %v2667 = vpack.c.b16 %v2658, %v2657
      %v2668 = vpack.c.b16 %v2660, %v2659
      %2677 = vmatprep.subr.bf16.mxu0 0
      %2678 = vmatpush1.bf16.msra.mxu0 %v2661
      %2679 = vmatprep.subr.bf16.mxu0 0
      %2680 = vmatpush1.bf16.msra.mxu0 %v2662
      %2681 = vmatprep.subr.bf16.mxu0 0
      %2682 = vmatpush1.bf16.msra.mxu0 %v2663
      %2683 = vmatprep.subr.bf16.mxu0 0
      %2684 = vmatpush1.bf16.msra.mxu0 %v2664
      %2685 = vmatprep.subr.bf16.mxu0 0
      %2686 = vmatpush1.bf16.msra.mxu0 %v2665
      %2687 = vmatprep.subr.bf16.mxu0 0
      %2688 = vmatpush1.bf16.msra.mxu0 %v2666
      %2689 = vmatprep.subr.bf16.mxu0 0
      %2690 = vmatpush1.bf16.msra.mxu0 %v2667
      %2691 = vmatprep.subr.bf16.mxu0 0
      %2692 = vmatpush1.bf16.msra.mxu0 %v2668
      %2693 = vmatprep.subr.bf16.mxu0 0
      %2694 = vmatpush1.bf16.msra.mxu0 0
      %2695 = vmatprep.subr.bf16.mxu0 0
      %2696 = vmatpush1.bf16.msra.mxu0 0
      %2697 = vmatprep.subr.bf16.mxu0 0
      %2698 = vmatpush1.bf16.msra.mxu0 0
      %2699 = vmatprep.subr.bf16.mxu0 0
      %2700 = vmatpush1.bf16.msra.mxu0 0
      %2701 = vmatprep.subr.bf16.mxu0 0
      %2702 = vmatpush1.bf16.msra.mxu0 0
      %2703 = vmatprep.subr.bf16.mxu0 0
      %2704 = vmatpush1.bf16.msra.mxu0 0
      %2705 = vmatprep.subr.bf16.mxu0 0
      %2706 = vmatpush1.bf16.msra.mxu0 0
      %2707 = vmatprep.subr.bf16.mxu0 0
      %2708 = vmatpush1.bf16.msra.mxu0 0
      %2709 = vmatprep.mubr.bf16.mxu0 0
      %2710 = vmatmul.mubr.bf16.gmra.mrb[0].mxu0 %v2606
      %v2711 = vpop.f32.mrb[0].mxu0
      %v2712 = vadd.f32 0.0, %v2711
      %v2713 = vpop.f32.mrb[0].mxu0
      %v2714 = vpop.f32.mrb[0].mxu0
      %v2715 = vadd.f32 0.0, %v2714
      %v2716 = vpop.f32.mrb[0].mxu0
      %2717 = vmatprep.mubr.bf16.mxu0 0
      %2718 = vmatmul.mubr.bf16.gmra.mrb[0].mxu0 %v2608
      %v2719 = vpop.f32.mrb[0].mxu0
      %v2720 = vadd.f32 0.0, %v2719
      %v2721 = vpop.f32.mrb[0].mxu0
      %v2722 = vpop.f32.mrb[0].mxu0
      %v2723 = vadd.f32 0.0, %v2722
      %v2724 = vpop.f32.mrb[0].mxu0
      %2725 = vmatprep.mubr.bf16.mxu0 0
      %2726 = vmatmul.mubr.bf16.gmra.mrb[0].mxu0 %v2610
      %v2727 = vpop.f32.mrb[0].mxu0
      %v2728 = vadd.f32 0.0, %v2727
      %v2729 = vpop.f32.mrb[0].mxu0
      %v2730 = vpop.f32.mrb[0].mxu0
      %v2731 = vadd.f32 0.0, %v2730
      %v2732 = vpop.f32.mrb[0].mxu0
      %2733 = vmatprep.mubr.bf16.mxu0 0
      %2734 = vmatmul.mubr.bf16.gmra.mrb[0].mxu0 %v2612
      %v2735 = vpop.f32.mrb[0].mxu0
      %v2736 = vadd.f32 0.0, %v2735
      %v2737 = vpop.f32.mrb[0].mxu0
      %v2738 = vpop.f32.mrb[0].mxu0
      %v2739 = vadd.f32 0.0, %v2738
      %v2740 = vpop.f32.mrb[0].mxu0
      %2741 = vmatprep.mubr.bf16.mxu0 0
      %2742 = vmatmul.mubr.bf16.gmra.mrb[0].mxu0 %v2614
      %v2743 = vpop.f32.mrb[0].mxu0
      %v2744 = vadd.f32 0.0, %v2743
      %v2745 = vpop.f32.mrb[0].mxu0
      %v2746 = vpop.f32.mrb[0].mxu0
      %v2747 = vadd.f32 0.0, %v2746
      %v2748 = vpop.f32.mrb[0].mxu0
      %2749 = vmatprep.mubr.bf16.mxu0 0
      %2750 = vmatmul.mubr.bf16.gmra.mrb[0].mxu0 %v2616
      %v2751 = vpop.f32.mrb[0].mxu0
      %v2752 = vadd.f32 0.0, %v2751
      %v2753 = vpop.f32.mrb[0].mxu0
      %v2754 = vpop.f32.mrb[0].mxu0
      %v2755 = vadd.f32 0.0, %v2754
      %v2756 = vpop.f32.mrb[0].mxu0
      %2757 = vmatprep.mubr.bf16.mxu0 0
      %2758 = vmatmul.mubr.bf16.gmra.mrb[0].mxu0 %v2618
      %v2759 = vpop.f32.mrb[0].mxu0
      %v2760 = vadd.f32 0.0, %v2759
      %v2761 = vpop.f32.mrb[0].mxu0
      %v2762 = vpop.f32.mrb[0].mxu0
      %v2763 = vadd.f32 0.0, %v2762
      %v2764 = vpop.f32.mrb[0].mxu0
      %2765 = vmatprep.mubr.bf16.mxu0 0
      %2766 = vmatmul.mubr.bf16.gmra.mrb[0].mxu0 %v2620
      %v2767 = vpop.f32.mrb[0].mxu0
      %v2768 = vadd.f32 0.0, %v2767
      %v2769 = vpop.f32.mrb[0].mxu0
      %v2770 = vpop.f32.mrb[0].mxu0
      %v2771 = vadd.f32 0.0, %v2770
      %v2772 = vpop.f32.mrb[0].mxu0
      %2773 = vdwg.mxu0
      %v2774 = vadd.f32 %v2568, %v2712
      %v2775 = vadd.f32 %v2569, %v2715
      %v2776 = vadd.f32 %v2570, %v2720
      %v2777 = vadd.f32 %v2571, %v2723
      %v2778 = vadd.f32 %v2572, %v2728
      %v2779 = vadd.f32 %v2573, %v2731
      %v2780 = vadd.f32 %v2574, %v2736
      %v2781 = vadd.f32 %v2575, %v2739
      %v2782 = vadd.f32 %v2576, %v2744
      %v2783 = vadd.f32 %v2577, %v2747
      %v2784 = vadd.f32 %v2578, %v2752
      %v2785 = vadd.f32 %v2579, %v2755
      %v2786 = vadd.f32 %v2580, %v2760
      %v2787 = vadd.f32 %v2581, %v2763
      %v2788 = vadd.f32 %v2582, %v2768
      %v2789 = vadd.f32 %v2583, %v2771
      %2790 = vst [vmem:[%s470] sm:$0xff] %v2774
      %2791 = vst [vmem:[%s470 + $0x8] sm:$0xff] %v2775
      %2792 = vst [vmem:[%s470 + $0x10] sm:$0xff] %v2776
      %2793 = vst [vmem:[%s470 + $0x18] sm:$0xff] %v2777
      %2794 = vst [vmem:[%s470 + $0x20] sm:$0xff] %v2778
      %2795 = vst [vmem:[%s470 + $0x28] sm:$0xff] %v2779
      %2796 = vst [vmem:[%s470 + $0x30] sm:$0xff] %v2780
      %2797 = vst [vmem:[%s470 + $0x38] sm:$0xff] %v2781
      %2798 = vst [vmem:[%s470 + $0x40] sm:$0xff] %v2782
      %2799 = vst [vmem:[%s470 + $0x48] sm:$0xff] %v2783
      %2800 = vst [vmem:[%s470 + $0x50] sm:$0xff] %v2784
      %2801 = vst [vmem:[%s470 + $0x58] sm:$0xff] %v2785
      %2802 = vst [vmem:[%s470 + $0x60] sm:$0xff] %v2786
      %2803 = vst [vmem:[%s470 + $0x68] sm:$0xff] %v2787
      %2804 = vst [vmem:[%s470 + $0x70] sm:$0xff] %v2788
      %2805 = vst [vmem:[%s470 + $0x78] sm:$0xff] %v2789
      %v2806 = vld [vmem:[%s464] sm:$0xff]
      %v2807 = vld [vmem:[%s464 + $0x8] sm:$0xff]
      %v2808 = vld [vmem:[%s464 + $0x10] sm:$0xff]
      %v2809 = vld [vmem:[%s464 + $0x18] sm:$0xff]
      %v2810 = vld [vmem:[%s464 + $0x20] sm:$0xff]
      %v2811 = vld [vmem:[%s464 + $0x28] sm:$0xff]
      %v2812 = vld [vmem:[%s464 + $0x30] sm:$0xff]
      %v2813 = vld [vmem:[%s464 + $0x38] sm:$0xff]
      %v2814 = vld [vmem:[%s464 + $0x40] sm:$0xff]
      %v2815 = vld [vmem:[%s464 + $0x48] sm:$0xff]
      %v2816 = vld [vmem:[%s464 + $0x50] sm:$0xff]
      %v2817 = vld [vmem:[%s464 + $0x58] sm:$0xff]
      %v2818 = vld [vmem:[%s464 + $0x60] sm:$0xff]
      %v2819 = vld [vmem:[%s464 + $0x68] sm:$0xff]
      %v2820 = vld [vmem:[%s464 + $0x70] sm:$0xff]
      %v2821 = vld [vmem:[%s464 + $0x78] sm:$0xff]
      %2823 = vset.pattern.permute.xlu0 0
      %2824 = vperm.xlu0 %2823, %v2806
      %v2825 = vpop.permute.xlu0 %2824
      %2828 = vset.pattern.permute.xlu0 0
      %2829 = vperm.xlu0 %2828, %v2807
      %v2830 = vpop.permute.xlu0 %2829
      %2833 = vset.pattern.permute.xlu0 0
      %2834 = vperm.xlu0 %2833, %v2808
      %v2835 = vpop.permute.xlu0 %2834
      %2838 = vset.pattern.permute.xlu0 0
      %2839 = vperm.xlu0 %2838, %v2809
      %v2840 = vpop.permute.xlu0 %2839
      %2843 = vset.pattern.permute.xlu0 0
      %2844 = vperm.xlu0 %2843, %v2810
      %v2845 = vpop.permute.xlu0 %2844
      %2848 = vset.pattern.permute.xlu0 0
      %2849 = vperm.xlu0 %2848, %v2811
      %v2850 = vpop.permute.xlu0 %2849
      %2853 = vset.pattern.permute.xlu0 0
      %2854 = vperm.xlu0 %2853, %v2812
      %v2855 = vpop.permute.xlu0 %2854
      %2858 = vset.pattern.permute.xlu0 0
      %2859 = vperm.xlu0 %2858, %v2813
      %v2860 = vpop.permute.xlu0 %2859
      %2863 = vset.pattern.permute.xlu0 0
      %2864 = vperm.xlu0 %2863, %v2814
      %v2865 = vpop.permute.xlu0 %2864
      %2868 = vset.pattern.permute.xlu0 0
      %2869 = vperm.xlu0 %2868, %v2815
      %v2870 = vpop.permute.xlu0 %2869
      %2873 = vset.pattern.permute.xlu0 0
      %2874 = vperm.xlu0 %2873, %v2816
      %v2875 = vpop.permute.xlu0 %2874
      %2878 = vset.pattern.permute.xlu0 0
      %2879 = vperm.xlu0 %2878, %v2817
      %v2880 = vpop.permute.xlu0 %2879
      %2883 = vset.pattern.permute.xlu0 0
      %2884 = vperm.xlu0 %2883, %v2818
      %v2885 = vpop.permute.xlu0 %2884
      %2888 = vset.pattern.permute.xlu0 0
      %2889 = vperm.xlu0 %2888, %v2819
      %v2890 = vpop.permute.xlu0 %2889
      %2893 = vset.pattern.permute.xlu0 0
      %2894 = vperm.xlu0 %2893, %v2820
      %v2895 = vpop.permute.xlu0 %2894
      %2898 = vset.pattern.permute.xlu0 0
      %2899 = vperm.xlu0 %2898, %v2821
      %v2900 = vpop.permute.xlu0 %2899
      %v2902 = vmul.f32 %v2774, %v2825
      %v2903 = vmul.f32 %v2775, %v2830
      %v2904 = vmul.f32 %v2776, %v2835
      %v2905 = vmul.f32 %v2777, %v2840
      %v2906 = vmul.f32 %v2778, %v2845
      %v2907 = vmul.f32 %v2779, %v2850
      %v2908 = vmul.f32 %v2780, %v2855
      %v2909 = vmul.f32 %v2781, %v2860
      %v2910 = vmul.f32 %v2782, %v2865
      %v2911 = vmul.f32 %v2783, %v2870
      %v2912 = vmul.f32 %v2784, %v2875
      %v2913 = vmul.f32 %v2785, %v2880
      %v2914 = vmul.f32 %v2786, %v2885
      %v2915 = vmul.f32 %v2787, %v2890
      %v2916 = vmul.f32 %v2788, %v2895
      %v2917 = vmul.f32 %v2789, %v2900
      %v2918 = vadd.f32 %v2902, %v2903
      %v2919 = vadd.f32 %v2918, %v2904
      %v2920 = vadd.f32 %v2919, %v2905
      %v2921 = vadd.f32 %v2920, %v2906
      %v2922 = vadd.f32 %v2921, %v2907
      %v2923 = vadd.f32 %v2922, %v2908
      %v2924 = vadd.f32 %v2923, %v2909
      %v2925 = vadd.f32 %v2924, %v2910
      %v2926 = vadd.f32 %v2925, %v2911
      %v2927 = vadd.f32 %v2926, %v2912
      %v2928 = vadd.f32 %v2927, %v2913
      %v2929 = vadd.f32 %v2928, %v2914
      %v2930 = vadd.f32 %v2929, %v2915
      %v2931 = vadd.f32 %v2930, %v2916
      %v2932 = vadd.f32 %v2931, %v2917
      %v2933 = vrot.slane %v2932, 4
      %v2934 = vadd.f32 %v2932, %v2933
      %v2935 = vrot.slane %v2934, 2
      %v2936 = vadd.f32 %v2934, %v2935
      %v2937 = vrot.slane %v2936, 1
      %v2938 = vadd.f32 %v2936, %v2937
      %v2939 = vmul.f32 %v2774, %v2774
      %v2940 = vmul.f32 %v2775, %v2775
      %v2941 = vmul.f32 %v2776, %v2776
      %v2942 = vmul.f32 %v2777, %v2777
      %v2943 = vmul.f32 %v2778, %v2778
      %v2944 = vmul.f32 %v2779, %v2779
      %v2945 = vmul.f32 %v2780, %v2780
      %v2946 = vmul.f32 %v2781, %v2781
      %v2947 = vmul.f32 %v2782, %v2782
      %v2948 = vmul.f32 %v2783, %v2783
      %v2949 = vmul.f32 %v2784, %v2784
      %v2950 = vmul.f32 %v2785, %v2785
      %v2951 = vmul.f32 %v2786, %v2786
      %v2952 = vmul.f32 %v2787, %v2787
      %v2953 = vmul.f32 %v2788, %v2788
      %v2954 = vmul.f32 %v2789, %v2789
      %v2955 = vmul.f32 %v2939, %v2825
      %v2956 = vmul.f32 %v2940, %v2830
      %v2957 = vmul.f32 %v2941, %v2835
      %v2958 = vmul.f32 %v2942, %v2840
      %v2959 = vmul.f32 %v2943, %v2845
      %v2960 = vmul.f32 %v2944, %v2850
      %v2961 = vmul.f32 %v2945, %v2855
      %v2962 = vmul.f32 %v2946, %v2860
      %v2963 = vmul.f32 %v2947, %v2865
      %v2964 = vmul.f32 %v2948, %v2870
      %v2965 = vmul.f32 %v2949, %v2875
      %v2966 = vmul.f32 %v2950, %v2880
      %v2967 = vmul.f32 %v2951, %v2885
      %v2968 = vmul.f32 %v2952, %v2890
      %v2969 = vmul.f32 %v2953, %v2895
      %v2970 = vmul.f32 %v2954, %v2900
      %v2971 = vadd.f32 %v2955, %v2956
      %v2972 = vadd.f32 %v2971, %v2957
      %v2973 = vadd.f32 %v2972, %v2958
      %v2974 = vadd.f32 %v2973, %v2959
      %v2975 = vadd.f32 %v2974, %v2960
      %v2976 = vadd.f32 %v2975, %v2961
      %v2977 = vadd.f32 %v2976, %v2962
      %v2978 = vadd.f32 %v2977, %v2963
      %v2979 = vadd.f32 %v2978, %v2964
      %v2980 = vadd.f32 %v2979, %v2965
      %v2981 = vadd.f32 %v2980, %v2966
      %v2982 = vadd.f32 %v2981, %v2967
      %v2983 = vadd.f32 %v2982, %v2968
      %v2984 = vadd.f32 %v2983, %v2969
      %v2985 = vadd.f32 %v2984, %v2970
      %v2986 = vrot.slane %v2985, 4
      %v2987 = vadd.f32 %v2985, %v2986
      %v2988 = vrot.slane %v2987, 2
      %v2989 = vadd.f32 %v2987, %v2988
      %v2990 = vrot.slane %v2989, 1
      %v2991 = vadd.f32 %v2989, %v2990
      %vm2992 = vcmask 1040384
      %v2993 = vsel %vm2992, %v2938, %v2991
      %vm2994 = vcmask 1041408
      %v2995 = vsel %vm2994, %v2993, 0.0
      %2996 = vst [vmem:[%s475] sm:$0xff] %v2995
      %s2997 = smul.u32 16, %s20
      %p2998 = scmp.lt.s32.totalorder %s2997, 31
      %s2999 = scalar_select %p2998, %s2997, 31
      %s3000 = smul.addr %s2999, 8
      %s3001 = scalar_lea.vmem %s7, %s3000
      %p3002 = scmp.lt.s32.totalorder %s20, 1
      %s3003 = scalar_select %p3002, %s20, 1
      %s3004 = smul.addr %s3003, 8
      %s3005 = scalar_lea.vmem %s8, %s3004
      // Predicated region
      $region49: #{baseline_arch_forward.4} parent=47 // pred_check
        %p3006 = pneg %p218
      $region50: #{baseline_arch_forward.4} parent=47 // pred_check_branch
        %3008 = sbr.rel (%p3006) target = $region52
      $region51: #{baseline_arch_forward.4} parent=47 // pred_region
        %s3009 = smul.u32 16, %s20
      $region52: #{baseline_arch_forward.4} parent=47 // pred_fallthru
        _
      // Predicated region
      $region53: #{baseline_arch_forward.4} parent=47 // pred_check
        %p3010 = pneg %p244
      $region54: #{baseline_arch_forward.4} parent=47 // pred_check_branch
        %3012 = sbr.rel (%p3010) target = $region56
      $region55: #{baseline_arch_forward.4} parent=47 // pred_region
        _
      $region56: #{baseline_arch_forward.4} parent=47 // pred_fallthru
        _
    $region48: #{baseline_arch_forward.4} parent=5 // pred_fallthru
      _
    %p3013 = scmp.le.s32.totalorder 2, %s15
    // Predicated region
    $region57: #{baseline_arch_forward.4} parent=5 // pred_check
      %p3014 = pneg %p3013
    $region58: #{baseline_arch_forward.4} parent=5 // pred_check_branch
      %3016 = sbr.rel (%p3014) target = $region60
    $region59: #{baseline_arch_forward.4} parent=5 // pred_region
      %s3017 = ssub.s32 %s15, 2
      // Predicated region
      $region61: #{baseline_arch_forward.4} parent=59 // pred_check
        %p3018 = pneg %p224
      $region62: #{baseline_arch_forward.4} parent=59 // pred_check_branch
        %3020 = sbr.rel (%p3018) target = $region64
      $region63: #{baseline_arch_forward.4} parent=59 // pred_region
        %s3021 = smul.u32 16, %s21
        %p3022 = scmp.lt.s32.totalorder %s3021, 31
        %s3023 = scalar_select %p3022, %s3021, 31
        %s3024 = smul.addr %s3023, 8
        %s3025 = scalar_lea.vmem %s7, %s3024
      $region64: #{baseline_arch_forward.4} parent=59 // pred_fallthru
        _
      // Predicated region
      $region65: #{baseline_arch_forward.4} parent=59 // pred_check
        %p3026 = pneg %p250
      $region66: #{baseline_arch_forward.4} parent=59 // pred_check_branch
        %3028 = sbr.rel (%p3026) target = $region68
      $region67: #{baseline_arch_forward.4} parent=59 // pred_region
        %p3029 = scmp.lt.s32.totalorder %s21, 1
        %s3030 = scalar_select %p3029, %s21, 1
        %s3031 = smul.addr %s3030, 8
        %s3032 = scalar_lea.vmem %s8, %s3031
      $region68: #{baseline_arch_forward.4} parent=59 // pred_fallthru
        _
    $region60: #{baseline_arch_forward.4} parent=5 // pred_fallthru
      _
  $region6: #{baseline_arch_forward.4} parent=0 // loop_footer
    %s19 = sadd.s32 1, %s15
  $region7: #{baseline_arch_forward.4} parent=0 // loop_footer_branch
    %14 = sbr.rel target = $region3
  $region8: #{baseline_arch_forward.4} parent=0 // loop_exit
    _

</llo_original>
